<compile_context>
chip_gen: v7x
topology: tpu7x:2x2x1
jax: 0.10.0
libtpu: 0.0.40
codegen_flags: <defaults>
</compile_context>

<pallas_src>
import jax
import jax.numpy as jnp
from jax import lax
from jax.experimental import pallas as pl
from jax.experimental.pallas import tpu as pltpu

HIDDEN = 768  # fixed by the module (W_bert is (769, 768), linear is 768 -> 1)


def _make_object_kernel(Bt, L1, L2, H):
    """Builds the per-batch-tile kernel (Bt examples per grid step)."""

    def kernel(x1_ref, y_ref, x2_ref, m1_ref, m2_ref, rid_ref, cid_ref,
               wm_ref, wext_ref, lw_ref, lb_ref, o_ref, x1w_scr):
        # x1_ref : (Bt*L1, H)  f32    flattened x1
        # y_ref  : (Bt*L1, 1)  f32    extra feature column
        # x2_ref : (Bt*L2, H)  f32    flattened x2
        # m1_ref : (1, Bt*L1)  f32    1.0 where original x1_mask == 0 (lane-dense)
        # m2_ref : (Bt*L2, 1)  f32    1.0 where original x2_mask == 0
        # rid_ref: (Bt*L2, 1)  f32    row -> example id within tile
        # cid_ref: (1, Bt*L1)  f32    col -> example id within tile
        # wm_ref : (H, H)      bf16   W_bert[:768]
        # wext_ref:(1, H)      f32    W_bert[768]  (the `y` row)
        # lw_ref : (1, H)      f32    linear weight row
        # lb_ref : (1, 1)      f32    linear bias
        # o_ref  : (1, 1, Bt)  f32    sigmoid outputs (lane-dense)
        # x1w_scr: (Bt*L1, H)  bf16   projected x1 scratch

        # ---- projection: x1w = [x1 ; y] @ W_bert == x1 @ W_main + y * w_extra ----
        x1_bf = x1_ref[...].astype(jnp.bfloat16)                       # (Bt*L1, H)
        proj = jnp.dot(x1_bf, wm_ref[...],
                       preferred_element_type=jnp.float32)             # (Bt*L1, H) f32
        proj = proj + y_ref[...] * wext_ref[...]                       # rank-1 VPU update
        x1w_scr[...] = proj.astype(jnp.bfloat16)
        x1w_bf = x1w_scr[...]                                          # (Bt*L1, H) bf16

        # ---- block-diagonal batched attention over the whole batch tile ----
        x2_bf = x2_ref[...].astype(jnp.bfloat16)                       # (Bt*L2, H)
        s = lax.dot_general(x2_bf, x1w_bf, (((1,), (1,)), ((), ())),
                            preferred_element_type=jnp.float32)        # (Bt*L2, Bt*L1)

        # in-block masked_fill(x1_mask, -1e-05); mirrors the PyTorch module exactly.
        # TODO(synk): -1e-05 barely masks anything (vs -1e5 later) — likely an
        # upstream bug in the original module, intentionally NOT "fixed" here.
        s = jnp.where(m1_ref[...] > 0.0, jnp.float32(-1e-05), s)
        # cross-example (off-block-diagonal) entries -> large finite negative so
        # they exp to exactly 0 after the row-max subtraction (NaN-safe).
        offdiag = rid_ref[...] != cid_ref[...]                         # (Bt*L2, Bt*L1)
        s = jnp.where(offdiag, jnp.float32(-1e30), s)

        # one row-wise softmax over the whole score tile
        s = s - jnp.max(s, axis=-1, keepdims=True)
        e = jnp.exp(s)
        p = e * pl.reciprocal(jnp.sum(e, axis=-1, keepdims=True), approx=True)

        # x12 = P @ x1w  (off-diagonal P entries are exactly 0)
        x12 = jnp.dot(p.astype(jnp.bfloat16), x1w_bf,
                      preferred_element_type=jnp.float32)              # (Bt*L2, H)
        x12 = jnp.where(m2_ref[...] > 0.0, jnp.float32(-100000.0), x12)

        # masked max-pool over L2 for every example, one fused reduce + one store
        pooled = jnp.max(x12.reshape(Bt, L2, H), axis=1)               # (Bt, H) f32

        # ---- linear head + sigmoid, lane-dense (1, Bt) output ----
        logit = lax.dot_general(lw_ref[...], pooled, (((1,), (1,)), ((), ())),
                                preferred_element_type=jnp.float32)    # (1, Bt)
        z = logit + lb_ref[...]
        o_ref[0] = 1.0 / (1.0 + jnp.exp(-z))   # exact divide on the visible output

    return kernel


def object_model_forward(params, x1, x1_h, x1_mask, y, x2, x2_h, x2_mask, tt, tt2,
                         *, block_b=32):
    del x1_h, x2_h, tt, tt2  # unused by the PyTorch forward as well
    B, L1, H = x1.shape
    L2 = x2.shape[1]
    assert H == HIDDEN

    # byte masks are also returned (matches the PyTorch module)
    x1_mask_inv = (1 - x1_mask.astype(jnp.uint8)).astype(jnp.uint8)    # (B, L1)
    x2_mask_inv = (1 - x2_mask.astype(jnp.uint8)).astype(jnp.uint8)    # (B, L2)

    # batch-tile size: 32 -> (256,256) score tile, nb>=2 for v7x megacore.
    Bt = B if B < block_b else block_b
    nb = (B + Bt - 1) // Bt
    Bpad = nb * Bt
    pad = Bpad - B

    m1f = x1_mask_inv.astype(jnp.float32)                              # (B, L1)
    m2f = x2_mask_inv.astype(jnp.float32)                              # (B, L2)
    x1p, yp, x2p = x1, y, x2
    if pad:
        x1p = jnp.pad(x1p, ((0, pad), (0, 0), (0, 0)))
        yp = jnp.pad(yp, ((0, pad), (0, 0)))
        x2p = jnp.pad(x2p, ((0, pad), (0, 0), (0, 0)))
        m1f = jnp.pad(m1f, ((0, pad), (0, 0)), constant_values=1.0)
        m2f = jnp.pad(m2f, ((0, pad), (0, 0)), constant_values=1.0)

    # flatten batch*seq so every kernel operand is a simple 2-D tile
    x1f = x1p.reshape(Bpad * L1, H).astype(jnp.float32)
    yf = yp.reshape(Bpad * L1, 1).astype(jnp.float32)
    x2f = x2p.reshape(Bpad * L2, H).astype(jnp.float32)
    m1f = m1f.reshape(1, Bpad * L1)                                    # lane-dense fill mask
    m2f = m2f.reshape(Bpad * L2, 1)

    # per-tile row/col example-id vectors for the off-block-diagonal mask
    rid = (jnp.arange(Bt * L2) // L2).astype(jnp.float32).reshape(Bt * L2, 1)
    cid = (jnp.arange(Bt * L1) // L1).astype(jnp.float32).reshape(1, Bt * L1)

    # split W_bert: last row corresponds to the concatenated `y` column
    wm = params["W_bert"][:H, :].astype(jnp.bfloat16)                  # (H, H)
    wext = params["W_bert"][H:, :].astype(jnp.float32)                 # (1, H)
    lw = params["lin_w"].astype(jnp.float32).reshape(1, H)             # (1, H)
    lb = params["lin_b"].astype(jnp.float32).reshape(1, 1)             # (1, 1)

    kernel = _make_object_kernel(Bt, L1, L2, H)

    o3 = pl.pallas_call(
        kernel,
        out_shape=jax.ShapeDtypeStruct((nb, 1, Bt), jnp.float32),
        grid_spec=pltpu.PrefetchScalarGridSpec(
            num_scalar_prefetch=0,
            grid=(nb,),
            in_specs=[
                pl.BlockSpec((Bt * L1, H), lambda i: (i, 0)),   # x1 (f32)
                pl.BlockSpec((Bt * L1, 1), lambda i: (i, 0)),   # y
                pl.BlockSpec((Bt * L2, H), lambda i: (i, 0)),   # x2 (f32)
                pl.BlockSpec((1, Bt * L1), lambda i: (0, i)),   # m1 fill mask (lane-dense)
                pl.BlockSpec((Bt * L2, 1), lambda i: (i, 0)),   # m2 fill mask
                pl.BlockSpec((Bt * L2, 1), lambda i: (0, 0)),   # row example-id
                pl.BlockSpec((1, Bt * L1), lambda i: (0, 0)),   # col example-id
                pl.BlockSpec((H, H), lambda i: (0, 0)),         # W_main (bf16)
                pl.BlockSpec((1, H), lambda i: (0, 0)),         # w_extra
                pl.BlockSpec((1, H), lambda i: (0, 0)),         # lin W row
                pl.BlockSpec((1, 1), lambda i: (0, 0)),         # lin b
            ],
            out_specs=pl.BlockSpec((1, 1, Bt), lambda i: (i, 0, 0)),
            scratch_shapes=[
                pltpu.VMEM((Bt * L1, H), jnp.bfloat16),         # x1w (bf16)
            ],
        ),
        compiler_params=pltpu.CompilerParams(
            dimension_semantics=("parallel",)),
    )(x1f, yf, x2f, m1f, m2f, rid, cid, wm, wext, lw, lb)

    o = o3.reshape(Bpad, 1)[:B]
    return o, x1_mask_inv, x2_mask_inv


def _reference_forward(params, x1, x1_mask, y, x2, x2_mask):
    """Pure-JAX mirror of the kernel math (bf16 MXU operands, f32 accum)."""
    H = HIDDEN
    m1 = (1 - x1_mask.astype(jnp.uint8)).astype(jnp.float32)
    m2 = (1 - x2_mask.astype(jnp.uint8)).astype(jnp.float32)
    wm = params["W_bert"][:H, :].astype(jnp.bfloat16)
    wext = params["W_bert"][H:, :]
    x1w = jnp.einsum("blk,kh->blh", x1.astype(jnp.bfloat16), wm,
                     preferred_element_type=jnp.float32)
    x1w = x1w + y[..., None] * wext[None, :, :]
    x1w_b = x1w.astype(jnp.bfloat16)
    a = jnp.einsum("bmh,blh->bml", x2.astype(jnp.bfloat16), x1w_b,
                   preferred_element_type=jnp.float32)
    a = jnp.where(m1[:, None, :] > 0, -1e-05, a)
    a = jax.nn.softmax(a, axis=-1)
    x12 = jnp.einsum("bml,blh->bmh", a.astype(jnp.bfloat16), x1w_b,
                     preferred_element_type=jnp.float32)
    x12 = jnp.where(m2[:, :, None] > 0, -100000.0, x12)
    pooled = jnp.max(x12, axis=1)
    logit = pooled @ params["lin_w"].T + params["lin_b"]
    return jax.nn.sigmoid(logit)


def init_params(key):
    k1, k2, k3 = jax.random.split(key, 3)
    fan_in, fan_out = HIDDEN + 1, HIDDEN
    xavier_std = (2.0 / (fan_in + fan_out)) ** 0.5
    W_bert = xavier_std * jax.random.normal(k1, (HIDDEN + 1, HIDDEN), jnp.float32)
    lin_w = 0.02 * jax.random.normal(k2, (1, HIDDEN), jnp.float32)
    lin_b = 0.01 * jax.random.normal(k3, (1,), jnp.float32)
    return {"W_bert": W_bert, "lin_w": lin_w, "lin_b": lin_b}


if __name__ == "__main__":
    B, L1, L2, H = 64, 8, 8, HIDDEN
    key = jax.random.PRNGKey(0)
    kp, kx1, ky, kx2, km1, km2, kh1, kh2 = jax.random.split(key, 8)

    params = init_params(kp)

    x1 = jax.random.normal(kx1, (B, L1, H), jnp.float32)
    x1_h = jax.random.normal(kh1, (B, L1, H), jnp.float32)   # unused
    y = jax.random.normal(ky, (B, L1), jnp.float32)
    x2 = jax.random.normal(kx2, (B, L2, H), jnp.float32)
    x2_h = jax.random.normal(kh2, (B, L2, H), jnp.float32)   # unused
    x1_mask = (jax.random.uniform(km1, (B, L1)) > 0.25).astype(jnp.float32)
    x2_mask = (jax.random.uniform(km2, (B, L2)) > 0.25).astype(jnp.float32)
    tt = jnp.zeros((B,), jnp.int32)    # unused
    tt2 = jnp.zeros((B,), jnp.int32)   # unused

    forward = jax.jit(object_model_forward)
    o, m1_out, m2_out = forward(
        params, x1, x1_h, x1_mask, y, x2, x2_h, x2_mask, tt, tt2)
    jax.block_until_ready((o, m1_out, m2_out))

    # correctness check against a pure-JAX mirror of the same math
    o_ref = _reference_forward(params, x1, x1_mask, y, x2, x2_mask)
    assert o.shape == (B, 1) and m1_out.dtype == jnp.uint8 and m2_out.dtype == jnp.uint8
    assert jnp.allclose(o, o_ref, atol=5e-3, rtol=5e-3), float(jnp.max(jnp.abs(o - o_ref)))

    print("KERNEL_OK")
</pallas_src>

<mosaic_0001>
module attributes {stable_mosaic.version = 11 : i64} {
  func.func @kernel(%arg0: i32, %arg1: memref<256x768xf32, #tpu.memory_space<vmem>>, %arg2: memref<256x1xf32, #tpu.memory_space<vmem>>, %arg3: memref<256x768xf32, #tpu.memory_space<vmem>>, %arg4: memref<1x256xf32, #tpu.memory_space<vmem>>, %arg5: memref<256x1xf32, #tpu.memory_space<vmem>>, %arg6: memref<256x1xf32, #tpu.memory_space<vmem>>, %arg7: memref<1x256xf32, #tpu.memory_space<vmem>>, %arg8: memref<768x768xbf16, #tpu.memory_space<vmem>>, %arg9: memref<1x768xf32, #tpu.memory_space<vmem>>, %arg10: memref<1x768xf32, #tpu.memory_space<vmem>>, %arg11: memref<1x1xf32, #tpu.memory_space<vmem>>, %arg12: memref<1x1x32xf32, #tpu.memory_space<vmem>>, %arg13: memref<256x768xbf16, #tpu.memory_space<vmem>>) attributes {dimension_semantics = [#tpu.dimension_semantics<parallel>], iteration_bounds = array<i64: 2>, scalar_prefetch = 0 : i64, scratch_operands = 1 : i64, tpu.core_type = #tpu.core_type<tc>, window_params = [{transform_indices = @transform_0, window_bounds = array<i64: 256, 768>}, {transform_indices = @transform_1, window_bounds = array<i64: 256, 1>}, {transform_indices = @transform_2, window_bounds = array<i64: 256, 768>}, {transform_indices = @transform_3, window_bounds = array<i64: 1, 256>}, {transform_indices = @transform_4, window_bounds = array<i64: 256, 1>}, {pipeline_mode = #tpu.pipeline_mode<synchronous>, transform_indices = @transform_5, window_bounds = array<i64: 256, 1>}, {pipeline_mode = #tpu.pipeline_mode<synchronous>, transform_indices = @transform_6, window_bounds = array<i64: 1, 256>}, {pipeline_mode = #tpu.pipeline_mode<synchronous>, transform_indices = @transform_7, window_bounds = array<i64: 768, 768>}, {pipeline_mode = #tpu.pipeline_mode<synchronous>, transform_indices = @transform_8, window_bounds = array<i64: 1, 768>}, {pipeline_mode = #tpu.pipeline_mode<synchronous>, transform_indices = @transform_9, window_bounds = array<i64: 1, 768>}, {pipeline_mode = #tpu.pipeline_mode<synchronous>, transform_indices = @transform_10, window_bounds = array<i64: 1, 1>}, {transform_indices = @transform_11, window_bounds = array<i64: 1, 1, 32>}]} {
    %c0 = arith.constant 0 : index
    %c0_0 = arith.constant 0 : index
    %0 = vector.load %arg1[%c0, %c0_0] : memref<256x768xf32, #tpu.memory_space<vmem>>, vector<256x768xf32>
    %1 = arith.truncf %0 : vector<256x768xf32> to vector<256x768xbf16>
    %c0_1 = arith.constant 0 : index
    %c0_2 = arith.constant 0 : index
    %2 = vector.load %arg8[%c0_1, %c0_2] : memref<768x768xbf16, #tpu.memory_space<vmem>>, vector<768x768xbf16>
    %cst = arith.constant dense<0.000000e+00> : vector<256x768xf32>
    %3 = tpu.matmul %1, %2, %cst {dimension_numbers = #tpu.dot_dimension_numbers<[1], [0], [0], [1], [0, 0, 1, 1], [], []>} : vector<256x768xbf16>, vector<768x768xbf16>, vector<256x768xf32> -> vector<256x768xf32>
    %c0_3 = arith.constant 0 : index
    %c0_4 = arith.constant 0 : index
    %4 = vector.load %arg2[%c0_3, %c0_4] : memref<256x1xf32, #tpu.memory_space<vmem>>, vector<256x1xf32>
    %c0_5 = arith.constant 0 : index
    %c0_6 = arith.constant 0 : index
    %5 = vector.load %arg9[%c0_5, %c0_6] : memref<1x768xf32, #tpu.memory_space<vmem>>, vector<1x768xf32>
    %6 = vector.broadcast %4 : vector<256x1xf32> to vector<256x768xf32>
    %7 = vector.broadcast %5 : vector<1x768xf32> to vector<256x768xf32>
    %8 = arith.mulf %6, %7 : vector<256x768xf32>
    %9 = arith.addf %3, %8 : vector<256x768xf32>
    %10 = arith.truncf %9 : vector<256x768xf32> to vector<256x768xbf16>
    %c0_7 = arith.constant 0 : index
    %c0_8 = arith.constant 0 : index
    %11 = vector.load %arg13[%c0_7, %c0_8] : memref<256x768xbf16, #tpu.memory_space<vmem>>, vector<256x768xbf16>
    tpu.vector_store %arg13[%c0_7, %c0_8], %10 {strides = array<i32>} : memref<256x768xbf16, #tpu.memory_space<vmem>>, vector<256x768xbf16>,
    %c0_9 = arith.constant 0 : index
    %c0_10 = arith.constant 0 : index
    %12 = vector.load %arg13[%c0_9, %c0_10] : memref<256x768xbf16, #tpu.memory_space<vmem>>, vector<256x768xbf16>
    %c0_11 = arith.constant 0 : index
    %c0_12 = arith.constant 0 : index
    %13 = vector.load %arg3[%c0_11, %c0_12] : memref<256x768xf32, #tpu.memory_space<vmem>>, vector<256x768xf32>
    %14 = arith.truncf %13 : vector<256x768xf32> to vector<256x768xbf16>
    %cst_13 = arith.constant dense<0.000000e+00> : vector<256x256xf32>
    %15 = tpu.matmul %14, %12, %cst_13 {dimension_numbers = #tpu.dot_dimension_numbers<[1], [1], [0], [0], [0, 0, 1, 0], [], []>} : vector<256x768xbf16>, vector<256x768xbf16>, vector<256x256xf32> -> vector<256x256xf32>
    %c0_14 = arith.constant 0 : index
    %c0_15 = arith.constant 0 : index
    %16 = vector.load %arg4[%c0_14, %c0_15] : memref<1x256xf32, #tpu.memory_space<vmem>>, vector<1x256xf32>
    %cst_16 = arith.constant 0.000000e+00 : f32
    %17 = vector.broadcast %cst_16 : f32 to vector<1x256xf32>
    %18 = arith.cmpf ogt, %16, %17 : vector<1x256xf32>
    %cst_17 = arith.constant -9.99999974E-6 : f32
    %19 = vector.shape_cast %18 : vector<1x256xi1> to vector<1x256xi1>
    %20 = vector.broadcast %19 : vector<1x256xi1> to vector<256x256xi1>
    %21 = vector.broadcast %cst_17 : f32 to vector<256x256xf32>
    %22 = arith.select %20, %21, %15 : vector<256x256xi1>, vector<256x256xf32>
    %c0_18 = arith.constant 0 : index
    %c0_19 = arith.constant 0 : index
    %23 = vector.load %arg6[%c0_18, %c0_19] : memref<256x1xf32, #tpu.memory_space<vmem>>, vector<256x1xf32>
    %c0_20 = arith.constant 0 : index
    %c0_21 = arith.constant 0 : index
    %24 = vector.load %arg7[%c0_20, %c0_21] : memref<1x256xf32, #tpu.memory_space<vmem>>, vector<1x256xf32>
    %25 = vector.broadcast %23 : vector<256x1xf32> to vector<256x256xf32>
    %26 = vector.broadcast %24 : vector<1x256xf32> to vector<256x256xf32>
    %27 = arith.cmpf one, %25, %26 : vector<256x256xf32>
    %cst_22 = arith.constant -1.000000e+30 : f32
    %28 = vector.broadcast %cst_22 : f32 to vector<256x256xf32>
    %29 = arith.select %27, %28, %22 : vector<256x256xi1>, vector<256x256xf32>
    %cst_23 = arith.constant dense<0xFF800000> : vector<256xf32>
    %30 = vector.multi_reduction <maximumf>, %29, %cst_23 [1] : vector<256x256xf32> to vector<256xf32>
    %31 = vector.shape_cast %30 : vector<256xf32> to vector<256x1xf32>
    %32 = vector.broadcast %31 : vector<256x1xf32> to vector<256x256xf32>
    %33 = arith.subf %29, %32 : vector<256x256xf32>
    %34 = math.exp %33 : vector<256x256xf32>
    %cst_24 = arith.constant dense<0.000000e+00> : vector<256xf32>
    %35 = vector.multi_reduction <add>, %34, %cst_24 [1] : vector<256x256xf32> to vector<256xf32>
    %36 = vector.shape_cast %35 : vector<256xf32> to vector<256x1xf32>
    %37 = tpu.reciprocal %36 {approx = true} : vector<256x1xf32> -> vector<256x1xf32>
    %38 = vector.broadcast %37 : vector<256x1xf32> to vector<256x256xf32>
    %39 = arith.mulf %34, %38 : vector<256x256xf32>
    %40 = arith.truncf %39 : vector<256x256xf32> to vector<256x256xbf16>
    %cst_25 = arith.constant dense<0.000000e+00> : vector<256x768xf32>
    %41 = tpu.matmul %40, %12, %cst_25 {dimension_numbers = #tpu.dot_dimension_numbers<[1], [0], [0], [1], [0, 0, 1, 1], [], []>} : vector<256x256xbf16>, vector<256x768xbf16>, vector<256x768xf32> -> vector<256x768xf32>
    %c0_26 = arith.constant 0 : index
    %c0_27 = arith.constant 0 : index
    %42 = vector.load %arg5[%c0_26, %c0_27] : memref<256x1xf32, #tpu.memory_space<vmem>>, vector<256x1xf32>
    %cst_28 = arith.constant 0.000000e+00 : f32
    %43 = vector.broadcast %cst_28 : f32 to vector<256x1xf32>
    %44 = arith.cmpf ogt, %42, %43 : vector<256x1xf32>
    %cst_29 = arith.constant -1.000000e+05 : f32
    %45 = vector.shape_cast %44 : vector<256x1xi1> to vector<256x1xi1>
    %46 = vector.broadcast %45 : vector<256x1xi1> to vector<256x768xi1>
    %47 = vector.broadcast %cst_29 : f32 to vector<256x768xf32>
    %48 = arith.select %46, %47, %41 : vector<256x768xi1>, vector<256x768xf32>
    %49 = vector.shape_cast %48 : vector<256x768xf32> to vector<32x8x768xf32>
    %cst_30 = arith.constant dense<0xFF800000> : vector<32x768xf32>
    %50 = vector.multi_reduction <maximumf>, %49, %cst_30 [1] : vector<32x8x768xf32> to vector<32x768xf32>
    %c0_31 = arith.constant 0 : index
    %c0_32 = arith.constant 0 : index
    %51 = vector.load %arg10[%c0_31, %c0_32] : memref<1x768xf32, #tpu.memory_space<vmem>>, vector<1x768xf32>
    %cst_33 = arith.constant dense<0.000000e+00> : vector<1x32xf32>
    %52 = tpu.matmul %51, %50, %cst_33 {dimension_numbers = #tpu.dot_dimension_numbers<[1], [1], [0], [0], [0, 0, 1, 0], [], []>} : vector<1x768xf32>, vector<32x768xf32>, vector<1x32xf32> -> vector<1x32xf32>
    %c0_34 = arith.constant 0 : index
    %c0_35 = arith.constant 0 : index
    %53 = vector.load %arg11[%c0_34, %c0_35] : memref<1x1xf32, #tpu.memory_space<vmem>>, vector<1x1xf32>
    %54 = vector.broadcast %53 : vector<1x1xf32> to vector<1x32xf32>
    %55 = arith.addf %52, %54 : vector<1x32xf32>
    %cst_36 = arith.constant 0.000000e+00 : f32
    %56 = vector.broadcast %cst_36 : f32 to vector<1x32xf32>
    %57 = arith.subf %56, %55 : vector<1x32xf32>
    %58 = math.exp %57 : vector<1x32xf32>
    %cst_37 = arith.constant 1.000000e+00 : f32
    %59 = vector.broadcast %cst_37 : f32 to vector<1x32xf32>
    %60 = arith.addf %59, %58 : vector<1x32xf32>
    %cst_38 = arith.constant 1.000000e+00 : f32
    %61 = vector.broadcast %cst_38 : f32 to vector<1x32xf32>
    %62 = arith.divf %61, %60 : vector<1x32xf32>
    %c0_39 = arith.constant 0 : index
    %c0_40 = arith.constant 0 : index
    %c0_41 = arith.constant 0 : index
    %63 = vector.load %arg12[%c0_39, %c0_40, %c0_41] : memref<1x1x32xf32, #tpu.memory_space<vmem>>, vector<1x1x32xf32>
    %64 = vector.shape_cast %63 : vector<1x1x32xf32> to vector<1x32xf32>
    %65 = vector.shape_cast %62 : vector<1x32xf32> to vector<1x1x32xf32>
    tpu.vector_store %arg12[%c0_39, %c0_40, %c0_41], %65 {strides = array<i32>} : memref<1x1x32xf32, #tpu.memory_space<vmem>>, vector<1x1x32xf32>,
    return
  }
  func.func @transform_0(%arg0: i32) -> (i32, i32) {
    %c0_i32 = arith.constant 0 : i32
    %c0_i32_0 = arith.constant 0 : i32
    return %arg0, %c0_i32 : i32, i32
  }
  func.func @transform_1(%arg0: i32) -> (i32, i32) {
    %c0_i32 = arith.constant 0 : i32
    %c0_i32_0 = arith.constant 0 : i32
    return %arg0, %c0_i32 : i32, i32
  }
  func.func @transform_2(%arg0: i32) -> (i32, i32) {
    %c0_i32 = arith.constant 0 : i32
    %c0_i32_0 = arith.constant 0 : i32
    return %arg0, %c0_i32 : i32, i32
  }
  func.func @transform_3(%arg0: i32) -> (i32, i32) {
    %c0_i32 = arith.constant 0 : i32
    %c0_i32_0 = arith.constant 0 : i32
    return %c0_i32, %arg0 : i32, i32
  }
  func.func @transform_4(%arg0: i32) -> (i32, i32) {
    %c0_i32 = arith.constant 0 : i32
    %c0_i32_0 = arith.constant 0 : i32
    return %arg0, %c0_i32 : i32, i32
  }
  func.func @transform_5(%arg0: i32) -> (i32, i32) {
    %c0_i32 = arith.constant 0 : i32
    %c0_i32_0 = arith.constant 0 : i32
    %c0_i32_1 = arith.constant 0 : i32
    return %c0_i32, %c0_i32_0 : i32, i32
  }
  func.func @transform_6(%arg0: i32) -> (i32, i32) {
    %c0_i32 = arith.constant 0 : i32
    %c0_i32_0 = arith.constant 0 : i32
    %c0_i32_1 = arith.constant 0 : i32
    return %c0_i32, %c0_i32_0 : i32, i32
  }
  func.func @transform_7(%arg0: i32) -> (i32, i32) {
    %c0_i32 = arith.constant 0 : i32
    %c0_i32_0 = arith.constant 0 : i32
    %c0_i32_1 = arith.constant 0 : i32
    return %c0_i32, %c0_i32_0 : i32, i32
  }
  func.func @transform_8(%arg0: i32) -> (i32, i32) {
    %c0_i32 = arith.constant 0 : i32
    %c0_i32_0 = arith.constant 0 : i32
    %c0_i32_1 = arith.constant 0 : i32
    return %c0_i32, %c0_i32_0 : i32, i32
  }
  func.func @transform_9(%arg0: i32) -> (i32, i32) {
    %c0_i32 = arith.constant 0 : i32
    %c0_i32_0 = arith.constant 0 : i32
    %c0_i32_1 = arith.constant 0 : i32
    return %c0_i32, %c0_i32_0 : i32, i32
  }
  func.func @transform_10(%arg0: i32) -> (i32, i32) {
    %c0_i32 = arith.constant 0 : i32
    %c0_i32_0 = arith.constant 0 : i32
    %c0_i32_1 = arith.constant 0 : i32
    return %c0_i32, %c0_i32_0 : i32, i32
  }
  func.func @transform_11(%arg0: i32) -> (i32, i32, i32) {
    %c0_i32 = arith.constant 0 : i32
    %c0_i32_0 = arith.constant 0 : i32
    %c0_i32_1 = arith.constant 0 : i32
    return %arg0, %c0_i32, %c0_i32_0 : i32, i32, i32
  }
}

</mosaic_0001>

<llo_original>
// kernel: object_model_forward.1
$region0: #{object_model_forward.1}
  #allocation0 [shape = 'u32[]', space=smem, size = 0x4, offset = 0x4, fixed_abs, tag = 'smem constant byte address 0x4 - core index']
  #allocation1 [shape = 'u32[144,128]{1,0:T(1,128)}', space=vmem, size = 0x12000, scoped, tag = 'internal scratch']
  #allocation2 [shape = 'bf16[256,768]{1,0:T(16,128)(2,1)}', space=vmem, size = 0x60000, scoped, tag = 'scratch operand']
  #allocation3 [shape = 'f32[1,1]{1,0:T(1,128)S(1)}', space=vmem, size = 0x200, scoped, tag = 'scoped memory for object_model_forward.1']
  %s0 = inlined_call_operand.vmem [shape: f32[512,768], index: 0, kind: input, shape index: {}]
  %s1 = inlined_call_operand.vmem [shape: f32[512,1], index: 1, kind: input, shape index: {}]
  %s2 = inlined_call_operand.vmem [shape: f32[512,768], index: 2, kind: input, shape index: {}]
  %s3 = inlined_call_operand.vmem [shape: f32[1,512], index: 3, kind: input, shape index: {}]
  %s4 = inlined_call_operand.vmem [shape: f32[512,1], index: 4, kind: input, shape index: {}]
  %s5 = inlined_call_operand.vmem [shape: f32[256,1], index: 5, kind: input, shape index: {}]
  %s6 = inlined_call_operand.vmem [shape: f32[1,256], index: 6, kind: input, shape index: {}]
  %s7 = inlined_call_operand.vmem [shape: bf16[768,768], index: 7, kind: input, shape index: {}]
  %s8 = inlined_call_operand.vmem [shape: f32[1,768], index: 8, kind: input, shape index: {}]
  %s9 = inlined_call_operand.vmem [shape: f32[1,768], index: 9, kind: input, shape index: {}]
  %s10 = inlined_call_operand.<no memory space> [shape: f32[1,1], index: 10, kind: input, shape index: {}]
  %s11 = inlined_call_operand.vmem [shape: f32[2,1,32], index: 11, kind: output, shape index: {}]
  %s12 = sld [smem:[#allocation0]]
  $region77: #{object_model_forward.1} parent=0
    _
  %s14 = ssub.s32 1, %s12
  %s15 = scalar_select 0, %s14, %s12
  %v16 = vstv %s10
  %17 = vst [vmem:[#allocation3] sm:$0x1] %v16
  loop: start=0, step=1, limit=4
  $region2: #{object_model_forward.1} parent=0 // loop_pre_header
    _
  $region3: #{object_model_forward.1} parent=0 // loop_header
    %s19 = sphi 0, %s23
    %p20 = scmp.ge.s32.totalorder %s19, 4
    %s29 = sphi 0, %s31
    %s32 = sphi 0, %s29
    %s33 = sphi 0, %s32
    %s49 = sphi 0, %s33
    %s55 = sphi 0, %s57
    %s58 = sphi 0, %s55
    %s59 = sphi 0, %s58
    %s75 = sphi 0, %s59
    %s81 = sphi 0, %s83
    %s84 = sphi 0, %s81
    %s85 = sphi 0, %s84
    %s101 = sphi 0, %s85
    %s107 = sphi 0, %s109
    %s110 = sphi 0, %s107
    %s111 = sphi 0, %s110
    %s127 = sphi 0, %s111
    %s133 = sphi 0, %s135
    %s136 = sphi 0, %s133
    %s137 = sphi 0, %s136
    %s153 = sphi 0, %s137
    %s157 = sphi 0, %s157
    %s159 = sphi 0, %s157
    %s160 = sphi 0, %s159
    %s174 = sphi 0, %s160
    %s178 = sphi 0, %s178
    %s180 = sphi 0, %s178
    %s181 = sphi 0, %s180
    %s195 = sphi 0, %s181
    %s199 = sphi 0, %s199
    %s201 = sphi 0, %s199
    %s202 = sphi 0, %s201
    %s216 = sphi 0, %s202
    %s220 = sphi 0, %s220
    %s222 = sphi 0, %s220
    %s223 = sphi 0, %s222
    %s237 = sphi 0, %s223
    %s241 = sphi 0, %s241
    %s243 = sphi 0, %s241
    %s244 = sphi 0, %s243
    %s258 = sphi 0, %s244
    %s262 = sphi 0, %s262
    %s264 = sphi 0, %s262
    %s265 = sphi 0, %s264
    %s279 = sphi 0, %s265
    %s285 = sphi 0, %s287
    %s288 = sphi 0, %s285
    %s289 = sphi 0, %s288
    %s305 = sphi 0, %s289
  $region4: #{object_model_forward.1} parent=0 // loop_header_branch
    %22 = sbr.rel (%p20) target = $region8
  $region5: #{object_model_forward.1} parent=0 // loop_body
    %s24 = ssub.s32 %s19, 1
    %s25 = ssub.s32 %s19, 2
    %s26 = sadd.s32 %s19, 1
    %s27 = ssub.s32 %s19, %s26
    %p28 = scmp.eq.s32.totalorder %s27, 0
    %s30 = sadd.s32 %s29, 1
    %s31 = scalar_select %p28, %s29, %s30
    %p34 = pneg %p28
    %p35 = scmp.eq.s32.totalorder %s19, 1
    %p36 = por %p34, %p35
    %p37 = scmp.ne.s32.totalorder %s29, %s32
    %p38 = scmp.eq.s32.totalorder %s19, 0
    %p39 = por %p37, %p38
    %p40 = scmp.ne.s32.totalorder %s29, %s32
    %p41 = scmp.eq.s32.totalorder %s24, 1
    %p42 = por %p40, %p41
    %p43 = scmp.ne.s32.totalorder %s32, %s33
    %p44 = scmp.eq.s32.totalorder %s24, 0
    %p45 = por %p43, %p44
    %p46 = scmp.ne.s32.totalorder %s32, %s33
    %p47 = scmp.eq.s32.totalorder %s25, 1
    %p48 = por %p46, %p47
    %p50 = scmp.ne.s32.totalorder %s33, %s49
    %p51 = scmp.eq.s32.totalorder %s25, 0
    %p52 = por %p50, %p51
    %s53 = ssub.s32 %s19, %s26
    %p54 = scmp.eq.s32.totalorder %s53, 0
    %s56 = sadd.s32 %s55, 1
    %s57 = scalar_select %p54, %s55, %s56
    %p60 = pneg %p54
    %p61 = scmp.eq.s32.totalorder %s19, 1
    %p62 = por %p60, %p61
    %p63 = scmp.ne.s32.totalorder %s55, %s58
    %p64 = scmp.eq.s32.totalorder %s19, 0
    %p65 = por %p63, %p64
    %p66 = scmp.ne.s32.totalorder %s55, %s58
    %p67 = scmp.eq.s32.totalorder %s24, 1
    %p68 = por %p66, %p67
    %p69 = scmp.ne.s32.totalorder %s58, %s59
    %p70 = scmp.eq.s32.totalorder %s24, 0
    %p71 = por %p69, %p70
    %p72 = scmp.ne.s32.totalorder %s58, %s59
    %p73 = scmp.eq.s32.totalorder %s25, 1
    %p74 = por %p72, %p73
    %p76 = scmp.ne.s32.totalorder %s59, %s75
    %p77 = scmp.eq.s32.totalorder %s25, 0
    %p78 = por %p76, %p77
    %s79 = ssub.s32 %s19, %s26
    %p80 = scmp.eq.s32.totalorder %s79, 0
    %s82 = sadd.s32 %s81, 1
    %s83 = scalar_select %p80, %s81, %s82
    %p86 = pneg %p80
    %p87 = scmp.eq.s32.totalorder %s19, 1
    %p88 = por %p86, %p87
    %p89 = scmp.ne.s32.totalorder %s81, %s84
    %p90 = scmp.eq.s32.totalorder %s19, 0
    %p91 = por %p89, %p90
    %p92 = scmp.ne.s32.totalorder %s81, %s84
    %p93 = scmp.eq.s32.totalorder %s24, 1
    %p94 = por %p92, %p93
    %p95 = scmp.ne.s32.totalorder %s84, %s85
    %p96 = scmp.eq.s32.totalorder %s24, 0
    %p97 = por %p95, %p96
    %p98 = scmp.ne.s32.totalorder %s84, %s85
    %p99 = scmp.eq.s32.totalorder %s25, 1
    %p100 = por %p98, %p99
    %p102 = scmp.ne.s32.totalorder %s85, %s101
    %p103 = scmp.eq.s32.totalorder %s25, 0
    %p104 = por %p102, %p103
    %s105 = ssub.s32 %s19, %s26
    %p106 = scmp.eq.s32.totalorder %s105, 0
    %s108 = sadd.s32 %s107, 1
    %s109 = scalar_select %p106, %s107, %s108
    %p112 = pneg %p106
    %p113 = scmp.eq.s32.totalorder %s19, 1
    %p114 = por %p112, %p113
    %p115 = scmp.ne.s32.totalorder %s107, %s110
    %p116 = scmp.eq.s32.totalorder %s19, 0
    %p117 = por %p115, %p116
    %p118 = scmp.ne.s32.totalorder %s107, %s110
    %p119 = scmp.eq.s32.totalorder %s24, 1
    %p120 = por %p118, %p119
    %p121 = scmp.ne.s32.totalorder %s110, %s111
    %p122 = scmp.eq.s32.totalorder %s24, 0
    %p123 = por %p121, %p122
    %p124 = scmp.ne.s32.totalorder %s110, %s111
    %p125 = scmp.eq.s32.totalorder %s25, 1
    %p126 = por %p124, %p125
    %p128 = scmp.ne.s32.totalorder %s111, %s127
    %p129 = scmp.eq.s32.totalorder %s25, 0
    %p130 = por %p128, %p129
    %s131 = ssub.s32 %s19, %s26
    %p132 = scmp.eq.s32.totalorder %s131, 0
    %s134 = sadd.s32 %s133, 1
    %s135 = scalar_select %p132, %s133, %s134
    %p138 = pneg %p132
    %p139 = scmp.eq.s32.totalorder %s19, 1
    %p140 = por %p138, %p139
    %p141 = scmp.ne.s32.totalorder %s133, %s136
    %p142 = scmp.eq.s32.totalorder %s19, 0
    %p143 = por %p141, %p142
    %p144 = scmp.ne.s32.totalorder %s133, %s136
    %p145 = scmp.eq.s32.totalorder %s24, 1
    %p146 = por %p144, %p145
    %p147 = scmp.ne.s32.totalorder %s136, %s137
    %p148 = scmp.eq.s32.totalorder %s24, 0
    %p149 = por %p147, %p148
    %p150 = scmp.ne.s32.totalorder %s136, %s137
    %p151 = scmp.eq.s32.totalorder %s25, 1
    %p152 = por %p150, %p151
    %p154 = scmp.ne.s32.totalorder %s137, %s153
    %p155 = scmp.eq.s32.totalorder %s25, 0
    %p156 = por %p154, %p155
    %s158 = sadd.s32 %s157, 1
    %p161 = scmp.eq.s32.totalorder %s19, 1
    %p162 = scmp.ne.s32.totalorder %s157, %s159
    %p163 = scmp.eq.s32.totalorder %s19, 0
    %p164 = por %p162, %p163
    %p165 = scmp.ne.s32.totalorder %s157, %s159
    %p166 = scmp.eq.s32.totalorder %s24, 1
    %p167 = por %p165, %p166
    %p168 = scmp.ne.s32.totalorder %s159, %s160
    %p169 = scmp.eq.s32.totalorder %s24, 0
    %p170 = por %p168, %p169
    %p171 = scmp.ne.s32.totalorder %s159, %s160
    %p172 = scmp.eq.s32.totalorder %s25, 1
    %p173 = por %p171, %p172
    %p175 = scmp.ne.s32.totalorder %s160, %s174
    %p176 = scmp.eq.s32.totalorder %s25, 0
    %p177 = por %p175, %p176
    %s179 = sadd.s32 %s178, 1
    %p182 = scmp.eq.s32.totalorder %s19, 1
    %p183 = scmp.ne.s32.totalorder %s178, %s180
    %p184 = scmp.eq.s32.totalorder %s19, 0
    %p185 = por %p183, %p184
    %p186 = scmp.ne.s32.totalorder %s178, %s180
    %p187 = scmp.eq.s32.totalorder %s24, 1
    %p188 = por %p186, %p187
    %p189 = scmp.ne.s32.totalorder %s180, %s181
    %p190 = scmp.eq.s32.totalorder %s24, 0
    %p191 = por %p189, %p190
    %p192 = scmp.ne.s32.totalorder %s180, %s181
    %p193 = scmp.eq.s32.totalorder %s25, 1
    %p194 = por %p192, %p193
    %p196 = scmp.ne.s32.totalorder %s181, %s195
    %p197 = scmp.eq.s32.totalorder %s25, 0
    %p198 = por %p196, %p197
    %s200 = sadd.s32 %s199, 1
    %p203 = scmp.eq.s32.totalorder %s19, 1
    %p204 = scmp.ne.s32.totalorder %s199, %s201
    %p205 = scmp.eq.s32.totalorder %s19, 0
    %p206 = por %p204, %p205
    %p207 = scmp.ne.s32.totalorder %s199, %s201
    %p208 = scmp.eq.s32.totalorder %s24, 1
    %p209 = por %p207, %p208
    %p210 = scmp.ne.s32.totalorder %s201, %s202
    %p211 = scmp.eq.s32.totalorder %s24, 0
    %p212 = por %p210, %p211
    %p213 = scmp.ne.s32.totalorder %s201, %s202
    %p214 = scmp.eq.s32.totalorder %s25, 1
    %p215 = por %p213, %p214
    %p217 = scmp.ne.s32.totalorder %s202, %s216
    %p218 = scmp.eq.s32.totalorder %s25, 0
    %p219 = por %p217, %p218
    %s221 = sadd.s32 %s220, 1
    %p224 = scmp.eq.s32.totalorder %s19, 1
    %p225 = scmp.ne.s32.totalorder %s220, %s222
    %p226 = scmp.eq.s32.totalorder %s19, 0
    %p227 = por %p225, %p226
    %p228 = scmp.ne.s32.totalorder %s220, %s222
    %p229 = scmp.eq.s32.totalorder %s24, 1
    %p230 = por %p228, %p229
    %p231 = scmp.ne.s32.totalorder %s222, %s223
    %p232 = scmp.eq.s32.totalorder %s24, 0
    %p233 = por %p231, %p232
    %p234 = scmp.ne.s32.totalorder %s222, %s223
    %p235 = scmp.eq.s32.totalorder %s25, 1
    %p236 = por %p234, %p235
    %p238 = scmp.ne.s32.totalorder %s223, %s237
    %p239 = scmp.eq.s32.totalorder %s25, 0
    %p240 = por %p238, %p239
    %s242 = sadd.s32 %s241, 1
    %p245 = scmp.eq.s32.totalorder %s19, 1
    %p246 = scmp.ne.s32.totalorder %s241, %s243
    %p247 = scmp.eq.s32.totalorder %s19, 0
    %p248 = por %p246, %p247
    %p249 = scmp.ne.s32.totalorder %s241, %s243
    %p250 = scmp.eq.s32.totalorder %s24, 1
    %p251 = por %p249, %p250
    %p252 = scmp.ne.s32.totalorder %s243, %s244
    %p253 = scmp.eq.s32.totalorder %s24, 0
    %p254 = por %p252, %p253
    %p255 = scmp.ne.s32.totalorder %s243, %s244
    %p256 = scmp.eq.s32.totalorder %s25, 1
    %p257 = por %p255, %p256
    %p259 = scmp.ne.s32.totalorder %s244, %s258
    %p260 = scmp.eq.s32.totalorder %s25, 0
    %p261 = por %p259, %p260
    %s263 = sadd.s32 %s262, 1
    %p266 = scmp.eq.s32.totalorder %s19, 1
    %p267 = scmp.ne.s32.totalorder %s262, %s264
    %p268 = scmp.eq.s32.totalorder %s19, 0
    %p269 = por %p267, %p268
    %p270 = scmp.ne.s32.totalorder %s262, %s264
    %p271 = scmp.eq.s32.totalorder %s24, 1
    %p272 = por %p270, %p271
    %p273 = scmp.ne.s32.totalorder %s264, %s265
    %p274 = scmp.eq.s32.totalorder %s24, 0
    %p275 = por %p273, %p274
    %p276 = scmp.ne.s32.totalorder %s264, %s265
    %p277 = scmp.eq.s32.totalorder %s25, 1
    %p278 = por %p276, %p277
    %p280 = scmp.ne.s32.totalorder %s265, %s279
    %p281 = scmp.eq.s32.totalorder %s25, 0
    %p282 = por %p280, %p281
    %s283 = ssub.s32 %s19, %s26
    %p284 = scmp.eq.s32.totalorder %s283, 0
    %s286 = sadd.s32 %s285, 1
    %s287 = scalar_select %p284, %s285, %s286
    %p290 = pneg %p284
    %p291 = scmp.eq.s32.totalorder %s19, 1
    %p292 = por %p290, %p291
    %p293 = scmp.ne.s32.totalorder %s285, %s288
    %p294 = scmp.eq.s32.totalorder %s19, 0
    %p295 = por %p293, %p294
    %p296 = scmp.ne.s32.totalorder %s285, %s288
    %p297 = scmp.eq.s32.totalorder %s24, 1
    %p298 = por %p296, %p297
    %p299 = scmp.ne.s32.totalorder %s288, %s289
    %p300 = scmp.eq.s32.totalorder %s24, 0
    %p301 = por %p299, %p300
    %p302 = scmp.ne.s32.totalorder %s288, %s289
    %p303 = scmp.eq.s32.totalorder %s25, 1
    %p304 = por %p302, %p303
    %p306 = scmp.ne.s32.totalorder %s289, %s305
    %p307 = scmp.eq.s32.totalorder %s25, 0
    %p308 = por %p306, %p307
    %p309 = scmp.le.s32.totalorder 1, %s19
    %p310 = scmp.lt.s32.totalorder %s19, 3
    %p311 = pnand %p309, %p310
    %p312 = pneg %p311
    // Predicated region
    $region9: #{object_model_forward.1} parent=5 // pred_check
      _
    $region10: #{object_model_forward.1} parent=5 // pred_check_branch
      %314 = sbr.rel (%p311) target = $region12
    $region11: #{object_model_forward.1} parent=5 // pred_region
      %s315 = ssub.s32 %s19, 1
      // Predicated region
      $region13: #{object_model_forward.1} parent=11 // pred_check
        %p316 = pneg %p170
      $region14: #{object_model_forward.1} parent=11 // pred_check_branch
        %318 = sbr.rel (%p316) target = $region16
      $region15: #{object_model_forward.1} parent=11 // pred_region
        _
      $region16: #{object_model_forward.1} parent=11 // pred_fallthru
        _
      // Predicated region
      $region17: #{object_model_forward.1} parent=11 // pred_check
        %p319 = pneg %p191
      $region18: #{object_model_forward.1} parent=11 // pred_check_branch
        %321 = sbr.rel (%p319) target = $region20
      $region19: #{object_model_forward.1} parent=11 // pred_region
        _
      $region20: #{object_model_forward.1} parent=11 // pred_fallthru
        _
      // Predicated region
      $region21: #{object_model_forward.1} parent=11 // pred_check
        %p322 = pneg %p212
      $region22: #{object_model_forward.1} parent=11 // pred_check_branch
        %324 = sbr.rel (%p322) target = $region24
      $region23: #{object_model_forward.1} parent=11 // pred_region
        _
      $region24: #{object_model_forward.1} parent=11 // pred_fallthru
        _
      // Predicated region
      $region25: #{object_model_forward.1} parent=11 // pred_check
        %p325 = pneg %p233
      $region26: #{object_model_forward.1} parent=11 // pred_check_branch
        %327 = sbr.rel (%p325) target = $region28
      $region27: #{object_model_forward.1} parent=11 // pred_region
        _
      $region28: #{object_model_forward.1} parent=11 // pred_fallthru
        _
      // Predicated region
      $region29: #{object_model_forward.1} parent=11 // pred_check
        %p328 = pneg %p254
      $region30: #{object_model_forward.1} parent=11 // pred_check_branch
        %330 = sbr.rel (%p328) target = $region32
      $region31: #{object_model_forward.1} parent=11 // pred_region
        _
      $region32: #{object_model_forward.1} parent=11 // pred_fallthru
        _
      // Predicated region
      $region33: #{object_model_forward.1} parent=11 // pred_check
        %p331 = pneg %p275
      $region34: #{object_model_forward.1} parent=11 // pred_check_branch
        %333 = sbr.rel (%p331) target = $region36
      $region35: #{object_model_forward.1} parent=11 // pred_region
        _
      $region36: #{object_model_forward.1} parent=11 // pred_fallthru
        _
    $region12: #{object_model_forward.1} parent=5 // pred_fallthru
      _
    %p334 = scmp.lt.s32.totalorder %s19, 2
    // Predicated region
    $region37: #{object_model_forward.1} parent=5 // pred_check
      %p335 = pneg %p334
    $region38: #{object_model_forward.1} parent=5 // pred_check_branch
      %337 = sbr.rel (%p335) target = $region40
    $region39: #{object_model_forward.1} parent=5 // pred_region
      // Predicated region
      $region41: #{object_model_forward.1} parent=39 // pred_check
        %p338 = pneg %p39
      $region42: #{object_model_forward.1} parent=39 // pred_check_branch
        %340 = sbr.rel (%p338) target = $region44
      $region43: #{object_model_forward.1} parent=39 // pred_region
        %s341 = smul.u32 32, %s19
        %p342 = scmp.lt.s32.totalorder %s341, 63
        %s343 = scalar_select %p342, %s341, 63
        %s344 = smul.addr %s343, 6
        %s345 = smul.addr %s344, 8
        %s346 = scalar_lea.vmem %s0, %s345
        %s347 = smul.u32 32, %s19
      $region44: #{object_model_forward.1} parent=39 // pred_fallthru
        _
      // Predicated region
      $region45: #{object_model_forward.1} parent=39 // pred_check
        %p348 = pneg %p65
      $region46: #{object_model_forward.1} parent=39 // pred_check_branch
        %350 = sbr.rel (%p348) target = $region48
      $region47: #{object_model_forward.1} parent=39 // pred_region
        %s351 = smul.u32 32, %s19
        %p352 = scmp.lt.s32.totalorder %s351, 63
        %s353 = scalar_select %p352, %s351, 63
        %s354 = smul.addr %s353, 8
        %s355 = scalar_lea.vmem %s1, %s354
        %s356 = smul.u32 32, %s19
      $region48: #{object_model_forward.1} parent=39 // pred_fallthru
        _
      // Predicated region
      $region49: #{object_model_forward.1} parent=39 // pred_check
        %p357 = pneg %p91
      $region50: #{object_model_forward.1} parent=39 // pred_check_branch
        %359 = sbr.rel (%p357) target = $region52
      $region51: #{object_model_forward.1} parent=39 // pred_region
        %s360 = smul.u32 32, %s19
        %p361 = scmp.lt.s32.totalorder %s360, 63
        %s362 = scalar_select %p361, %s360, 63
        %s363 = smul.addr %s362, 6
        %s364 = smul.addr %s363, 8
        %s365 = scalar_lea.vmem %s2, %s364
        %s366 = smul.u32 32, %s19
      $region52: #{object_model_forward.1} parent=39 // pred_fallthru
        _
      // Predicated region
      $region53: #{object_model_forward.1} parent=39 // pred_check
        %p367 = pneg %p117
      $region54: #{object_model_forward.1} parent=39 // pred_check_branch
        %369 = sbr.rel (%p367) target = $region56
      $region55: #{object_model_forward.1} parent=39 // pred_region
        %s370 = smul.u32 2, %s19
        %p371 = scmp.lt.s32.totalorder %s370, 3
        %s372 = scalar_select %p371, %s370, 3
        %s373 = scalar_lea.vmem %s3, %s372
        %s374 = smul.u32 2, %s19
      $region56: #{object_model_forward.1} parent=39 // pred_fallthru
        _
      // Predicated region
      $region57: #{object_model_forward.1} parent=39 // pred_check
        %p375 = pneg %p143
      $region58: #{object_model_forward.1} parent=39 // pred_check_branch
        %377 = sbr.rel (%p375) target = $region60
      $region59: #{object_model_forward.1} parent=39 // pred_region
        %s378 = smul.u32 32, %s19
        %p379 = scmp.lt.s32.totalorder %s378, 63
        %s380 = scalar_select %p379, %s378, 63
        %s381 = smul.addr %s380, 8
        %s382 = scalar_lea.vmem %s4, %s381
        %s383 = smul.u32 32, %s19
      $region60: #{object_model_forward.1} parent=39 // pred_fallthru
        _
    $region40: #{object_model_forward.1} parent=5 // pred_fallthru
      _
    %p384 = scmp.le.s32.totalorder 1, %s19
    %p385 = scmp.lt.s32.totalorder %s19, 3
    %p386 = pnand %p384, %p385
    %p387 = pneg %p386
    // Predicated region
    $region61: #{object_model_forward.1} parent=5 // pred_check
      _
    $region62: #{object_model_forward.1} parent=5 // pred_check_branch
      %389 = sbr.rel (%p386) target = $region64
    $region63: #{object_model_forward.1} parent=5 // pred_region
      %s390 = ssub.s32 %s19, 1
      %s391 = smul.u32 32, %s24
      %p392 = scmp.lt.s32.totalorder %s391, 63
      %s393 = scalar_select %p392, %s391, 63
      %s394 = smul.addr %s393, 6
      %s395 = smul.addr %s394, 8
      %s396 = scalar_lea.vmem %s0, %s395
      %p397 = pneg %p45
      %p398 = pneg %p42
      %s399 = smul.u32 32, %s24
      %p400 = scmp.lt.s32.totalorder %s399, 63
      %s401 = scalar_select %p400, %s399, 63
      %s402 = smul.addr %s401, 8
      %s403 = scalar_lea.vmem %s1, %s402
      %p404 = pneg %p71
      %p405 = pneg %p68
      %s406 = smul.u32 32, %s24
      %p407 = scmp.lt.s32.totalorder %s406, 63
      %s408 = scalar_select %p407, %s406, 63
      %s409 = smul.addr %s408, 6
      %s410 = smul.addr %s409, 8
      %s411 = scalar_lea.vmem %s2, %s410
      %p412 = pneg %p97
      %p413 = pneg %p94
      %s414 = smul.u32 2, %s24
      %p415 = scmp.lt.s32.totalorder %s414, 3
      %s416 = scalar_select %p415, %s414, 3
      %s417 = scalar_lea.vmem %s3, %s416
      %p418 = pneg %p123
      %p419 = pneg %p120
      %s420 = smul.u32 32, %s24
      %p421 = scmp.lt.s32.totalorder %s420, 63
      %s422 = scalar_select %p421, %s420, 63
      %s423 = smul.addr %s422, 8
      %s424 = scalar_lea.vmem %s4, %s423
      %p425 = pneg %p149
      %p426 = pneg %p146
      %p427 = pneg %p170
      %p428 = pneg %p167
      %p429 = pneg %p191
      %p430 = pneg %p188
      %p431 = pneg %p212
      %p432 = pneg %p209
      %p433 = pneg %p233
      %p434 = pneg %p230
      %p435 = pneg %p254
      %p436 = pneg %p251
      %p437 = pneg %p275
      %p438 = pneg %p272
      %p439 = pneg %p301
      %p440 = pneg %p298
      %p441 = scmp.lt.s32.totalorder %s24, 1
      %s442 = scalar_select %p441, %s24, 1
      %s443 = scalar_lea.vmem %s11, %s442
      %s444 = smul.u32 32, %s24
      %p445 = scmp.lt.s32.totalorder %s444, 63
      %s446 = scalar_select %p445, %s444, 63
      %s447 = smul.addr %s446, 6
      %s448 = smul.addr %s447, 8
      %s449 = scalar_lea.vmem %s0, %s448
      %s450 = smul.u32 32, %s24
      %s451 = smul.u32 32, %s24
      %p452 = scmp.lt.s32.totalorder %s451, 63
      %s453 = scalar_select %p452, %s451, 63
      %s454 = smul.addr %s453, 8
      %s455 = scalar_lea.vmem %s1, %s454
      %s456 = smul.u32 32, %s24
      %s457 = smul.u32 32, %s24
      %p458 = scmp.lt.s32.totalorder %s457, 63
      %s459 = scalar_select %p458, %s457, 63
      %s460 = smul.addr %s459, 6
      %s461 = smul.addr %s460, 8
      %s462 = scalar_lea.vmem %s2, %s461
      %s463 = smul.u32 32, %s24
      %s464 = smul.u32 2, %s24
      %p465 = scmp.lt.s32.totalorder %s464, 3
      %s466 = scalar_select %p465, %s464, 3
      %s467 = scalar_lea.vmem %s3, %s466
      %s468 = smul.u32 2, %s24
      %s469 = smul.u32 32, %s24
      %p470 = scmp.lt.s32.totalorder %s469, 63
      %s471 = scalar_select %p470, %s469, 63
      %s472 = smul.addr %s471, 8
      %s473 = scalar_lea.vmem %s4, %s472
      %s474 = smul.u32 32, %s24
      %p475 = scmp.lt.s32.totalorder %s24, 1
      %s476 = scalar_select %p475, %s24, 1
      %s477 = scalar_lea.vmem %s11, %s476
      %v478 = vld [vmem:[%s449] sm:$0xff]
      %v479 = vld [vmem:[%s449 + $0x8] sm:$0xff]
      %v480 = vld [vmem:[%s449 + $0x10] sm:$0xff]
      %v481 = vld [vmem:[%s449 + $0x18] sm:$0xff]
      %v482 = vld [vmem:[%s449 + $0x20] sm:$0xff]
      %v483 = vld [vmem:[%s449 + $0x28] sm:$0xff]
      %v484 = vld [vmem:[%s449 + $0x30] sm:$0xff]
      %v485 = vld [vmem:[%s449 + $0x38] sm:$0xff]
      %v486 = vld [vmem:[%s449 + $0x40] sm:$0xff]
      %v487 = vld [vmem:[%s449 + $0x48] sm:$0xff]
      %v488 = vld [vmem:[%s449 + $0x50] sm:$0xff]
      %v489 = vld [vmem:[%s449 + $0x58] sm:$0xff]
      %v490 = vld [vmem:[%s449 + $0x60] sm:$0xff]
      %v491 = vld [vmem:[%s449 + $0x68] sm:$0xff]
      %v492 = vld [vmem:[%s449 + $0x70] sm:$0xff]
      %v493 = vld [vmem:[%s449 + $0x78] sm:$0xff]
      %v494 = vld [vmem:[%s449 + $0x80] sm:$0xff]
      %v495 = vld [vmem:[%s449 + $0x88] sm:$0xff]
      %v496 = vld [vmem:[%s449 + $0x90] sm:$0xff]
      %v497 = vld [vmem:[%s449 + $0x98] sm:$0xff]
      %v498 = vld [vmem:[%s449 + $0xa0] sm:$0xff]
      %v499 = vld [vmem:[%s449 + $0xa8] sm:$0xff]
      %v500 = vld [vmem:[%s449 + $0xb0] sm:$0xff]
      %v501 = vld [vmem:[%s449 + $0xb8] sm:$0xff]
      %v502 = vld [vmem:[%s449 + $0xc0] sm:$0xff]
      %v503 = vld [vmem:[%s449 + $0xc8] sm:$0xff]
      %v504 = vld [vmem:[%s449 + $0xd0] sm:$0xff]
      %v505 = vld [vmem:[%s449 + $0xd8] sm:$0xff]
      %v506 = vld [vmem:[%s449 + $0xe0] sm:$0xff]
      %v507 = vld [vmem:[%s449 + $0xe8] sm:$0xff]
      %v508 = vld [vmem:[%s449 + $0xf0] sm:$0xff]
      %v509 = vld [vmem:[%s449 + $0xf8] sm:$0xff]
      %v510 = vld [vmem:[%s449 + $0x100] sm:$0xff]
      %v511 = vld [vmem:[%s449 + $0x108] sm:$0xff]
      %v512 = vld [vmem:[%s449 + $0x110] sm:$0xff]
      %v513 = vld [vmem:[%s449 + $0x118] sm:$0xff]
      %v514 = vld [vmem:[%s449 + $0x120] sm:$0xff]
      %v515 = vld [vmem:[%s449 + $0x128] sm:$0xff]
      %v516 = vld [vmem:[%s449 + $0x130] sm:$0xff]
      %v517 = vld [vmem:[%s449 + $0x138] sm:$0xff]
      %v518 = vld [vmem:[%s449 + $0x140] sm:$0xff]
      %v519 = vld [vmem:[%s449 + $0x148] sm:$0xff]
      %v520 = vld [vmem:[%s449 + $0x150] sm:$0xff]
      %v521 = vld [vmem:[%s449 + $0x158] sm:$0xff]
      %v522 = vld [vmem:[%s449 + $0x160] sm:$0xff]
      %v523 = vld [vmem:[%s449 + $0x168] sm:$0xff]
      %v524 = vld [vmem:[%s449 + $0x170] sm:$0xff]
      %v525 = vld [vmem:[%s449 + $0x178] sm:$0xff]
      %v526 = vld [vmem:[%s449 + $0x180] sm:$0xff]
      %v527 = vld [vmem:[%s449 + $0x188] sm:$0xff]
      %v528 = vld [vmem:[%s449 + $0x190] sm:$0xff]
      %v529 = vld [vmem:[%s449 + $0x198] sm:$0xff]
      %v530 = vld [vmem:[%s449 + $0x1a0] sm:$0xff]
      %v531 = vld [vmem:[%s449 + $0x1a8] sm:$0xff]
      %v532 = vld [vmem:[%s449 + $0x1b0] sm:$0xff]
      %v533 = vld [vmem:[%s449 + $0x1b8] sm:$0xff]
      %v534 = vld [vmem:[%s449 + $0x1c0] sm:$0xff]
      %v535 = vld [vmem:[%s449 + $0x1c8] sm:$0xff]
      %v536 = vld [vmem:[%s449 + $0x1d0] sm:$0xff]
      %v537 = vld [vmem:[%s449 + $0x1d8] sm:$0xff]
      %v538 = vld [vmem:[%s449 + $0x1e0] sm:$0xff]
      %v539 = vld [vmem:[%s449 + $0x1e8] sm:$0xff]
      %v540 = vld [vmem:[%s449 + $0x1f0] sm:$0xff]
      %v541 = vld [vmem:[%s449 + $0x1f8] sm:$0xff]
      %v542 = vld [vmem:[%s449 + $0x200] sm:$0xff]
      %v543 = vld [vmem:[%s449 + $0x208] sm:$0xff]
      %v544 = vld [vmem:[%s449 + $0x210] sm:$0xff]
      %v545 = vld [vmem:[%s449 + $0x218] sm:$0xff]
      %v546 = vld [vmem:[%s449 + $0x220] sm:$0xff]
      %v547 = vld [vmem:[%s449 + $0x228] sm:$0xff]
      %v548 = vld [vmem:[%s449 + $0x230] sm:$0xff]
      %v549 = vld [vmem:[%s449 + $0x238] sm:$0xff]
      %v550 = vld [vmem:[%s449 + $0x240] sm:$0xff]
      %v551 = vld [vmem:[%s449 + $0x248] sm:$0xff]
      %v552 = vld [vmem:[%s449 + $0x250] sm:$0xff]
      %v553 = vld [vmem:[%s449 + $0x258] sm:$0xff]
      %v554 = vld [vmem:[%s449 + $0x260] sm:$0xff]
      %v555 = vld [vmem:[%s449 + $0x268] sm:$0xff]
      %v556 = vld [vmem:[%s449 + $0x270] sm:$0xff]
      %v557 = vld [vmem:[%s449 + $0x278] sm:$0xff]
      %v558 = vld [vmem:[%s449 + $0x280] sm:$0xff]
      %v559 = vld [vmem:[%s449 + $0x288] sm:$0xff]
      %v560 = vld [vmem:[%s449 + $0x290] sm:$0xff]
      %v561 = vld [vmem:[%s449 + $0x298] sm:$0xff]
      %v562 = vld [vmem:[%s449 + $0x2a0] sm:$0xff]
      %v563 = vld [vmem:[%s449 + $0x2a8] sm:$0xff]
      %v564 = vld [vmem:[%s449 + $0x2b0] sm:$0xff]
      %v565 = vld [vmem:[%s449 + $0x2b8] sm:$0xff]
      %v566 = vld [vmem:[%s449 + $0x2c0] sm:$0xff]
      %v567 = vld [vmem:[%s449 + $0x2c8] sm:$0xff]
      %v568 = vld [vmem:[%s449 + $0x2d0] sm:$0xff]
      %v569 = vld [vmem:[%s449 + $0x2d8] sm:$0xff]
      %v570 = vld [vmem:[%s449 + $0x2e0] sm:$0xff]
      %v571 = vld [vmem:[%s449 + $0x2e8] sm:$0xff]
      %v572 = vld [vmem:[%s449 + $0x2f0] sm:$0xff]
      %v573 = vld [vmem:[%s449 + $0x2f8] sm:$0xff]
      %v574 = vld [vmem:[%s449 + $0x300] sm:$0xff]
      %v575 = vld [vmem:[%s449 + $0x308] sm:$0xff]
      %v576 = vld [vmem:[%s449 + $0x310] sm:$0xff]
      %v577 = vld [vmem:[%s449 + $0x318] sm:$0xff]
      %v578 = vld [vmem:[%s449 + $0x320] sm:$0xff]
      %v579 = vld [vmem:[%s449 + $0x328] sm:$0xff]
      %v580 = vld [vmem:[%s449 + $0x330] sm:$0xff]
      %v581 = vld [vmem:[%s449 + $0x338] sm:$0xff]
      %v582 = vld [vmem:[%s449 + $0x340] sm:$0xff]
      %v583 = vld [vmem:[%s449 + $0x348] sm:$0xff]
      %v584 = vld [vmem:[%s449 + $0x350] sm:$0xff]
      %v585 = vld [vmem:[%s449 + $0x358] sm:$0xff]
      %v586 = vld [vmem:[%s449 + $0x360] sm:$0xff]
      %v587 = vld [vmem:[%s449 + $0x368] sm:$0xff]
      %v588 = vld [vmem:[%s449 + $0x370] sm:$0xff]
      %v589 = vld [vmem:[%s449 + $0x378] sm:$0xff]
      %v590 = vld [vmem:[%s449 + $0x380] sm:$0xff]
      %v591 = vld [vmem:[%s449 + $0x388] sm:$0xff]
      %v592 = vld [vmem:[%s449 + $0x390] sm:$0xff]
      %v593 = vld [vmem:[%s449 + $0x398] sm:$0xff]
      %v594 = vld [vmem:[%s449 + $0x3a0] sm:$0xff]
      %v595 = vld [vmem:[%s449 + $0x3a8] sm:$0xff]
      %v596 = vld [vmem:[%s449 + $0x3b0] sm:$0xff]
      %v597 = vld [vmem:[%s449 + $0x3b8] sm:$0xff]
      %v598 = vld [vmem:[%s449 + $0x3c0] sm:$0xff]
      %v599 = vld [vmem:[%s449 + $0x3c8] sm:$0xff]
      %v600 = vld [vmem:[%s449 + $0x3d0] sm:$0xff]
      %v601 = vld [vmem:[%s449 + $0x3d8] sm:$0xff]
      %v602 = vld [vmem:[%s449 + $0x3e0] sm:$0xff]
      %v603 = vld [vmem:[%s449 + $0x3e8] sm:$0xff]
      %v604 = vld [vmem:[%s449 + $0x3f0] sm:$0xff]
      %v605 = vld [vmem:[%s449 + $0x3f8] sm:$0xff]
      %v606 = vld [vmem:[%s449 + $0x400] sm:$0xff]
      %v607 = vld [vmem:[%s449 + $0x408] sm:$0xff]
      %v608 = vld [vmem:[%s449 + $0x410] sm:$0xff]
      %v609 = vld [vmem:[%s449 + $0x418] sm:$0xff]
      %v610 = vld [vmem:[%s449 + $0x420] sm:$0xff]
      %v611 = vld [vmem:[%s449 + $0x428] sm:$0xff]
      %v612 = vld [vmem:[%s449 + $0x430] sm:$0xff]
      %v613 = vld [vmem:[%s449 + $0x438] sm:$0xff]
      %v614 = vld [vmem:[%s449 + $0x440] sm:$0xff]
      %v615 = vld [vmem:[%s449 + $0x448] sm:$0xff]
      %v616 = vld [vmem:[%s449 + $0x450] sm:$0xff]
      %v617 = vld [vmem:[%s449 + $0x458] sm:$0xff]
      %v618 = vld [vmem:[%s449 + $0x460] sm:$0xff]
      %v619 = vld [vmem:[%s449 + $0x468] sm:$0xff]
      %v620 = vld [vmem:[%s449 + $0x470] sm:$0xff]
      %v621 = vld [vmem:[%s449 + $0x478] sm:$0xff]
      %v622 = vld [vmem:[%s449 + $0x480] sm:$0xff]
      %v623 = vld [vmem:[%s449 + $0x488] sm:$0xff]
      %v624 = vld [vmem:[%s449 + $0x490] sm:$0xff]
      %v625 = vld [vmem:[%s449 + $0x498] sm:$0xff]
      %v626 = vld [vmem:[%s449 + $0x4a0] sm:$0xff]
      %v627 = vld [vmem:[%s449 + $0x4a8] sm:$0xff]
      %v628 = vld [vmem:[%s449 + $0x4b0] sm:$0xff]
      %v629 = vld [vmem:[%s449 + $0x4b8] sm:$0xff]
      %v630 = vld [vmem:[%s449 + $0x4c0] sm:$0xff]
      %v631 = vld [vmem:[%s449 + $0x4c8] sm:$0xff]
      %v632 = vld [vmem:[%s449 + $0x4d0] sm:$0xff]
      %v633 = vld [vmem:[%s449 + $0x4d8] sm:$0xff]
      %v634 = vld [vmem:[%s449 + $0x4e0] sm:$0xff]
      %v635 = vld [vmem:[%s449 + $0x4e8] sm:$0xff]
      %v636 = vld [vmem:[%s449 + $0x4f0] sm:$0xff]
      %v637 = vld [vmem:[%s449 + $0x4f8] sm:$0xff]
      %v638 = vld [vmem:[%s449 + $0x500] sm:$0xff]
      %v639 = vld [vmem:[%s449 + $0x508] sm:$0xff]
      %v640 = vld [vmem:[%s449 + $0x510] sm:$0xff]
      %v641 = vld [vmem:[%s449 + $0x518] sm:$0xff]
      %v642 = vld [vmem:[%s449 + $0x520] sm:$0xff]
      %v643 = vld [vmem:[%s449 + $0x528] sm:$0xff]
      %v644 = vld [vmem:[%s449 + $0x530] sm:$0xff]
      %v645 = vld [vmem:[%s449 + $0x538] sm:$0xff]
      %v646 = vld [vmem:[%s449 + $0x540] sm:$0xff]
      %v647 = vld [vmem:[%s449 + $0x548] sm:$0xff]
      %v648 = vld [vmem:[%s449 + $0x550] sm:$0xff]
      %v649 = vld [vmem:[%s449 + $0x558] sm:$0xff]
      %v650 = vld [vmem:[%s449 + $0x560] sm:$0xff]
      %v651 = vld [vmem:[%s449 + $0x568] sm:$0xff]
      %v652 = vld [vmem:[%s449 + $0x570] sm:$0xff]
      %v653 = vld [vmem:[%s449 + $0x578] sm:$0xff]
      %v654 = vld [vmem:[%s449 + $0x580] sm:$0xff]
      %v655 = vld [vmem:[%s449 + $0x588] sm:$0xff]
      %v656 = vld [vmem:[%s449 + $0x590] sm:$0xff]
      %v657 = vld [vmem:[%s449 + $0x598] sm:$0xff]
      %v658 = vld [vmem:[%s449 + $0x5a0] sm:$0xff]
      %v659 = vld [vmem:[%s449 + $0x5a8] sm:$0xff]
      %v660 = vld [vmem:[%s449 + $0x5b0] sm:$0xff]
      %v661 = vld [vmem:[%s449 + $0x5b8] sm:$0xff]
      %v662 = vld [vmem:[%s449 + $0x5c0] sm:$0xff]
      %v663 = vld [vmem:[%s449 + $0x5c8] sm:$0xff]
      %v664 = vld [vmem:[%s449 + $0x5d0] sm:$0xff]
      %v665 = vld [vmem:[%s449 + $0x5d8] sm:$0xff]
      %v666 = vld [vmem:[%s449 + $0x5e0] sm:$0xff]
      %v667 = vld [vmem:[%s449 + $0x5e8] sm:$0xff]
      %v668 = vld [vmem:[%s449 + $0x5f0] sm:$0xff]
      %v669 = vld [vmem:[%s449 + $0x5f8] sm:$0xff]
      %v670 = vpack.c.bf16 %v484, %v478
      %v671 = vpack.c.bf16 %v485, %v479
      %v672 = vpack.c.bf16 %v486, %v480
      %v673 = vpack.c.bf16 %v487, %v481
      %v674 = vpack.c.bf16 %v488, %v482
      %v675 = vpack.c.bf16 %v489, %v483
      %v676 = vpack.c.bf16 %v496, %v490
      %v677 = vpack.c.bf16 %v497, %v491
      %v678 = vpack.c.bf16 %v498, %v492
      %v679 = vpack.c.bf16 %v499, %v493
      %v680 = vpack.c.bf16 %v500, %v494
      %v681 = vpack.c.bf16 %v501, %v495
      %v682 = vpack.c.bf16 %v508, %v502
      %v683 = vpack.c.bf16 %v509, %v503
      %v684 = vpack.c.bf16 %v510, %v504
      %v685 = vpack.c.bf16 %v511, %v505
      %v686 = vpack.c.bf16 %v512, %v506
      %v687 = vpack.c.bf16 %v513, %v507
      %v688 = vpack.c.bf16 %v520, %v514
      %v689 = vpack.c.bf16 %v521, %v515
      %v690 = vpack.c.bf16 %v522, %v516
      %v691 = vpack.c.bf16 %v523, %v517
      %v692 = vpack.c.bf16 %v524, %v518
      %v693 = vpack.c.bf16 %v525, %v519
      %v694 = vpack.c.bf16 %v532, %v526
      %v695 = vpack.c.bf16 %v533, %v527
      %v696 = vpack.c.bf16 %v534, %v528
      %v697 = vpack.c.bf16 %v535, %v529
      %v698 = vpack.c.bf16 %v536, %v530
      %v699 = vpack.c.bf16 %v537, %v531
      %v700 = vpack.c.bf16 %v544, %v538
      %v701 = vpack.c.bf16 %v545, %v539
      %v702 = vpack.c.bf16 %v546, %v540
      %v703 = vpack.c.bf16 %v547, %v541
      %v704 = vpack.c.bf16 %v548, %v542
      %v705 = vpack.c.bf16 %v549, %v543
      %v706 = vpack.c.bf16 %v556, %v550
      %v707 = vpack.c.bf16 %v557, %v551
      %v708 = vpack.c.bf16 %v558, %v552
      %v709 = vpack.c.bf16 %v559, %v553
      %v710 = vpack.c.bf16 %v560, %v554
      %v711 = vpack.c.bf16 %v561, %v555
      %v712 = vpack.c.bf16 %v568, %v562
      %v713 = vpack.c.bf16 %v569, %v563
      %v714 = vpack.c.bf16 %v570, %v564
      %v715 = vpack.c.bf16 %v571, %v565
      %v716 = vpack.c.bf16 %v572, %v566
      %v717 = vpack.c.bf16 %v573, %v567
      %v718 = vpack.c.bf16 %v580, %v574
      %v719 = vpack.c.bf16 %v581, %v575
      %v720 = vpack.c.bf16 %v582, %v576
      %v721 = vpack.c.bf16 %v583, %v577
      %v722 = vpack.c.bf16 %v584, %v578
      %v723 = vpack.c.bf16 %v585, %v579
      %v724 = vpack.c.bf16 %v592, %v586
      %v725 = vpack.c.bf16 %v593, %v587
      %v726 = vpack.c.bf16 %v594, %v588
      %v727 = vpack.c.bf16 %v595, %v589
      %v728 = vpack.c.bf16 %v596, %v590
      %v729 = vpack.c.bf16 %v597, %v591
      %v730 = vpack.c.bf16 %v604, %v598
      %v731 = vpack.c.bf16 %v605, %v599
      %v732 = vpack.c.bf16 %v606, %v600
      %v733 = vpack.c.bf16 %v607, %v601
      %v734 = vpack.c.bf16 %v608, %v602
      %v735 = vpack.c.bf16 %v609, %v603
      %v736 = vpack.c.bf16 %v616, %v610
      %v737 = vpack.c.bf16 %v617, %v611
      %v738 = vpack.c.bf16 %v618, %v612
      %v739 = vpack.c.bf16 %v619, %v613
      %v740 = vpack.c.bf16 %v620, %v614
      %v741 = vpack.c.bf16 %v621, %v615
      %v742 = vpack.c.bf16 %v628, %v622
      %v743 = vpack.c.bf16 %v629, %v623
      %v744 = vpack.c.bf16 %v630, %v624
      %v745 = vpack.c.bf16 %v631, %v625
      %v746 = vpack.c.bf16 %v632, %v626
      %v747 = vpack.c.bf16 %v633, %v627
      %v748 = vpack.c.bf16 %v640, %v634
      %v749 = vpack.c.bf16 %v641, %v635
      %v750 = vpack.c.bf16 %v642, %v636
      %v751 = vpack.c.bf16 %v643, %v637
      %v752 = vpack.c.bf16 %v644, %v638
      %v753 = vpack.c.bf16 %v645, %v639
      %v754 = vpack.c.bf16 %v652, %v646
      %v755 = vpack.c.bf16 %v653, %v647
      %v756 = vpack.c.bf16 %v654, %v648
      %v757 = vpack.c.bf16 %v655, %v649
      %v758 = vpack.c.bf16 %v656, %v650
      %v759 = vpack.c.bf16 %v657, %v651
      %v760 = vpack.c.bf16 %v664, %v658
      %v761 = vpack.c.bf16 %v665, %v659
      %v762 = vpack.c.bf16 %v666, %v660
      %v763 = vpack.c.bf16 %v667, %v661
      %v764 = vpack.c.bf16 %v668, %v662
      %v765 = vpack.c.bf16 %v669, %v663
      %v766 = vld [vmem:[%s7] sm:$0xff]
      %v767 = vld [vmem:[%s7 + $0x8] sm:$0xff]
      %v768 = vld [vmem:[%s7 + $0x10] sm:$0xff]
      %v769 = vld [vmem:[%s7 + $0x18] sm:$0xff]
      %v770 = vld [vmem:[%s7 + $0x20] sm:$0xff]
      %v771 = vld [vmem:[%s7 + $0x28] sm:$0xff]
      %v772 = vld [vmem:[%s7 + $0x30] sm:$0xff]
      %v773 = vld [vmem:[%s7 + $0x38] sm:$0xff]
      %v774 = vld [vmem:[%s7 + $0x40] sm:$0xff]
      %v775 = vld [vmem:[%s7 + $0x48] sm:$0xff]
      %v776 = vld [vmem:[%s7 + $0x50] sm:$0xff]
      %v777 = vld [vmem:[%s7 + $0x58] sm:$0xff]
      %v778 = vld [vmem:[%s7 + $0x60] sm:$0xff]
      %v779 = vld [vmem:[%s7 + $0x68] sm:$0xff]
      %v780 = vld [vmem:[%s7 + $0x70] sm:$0xff]
      %v781 = vld [vmem:[%s7 + $0x78] sm:$0xff]
      %v782 = vld [vmem:[%s7 + $0x80] sm:$0xff]
      %v783 = vld [vmem:[%s7 + $0x88] sm:$0xff]
      %v784 = vld [vmem:[%s7 + $0x90] sm:$0xff]
      %v785 = vld [vmem:[%s7 + $0x98] sm:$0xff]
      %v786 = vld [vmem:[%s7 + $0xa0] sm:$0xff]
      %v787 = vld [vmem:[%s7 + $0xa8] sm:$0xff]
      %v788 = vld [vmem:[%s7 + $0xb0] sm:$0xff]
      %v789 = vld [vmem:[%s7 + $0xb8] sm:$0xff]
      %v790 = vld [vmem:[%s7 + $0xc0] sm:$0xff]
      %v791 = vld [vmem:[%s7 + $0xc8] sm:$0xff]
      %v792 = vld [vmem:[%s7 + $0xd0] sm:$0xff]
      %v793 = vld [vmem:[%s7 + $0xd8] sm:$0xff]
      %v794 = vld [vmem:[%s7 + $0xe0] sm:$0xff]
      %v795 = vld [vmem:[%s7 + $0xe8] sm:$0xff]
      %v796 = vld [vmem:[%s7 + $0xf0] sm:$0xff]
      %v797 = vld [vmem:[%s7 + $0xf8] sm:$0xff]
      %v798 = vld [vmem:[%s7 + $0x100] sm:$0xff]
      %v799 = vld [vmem:[%s7 + $0x108] sm:$0xff]
      %v800 = vld [vmem:[%s7 + $0x110] sm:$0xff]
      %v801 = vld [vmem:[%s7 + $0x118] sm:$0xff]
      %v802 = vld [vmem:[%s7 + $0x120] sm:$0xff]
      %v803 = vld [vmem:[%s7 + $0x128] sm:$0xff]
      %v804 = vld [vmem:[%s7 + $0x130] sm:$0xff]
      %v805 = vld [vmem:[%s7 + $0x138] sm:$0xff]
      %v806 = vld [vmem:[%s7 + $0x140] sm:$0xff]
      %v807 = vld [vmem:[%s7 + $0x148] sm:$0xff]
      %v808 = vld [vmem:[%s7 + $0x150] sm:$0xff]
      %v809 = vld [vmem:[%s7 + $0x158] sm:$0xff]
      %v810 = vld [vmem:[%s7 + $0x160] sm:$0xff]
      %v811 = vld [vmem:[%s7 + $0x168] sm:$0xff]
      %v812 = vld [vmem:[%s7 + $0x170] sm:$0xff]
      %v813 = vld [vmem:[%s7 + $0x178] sm:$0xff]
      %v814 = vld [vmem:[%s7 + $0x180] sm:$0xff]
      %v815 = vld [vmem:[%s7 + $0x188] sm:$0xff]
      %v816 = vld [vmem:[%s7 + $0x190] sm:$0xff]
      %v817 = vld [vmem:[%s7 + $0x198] sm:$0xff]
      %v818 = vld [vmem:[%s7 + $0x1a0] sm:$0xff]
      %v819 = vld [vmem:[%s7 + $0x1a8] sm:$0xff]
      %v820 = vld [vmem:[%s7 + $0x1b0] sm:$0xff]
      %v821 = vld [vmem:[%s7 + $0x1b8] sm:$0xff]
      %v822 = vld [vmem:[%s7 + $0x1c0] sm:$0xff]
      %v823 = vld [vmem:[%s7 + $0x1c8] sm:$0xff]
      %v824 = vld [vmem:[%s7 + $0x1d0] sm:$0xff]
      %v825 = vld [vmem:[%s7 + $0x1d8] sm:$0xff]
      %v826 = vld [vmem:[%s7 + $0x1e0] sm:$0xff]
      %v827 = vld [vmem:[%s7 + $0x1e8] sm:$0xff]
      %v828 = vld [vmem:[%s7 + $0x1f0] sm:$0xff]
      %v829 = vld [vmem:[%s7 + $0x1f8] sm:$0xff]
      %v830 = vld [vmem:[%s7 + $0x200] sm:$0xff]
      %v831 = vld [vmem:[%s7 + $0x208] sm:$0xff]
      %v832 = vld [vmem:[%s7 + $0x210] sm:$0xff]
      %v833 = vld [vmem:[%s7 + $0x218] sm:$0xff]
      %v834 = vld [vmem:[%s7 + $0x220] sm:$0xff]
      %v835 = vld [vmem:[%s7 + $0x228] sm:$0xff]
      %v836 = vld [vmem:[%s7 + $0x230] sm:$0xff]
      %v837 = vld [vmem:[%s7 + $0x238] sm:$0xff]
      %v838 = vld [vmem:[%s7 + $0x240] sm:$0xff]
      %v839 = vld [vmem:[%s7 + $0x248] sm:$0xff]
      %v840 = vld [vmem:[%s7 + $0x250] sm:$0xff]
      %v841 = vld [vmem:[%s7 + $0x258] sm:$0xff]
      %v842 = vld [vmem:[%s7 + $0x260] sm:$0xff]
      %v843 = vld [vmem:[%s7 + $0x268] sm:$0xff]
      %v844 = vld [vmem:[%s7 + $0x270] sm:$0xff]
      %v845 = vld [vmem:[%s7 + $0x278] sm:$0xff]
      %v846 = vld [vmem:[%s7 + $0x280] sm:$0xff]
      %v847 = vld [vmem:[%s7 + $0x288] sm:$0xff]
      %v848 = vld [vmem:[%s7 + $0x290] sm:$0xff]
      %v849 = vld [vmem:[%s7 + $0x298] sm:$0xff]
      %v850 = vld [vmem:[%s7 + $0x2a0] sm:$0xff]
      %v851 = vld [vmem:[%s7 + $0x2a8] sm:$0xff]
      %v852 = vld [vmem:[%s7 + $0x2b0] sm:$0xff]
      %v853 = vld [vmem:[%s7 + $0x2b8] sm:$0xff]
      %v854 = vld [vmem:[%s7 + $0x2c0] sm:$0xff]
      %v855 = vld [vmem:[%s7 + $0x2c8] sm:$0xff]
      %v856 = vld [vmem:[%s7 + $0x2d0] sm:$0xff]
      %v857 = vld [vmem:[%s7 + $0x2d8] sm:$0xff]
      %v858 = vld [vmem:[%s7 + $0x2e0] sm:$0xff]
      %v859 = vld [vmem:[%s7 + $0x2e8] sm:$0xff]
      %v860 = vld [vmem:[%s7 + $0x2f0] sm:$0xff]
      %v861 = vld [vmem:[%s7 + $0x2f8] sm:$0xff]
      %v862 = vld [vmem:[%s7 + $0x300] sm:$0xff]
      %v863 = vld [vmem:[%s7 + $0x308] sm:$0xff]
      %v864 = vld [vmem:[%s7 + $0x310] sm:$0xff]
      %v865 = vld [vmem:[%s7 + $0x318] sm:$0xff]
      %v866 = vld [vmem:[%s7 + $0x320] sm:$0xff]
      %v867 = vld [vmem:[%s7 + $0x328] sm:$0xff]
      %v868 = vld [vmem:[%s7 + $0x330] sm:$0xff]
      %v869 = vld [vmem:[%s7 + $0x338] sm:$0xff]
      %v870 = vld [vmem:[%s7 + $0x340] sm:$0xff]
      %v871 = vld [vmem:[%s7 + $0x348] sm:$0xff]
      %v872 = vld [vmem:[%s7 + $0x350] sm:$0xff]
      %v873 = vld [vmem:[%s7 + $0x358] sm:$0xff]
      %v874 = vld [vmem:[%s7 + $0x360] sm:$0xff]
      %v875 = vld [vmem:[%s7 + $0x368] sm:$0xff]
      %v876 = vld [vmem:[%s7 + $0x370] sm:$0xff]
      %v877 = vld [vmem:[%s7 + $0x378] sm:$0xff]
      %v878 = vld [vmem:[%s7 + $0x380] sm:$0xff]
      %v879 = vld [vmem:[%s7 + $0x388] sm:$0xff]
      %v880 = vld [vmem:[%s7 + $0x390] sm:$0xff]
      %v881 = vld [vmem:[%s7 + $0x398] sm:$0xff]
      %v882 = vld [vmem:[%s7 + $0x3a0] sm:$0xff]
      %v883 = vld [vmem:[%s7 + $0x3a8] sm:$0xff]
      %v884 = vld [vmem:[%s7 + $0x3b0] sm:$0xff]
      %v885 = vld [vmem:[%s7 + $0x3b8] sm:$0xff]
      %v886 = vld [vmem:[%s7 + $0x3c0] sm:$0xff]
      %v887 = vld [vmem:[%s7 + $0x3c8] sm:$0xff]
      %v888 = vld [vmem:[%s7 + $0x3d0] sm:$0xff]
      %v889 = vld [vmem:[%s7 + $0x3d8] sm:$0xff]
      %v890 = vld [vmem:[%s7 + $0x3e0] sm:$0xff]
      %v891 = vld [vmem:[%s7 + $0x3e8] sm:$0xff]
      %v892 = vld [vmem:[%s7 + $0x3f0] sm:$0xff]
      %v893 = vld [vmem:[%s7 + $0x3f8] sm:$0xff]
      %v894 = vld [vmem:[%s7 + $0x400] sm:$0xff]
      %v895 = vld [vmem:[%s7 + $0x408] sm:$0xff]
      %v896 = vld [vmem:[%s7 + $0x410] sm:$0xff]
      %v897 = vld [vmem:[%s7 + $0x418] sm:$0xff]
      %v898 = vld [vmem:[%s7 + $0x420] sm:$0xff]
      %v899 = vld [vmem:[%s7 + $0x428] sm:$0xff]
      %v900 = vld [vmem:[%s7 + $0x430] sm:$0xff]
      %v901 = vld [vmem:[%s7 + $0x438] sm:$0xff]
      %v902 = vld [vmem:[%s7 + $0x440] sm:$0xff]
      %v903 = vld [vmem:[%s7 + $0x448] sm:$0xff]
      %v904 = vld [vmem:[%s7 + $0x450] sm:$0xff]
      %v905 = vld [vmem:[%s7 + $0x458] sm:$0xff]
      %v906 = vld [vmem:[%s7 + $0x460] sm:$0xff]
      %v907 = vld [vmem:[%s7 + $0x468] sm:$0xff]
      %v908 = vld [vmem:[%s7 + $0x470] sm:$0xff]
      %v909 = vld [vmem:[%s7 + $0x478] sm:$0xff]
      %v910 = vld [vmem:[%s7 + $0x480] sm:$0xff]
      %v911 = vld [vmem:[%s7 + $0x488] sm:$0xff]
      %v912 = vld [vmem:[%s7 + $0x490] sm:$0xff]
      %v913 = vld [vmem:[%s7 + $0x498] sm:$0xff]
      %v914 = vld [vmem:[%s7 + $0x4a0] sm:$0xff]
      %v915 = vld [vmem:[%s7 + $0x4a8] sm:$0xff]
      %v916 = vld [vmem:[%s7 + $0x4b0] sm:$0xff]
      %v917 = vld [vmem:[%s7 + $0x4b8] sm:$0xff]
      %v918 = vld [vmem:[%s7 + $0x4c0] sm:$0xff]
      %v919 = vld [vmem:[%s7 + $0x4c8] sm:$0xff]
      %v920 = vld [vmem:[%s7 + $0x4d0] sm:$0xff]
      %v921 = vld [vmem:[%s7 + $0x4d8] sm:$0xff]
      %v922 = vld [vmem:[%s7 + $0x4e0] sm:$0xff]
      %v923 = vld [vmem:[%s7 + $0x4e8] sm:$0xff]
      %v924 = vld [vmem:[%s7 + $0x4f0] sm:$0xff]
      %v925 = vld [vmem:[%s7 + $0x4f8] sm:$0xff]
      %v926 = vld [vmem:[%s7 + $0x500] sm:$0xff]
      %v927 = vld [vmem:[%s7 + $0x508] sm:$0xff]
      %v928 = vld [vmem:[%s7 + $0x510] sm:$0xff]
      %v929 = vld [vmem:[%s7 + $0x518] sm:$0xff]
      %v930 = vld [vmem:[%s7 + $0x520] sm:$0xff]
      %v931 = vld [vmem:[%s7 + $0x528] sm:$0xff]
      %v932 = vld [vmem:[%s7 + $0x530] sm:$0xff]
      %v933 = vld [vmem:[%s7 + $0x538] sm:$0xff]
      %v934 = vld [vmem:[%s7 + $0x540] sm:$0xff]
      %v935 = vld [vmem:[%s7 + $0x548] sm:$0xff]
      %v936 = vld [vmem:[%s7 + $0x550] sm:$0xff]
      %v937 = vld [vmem:[%s7 + $0x558] sm:$0xff]
      %v938 = vld [vmem:[%s7 + $0x560] sm:$0xff]
      %v939 = vld [vmem:[%s7 + $0x568] sm:$0xff]
      %v940 = vld [vmem:[%s7 + $0x570] sm:$0xff]
      %v941 = vld [vmem:[%s7 + $0x578] sm:$0xff]
      %v942 = vld [vmem:[%s7 + $0x580] sm:$0xff]
      %v943 = vld [vmem:[%s7 + $0x588] sm:$0xff]
      %v944 = vld [vmem:[%s7 + $0x590] sm:$0xff]
      %v945 = vld [vmem:[%s7 + $0x598] sm:$0xff]
      %v946 = vld [vmem:[%s7 + $0x5a0] sm:$0xff]
      %v947 = vld [vmem:[%s7 + $0x5a8] sm:$0xff]
      %v948 = vld [vmem:[%s7 + $0x5b0] sm:$0xff]
      %v949 = vld [vmem:[%s7 + $0x5b8] sm:$0xff]
      %v950 = vld [vmem:[%s7 + $0x5c0] sm:$0xff]
      %v951 = vld [vmem:[%s7 + $0x5c8] sm:$0xff]
      %v952 = vld [vmem:[%s7 + $0x5d0] sm:$0xff]
      %v953 = vld [vmem:[%s7 + $0x5d8] sm:$0xff]
      %v954 = vld [vmem:[%s7 + $0x5e0] sm:$0xff]
      %v955 = vld [vmem:[%s7 + $0x5e8] sm:$0xff]
      %v956 = vld [vmem:[%s7 + $0x5f0] sm:$0xff]
      %v957 = vld [vmem:[%s7 + $0x5f8] sm:$0xff]
      %v958 = vld [vmem:[%s7 + $0x600] sm:$0xff]
      %v959 = vld [vmem:[%s7 + $0x608] sm:$0xff]
      %v960 = vld [vmem:[%s7 + $0x610] sm:$0xff]
      %v961 = vld [vmem:[%s7 + $0x618] sm:$0xff]
      %v962 = vld [vmem:[%s7 + $0x620] sm:$0xff]
      %v963 = vld [vmem:[%s7 + $0x628] sm:$0xff]
      %v964 = vld [vmem:[%s7 + $0x630] sm:$0xff]
      %v965 = vld [vmem:[%s7 + $0x638] sm:$0xff]
      %v966 = vld [vmem:[%s7 + $0x640] sm:$0xff]
      %v967 = vld [vmem:[%s7 + $0x648] sm:$0xff]
      %v968 = vld [vmem:[%s7 + $0x650] sm:$0xff]
      %v969 = vld [vmem:[%s7 + $0x658] sm:$0xff]
      %v970 = vld [vmem:[%s7 + $0x660] sm:$0xff]
      %v971 = vld [vmem:[%s7 + $0x668] sm:$0xff]
      %v972 = vld [vmem:[%s7 + $0x670] sm:$0xff]
      %v973 = vld [vmem:[%s7 + $0x678] sm:$0xff]
      %v974 = vld [vmem:[%s7 + $0x680] sm:$0xff]
      %v975 = vld [vmem:[%s7 + $0x688] sm:$0xff]
      %v976 = vld [vmem:[%s7 + $0x690] sm:$0xff]
      %v977 = vld [vmem:[%s7 + $0x698] sm:$0xff]
      %v978 = vld [vmem:[%s7 + $0x6a0] sm:$0xff]
      %v979 = vld [vmem:[%s7 + $0x6a8] sm:$0xff]
      %v980 = vld [vmem:[%s7 + $0x6b0] sm:$0xff]
      %v981 = vld [vmem:[%s7 + $0x6b8] sm:$0xff]
      %v982 = vld [vmem:[%s7 + $0x6c0] sm:$0xff]
      %v983 = vld [vmem:[%s7 + $0x6c8] sm:$0xff]
      %v984 = vld [vmem:[%s7 + $0x6d0] sm:$0xff]
      %v985 = vld [vmem:[%s7 + $0x6d8] sm:$0xff]
      %v986 = vld [vmem:[%s7 + $0x6e0] sm:$0xff]
      %v987 = vld [vmem:[%s7 + $0x6e8] sm:$0xff]
      %v988 = vld [vmem:[%s7 + $0x6f0] sm:$0xff]
      %v989 = vld [vmem:[%s7 + $0x6f8] sm:$0xff]
      %v990 = vld [vmem:[%s7 + $0x700] sm:$0xff]
      %v991 = vld [vmem:[%s7 + $0x708] sm:$0xff]
      %v992 = vld [vmem:[%s7 + $0x710] sm:$0xff]
      %v993 = vld [vmem:[%s7 + $0x718] sm:$0xff]
      %v994 = vld [vmem:[%s7 + $0x720] sm:$0xff]
      %v995 = vld [vmem:[%s7 + $0x728] sm:$0xff]
      %v996 = vld [vmem:[%s7 + $0x730] sm:$0xff]
      %v997 = vld [vmem:[%s7 + $0x738] sm:$0xff]
      %v998 = vld [vmem:[%s7 + $0x740] sm:$0xff]
      %v999 = vld [vmem:[%s7 + $0x748] sm:$0xff]
      %v1000 = vld [vmem:[%s7 + $0x750] sm:$0xff]
      %v1001 = vld [vmem:[%s7 + $0x758] sm:$0xff]
      %v1002 = vld [vmem:[%s7 + $0x760] sm:$0xff]
      %v1003 = vld [vmem:[%s7 + $0x768] sm:$0xff]
      %v1004 = vld [vmem:[%s7 + $0x770] sm:$0xff]
      %v1005 = vld [vmem:[%s7 + $0x778] sm:$0xff]
      %v1006 = vld [vmem:[%s7 + $0x780] sm:$0xff]
      %v1007 = vld [vmem:[%s7 + $0x788] sm:$0xff]
      %v1008 = vld [vmem:[%s7 + $0x790] sm:$0xff]
      %v1009 = vld [vmem:[%s7 + $0x798] sm:$0xff]
      %v1010 = vld [vmem:[%s7 + $0x7a0] sm:$0xff]
      %v1011 = vld [vmem:[%s7 + $0x7a8] sm:$0xff]
      %v1012 = vld [vmem:[%s7 + $0x7b0] sm:$0xff]
      %v1013 = vld [vmem:[%s7 + $0x7b8] sm:$0xff]
      %v1014 = vld [vmem:[%s7 + $0x7c0] sm:$0xff]
      %v1015 = vld [vmem:[%s7 + $0x7c8] sm:$0xff]
      %v1016 = vld [vmem:[%s7 + $0x7d0] sm:$0xff]
      %v1017 = vld [vmem:[%s7 + $0x7d8] sm:$0xff]
      %v1018 = vld [vmem:[%s7 + $0x7e0] sm:$0xff]
      %v1019 = vld [vmem:[%s7 + $0x7e8] sm:$0xff]
      %v1020 = vld [vmem:[%s7 + $0x7f0] sm:$0xff]
      %v1021 = vld [vmem:[%s7 + $0x7f8] sm:$0xff]
      %v1022 = vld [vmem:[%s7 + $0x800] sm:$0xff]
      %v1023 = vld [vmem:[%s7 + $0x808] sm:$0xff]
      %v1024 = vld [vmem:[%s7 + $0x810] sm:$0xff]
      %v1025 = vld [vmem:[%s7 + $0x818] sm:$0xff]
      %v1026 = vld [vmem:[%s7 + $0x820] sm:$0xff]
      %v1027 = vld [vmem:[%s7 + $0x828] sm:$0xff]
      %v1028 = vld [vmem:[%s7 + $0x830] sm:$0xff]
      %v1029 = vld [vmem:[%s7 + $0x838] sm:$0xff]
      %v1030 = vld [vmem:[%s7 + $0x840] sm:$0xff]
      %v1031 = vld [vmem:[%s7 + $0x848] sm:$0xff]
      %v1032 = vld [vmem:[%s7 + $0x850] sm:$0xff]
      %v1033 = vld [vmem:[%s7 + $0x858] sm:$0xff]
      %v1034 = vld [vmem:[%s7 + $0x860] sm:$0xff]
      %v1035 = vld [vmem:[%s7 + $0x868] sm:$0xff]
      %v1036 = vld [vmem:[%s7 + $0x870] sm:$0xff]
      %v1037 = vld [vmem:[%s7 + $0x878] sm:$0xff]
      %v1038 = vld [vmem:[%s7 + $0x880] sm:$0xff]
      %v1039 = vld [vmem:[%s7 + $0x888] sm:$0xff]
      %v1040 = vld [vmem:[%s7 + $0x890] sm:$0xff]
      %v1041 = vld [vmem:[%s7 + $0x898] sm:$0xff]
      %v1042 = vld [vmem:[%s7 + $0x8a0] sm:$0xff]
      %v1043 = vld [vmem:[%s7 + $0x8a8] sm:$0xff]
      %v1044 = vld [vmem:[%s7 + $0x8b0] sm:$0xff]
      %v1045 = vld [vmem:[%s7 + $0x8b8] sm:$0xff]
      %v1046 = vld [vmem:[%s7 + $0x8c0] sm:$0xff]
      %v1047 = vld [vmem:[%s7 + $0x8c8] sm:$0xff]
      %v1048 = vld [vmem:[%s7 + $0x8d0] sm:$0xff]
      %v1049 = vld [vmem:[%s7 + $0x8d8] sm:$0xff]
      %v1050 = vld [vmem:[%s7 + $0x8e0] sm:$0xff]
      %v1051 = vld [vmem:[%s7 + $0x8e8] sm:$0xff]
      %v1052 = vld [vmem:[%s7 + $0x8f0] sm:$0xff]
      %v1053 = vld [vmem:[%s7 + $0x8f8] sm:$0xff]
      %v1054 = vld [vmem:[%s455] sm:$0xff]
      %v1055 = vld [vmem:[%s455 + $0x8] sm:$0xff]
      %v1056 = vld [vmem:[%s455 + $0x10] sm:$0xff]
      %v1057 = vld [vmem:[%s455 + $0x18] sm:$0xff]
      %v1058 = vld [vmem:[%s455 + $0x20] sm:$0xff]
      %v1059 = vld [vmem:[%s455 + $0x28] sm:$0xff]
      %v1060 = vld [vmem:[%s455 + $0x30] sm:$0xff]
      %v1061 = vld [vmem:[%s455 + $0x38] sm:$0xff]
      %v1062 = vld [vmem:[%s455 + $0x40] sm:$0xff]
      %v1063 = vld [vmem:[%s455 + $0x48] sm:$0xff]
      %v1064 = vld [vmem:[%s455 + $0x50] sm:$0xff]
      %v1065 = vld [vmem:[%s455 + $0x58] sm:$0xff]
      %v1066 = vld [vmem:[%s455 + $0x60] sm:$0xff]
      %v1067 = vld [vmem:[%s455 + $0x68] sm:$0xff]
      %v1068 = vld [vmem:[%s455 + $0x70] sm:$0xff]
      %v1069 = vld [vmem:[%s455 + $0x78] sm:$0xff]
      %v1070 = vld [vmem:[%s455 + $0x80] sm:$0xff]
      %v1071 = vld [vmem:[%s455 + $0x88] sm:$0xff]
      %v1072 = vld [vmem:[%s455 + $0x90] sm:$0xff]
      %v1073 = vld [vmem:[%s455 + $0x98] sm:$0xff]
      %v1074 = vld [vmem:[%s455 + $0xa0] sm:$0xff]
      %v1075 = vld [vmem:[%s455 + $0xa8] sm:$0xff]
      %v1076 = vld [vmem:[%s455 + $0xb0] sm:$0xff]
      %v1077 = vld [vmem:[%s455 + $0xb8] sm:$0xff]
      %v1078 = vld [vmem:[%s455 + $0xc0] sm:$0xff]
      %v1079 = vld [vmem:[%s455 + $0xc8] sm:$0xff]
      %v1080 = vld [vmem:[%s455 + $0xd0] sm:$0xff]
      %v1081 = vld [vmem:[%s455 + $0xd8] sm:$0xff]
      %v1082 = vld [vmem:[%s455 + $0xe0] sm:$0xff]
      %v1083 = vld [vmem:[%s455 + $0xe8] sm:$0xff]
      %v1084 = vld [vmem:[%s455 + $0xf0] sm:$0xff]
      %v1085 = vld [vmem:[%s455 + $0xf8] sm:$0xff]
      %v1086 = vld [vmem:[%s8] sm:$0x3f]
      %1088 = vset.pattern.permute.xlu0 0
      %1089 = vperm.xlu0 %1088, %v1054
      %v1090 = vpop.permute.xlu0 %1089
      %1093 = vset.pattern.permute.xlu0 0
      %1094 = vperm.xlu0 %1093, %v1055
      %v1095 = vpop.permute.xlu0 %1094
      %1098 = vset.pattern.permute.xlu0 0
      %1099 = vperm.xlu0 %1098, %v1056
      %v1100 = vpop.permute.xlu0 %1099
      %1103 = vset.pattern.permute.xlu0 0
      %1104 = vperm.xlu0 %1103, %v1057
      %v1105 = vpop.permute.xlu0 %1104
      %1108 = vset.pattern.permute.xlu0 0
      %1109 = vperm.xlu0 %1108, %v1058
      %v1110 = vpop.permute.xlu0 %1109
      %1113 = vset.pattern.permute.xlu0 0
      %1114 = vperm.xlu0 %1113, %v1059
      %v1115 = vpop.permute.xlu0 %1114
      %1118 = vset.pattern.permute.xlu0 0
      %1119 = vperm.xlu0 %1118, %v1060
      %v1120 = vpop.permute.xlu0 %1119
      %1123 = vset.pattern.permute.xlu0 0
      %1124 = vperm.xlu0 %1123, %v1061
      %v1125 = vpop.permute.xlu0 %1124
      %1128 = vset.pattern.permute.xlu0 0
      %1129 = vperm.xlu0 %1128, %v1062
      %v1130 = vpop.permute.xlu0 %1129
      %1133 = vset.pattern.permute.xlu0 0
      %1134 = vperm.xlu0 %1133, %v1063
      %v1135 = vpop.permute.xlu0 %1134
      %1138 = vset.pattern.permute.xlu0 0
      %1139 = vperm.xlu0 %1138, %v1064
      %v1140 = vpop.permute.xlu0 %1139
      %1143 = vset.pattern.permute.xlu0 0
      %1144 = vperm.xlu0 %1143, %v1065
      %v1145 = vpop.permute.xlu0 %1144
      %1148 = vset.pattern.permute.xlu0 0
      %1149 = vperm.xlu0 %1148, %v1066
      %v1150 = vpop.permute.xlu0 %1149
      %1153 = vset.pattern.permute.xlu0 0
      %1154 = vperm.xlu0 %1153, %v1067
      %v1155 = vpop.permute.xlu0 %1154
      %1158 = vset.pattern.permute.xlu0 0
      %1159 = vperm.xlu0 %1158, %v1068
      %v1160 = vpop.permute.xlu0 %1159
      %1163 = vset.pattern.permute.xlu0 0
      %1164 = vperm.xlu0 %1163, %v1069
      %v1165 = vpop.permute.xlu0 %1164
      %1168 = vset.pattern.permute.xlu0 0
      %1169 = vperm.xlu0 %1168, %v1070
      %v1170 = vpop.permute.xlu0 %1169
      %1173 = vset.pattern.permute.xlu0 0
      %1174 = vperm.xlu0 %1173, %v1071
      %v1175 = vpop.permute.xlu0 %1174
      %1178 = vset.pattern.permute.xlu0 0
      %1179 = vperm.xlu0 %1178, %v1072
      %v1180 = vpop.permute.xlu0 %1179
      %1183 = vset.pattern.permute.xlu0 0
      %1184 = vperm.xlu0 %1183, %v1073
      %v1185 = vpop.permute.xlu0 %1184
      %1188 = vset.pattern.permute.xlu0 0
      %1189 = vperm.xlu0 %1188, %v1074
      %v1190 = vpop.permute.xlu0 %1189
      %1193 = vset.pattern.permute.xlu0 0
      %1194 = vperm.xlu0 %1193, %v1075
      %v1195 = vpop.permute.xlu0 %1194
      %1198 = vset.pattern.permute.xlu0 0
      %1199 = vperm.xlu0 %1198, %v1076
      %v1200 = vpop.permute.xlu0 %1199
      %1203 = vset.pattern.permute.xlu0 0
      %1204 = vperm.xlu0 %1203, %v1077
      %v1205 = vpop.permute.xlu0 %1204
      %1208 = vset.pattern.permute.xlu0 0
      %1209 = vperm.xlu0 %1208, %v1078
      %v1210 = vpop.permute.xlu0 %1209
      %1213 = vset.pattern.permute.xlu0 0
      %1214 = vperm.xlu0 %1213, %v1079
      %v1215 = vpop.permute.xlu0 %1214
      %1218 = vset.pattern.permute.xlu0 0
      %1219 = vperm.xlu0 %1218, %v1080
      %v1220 = vpop.permute.xlu0 %1219
      %1223 = vset.pattern.permute.xlu0 0
      %1224 = vperm.xlu0 %1223, %v1081
      %v1225 = vpop.permute.xlu0 %1224
      %1228 = vset.pattern.permute.xlu0 0
      %1229 = vperm.xlu0 %1228, %v1082
      %v1230 = vpop.permute.xlu0 %1229
      %1233 = vset.pattern.permute.xlu0 0
      %1234 = vperm.xlu0 %1233, %v1083
      %v1235 = vpop.permute.xlu0 %1234
      %1238 = vset.pattern.permute.xlu0 0
      %1239 = vperm.xlu0 %1238, %v1084
      %v1240 = vpop.permute.xlu0 %1239
      %1243 = vset.pattern.permute.xlu0 0
      %1244 = vperm.xlu0 %1243, %v1085
      %v1245 = vpop.permute.xlu0 %1244
      %v1248 = vlaneseq
      %v1249 = vshrl.u32 %v1248, 7
      %v1250 = vsub.s32 0, %v1249
      %v1251 = vrot.slane %v1086, %v1250
      %v1252 = vlaneseq
      %v1253 = vshrl.u32 %v1252, 7
      %v1254 = vsub.s32 1, %v1253
      %v1255 = vrot.slane %v1086, %v1254
      %v1256 = vlaneseq
      %v1257 = vshrl.u32 %v1256, 7
      %v1258 = vsub.s32 2, %v1257
      %v1259 = vrot.slane %v1086, %v1258
      %v1260 = vlaneseq
      %v1261 = vshrl.u32 %v1260, 7
      %v1262 = vsub.s32 3, %v1261
      %v1263 = vrot.slane %v1086, %v1262
      %v1264 = vlaneseq
      %v1265 = vshrl.u32 %v1264, 7
      %v1266 = vsub.s32 4, %v1265
      %v1267 = vrot.slane %v1086, %v1266
      %v1268 = vlaneseq
      %v1269 = vshrl.u32 %v1268, 7
      %v1270 = vsub.s32 5, %v1269
      %v1271 = vrot.slane %v1086, %v1270
      %v1278 = vmul.f32 %v1090, %v1251
      %v1279 = vmul.f32 %v1090, %v1255
      %v1280 = vmul.f32 %v1090, %v1259
      %v1281 = vmul.f32 %v1090, %v1263
      %v1282 = vmul.f32 %v1090, %v1267
      %v1283 = vmul.f32 %v1090, %v1271
      %v1284 = vmul.f32 %v1095, %v1251
      %v1285 = vmul.f32 %v1095, %v1255
      %v1286 = vmul.f32 %v1095, %v1259
      %v1287 = vmul.f32 %v1095, %v1263
      %v1288 = vmul.f32 %v1095, %v1267
      %v1289 = vmul.f32 %v1095, %v1271
      %v1290 = vmul.f32 %v1100, %v1251
      %v1291 = vmul.f32 %v1100, %v1255
      %v1292 = vmul.f32 %v1100, %v1259
      %v1293 = vmul.f32 %v1100, %v1263
      %v1294 = vmul.f32 %v1100, %v1267
      %v1295 = vmul.f32 %v1100, %v1271
      %v1296 = vmul.f32 %v1105, %v1251
      %v1297 = vmul.f32 %v1105, %v1255
      %v1298 = vmul.f32 %v1105, %v1259
      %v1299 = vmul.f32 %v1105, %v1263
      %v1300 = vmul.f32 %v1105, %v1267
      %v1301 = vmul.f32 %v1105, %v1271
      %v1302 = vmul.f32 %v1110, %v1251
      %v1303 = vmul.f32 %v1110, %v1255
      %v1304 = vmul.f32 %v1110, %v1259
      %v1305 = vmul.f32 %v1110, %v1263
      %v1306 = vmul.f32 %v1110, %v1267
      %v1307 = vmul.f32 %v1110, %v1271
      %v1308 = vmul.f32 %v1115, %v1251
      %v1309 = vmul.f32 %v1115, %v1255
      %v1310 = vmul.f32 %v1115, %v1259
      %v1311 = vmul.f32 %v1115, %v1263
      %v1312 = vmul.f32 %v1115, %v1267
      %v1313 = vmul.f32 %v1115, %v1271
      %v1314 = vmul.f32 %v1120, %v1251
      %v1315 = vmul.f32 %v1120, %v1255
      %v1316 = vmul.f32 %v1120, %v1259
      %v1317 = vmul.f32 %v1120, %v1263
      %v1318 = vmul.f32 %v1120, %v1267
      %v1319 = vmul.f32 %v1120, %v1271
      %v1320 = vmul.f32 %v1125, %v1251
      %v1321 = vmul.f32 %v1125, %v1255
      %v1322 = vmul.f32 %v1125, %v1259
      %v1323 = vmul.f32 %v1125, %v1263
      %v1324 = vmul.f32 %v1125, %v1267
      %v1325 = vmul.f32 %v1125, %v1271
      %v1326 = vmul.f32 %v1130, %v1251
      %v1327 = vmul.f32 %v1130, %v1255
      %v1328 = vmul.f32 %v1130, %v1259
      %v1329 = vmul.f32 %v1130, %v1263
      %v1330 = vmul.f32 %v1130, %v1267
      %v1331 = vmul.f32 %v1130, %v1271
      %v1332 = vmul.f32 %v1135, %v1251
      %v1333 = vmul.f32 %v1135, %v1255
      %v1334 = vmul.f32 %v1135, %v1259
      %v1335 = vmul.f32 %v1135, %v1263
      %v1336 = vmul.f32 %v1135, %v1267
      %v1337 = vmul.f32 %v1135, %v1271
      %v1338 = vmul.f32 %v1140, %v1251
      %v1339 = vmul.f32 %v1140, %v1255
      %v1340 = vmul.f32 %v1140, %v1259
      %v1341 = vmul.f32 %v1140, %v1263
      %v1342 = vmul.f32 %v1140, %v1267
      %v1343 = vmul.f32 %v1140, %v1271
      %v1344 = vmul.f32 %v1145, %v1251
      %v1345 = vmul.f32 %v1145, %v1255
      %v1346 = vmul.f32 %v1145, %v1259
      %v1347 = vmul.f32 %v1145, %v1263
      %v1348 = vmul.f32 %v1145, %v1267
      %v1349 = vmul.f32 %v1145, %v1271
      %v1350 = vmul.f32 %v1150, %v1251
      %v1351 = vmul.f32 %v1150, %v1255
      %v1352 = vmul.f32 %v1150, %v1259
      %v1353 = vmul.f32 %v1150, %v1263
      %v1354 = vmul.f32 %v1150, %v1267
      %v1355 = vmul.f32 %v1150, %v1271
      %v1356 = vmul.f32 %v1155, %v1251
      %v1357 = vmul.f32 %v1155, %v1255
      %v1358 = vmul.f32 %v1155, %v1259
      %v1359 = vmul.f32 %v1155, %v1263
      %v1360 = vmul.f32 %v1155, %v1267
      %v1361 = vmul.f32 %v1155, %v1271
      %v1362 = vmul.f32 %v1160, %v1251
      %v1363 = vmul.f32 %v1160, %v1255
      %v1364 = vmul.f32 %v1160, %v1259
      %v1365 = vmul.f32 %v1160, %v1263
      %v1366 = vmul.f32 %v1160, %v1267
      %v1367 = vmul.f32 %v1160, %v1271
      %v1368 = vmul.f32 %v1165, %v1251
      %v1369 = vmul.f32 %v1165, %v1255
      %v1370 = vmul.f32 %v1165, %v1259
      %v1371 = vmul.f32 %v1165, %v1263
      %v1372 = vmul.f32 %v1165, %v1267
      %v1373 = vmul.f32 %v1165, %v1271
      %v1374 = vmul.f32 %v1170, %v1251
      %v1375 = vmul.f32 %v1170, %v1255
      %v1376 = vmul.f32 %v1170, %v1259
      %v1377 = vmul.f32 %v1170, %v1263
      %v1378 = vmul.f32 %v1170, %v1267
      %v1379 = vmul.f32 %v1170, %v1271
      %v1380 = vmul.f32 %v1175, %v1251
      %v1381 = vmul.f32 %v1175, %v1255
      %v1382 = vmul.f32 %v1175, %v1259
      %v1383 = vmul.f32 %v1175, %v1263
      %v1384 = vmul.f32 %v1175, %v1267
      %v1385 = vmul.f32 %v1175, %v1271
      %v1386 = vmul.f32 %v1180, %v1251
      %v1387 = vmul.f32 %v1180, %v1255
      %v1388 = vmul.f32 %v1180, %v1259
      %v1389 = vmul.f32 %v1180, %v1263
      %v1390 = vmul.f32 %v1180, %v1267
      %v1391 = vmul.f32 %v1180, %v1271
      %v1392 = vmul.f32 %v1185, %v1251
      %v1393 = vmul.f32 %v1185, %v1255
      %v1394 = vmul.f32 %v1185, %v1259
      %v1395 = vmul.f32 %v1185, %v1263
      %v1396 = vmul.f32 %v1185, %v1267
      %v1397 = vmul.f32 %v1185, %v1271
      %v1398 = vmul.f32 %v1190, %v1251
      %v1399 = vmul.f32 %v1190, %v1255
      %v1400 = vmul.f32 %v1190, %v1259
      %v1401 = vmul.f32 %v1190, %v1263
      %v1402 = vmul.f32 %v1190, %v1267
      %v1403 = vmul.f32 %v1190, %v1271
      %v1404 = vmul.f32 %v1195, %v1251
      %v1405 = vmul.f32 %v1195, %v1255
      %v1406 = vmul.f32 %v1195, %v1259
      %v1407 = vmul.f32 %v1195, %v1263
      %v1408 = vmul.f32 %v1195, %v1267
      %v1409 = vmul.f32 %v1195, %v1271
      %v1410 = vmul.f32 %v1200, %v1251
      %v1411 = vmul.f32 %v1200, %v1255
      %v1412 = vmul.f32 %v1200, %v1259
      %v1413 = vmul.f32 %v1200, %v1263
      %v1414 = vmul.f32 %v1200, %v1267
      %v1415 = vmul.f32 %v1200, %v1271
      %v1416 = vmul.f32 %v1205, %v1251
      %v1417 = vmul.f32 %v1205, %v1255
      %v1418 = vmul.f32 %v1205, %v1259
      %v1419 = vmul.f32 %v1205, %v1263
      %v1420 = vmul.f32 %v1205, %v1267
      %v1421 = vmul.f32 %v1205, %v1271
      %v1422 = vmul.f32 %v1210, %v1251
      %v1423 = vmul.f32 %v1210, %v1255
      %v1424 = vmul.f32 %v1210, %v1259
      %v1425 = vmul.f32 %v1210, %v1263
      %v1426 = vmul.f32 %v1210, %v1267
      %v1427 = vmul.f32 %v1210, %v1271
      %v1428 = vmul.f32 %v1215, %v1251
      %v1429 = vmul.f32 %v1215, %v1255
      %v1430 = vmul.f32 %v1215, %v1259
      %v1431 = vmul.f32 %v1215, %v1263
      %v1432 = vmul.f32 %v1215, %v1267
      %v1433 = vmul.f32 %v1215, %v1271
      %v1434 = vmul.f32 %v1220, %v1251
      %v1435 = vmul.f32 %v1220, %v1255
      %v1436 = vmul.f32 %v1220, %v1259
      %v1437 = vmul.f32 %v1220, %v1263
      %v1438 = vmul.f32 %v1220, %v1267
      %v1439 = vmul.f32 %v1220, %v1271
      %v1440 = vmul.f32 %v1225, %v1251
      %v1441 = vmul.f32 %v1225, %v1255
      %v1442 = vmul.f32 %v1225, %v1259
      %v1443 = vmul.f32 %v1225, %v1263
      %v1444 = vmul.f32 %v1225, %v1267
      %v1445 = vmul.f32 %v1225, %v1271
      %v1446 = vmul.f32 %v1230, %v1251
      %v1447 = vmul.f32 %v1230, %v1255
      %v1448 = vmul.f32 %v1230, %v1259
      %v1449 = vmul.f32 %v1230, %v1263
      %v1450 = vmul.f32 %v1230, %v1267
      %v1451 = vmul.f32 %v1230, %v1271
      %v1452 = vmul.f32 %v1235, %v1251
      %v1453 = vmul.f32 %v1235, %v1255
      %v1454 = vmul.f32 %v1235, %v1259
      %v1455 = vmul.f32 %v1235, %v1263
      %v1456 = vmul.f32 %v1235, %v1267
      %v1457 = vmul.f32 %v1235, %v1271
      %v1458 = vmul.f32 %v1240, %v1251
      %v1459 = vmul.f32 %v1240, %v1255
      %v1460 = vmul.f32 %v1240, %v1259
      %v1461 = vmul.f32 %v1240, %v1263
      %v1462 = vmul.f32 %v1240, %v1267
      %v1463 = vmul.f32 %v1240, %v1271
      %v1464 = vmul.f32 %v1245, %v1251
      %v1465 = vmul.f32 %v1245, %v1255
      %v1466 = vmul.f32 %v1245, %v1259
      %v1467 = vmul.f32 %v1245, %v1263
      %v1468 = vmul.f32 %v1245, %v1267
      %v1469 = vmul.f32 %v1245, %v1271
      %v1758 = vunpack.c.l.b16 %v766
      %v1759 = vunpack.c.h.b16 %v766
      %v1760 = vunpack.c.l.b16 %v767
      %v1761 = vunpack.c.h.b16 %v767
      %v1762 = vunpack.c.l.b16 %v768
      %v1763 = vunpack.c.h.b16 %v768
      %v1764 = vunpack.c.l.b16 %v769
      %v1765 = vunpack.c.h.b16 %v769
      %v1766 = vunpack.c.l.b16 %v770
      %v1767 = vunpack.c.h.b16 %v770
      %v1768 = vunpack.c.l.b16 %v771
      %v1769 = vunpack.c.h.b16 %v771
      %v1770 = vunpack.c.l.b16 %v772
      %v1771 = vunpack.c.h.b16 %v772
      %v1772 = vunpack.c.l.b16 %v773
      %v1773 = vunpack.c.h.b16 %v773
      %v1774 = vunpack.c.l.b16 %v774
      %v1775 = vunpack.c.h.b16 %v774
      %v1776 = vunpack.c.l.b16 %v775
      %v1777 = vunpack.c.h.b16 %v775
      %v1778 = vunpack.c.l.b16 %v776
      %v1779 = vunpack.c.h.b16 %v776
      %v1780 = vunpack.c.l.b16 %v777
      %v1781 = vunpack.c.h.b16 %v777
      %v1782 = vunpack.c.l.b16 %v778
      %v1783 = vunpack.c.h.b16 %v778
      %v1784 = vunpack.c.l.b16 %v779
      %v1785 = vunpack.c.h.b16 %v779
      %v1786 = vunpack.c.l.b16 %v780
      %v1787 = vunpack.c.h.b16 %v780
      %v1788 = vunpack.c.l.b16 %v781
      %v1789 = vunpack.c.h.b16 %v781
      %v1790 = vunpack.c.l.b16 %v782
      %v1791 = vunpack.c.h.b16 %v782
      %v1792 = vunpack.c.l.b16 %v783
      %v1793 = vunpack.c.h.b16 %v783
      %v1794 = vunpack.c.l.b16 %v784
      %v1795 = vunpack.c.h.b16 %v784
      %v1796 = vunpack.c.l.b16 %v785
      %v1797 = vunpack.c.h.b16 %v785
      %v1798 = vunpack.c.l.b16 %v786
      %v1799 = vunpack.c.h.b16 %v786
      %v1800 = vunpack.c.l.b16 %v787
      %v1801 = vunpack.c.h.b16 %v787
      %v1802 = vunpack.c.l.b16 %v788
      %v1803 = vunpack.c.h.b16 %v788
      %v1804 = vunpack.c.l.b16 %v789
      %v1805 = vunpack.c.h.b16 %v789
      %v1806 = vunpack.c.l.b16 %v790
      %v1807 = vunpack.c.h.b16 %v790
      %v1808 = vunpack.c.l.b16 %v791
      %v1809 = vunpack.c.h.b16 %v791
      %v1810 = vunpack.c.l.b16 %v792
      %v1811 = vunpack.c.h.b16 %v792
      %v1812 = vunpack.c.l.b16 %v793
      %v1813 = vunpack.c.h.b16 %v793
      %v1814 = vunpack.c.l.b16 %v794
      %v1815 = vunpack.c.h.b16 %v794
      %v1816 = vunpack.c.l.b16 %v795
      %v1817 = vunpack.c.h.b16 %v795
      %v1818 = vunpack.c.l.b16 %v796
      %v1819 = vunpack.c.h.b16 %v796
      %v1820 = vunpack.c.l.b16 %v797
      %v1821 = vunpack.c.h.b16 %v797
      %v1822 = vunpack.c.l.b16 %v798
      %v1823 = vunpack.c.h.b16 %v798
      %v1824 = vunpack.c.l.b16 %v799
      %v1825 = vunpack.c.h.b16 %v799
      %v1826 = vunpack.c.l.b16 %v800
      %v1827 = vunpack.c.h.b16 %v800
      %v1828 = vunpack.c.l.b16 %v801
      %v1829 = vunpack.c.h.b16 %v801
      %v1830 = vunpack.c.l.b16 %v802
      %v1831 = vunpack.c.h.b16 %v802
      %v1832 = vunpack.c.l.b16 %v803
      %v1833 = vunpack.c.h.b16 %v803
      %v1834 = vunpack.c.l.b16 %v804
      %v1835 = vunpack.c.h.b16 %v804
      %v1836 = vunpack.c.l.b16 %v805
      %v1837 = vunpack.c.h.b16 %v805
      %v1838 = vunpack.c.l.b16 %v806
      %v1839 = vunpack.c.h.b16 %v806
      %v1840 = vunpack.c.l.b16 %v807
      %v1841 = vunpack.c.h.b16 %v807
      %v1842 = vunpack.c.l.b16 %v808
      %v1843 = vunpack.c.h.b16 %v808
      %v1844 = vunpack.c.l.b16 %v809
      %v1845 = vunpack.c.h.b16 %v809
      %v1846 = vunpack.c.l.b16 %v810
      %v1847 = vunpack.c.h.b16 %v810
      %v1848 = vunpack.c.l.b16 %v811
      %v1849 = vunpack.c.h.b16 %v811
      %v1850 = vunpack.c.l.b16 %v812
      %v1851 = vunpack.c.h.b16 %v812
      %v1852 = vunpack.c.l.b16 %v813
      %v1853 = vunpack.c.h.b16 %v813
      %v1854 = vunpack.c.l.b16 %v814
      %v1855 = vunpack.c.h.b16 %v814
      %v1856 = vunpack.c.l.b16 %v815
      %v1857 = vunpack.c.h.b16 %v815
      %v1858 = vunpack.c.l.b16 %v816
      %v1859 = vunpack.c.h.b16 %v816
      %v1860 = vunpack.c.l.b16 %v817
      %v1861 = vunpack.c.h.b16 %v817
      %v1862 = vunpack.c.l.b16 %v818
      %v1863 = vunpack.c.h.b16 %v818
      %v1864 = vunpack.c.l.b16 %v819
      %v1865 = vunpack.c.h.b16 %v819
      %v1866 = vunpack.c.l.b16 %v820
      %v1867 = vunpack.c.h.b16 %v820
      %v1868 = vunpack.c.l.b16 %v821
      %v1869 = vunpack.c.h.b16 %v821
      %v1870 = vunpack.c.l.b16 %v822
      %v1871 = vunpack.c.h.b16 %v822
      %v1872 = vunpack.c.l.b16 %v823
      %v1873 = vunpack.c.h.b16 %v823
      %v1874 = vunpack.c.l.b16 %v824
      %v1875 = vunpack.c.h.b16 %v824
      %v1876 = vunpack.c.l.b16 %v825
      %v1877 = vunpack.c.h.b16 %v825
      %v1878 = vunpack.c.l.b16 %v826
      %v1879 = vunpack.c.h.b16 %v826
      %v1880 = vunpack.c.l.b16 %v827
      %v1881 = vunpack.c.h.b16 %v827
      %v1882 = vunpack.c.l.b16 %v828
      %v1883 = vunpack.c.h.b16 %v828
      %v1884 = vunpack.c.l.b16 %v829
      %v1885 = vunpack.c.h.b16 %v829
      %v1886 = vunpack.c.l.b16 %v830
      %v1887 = vunpack.c.h.b16 %v830
      %v1888 = vunpack.c.l.b16 %v831
      %v1889 = vunpack.c.h.b16 %v831
      %v1890 = vunpack.c.l.b16 %v832
      %v1891 = vunpack.c.h.b16 %v832
      %v1892 = vunpack.c.l.b16 %v833
      %v1893 = vunpack.c.h.b16 %v833
      %v1894 = vunpack.c.l.b16 %v834
      %v1895 = vunpack.c.h.b16 %v834
      %v1896 = vunpack.c.l.b16 %v835
      %v1897 = vunpack.c.h.b16 %v835
      %v1898 = vunpack.c.l.b16 %v836
      %v1899 = vunpack.c.h.b16 %v836
      %v1900 = vunpack.c.l.b16 %v837
      %v1901 = vunpack.c.h.b16 %v837
      %v1902 = vunpack.c.l.b16 %v838
      %v1903 = vunpack.c.h.b16 %v838
      %v1904 = vunpack.c.l.b16 %v839
      %v1905 = vunpack.c.h.b16 %v839
      %v1906 = vunpack.c.l.b16 %v840
      %v1907 = vunpack.c.h.b16 %v840
      %v1908 = vunpack.c.l.b16 %v841
      %v1909 = vunpack.c.h.b16 %v841
      %v1910 = vunpack.c.l.b16 %v842
      %v1911 = vunpack.c.h.b16 %v842
      %v1912 = vunpack.c.l.b16 %v843
      %v1913 = vunpack.c.h.b16 %v843
      %v1914 = vunpack.c.l.b16 %v844
      %v1915 = vunpack.c.h.b16 %v844
      %v1916 = vunpack.c.l.b16 %v845
      %v1917 = vunpack.c.h.b16 %v845
      %v1918 = vunpack.c.l.b16 %v846
      %v1919 = vunpack.c.h.b16 %v846
      %v1920 = vunpack.c.l.b16 %v847
      %v1921 = vunpack.c.h.b16 %v847
      %v1922 = vunpack.c.l.b16 %v848
      %v1923 = vunpack.c.h.b16 %v848
      %v1924 = vunpack.c.l.b16 %v849
      %v1925 = vunpack.c.h.b16 %v849
      %v1926 = vunpack.c.l.b16 %v850
      %v1927 = vunpack.c.h.b16 %v850
      %v1928 = vunpack.c.l.b16 %v851
      %v1929 = vunpack.c.h.b16 %v851
      %v1930 = vunpack.c.l.b16 %v852
      %v1931 = vunpack.c.h.b16 %v852
      %v1932 = vunpack.c.l.b16 %v853
      %v1933 = vunpack.c.h.b16 %v853
      %v1934 = vunpack.c.l.b16 %v854
      %v1935 = vunpack.c.h.b16 %v854
      %v1936 = vunpack.c.l.b16 %v855
      %v1937 = vunpack.c.h.b16 %v855
      %v1938 = vunpack.c.l.b16 %v856
      %v1939 = vunpack.c.h.b16 %v856
      %v1940 = vunpack.c.l.b16 %v857
      %v1941 = vunpack.c.h.b16 %v857
      %v1942 = vunpack.c.l.b16 %v858
      %v1943 = vunpack.c.h.b16 %v858
      %v1944 = vunpack.c.l.b16 %v859
      %v1945 = vunpack.c.h.b16 %v859
      %v1946 = vunpack.c.l.b16 %v860
      %v1947 = vunpack.c.h.b16 %v860
      %v1948 = vunpack.c.l.b16 %v861
      %v1949 = vunpack.c.h.b16 %v861
      %v1950 = vunpack.c.l.b16 %v862
      %v1951 = vunpack.c.h.b16 %v862
      %v1952 = vunpack.c.l.b16 %v863
      %v1953 = vunpack.c.h.b16 %v863
      %v1954 = vunpack.c.l.b16 %v864
      %v1955 = vunpack.c.h.b16 %v864
      %v1956 = vunpack.c.l.b16 %v865
      %v1957 = vunpack.c.h.b16 %v865
      %v1958 = vunpack.c.l.b16 %v866
      %v1959 = vunpack.c.h.b16 %v866
      %v1960 = vunpack.c.l.b16 %v867
      %v1961 = vunpack.c.h.b16 %v867
      %v1962 = vunpack.c.l.b16 %v868
      %v1963 = vunpack.c.h.b16 %v868
      %v1964 = vunpack.c.l.b16 %v869
      %v1965 = vunpack.c.h.b16 %v869
      %v1966 = vunpack.c.l.b16 %v870
      %v1967 = vunpack.c.h.b16 %v870
      %v1968 = vunpack.c.l.b16 %v871
      %v1969 = vunpack.c.h.b16 %v871
      %v1970 = vunpack.c.l.b16 %v872
      %v1971 = vunpack.c.h.b16 %v872
      %v1972 = vunpack.c.l.b16 %v873
      %v1973 = vunpack.c.h.b16 %v873
      %v1974 = vunpack.c.l.b16 %v874
      %v1975 = vunpack.c.h.b16 %v874
      %v1976 = vunpack.c.l.b16 %v875
      %v1977 = vunpack.c.h.b16 %v875
      %v1978 = vunpack.c.l.b16 %v876
      %v1979 = vunpack.c.h.b16 %v876
      %v1980 = vunpack.c.l.b16 %v877
      %v1981 = vunpack.c.h.b16 %v877
      %v1982 = vunpack.c.l.b16 %v878
      %v1983 = vunpack.c.h.b16 %v878
      %v1984 = vunpack.c.l.b16 %v879
      %v1985 = vunpack.c.h.b16 %v879
      %v1986 = vunpack.c.l.b16 %v880
      %v1987 = vunpack.c.h.b16 %v880
      %v1988 = vunpack.c.l.b16 %v881
      %v1989 = vunpack.c.h.b16 %v881
      %v1990 = vunpack.c.l.b16 %v882
      %v1991 = vunpack.c.h.b16 %v882
      %v1992 = vunpack.c.l.b16 %v883
      %v1993 = vunpack.c.h.b16 %v883
      %v1994 = vunpack.c.l.b16 %v884
      %v1995 = vunpack.c.h.b16 %v884
      %v1996 = vunpack.c.l.b16 %v885
      %v1997 = vunpack.c.h.b16 %v885
      %v1998 = vunpack.c.l.b16 %v886
      %v1999 = vunpack.c.h.b16 %v886
      %v2000 = vunpack.c.l.b16 %v887
      %v2001 = vunpack.c.h.b16 %v887
      %v2002 = vunpack.c.l.b16 %v888
      %v2003 = vunpack.c.h.b16 %v888
      %v2004 = vunpack.c.l.b16 %v889
      %v2005 = vunpack.c.h.b16 %v889
      %v2006 = vunpack.c.l.b16 %v890
      %v2007 = vunpack.c.h.b16 %v890
      %v2008 = vunpack.c.l.b16 %v891
      %v2009 = vunpack.c.h.b16 %v891
      %v2010 = vunpack.c.l.b16 %v892
      %v2011 = vunpack.c.h.b16 %v892
      %v2012 = vunpack.c.l.b16 %v893
      %v2013 = vunpack.c.h.b16 %v893
      %v2014 = vunpack.c.l.b16 %v894
      %v2015 = vunpack.c.h.b16 %v894
      %v2016 = vunpack.c.l.b16 %v895
      %v2017 = vunpack.c.h.b16 %v895
      %v2018 = vunpack.c.l.b16 %v896
      %v2019 = vunpack.c.h.b16 %v896
      %v2020 = vunpack.c.l.b16 %v897
      %v2021 = vunpack.c.h.b16 %v897
      %v2022 = vunpack.c.l.b16 %v898
      %v2023 = vunpack.c.h.b16 %v898
      %v2024 = vunpack.c.l.b16 %v899
      %v2025 = vunpack.c.h.b16 %v899
      %v2026 = vunpack.c.l.b16 %v900
      %v2027 = vunpack.c.h.b16 %v900
      %v2028 = vunpack.c.l.b16 %v901
      %v2029 = vunpack.c.h.b16 %v901
      %v2030 = vunpack.c.l.b16 %v902
      %v2031 = vunpack.c.h.b16 %v902
      %v2032 = vunpack.c.l.b16 %v903
      %v2033 = vunpack.c.h.b16 %v903
      %v2034 = vunpack.c.l.b16 %v904
      %v2035 = vunpack.c.h.b16 %v904
      %v2036 = vunpack.c.l.b16 %v905
      %v2037 = vunpack.c.h.b16 %v905
      %v2038 = vunpack.c.l.b16 %v906
      %v2039 = vunpack.c.h.b16 %v906
      %v2040 = vunpack.c.l.b16 %v907
      %v2041 = vunpack.c.h.b16 %v907
      %v2042 = vunpack.c.l.b16 %v908
      %v2043 = vunpack.c.h.b16 %v908
      %v2044 = vunpack.c.l.b16 %v909
      %v2045 = vunpack.c.h.b16 %v909
      %v2046 = vunpack.c.l.b16 %v910
      %v2047 = vunpack.c.h.b16 %v910
      %v2048 = vunpack.c.l.b16 %v911
      %v2049 = vunpack.c.h.b16 %v911
      %v2050 = vunpack.c.l.b16 %v912
      %v2051 = vunpack.c.h.b16 %v912
      %v2052 = vunpack.c.l.b16 %v913
      %v2053 = vunpack.c.h.b16 %v913
      %v2054 = vunpack.c.l.b16 %v914
      %v2055 = vunpack.c.h.b16 %v914
      %v2056 = vunpack.c.l.b16 %v915
      %v2057 = vunpack.c.h.b16 %v915
      %v2058 = vunpack.c.l.b16 %v916
      %v2059 = vunpack.c.h.b16 %v916
      %v2060 = vunpack.c.l.b16 %v917
      %v2061 = vunpack.c.h.b16 %v917
      %v2062 = vunpack.c.l.b16 %v918
      %v2063 = vunpack.c.h.b16 %v918
      %v2064 = vunpack.c.l.b16 %v919
      %v2065 = vunpack.c.h.b16 %v919
      %v2066 = vunpack.c.l.b16 %v920
      %v2067 = vunpack.c.h.b16 %v920
      %v2068 = vunpack.c.l.b16 %v921
      %v2069 = vunpack.c.h.b16 %v921
      %v2070 = vunpack.c.l.b16 %v922
      %v2071 = vunpack.c.h.b16 %v922
      %v2072 = vunpack.c.l.b16 %v923
      %v2073 = vunpack.c.h.b16 %v923
      %v2074 = vunpack.c.l.b16 %v924
      %v2075 = vunpack.c.h.b16 %v924
      %v2076 = vunpack.c.l.b16 %v925
      %v2077 = vunpack.c.h.b16 %v925
      %v2078 = vunpack.c.l.b16 %v926
      %v2079 = vunpack.c.h.b16 %v926
      %v2080 = vunpack.c.l.b16 %v927
      %v2081 = vunpack.c.h.b16 %v927
      %v2082 = vunpack.c.l.b16 %v928
      %v2083 = vunpack.c.h.b16 %v928
      %v2084 = vunpack.c.l.b16 %v929
      %v2085 = vunpack.c.h.b16 %v929
      %v2086 = vunpack.c.l.b16 %v930
      %v2087 = vunpack.c.h.b16 %v930
      %v2088 = vunpack.c.l.b16 %v931
      %v2089 = vunpack.c.h.b16 %v931
      %v2090 = vunpack.c.l.b16 %v932
      %v2091 = vunpack.c.h.b16 %v932
      %v2092 = vunpack.c.l.b16 %v933
      %v2093 = vunpack.c.h.b16 %v933
      %v2094 = vunpack.c.l.b16 %v934
      %v2095 = vunpack.c.h.b16 %v934
      %v2096 = vunpack.c.l.b16 %v935
      %v2097 = vunpack.c.h.b16 %v935
      %v2098 = vunpack.c.l.b16 %v936
      %v2099 = vunpack.c.h.b16 %v936
      %v2100 = vunpack.c.l.b16 %v937
      %v2101 = vunpack.c.h.b16 %v937
      %v2102 = vunpack.c.l.b16 %v938
      %v2103 = vunpack.c.h.b16 %v938
      %v2104 = vunpack.c.l.b16 %v939
      %v2105 = vunpack.c.h.b16 %v939
      %v2106 = vunpack.c.l.b16 %v940
      %v2107 = vunpack.c.h.b16 %v940
      %v2108 = vunpack.c.l.b16 %v941
      %v2109 = vunpack.c.h.b16 %v941
      %v2110 = vunpack.c.l.b16 %v942
      %v2111 = vunpack.c.h.b16 %v942
      %v2112 = vunpack.c.l.b16 %v943
      %v2113 = vunpack.c.h.b16 %v943
      %v2114 = vunpack.c.l.b16 %v944
      %v2115 = vunpack.c.h.b16 %v944
      %v2116 = vunpack.c.l.b16 %v945
      %v2117 = vunpack.c.h.b16 %v945
      %v2118 = vunpack.c.l.b16 %v946
      %v2119 = vunpack.c.h.b16 %v946
      %v2120 = vunpack.c.l.b16 %v947
      %v2121 = vunpack.c.h.b16 %v947
      %v2122 = vunpack.c.l.b16 %v948
      %v2123 = vunpack.c.h.b16 %v948
      %v2124 = vunpack.c.l.b16 %v949
      %v2125 = vunpack.c.h.b16 %v949
      %v2126 = vunpack.c.l.b16 %v950
      %v2127 = vunpack.c.h.b16 %v950
      %v2128 = vunpack.c.l.b16 %v951
      %v2129 = vunpack.c.h.b16 %v951
      %v2130 = vunpack.c.l.b16 %v952
      %v2131 = vunpack.c.h.b16 %v952
      %v2132 = vunpack.c.l.b16 %v953
      %v2133 = vunpack.c.h.b16 %v953
      %v2134 = vunpack.c.l.b16 %v954
      %v2135 = vunpack.c.h.b16 %v954
      %v2136 = vunpack.c.l.b16 %v955
      %v2137 = vunpack.c.h.b16 %v955
      %v2138 = vunpack.c.l.b16 %v956
      %v2139 = vunpack.c.h.b16 %v956
      %v2140 = vunpack.c.l.b16 %v957
      %v2141 = vunpack.c.h.b16 %v957
      %v2142 = vunpack.c.l.b16 %v958
      %v2143 = vunpack.c.h.b16 %v958
      %v2144 = vunpack.c.l.b16 %v959
      %v2145 = vunpack.c.h.b16 %v959
      %v2146 = vunpack.c.l.b16 %v960
      %v2147 = vunpack.c.h.b16 %v960
      %v2148 = vunpack.c.l.b16 %v961
      %v2149 = vunpack.c.h.b16 %v961
      %v2150 = vunpack.c.l.b16 %v962
      %v2151 = vunpack.c.h.b16 %v962
      %v2152 = vunpack.c.l.b16 %v963
      %v2153 = vunpack.c.h.b16 %v963
      %v2154 = vunpack.c.l.b16 %v964
      %v2155 = vunpack.c.h.b16 %v964
      %v2156 = vunpack.c.l.b16 %v965
      %v2157 = vunpack.c.h.b16 %v965
      %v2158 = vunpack.c.l.b16 %v966
      %v2159 = vunpack.c.h.b16 %v966
      %v2160 = vunpack.c.l.b16 %v967
      %v2161 = vunpack.c.h.b16 %v967
      %v2162 = vunpack.c.l.b16 %v968
      %v2163 = vunpack.c.h.b16 %v968
      %v2164 = vunpack.c.l.b16 %v969
      %v2165 = vunpack.c.h.b16 %v969
      %v2166 = vunpack.c.l.b16 %v970
      %v2167 = vunpack.c.h.b16 %v970
      %v2168 = vunpack.c.l.b16 %v971
      %v2169 = vunpack.c.h.b16 %v971
      %v2170 = vunpack.c.l.b16 %v972
      %v2171 = vunpack.c.h.b16 %v972
      %v2172 = vunpack.c.l.b16 %v973
      %v2173 = vunpack.c.h.b16 %v973
      %v2174 = vunpack.c.l.b16 %v974
      %v2175 = vunpack.c.h.b16 %v974
      %v2176 = vunpack.c.l.b16 %v975
      %v2177 = vunpack.c.h.b16 %v975
      %v2178 = vunpack.c.l.b16 %v976
      %v2179 = vunpack.c.h.b16 %v976
      %v2180 = vunpack.c.l.b16 %v977
      %v2181 = vunpack.c.h.b16 %v977
      %v2182 = vunpack.c.l.b16 %v978
      %v2183 = vunpack.c.h.b16 %v978
      %v2184 = vunpack.c.l.b16 %v979
      %v2185 = vunpack.c.h.b16 %v979
      %v2186 = vunpack.c.l.b16 %v980
      %v2187 = vunpack.c.h.b16 %v980
      %v2188 = vunpack.c.l.b16 %v981
      %v2189 = vunpack.c.h.b16 %v981
      %v2190 = vunpack.c.l.b16 %v982
      %v2191 = vunpack.c.h.b16 %v982
      %v2192 = vunpack.c.l.b16 %v983
      %v2193 = vunpack.c.h.b16 %v983
      %v2194 = vunpack.c.l.b16 %v984
      %v2195 = vunpack.c.h.b16 %v984
      %v2196 = vunpack.c.l.b16 %v985
      %v2197 = vunpack.c.h.b16 %v985
      %v2198 = vunpack.c.l.b16 %v986
      %v2199 = vunpack.c.h.b16 %v986
      %v2200 = vunpack.c.l.b16 %v987
      %v2201 = vunpack.c.h.b16 %v987
      %v2202 = vunpack.c.l.b16 %v988
      %v2203 = vunpack.c.h.b16 %v988
      %v2204 = vunpack.c.l.b16 %v989
      %v2205 = vunpack.c.h.b16 %v989
      %v2206 = vunpack.c.l.b16 %v990
      %v2207 = vunpack.c.h.b16 %v990
      %v2208 = vunpack.c.l.b16 %v991
      %v2209 = vunpack.c.h.b16 %v991
      %v2210 = vunpack.c.l.b16 %v992
      %v2211 = vunpack.c.h.b16 %v992
      %v2212 = vunpack.c.l.b16 %v993
      %v2213 = vunpack.c.h.b16 %v993
      %v2214 = vunpack.c.l.b16 %v994
      %v2215 = vunpack.c.h.b16 %v994
      %v2216 = vunpack.c.l.b16 %v995
      %v2217 = vunpack.c.h.b16 %v995
      %v2218 = vunpack.c.l.b16 %v996
      %v2219 = vunpack.c.h.b16 %v996
      %v2220 = vunpack.c.l.b16 %v997
      %v2221 = vunpack.c.h.b16 %v997
      %v2222 = vunpack.c.l.b16 %v998
      %v2223 = vunpack.c.h.b16 %v998
      %v2224 = vunpack.c.l.b16 %v999
      %v2225 = vunpack.c.h.b16 %v999
      %v2226 = vunpack.c.l.b16 %v1000
      %v2227 = vunpack.c.h.b16 %v1000
      %v2228 = vunpack.c.l.b16 %v1001
      %v2229 = vunpack.c.h.b16 %v1001
      %v2230 = vunpack.c.l.b16 %v1002
      %v2231 = vunpack.c.h.b16 %v1002
      %v2232 = vunpack.c.l.b16 %v1003
      %v2233 = vunpack.c.h.b16 %v1003
      %v2234 = vunpack.c.l.b16 %v1004
      %v2235 = vunpack.c.h.b16 %v1004
      %v2236 = vunpack.c.l.b16 %v1005
      %v2237 = vunpack.c.h.b16 %v1005
      %v2238 = vunpack.c.l.b16 %v1006
      %v2239 = vunpack.c.h.b16 %v1006
      %v2240 = vunpack.c.l.b16 %v1007
      %v2241 = vunpack.c.h.b16 %v1007
      %v2242 = vunpack.c.l.b16 %v1008
      %v2243 = vunpack.c.h.b16 %v1008
      %v2244 = vunpack.c.l.b16 %v1009
      %v2245 = vunpack.c.h.b16 %v1009
      %v2246 = vunpack.c.l.b16 %v1010
      %v2247 = vunpack.c.h.b16 %v1010
      %v2248 = vunpack.c.l.b16 %v1011
      %v2249 = vunpack.c.h.b16 %v1011
      %v2250 = vunpack.c.l.b16 %v1012
      %v2251 = vunpack.c.h.b16 %v1012
      %v2252 = vunpack.c.l.b16 %v1013
      %v2253 = vunpack.c.h.b16 %v1013
      %v2254 = vunpack.c.l.b16 %v1014
      %v2255 = vunpack.c.h.b16 %v1014
      %v2256 = vunpack.c.l.b16 %v1015
      %v2257 = vunpack.c.h.b16 %v1015
      %v2258 = vunpack.c.l.b16 %v1016
      %v2259 = vunpack.c.h.b16 %v1016
      %v2260 = vunpack.c.l.b16 %v1017
      %v2261 = vunpack.c.h.b16 %v1017
      %v2262 = vunpack.c.l.b16 %v1018
      %v2263 = vunpack.c.h.b16 %v1018
      %v2264 = vunpack.c.l.b16 %v1019
      %v2265 = vunpack.c.h.b16 %v1019
      %v2266 = vunpack.c.l.b16 %v1020
      %v2267 = vunpack.c.h.b16 %v1020
      %v2268 = vunpack.c.l.b16 %v1021
      %v2269 = vunpack.c.h.b16 %v1021
      %v2270 = vunpack.c.l.b16 %v1022
      %v2271 = vunpack.c.h.b16 %v1022
      %v2272 = vunpack.c.l.b16 %v1023
      %v2273 = vunpack.c.h.b16 %v1023
      %v2274 = vunpack.c.l.b16 %v1024
      %v2275 = vunpack.c.h.b16 %v1024
      %v2276 = vunpack.c.l.b16 %v1025
      %v2277 = vunpack.c.h.b16 %v1025
      %v2278 = vunpack.c.l.b16 %v1026
      %v2279 = vunpack.c.h.b16 %v1026
      %v2280 = vunpack.c.l.b16 %v1027
      %v2281 = vunpack.c.h.b16 %v1027
      %v2282 = vunpack.c.l.b16 %v1028
      %v2283 = vunpack.c.h.b16 %v1028
      %v2284 = vunpack.c.l.b16 %v1029
      %v2285 = vunpack.c.h.b16 %v1029
      %v2286 = vunpack.c.l.b16 %v1030
      %v2287 = vunpack.c.h.b16 %v1030
      %v2288 = vunpack.c.l.b16 %v1031
      %v2289 = vunpack.c.h.b16 %v1031
      %v2290 = vunpack.c.l.b16 %v1032
      %v2291 = vunpack.c.h.b16 %v1032
      %v2292 = vunpack.c.l.b16 %v1033
      %v2293 = vunpack.c.h.b16 %v1033
      %v2294 = vunpack.c.l.b16 %v1034
      %v2295 = vunpack.c.h.b16 %v1034
      %v2296 = vunpack.c.l.b16 %v1035
      %v2297 = vunpack.c.h.b16 %v1035
      %v2298 = vunpack.c.l.b16 %v1036
      %v2299 = vunpack.c.h.b16 %v1036
      %v2300 = vunpack.c.l.b16 %v1037
      %v2301 = vunpack.c.h.b16 %v1037
      %v2302 = vunpack.c.l.b16 %v1038
      %v2303 = vunpack.c.h.b16 %v1038
      %v2304 = vunpack.c.l.b16 %v1039
      %v2305 = vunpack.c.h.b16 %v1039
      %v2306 = vunpack.c.l.b16 %v1040
      %v2307 = vunpack.c.h.b16 %v1040
      %v2308 = vunpack.c.l.b16 %v1041
      %v2309 = vunpack.c.h.b16 %v1041
      %v2310 = vunpack.c.l.b16 %v1042
      %v2311 = vunpack.c.h.b16 %v1042
      %v2312 = vunpack.c.l.b16 %v1043
      %v2313 = vunpack.c.h.b16 %v1043
      %v2314 = vunpack.c.l.b16 %v1044
      %v2315 = vunpack.c.h.b16 %v1044
      %v2316 = vunpack.c.l.b16 %v1045
      %v2317 = vunpack.c.h.b16 %v1045
      %v2318 = vunpack.c.l.b16 %v1046
      %v2319 = vunpack.c.h.b16 %v1046
      %v2320 = vunpack.c.l.b16 %v1047
      %v2321 = vunpack.c.h.b16 %v1047
      %v2322 = vunpack.c.l.b16 %v1048
      %v2323 = vunpack.c.h.b16 %v1048
      %v2324 = vunpack.c.l.b16 %v1049
      %v2325 = vunpack.c.h.b16 %v1049
      %v2326 = vunpack.c.l.b16 %v1050
      %v2327 = vunpack.c.h.b16 %v1050
      %v2328 = vunpack.c.l.b16 %v1051
      %v2329 = vunpack.c.h.b16 %v1051
      %v2330 = vunpack.c.l.b16 %v1052
      %v2331 = vunpack.c.h.b16 %v1052
      %v2332 = vunpack.c.l.b16 %v1053
      %v2333 = vunpack.c.h.b16 %v1053
      %v2334 = vpack.c.b16 %v1764, %v1758
      %v2335 = vpack.c.b16 %v1765, %v1759
      %v2336 = vpack.c.b16 %v1766, %v1760
      %v2337 = vpack.c.b16 %v1767, %v1761
      %v2338 = vpack.c.b16 %v1768, %v1762
      %v2339 = vpack.c.b16 %v1769, %v1763
      %v2340 = vpack.c.b16 %v1776, %v1770
      %v2341 = vpack.c.b16 %v1777, %v1771
      %v2342 = vpack.c.b16 %v1778, %v1772
      %v2343 = vpack.c.b16 %v1779, %v1773
      %v2344 = vpack.c.b16 %v1780, %v1774
      %v2345 = vpack.c.b16 %v1781, %v1775
      %v2346 = vpack.c.b16 %v1788, %v1782
      %v2347 = vpack.c.b16 %v1789, %v1783
      %v2348 = vpack.c.b16 %v1790, %v1784
      %v2349 = vpack.c.b16 %v1791, %v1785
      %v2350 = vpack.c.b16 %v1792, %v1786
      %v2351 = vpack.c.b16 %v1793, %v1787
      %v2352 = vpack.c.b16 %v1800, %v1794
      %v2353 = vpack.c.b16 %v1801, %v1795
      %v2354 = vpack.c.b16 %v1802, %v1796
      %v2355 = vpack.c.b16 %v1803, %v1797
      %v2356 = vpack.c.b16 %v1804, %v1798
      %v2357 = vpack.c.b16 %v1805, %v1799
      %v2358 = vpack.c.b16 %v1812, %v1806
      %v2359 = vpack.c.b16 %v1813, %v1807
      %v2360 = vpack.c.b16 %v1814, %v1808
      %v2361 = vpack.c.b16 %v1815, %v1809
      %v2362 = vpack.c.b16 %v1816, %v1810
      %v2363 = vpack.c.b16 %v1817, %v1811
      %v2364 = vpack.c.b16 %v1824, %v1818
      %v2365 = vpack.c.b16 %v1825, %v1819
      %v2366 = vpack.c.b16 %v1826, %v1820
      %v2367 = vpack.c.b16 %v1827, %v1821
      %v2368 = vpack.c.b16 %v1828, %v1822
      %v2369 = vpack.c.b16 %v1829, %v1823
      %v2370 = vpack.c.b16 %v1836, %v1830
      %v2371 = vpack.c.b16 %v1837, %v1831
      %v2372 = vpack.c.b16 %v1838, %v1832
      %v2373 = vpack.c.b16 %v1839, %v1833
      %v2374 = vpack.c.b16 %v1840, %v1834
      %v2375 = vpack.c.b16 %v1841, %v1835
      %v2376 = vpack.c.b16 %v1848, %v1842
      %v2377 = vpack.c.b16 %v1849, %v1843
      %v2378 = vpack.c.b16 %v1850, %v1844
      %v2379 = vpack.c.b16 %v1851, %v1845
      %v2380 = vpack.c.b16 %v1852, %v1846
      %v2381 = vpack.c.b16 %v1853, %v1847
      %v2382 = vpack.c.b16 %v1860, %v1854
      %v2383 = vpack.c.b16 %v1861, %v1855
      %v2384 = vpack.c.b16 %v1862, %v1856
      %v2385 = vpack.c.b16 %v1863, %v1857
      %v2386 = vpack.c.b16 %v1864, %v1858
      %v2387 = vpack.c.b16 %v1865, %v1859
      %v2388 = vpack.c.b16 %v1872, %v1866
      %v2389 = vpack.c.b16 %v1873, %v1867
      %v2390 = vpack.c.b16 %v1874, %v1868
      %v2391 = vpack.c.b16 %v1875, %v1869
      %v2392 = vpack.c.b16 %v1876, %v1870
      %v2393 = vpack.c.b16 %v1877, %v1871
      %v2394 = vpack.c.b16 %v1884, %v1878
      %v2395 = vpack.c.b16 %v1885, %v1879
      %v2396 = vpack.c.b16 %v1886, %v1880
      %v2397 = vpack.c.b16 %v1887, %v1881
      %v2398 = vpack.c.b16 %v1888, %v1882
      %v2399 = vpack.c.b16 %v1889, %v1883
      %v2400 = vpack.c.b16 %v1896, %v1890
      %v2401 = vpack.c.b16 %v1897, %v1891
      %v2402 = vpack.c.b16 %v1898, %v1892
      %v2403 = vpack.c.b16 %v1899, %v1893
      %v2404 = vpack.c.b16 %v1900, %v1894
      %v2405 = vpack.c.b16 %v1901, %v1895
      %v2406 = vpack.c.b16 %v1908, %v1902
      %v2407 = vpack.c.b16 %v1909, %v1903
      %v2408 = vpack.c.b16 %v1910, %v1904
      %v2409 = vpack.c.b16 %v1911, %v1905
      %v2410 = vpack.c.b16 %v1912, %v1906
      %v2411 = vpack.c.b16 %v1913, %v1907
      %v2412 = vpack.c.b16 %v1920, %v1914
      %v2413 = vpack.c.b16 %v1921, %v1915
      %v2414 = vpack.c.b16 %v1922, %v1916
      %v2415 = vpack.c.b16 %v1923, %v1917
      %v2416 = vpack.c.b16 %v1924, %v1918
      %v2417 = vpack.c.b16 %v1925, %v1919
      %v2418 = vpack.c.b16 %v1932, %v1926
      %v2419 = vpack.c.b16 %v1933, %v1927
      %v2420 = vpack.c.b16 %v1934, %v1928
      %v2421 = vpack.c.b16 %v1935, %v1929
      %v2422 = vpack.c.b16 %v1936, %v1930
      %v2423 = vpack.c.b16 %v1937, %v1931
      %v2424 = vpack.c.b16 %v1944, %v1938
      %v2425 = vpack.c.b16 %v1945, %v1939
      %v2426 = vpack.c.b16 %v1946, %v1940
      %v2427 = vpack.c.b16 %v1947, %v1941
      %v2428 = vpack.c.b16 %v1948, %v1942
      %v2429 = vpack.c.b16 %v1949, %v1943
      %v2430 = vpack.c.b16 %v1956, %v1950
      %v2431 = vpack.c.b16 %v1957, %v1951
      %v2432 = vpack.c.b16 %v1958, %v1952
      %v2433 = vpack.c.b16 %v1959, %v1953
      %v2434 = vpack.c.b16 %v1960, %v1954
      %v2435 = vpack.c.b16 %v1961, %v1955
      %v2436 = vpack.c.b16 %v1968, %v1962
      %v2437 = vpack.c.b16 %v1969, %v1963
      %v2438 = vpack.c.b16 %v1970, %v1964
      %v2439 = vpack.c.b16 %v1971, %v1965
      %v2440 = vpack.c.b16 %v1972, %v1966
      %v2441 = vpack.c.b16 %v1973, %v1967
      %v2442 = vpack.c.b16 %v1980, %v1974
      %v2443 = vpack.c.b16 %v1981, %v1975
      %v2444 = vpack.c.b16 %v1982, %v1976
      %v2445 = vpack.c.b16 %v1983, %v1977
      %v2446 = vpack.c.b16 %v1984, %v1978
      %v2447 = vpack.c.b16 %v1985, %v1979
      %v2448 = vpack.c.b16 %v1992, %v1986
      %v2449 = vpack.c.b16 %v1993, %v1987
      %v2450 = vpack.c.b16 %v1994, %v1988
      %v2451 = vpack.c.b16 %v1995, %v1989
      %v2452 = vpack.c.b16 %v1996, %v1990
      %v2453 = vpack.c.b16 %v1997, %v1991
      %v2454 = vpack.c.b16 %v2004, %v1998
      %v2455 = vpack.c.b16 %v2005, %v1999
      %v2456 = vpack.c.b16 %v2006, %v2000
      %v2457 = vpack.c.b16 %v2007, %v2001
      %v2458 = vpack.c.b16 %v2008, %v2002
      %v2459 = vpack.c.b16 %v2009, %v2003
      %v2460 = vpack.c.b16 %v2016, %v2010
      %v2461 = vpack.c.b16 %v2017, %v2011
      %v2462 = vpack.c.b16 %v2018, %v2012
      %v2463 = vpack.c.b16 %v2019, %v2013
      %v2464 = vpack.c.b16 %v2020, %v2014
      %v2465 = vpack.c.b16 %v2021, %v2015
      %v2466 = vpack.c.b16 %v2028, %v2022
      %v2467 = vpack.c.b16 %v2029, %v2023
      %v2468 = vpack.c.b16 %v2030, %v2024
      %v2469 = vpack.c.b16 %v2031, %v2025
      %v2470 = vpack.c.b16 %v2032, %v2026
      %v2471 = vpack.c.b16 %v2033, %v2027
      %v2472 = vpack.c.b16 %v2040, %v2034
      %v2473 = vpack.c.b16 %v2041, %v2035
      %v2474 = vpack.c.b16 %v2042, %v2036
      %v2475 = vpack.c.b16 %v2043, %v2037
      %v2476 = vpack.c.b16 %v2044, %v2038
      %v2477 = vpack.c.b16 %v2045, %v2039
      %v2478 = vpack.c.b16 %v2052, %v2046
      %v2479 = vpack.c.b16 %v2053, %v2047
      %v2480 = vpack.c.b16 %v2054, %v2048
      %v2481 = vpack.c.b16 %v2055, %v2049
      %v2482 = vpack.c.b16 %v2056, %v2050
      %v2483 = vpack.c.b16 %v2057, %v2051
      %v2484 = vpack.c.b16 %v2064, %v2058
      %v2485 = vpack.c.b16 %v2065, %v2059
      %v2486 = vpack.c.b16 %v2066, %v2060
      %v2487 = vpack.c.b16 %v2067, %v2061
      %v2488 = vpack.c.b16 %v2068, %v2062
      %v2489 = vpack.c.b16 %v2069, %v2063
      %v2490 = vpack.c.b16 %v2076, %v2070
      %v2491 = vpack.c.b16 %v2077, %v2071
      %v2492 = vpack.c.b16 %v2078, %v2072
      %v2493 = vpack.c.b16 %v2079, %v2073
      %v2494 = vpack.c.b16 %v2080, %v2074
      %v2495 = vpack.c.b16 %v2081, %v2075
      %v2496 = vpack.c.b16 %v2088, %v2082
      %v2497 = vpack.c.b16 %v2089, %v2083
      %v2498 = vpack.c.b16 %v2090, %v2084
      %v2499 = vpack.c.b16 %v2091, %v2085
      %v2500 = vpack.c.b16 %v2092, %v2086
      %v2501 = vpack.c.b16 %v2093, %v2087
      %v2502 = vpack.c.b16 %v2100, %v2094
      %v2503 = vpack.c.b16 %v2101, %v2095
      %v2504 = vpack.c.b16 %v2102, %v2096
      %v2505 = vpack.c.b16 %v2103, %v2097
      %v2506 = vpack.c.b16 %v2104, %v2098
      %v2507 = vpack.c.b16 %v2105, %v2099
      %v2508 = vpack.c.b16 %v2112, %v2106
      %v2509 = vpack.c.b16 %v2113, %v2107
      %v2510 = vpack.c.b16 %v2114, %v2108
      %v2511 = vpack.c.b16 %v2115, %v2109
      %v2512 = vpack.c.b16 %v2116, %v2110
      %v2513 = vpack.c.b16 %v2117, %v2111
      %v2514 = vpack.c.b16 %v2124, %v2118
      %v2515 = vpack.c.b16 %v2125, %v2119
      %v2516 = vpack.c.b16 %v2126, %v2120
      %v2517 = vpack.c.b16 %v2127, %v2121
      %v2518 = vpack.c.b16 %v2128, %v2122
      %v2519 = vpack.c.b16 %v2129, %v2123
      %v2520 = vpack.c.b16 %v2136, %v2130
      %v2521 = vpack.c.b16 %v2137, %v2131
      %v2522 = vpack.c.b16 %v2138, %v2132
      %v2523 = vpack.c.b16 %v2139, %v2133
      %v2524 = vpack.c.b16 %v2140, %v2134
      %v2525 = vpack.c.b16 %v2141, %v2135
      %v2526 = vpack.c.b16 %v2148, %v2142
      %v2527 = vpack.c.b16 %v2149, %v2143
      %v2528 = vpack.c.b16 %v2150, %v2144
      %v2529 = vpack.c.b16 %v2151, %v2145
      %v2530 = vpack.c.b16 %v2152, %v2146
      %v2531 = vpack.c.b16 %v2153, %v2147
      %v2532 = vpack.c.b16 %v2160, %v2154
      %v2533 = vpack.c.b16 %v2161, %v2155
      %v2534 = vpack.c.b16 %v2162, %v2156
      %v2535 = vpack.c.b16 %v2163, %v2157
      %v2536 = vpack.c.b16 %v2164, %v2158
      %v2537 = vpack.c.b16 %v2165, %v2159
      %v2538 = vpack.c.b16 %v2172, %v2166
      %v2539 = vpack.c.b16 %v2173, %v2167
      %v2540 = vpack.c.b16 %v2174, %v2168
      %v2541 = vpack.c.b16 %v2175, %v2169
      %v2542 = vpack.c.b16 %v2176, %v2170
      %v2543 = vpack.c.b16 %v2177, %v2171
      %v2544 = vpack.c.b16 %v2184, %v2178
      %v2545 = vpack.c.b16 %v2185, %v2179
      %v2546 = vpack.c.b16 %v2186, %v2180
      %v2547 = vpack.c.b16 %v2187, %v2181
      %v2548 = vpack.c.b16 %v2188, %v2182
      %v2549 = vpack.c.b16 %v2189, %v2183
      %v2550 = vpack.c.b16 %v2196, %v2190
      %v2551 = vpack.c.b16 %v2197, %v2191
      %v2552 = vpack.c.b16 %v2198, %v2192
      %v2553 = vpack.c.b16 %v2199, %v2193
      %v2554 = vpack.c.b16 %v2200, %v2194
      %v2555 = vpack.c.b16 %v2201, %v2195
      %v2556 = vpack.c.b16 %v2208, %v2202
      %v2557 = vpack.c.b16 %v2209, %v2203
      %v2558 = vpack.c.b16 %v2210, %v2204
      %v2559 = vpack.c.b16 %v2211, %v2205
      %v2560 = vpack.c.b16 %v2212, %v2206
      %v2561 = vpack.c.b16 %v2213, %v2207
      %v2562 = vpack.c.b16 %v2220, %v2214
      %v2563 = vpack.c.b16 %v2221, %v2215
      %v2564 = vpack.c.b16 %v2222, %v2216
      %v2565 = vpack.c.b16 %v2223, %v2217
      %v2566 = vpack.c.b16 %v2224, %v2218
      %v2567 = vpack.c.b16 %v2225, %v2219
      %v2568 = vpack.c.b16 %v2232, %v2226
      %v2569 = vpack.c.b16 %v2233, %v2227
      %v2570 = vpack.c.b16 %v2234, %v2228
      %v2571 = vpack.c.b16 %v2235, %v2229
      %v2572 = vpack.c.b16 %v2236, %v2230
      %v2573 = vpack.c.b16 %v2237, %v2231
      %v2574 = vpack.c.b16 %v2244, %v2238
      %v2575 = vpack.c.b16 %v2245, %v2239
      %v2576 = vpack.c.b16 %v2246, %v2240
      %v2577 = vpack.c.b16 %v2247, %v2241
      %v2578 = vpack.c.b16 %v2248, %v2242
      %v2579 = vpack.c.b16 %v2249, %v2243
      %v2580 = vpack.c.b16 %v2256, %v2250
      %v2581 = vpack.c.b16 %v2257, %v2251
      %v2582 = vpack.c.b16 %v2258, %v2252
      %v2583 = vpack.c.b16 %v2259, %v2253
      %v2584 = vpack.c.b16 %v2260, %v2254
      %v2585 = vpack.c.b16 %v2261, %v2255
      %v2586 = vpack.c.b16 %v2268, %v2262
      %v2587 = vpack.c.b16 %v2269, %v2263
      %v2588 = vpack.c.b16 %v2270, %v2264
      %v2589 = vpack.c.b16 %v2271, %v2265
      %v2590 = vpack.c.b16 %v2272, %v2266
      %v2591 = vpack.c.b16 %v2273, %v2267
      %v2592 = vpack.c.b16 %v2280, %v2274
      %v2593 = vpack.c.b16 %v2281, %v2275
      %v2594 = vpack.c.b16 %v2282, %v2276
      %v2595 = vpack.c.b16 %v2283, %v2277
      %v2596 = vpack.c.b16 %v2284, %v2278
      %v2597 = vpack.c.b16 %v2285, %v2279
      %v2598 = vpack.c.b16 %v2292, %v2286
      %v2599 = vpack.c.b16 %v2293, %v2287
      %v2600 = vpack.c.b16 %v2294, %v2288
      %v2601 = vpack.c.b16 %v2295, %v2289
      %v2602 = vpack.c.b16 %v2296, %v2290
      %v2603 = vpack.c.b16 %v2297, %v2291
      %v2604 = vpack.c.b16 %v2304, %v2298
      %v2605 = vpack.c.b16 %v2305, %v2299
      %v2606 = vpack.c.b16 %v2306, %v2300
      %v2607 = vpack.c.b16 %v2307, %v2301
      %v2608 = vpack.c.b16 %v2308, %v2302
      %v2609 = vpack.c.b16 %v2309, %v2303
      %v2610 = vpack.c.b16 %v2316, %v2310
      %v2611 = vpack.c.b16 %v2317, %v2311
      %v2612 = vpack.c.b16 %v2318, %v2312
      %v2613 = vpack.c.b16 %v2319, %v2313
      %v2614 = vpack.c.b16 %v2320, %v2314
      %v2615 = vpack.c.b16 %v2321, %v2315
      %v2616 = vpack.c.b16 %v2328, %v2322
      %v2617 = vpack.c.b16 %v2329, %v2323
      %v2618 = vpack.c.b16 %v2330, %v2324
      %v2619 = vpack.c.b16 %v2331, %v2325
      %v2620 = vpack.c.b16 %v2332, %v2326
      %v2621 = vpack.c.b16 %v2333, %v2327
      %2910 = vmatprep.subr.bf16.mxu0 %v2335
      %2911 = vmatpush1.bf16.msra.mxu0 %v2334
      %2912 = vmatprep.subr.bf16.mxu0 %v2341
      %2913 = vmatpush1.bf16.msra.mxu0 %v2340
      %2914 = vmatprep.subr.bf16.mxu0 %v2347
      %2915 = vmatpush1.bf16.msra.mxu0 %v2346
      %2916 = vmatprep.subr.bf16.mxu0 %v2353
      %2917 = vmatpush1.bf16.msra.mxu0 %v2352
      %2918 = vmatprep.subr.bf16.mxu0 %v2359
      %2919 = vmatpush1.bf16.msra.mxu0 %v2358
      %2920 = vmatprep.subr.bf16.mxu0 %v2365
      %2921 = vmatpush1.bf16.msra.mxu0 %v2364
      %2922 = vmatprep.subr.bf16.mxu0 %v2371
      %2923 = vmatpush1.bf16.msra.mxu0 %v2370
      %2924 = vmatprep.subr.bf16.mxu0 %v2377
      %2925 = vmatpush1.bf16.msra.mxu0 %v2376
      %2926 = vmatprep.subr.bf16.mxu0 %v2383
      %2927 = vmatpush1.bf16.msra.mxu0 %v2382
      %2928 = vmatprep.subr.bf16.mxu0 %v2389
      %2929 = vmatpush1.bf16.msra.mxu0 %v2388
      %2930 = vmatprep.subr.bf16.mxu0 %v2395
      %2931 = vmatpush1.bf16.msra.mxu0 %v2394
      %2932 = vmatprep.subr.bf16.mxu0 %v2401
      %2933 = vmatpush1.bf16.msra.mxu0 %v2400
      %2934 = vmatprep.subr.bf16.mxu0 %v2407
      %2935 = vmatpush1.bf16.msra.mxu0 %v2406
      %2936 = vmatprep.subr.bf16.mxu0 %v2413
      %2937 = vmatpush1.bf16.msra.mxu0 %v2412
      %2938 = vmatprep.subr.bf16.mxu0 %v2419
      %2939 = vmatpush1.bf16.msra.mxu0 %v2418
      %2940 = vmatprep.subr.bf16.mxu0 %v2425
      %2941 = vmatpush1.bf16.msra.mxu0 %v2424
      %2942 = vmatprep.mubr.bf16.mxu0 %v671
      %2943 = vmatmul.mubr.bf16.gmra.mrb[0].mxu0 %v670
      %v2944 = vpop.f32.mrb[0].mxu0
      %v2945 = vadd.f32 %v1278, %v2944
      %v2946 = vpop.f32.mrb[0].mxu0
      %v2947 = vadd.f32 %v1279, %v2946
      %v2948 = vpop.f32.mrb[0].mxu0
      %v2949 = vadd.f32 %v1284, %v2948
      %v2950 = vpop.f32.mrb[0].mxu0
      %v2951 = vadd.f32 %v1285, %v2950
      %2952 = vmatprep.mubr.bf16.mxu0 %v677
      %2953 = vmatmul.mubr.bf16.gmra.mrb[0].mxu0 %v676
      %v2954 = vpop.f32.mrb[0].mxu0
      %v2955 = vadd.f32 %v1290, %v2954
      %v2956 = vpop.f32.mrb[0].mxu0
      %v2957 = vadd.f32 %v1291, %v2956
      %v2958 = vpop.f32.mrb[0].mxu0
      %v2959 = vadd.f32 %v1296, %v2958
      %v2960 = vpop.f32.mrb[0].mxu0
      %v2961 = vadd.f32 %v1297, %v2960
      %2962 = vmatprep.mubr.bf16.mxu0 %v683
      %2963 = vmatmul.mubr.bf16.gmra.mrb[0].mxu0 %v682
      %v2964 = vpop.f32.mrb[0].mxu0
      %v2965 = vadd.f32 %v1302, %v2964
      %v2966 = vpop.f32.mrb[0].mxu0
      %v2967 = vadd.f32 %v1303, %v2966
      %v2968 = vpop.f32.mrb[0].mxu0
      %v2969 = vadd.f32 %v1308, %v2968
      %v2970 = vpop.f32.mrb[0].mxu0
      %v2971 = vadd.f32 %v1309, %v2970
      %2972 = vmatprep.mubr.bf16.mxu0 %v689
      %2973 = vmatmul.mubr.bf16.gmra.mrb[0].mxu0 %v688
      %v2974 = vpop.f32.mrb[0].mxu0
      %v2975 = vadd.f32 %v1314, %v2974
      %v2976 = vpop.f32.mrb[0].mxu0
      %v2977 = vadd.f32 %v1315, %v2976
      %v2978 = vpop.f32.mrb[0].mxu0
      %v2979 = vadd.f32 %v1320, %v2978
      %v2980 = vpop.f32.mrb[0].mxu0
      %v2981 = vadd.f32 %v1321, %v2980
      %2982 = vmatprep.mubr.bf16.mxu0 %v695
      %2983 = vmatmul.mubr.bf16.gmra.mrb[0].mxu0 %v694
      %v2984 = vpop.f32.mrb[0].mxu0
      %v2985 = vadd.f32 %v1326, %v2984
      %v2986 = vpop.f32.mrb[0].mxu0
      %v2987 = vadd.f32 %v1327, %v2986
      %v2988 = vpop.f32.mrb[0].mxu0
      %v2989 = vadd.f32 %v1332, %v2988
      %v2990 = vpop.f32.mrb[0].mxu0
      %v2991 = vadd.f32 %v1333, %v2990
      %2992 = vmatprep.mubr.bf16.mxu0 %v701
      %2993 = vmatmul.mubr.bf16.gmra.mrb[0].mxu0 %v700
      %v2994 = vpop.f32.mrb[0].mxu0
      %v2995 = vadd.f32 %v1338, %v2994
      %v2996 = vpop.f32.mrb[0].mxu0
      %v2997 = vadd.f32 %v1339, %v2996
      %v2998 = vpop.f32.mrb[0].mxu0
      %v2999 = vadd.f32 %v1344, %v2998
      %v3000 = vpop.f32.mrb[0].mxu0
      %v3001 = vadd.f32 %v1345, %v3000
      %3002 = vmatprep.mubr.bf16.mxu0 %v707
      %3003 = vmatmul.mubr.bf16.gmra.mrb[0].mxu0 %v706
      %v3004 = vpop.f32.mrb[0].mxu0
      %v3005 = vadd.f32 %v1350, %v3004
      %v3006 = vpop.f32.mrb[0].mxu0
      %v3007 = vadd.f32 %v1351, %v3006
      %v3008 = vpop.f32.mrb[0].mxu0
      %v3009 = vadd.f32 %v1356, %v3008
      %v3010 = vpop.f32.mrb[0].mxu0
      %v3011 = vadd.f32 %v1357, %v3010
      %3012 = vmatprep.mubr.bf16.mxu0 %v713
      %3013 = vmatmul.mubr.bf16.gmra.mrb[0].mxu0 %v712
      %v3014 = vpop.f32.mrb[0].mxu0
      %v3015 = vadd.f32 %v1362, %v3014
      %v3016 = vpop.f32.mrb[0].mxu0
      %v3017 = vadd.f32 %v1363, %v3016
      %v3018 = vpop.f32.mrb[0].mxu0
      %v3019 = vadd.f32 %v1368, %v3018
      %v3020 = vpop.f32.mrb[0].mxu0
      %v3021 = vadd.f32 %v1369, %v3020
      %3022 = vmatprep.mubr.bf16.mxu0 %v719
      %3023 = vmatmul.mubr.bf16.gmra.mrb[0].mxu0 %v718
      %v3024 = vpop.f32.mrb[0].mxu0
      %v3025 = vadd.f32 %v1374, %v3024
      %v3026 = vpop.f32.mrb[0].mxu0
      %v3027 = vadd.f32 %v1375, %v3026
      %v3028 = vpop.f32.mrb[0].mxu0
      %v3029 = vadd.f32 %v1380, %v3028
      %v3030 = vpop.f32.mrb[0].mxu0
      %v3031 = vadd.f32 %v1381, %v3030
      %3032 = vmatprep.mubr.bf16.mxu0 %v725
      %3033 = vmatmul.mubr.bf16.gmra.mrb[0].mxu0 %v724
      %v3034 = vpop.f32.mrb[0].mxu0
      %v3035 = vadd.f32 %v1386, %v3034
      %v3036 = vpop.f32.mrb[0].mxu0
      %v3037 = vadd.f32 %v1387, %v3036
      %v3038 = vpop.f32.mrb[0].mxu0
      %v3039 = vadd.f32 %v1392, %v3038
      %v3040 = vpop.f32.mrb[0].mxu0
      %v3041 = vadd.f32 %v1393, %v3040
      %3042 = vmatprep.mubr.bf16.mxu0 %v731
      %3043 = vmatmul.mubr.bf16.gmra.mrb[0].mxu0 %v730
      %v3044 = vpop.f32.mrb[0].mxu0
      %v3045 = vadd.f32 %v1398, %v3044
      %v3046 = vpop.f32.mrb[0].mxu0
      %v3047 = vadd.f32 %v1399, %v3046
      %v3048 = vpop.f32.mrb[0].mxu0
      %v3049 = vadd.f32 %v1404, %v3048
      %v3050 = vpop.f32.mrb[0].mxu0
      %v3051 = vadd.f32 %v1405, %v3050
      %3052 = vmatprep.mubr.bf16.mxu0 %v737
      %3053 = vmatmul.mubr.bf16.gmra.mrb[0].mxu0 %v736
      %v3054 = vpop.f32.mrb[0].mxu0
      %v3055 = vadd.f32 %v1410, %v3054
      %v3056 = vpop.f32.mrb[0].mxu0
      %v3057 = vadd.f32 %v1411, %v3056
      %v3058 = vpop.f32.mrb[0].mxu0
      %v3059 = vadd.f32 %v1416, %v3058
      %v3060 = vpop.f32.mrb[0].mxu0
      %v3061 = vadd.f32 %v1417, %v3060
      %3062 = vmatprep.mubr.bf16.mxu0 %v743
      %3063 = vmatmul.mubr.bf16.gmra.mrb[0].mxu0 %v742
      %v3064 = vpop.f32.mrb[0].mxu0
      %v3065 = vadd.f32 %v1422, %v3064
      %v3066 = vpop.f32.mrb[0].mxu0
      %v3067 = vadd.f32 %v1423, %v3066
      %v3068 = vpop.f32.mrb[0].mxu0
      %v3069 = vadd.f32 %v1428, %v3068
      %v3070 = vpop.f32.mrb[0].mxu0
      %v3071 = vadd.f32 %v1429, %v3070
      %3072 = vmatprep.mubr.bf16.mxu0 %v749
      %3073 = vmatmul.mubr.bf16.gmra.mrb[0].mxu0 %v748
      %v3074 = vpop.f32.mrb[0].mxu0
      %v3075 = vadd.f32 %v1434, %v3074
      %v3076 = vpop.f32.mrb[0].mxu0
      %v3077 = vadd.f32 %v1435, %v3076
      %v3078 = vpop.f32.mrb[0].mxu0
      %v3079 = vadd.f32 %v1440, %v3078
      %v3080 = vpop.f32.mrb[0].mxu0
      %v3081 = vadd.f32 %v1441, %v3080
      %3082 = vmatprep.mubr.bf16.mxu0 %v755
      %3083 = vmatmul.mubr.bf16.gmra.mrb[0].mxu0 %v754
      %v3084 = vpop.f32.mrb[0].mxu0
      %v3085 = vadd.f32 %v1446, %v3084
      %v3086 = vpop.f32.mrb[0].mxu0
      %v3087 = vadd.f32 %v1447, %v3086
      %v3088 = vpop.f32.mrb[0].mxu0
      %v3089 = vadd.f32 %v1452, %v3088
      %v3090 = vpop.f32.mrb[0].mxu0
      %v3091 = vadd.f32 %v1453, %v3090
      %3092 = vmatprep.mubr.bf16.mxu0 %v761
      %3093 = vmatmul.mubr.bf16.gmra.mrb[0].mxu0 %v760
      %v3094 = vpop.f32.mrb[0].mxu0
      %v3095 = vadd.f32 %v1458, %v3094
      %v3096 = vpop.f32.mrb[0].mxu0
      %v3097 = vadd.f32 %v1459, %v3096
      %v3098 = vpop.f32.mrb[0].mxu0
      %v3099 = vadd.f32 %v1464, %v3098
      %v3100 = vpop.f32.mrb[0].mxu0
      %v3101 = vadd.f32 %v1465, %v3100
      %3102 = vdwg.mxu0
      %3103 = vmatprep.subr.bf16.mxu0 %v2431
      %3104 = vmatpush1.bf16.msra.mxu0 %v2430
      %3105 = vmatprep.subr.bf16.mxu0 %v2437
      %3106 = vmatpush1.bf16.msra.mxu0 %v2436
      %3107 = vmatprep.subr.bf16.mxu0 %v2443
      %3108 = vmatpush1.bf16.msra.mxu0 %v2442
      %3109 = vmatprep.subr.bf16.mxu0 %v2449
      %3110 = vmatpush1.bf16.msra.mxu0 %v2448
      %3111 = vmatprep.subr.bf16.mxu0 %v2455
      %3112 = vmatpush1.bf16.msra.mxu0 %v2454
      %3113 = vmatprep.subr.bf16.mxu0 %v2461
      %3114 = vmatpush1.bf16.msra.mxu0 %v2460
      %3115 = vmatprep.subr.bf16.mxu0 %v2467
      %3116 = vmatpush1.bf16.msra.mxu0 %v2466
      %3117 = vmatprep.subr.bf16.mxu0 %v2473
      %3118 = vmatpush1.bf16.msra.mxu0 %v2472
      %3119 = vmatprep.subr.bf16.mxu0 %v2479
      %3120 = vmatpush1.bf16.msra.mxu0 %v2478
      %3121 = vmatprep.subr.bf16.mxu0 %v2485
      %3122 = vmatpush1.bf16.msra.mxu0 %v2484
      %3123 = vmatprep.subr.bf16.mxu0 %v2491
      %3124 = vmatpush1.bf16.msra.mxu0 %v2490
      %3125 = vmatprep.subr.bf16.mxu0 %v2497
      %3126 = vmatpush1.bf16.msra.mxu0 %v2496
      %3127 = vmatprep.subr.bf16.mxu0 %v2503
      %3128 = vmatpush1.bf16.msra.mxu0 %v2502
      %3129 = vmatprep.subr.bf16.mxu0 %v2509
      %3130 = vmatpush1.bf16.msra.mxu0 %v2508
      %3131 = vmatprep.subr.bf16.mxu0 %v2515
      %3132 = vmatpush1.bf16.msra.mxu0 %v2514
      %3133 = vmatprep.subr.bf16.mxu0 %v2521
      %3134 = vmatpush1.bf16.msra.mxu0 %v2520
      %3135 = vmatprep.mubr.bf16.mxu0 %v673
      %3136 = vmatmul.mubr.bf16.gmra.mrb[0].mxu0 %v672
      %v3137 = vpop.f32.mrb[0].mxu0
      %v3138 = vadd.f32 %v2945, %v3137
      %v3139 = vpop.f32.mrb[0].mxu0
      %v3140 = vadd.f32 %v2947, %v3139
      %v3141 = vpop.f32.mrb[0].mxu0
      %v3142 = vadd.f32 %v2949, %v3141
      %v3143 = vpop.f32.mrb[0].mxu0
      %v3144 = vadd.f32 %v2951, %v3143
      %3145 = vmatprep.mubr.bf16.mxu0 %v679
      %3146 = vmatmul.mubr.bf16.gmra.mrb[0].mxu0 %v678
      %v3147 = vpop.f32.mrb[0].mxu0
      %v3148 = vadd.f32 %v2955, %v3147
      %v3149 = vpop.f32.mrb[0].mxu0
      %v3150 = vadd.f32 %v2957, %v3149
      %v3151 = vpop.f32.mrb[0].mxu0
      %v3152 = vadd.f32 %v2959, %v3151
      %v3153 = vpop.f32.mrb[0].mxu0
      %v3154 = vadd.f32 %v2961, %v3153
      %3155 = vmatprep.mubr.bf16.mxu0 %v685
      %3156 = vmatmul.mubr.bf16.gmra.mrb[0].mxu0 %v684
      %v3157 = vpop.f32.mrb[0].mxu0
      %v3158 = vadd.f32 %v2965, %v3157
      %v3159 = vpop.f32.mrb[0].mxu0
      %v3160 = vadd.f32 %v2967, %v3159
      %v3161 = vpop.f32.mrb[0].mxu0
      %v3162 = vadd.f32 %v2969, %v3161
      %v3163 = vpop.f32.mrb[0].mxu0
      %v3164 = vadd.f32 %v2971, %v3163
      %3165 = vmatprep.mubr.bf16.mxu0 %v691
      %3166 = vmatmul.mubr.bf16.gmra.mrb[0].mxu0 %v690
      %v3167 = vpop.f32.mrb[0].mxu0
      %v3168 = vadd.f32 %v2975, %v3167
      %v3169 = vpop.f32.mrb[0].mxu0
      %v3170 = vadd.f32 %v2977, %v3169
      %v3171 = vpop.f32.mrb[0].mxu0
      %v3172 = vadd.f32 %v2979, %v3171
      %v3173 = vpop.f32.mrb[0].mxu0
      %v3174 = vadd.f32 %v2981, %v3173
      %3175 = vmatprep.mubr.bf16.mxu0 %v697
      %3176 = vmatmul.mubr.bf16.gmra.mrb[0].mxu0 %v696
      %v3177 = vpop.f32.mrb[0].mxu0
      %v3178 = vadd.f32 %v2985, %v3177
      %v3179 = vpop.f32.mrb[0].mxu0
      %v3180 = vadd.f32 %v2987, %v3179
      %v3181 = vpop.f32.mrb[0].mxu0
      %v3182 = vadd.f32 %v2989, %v3181
      %v3183 = vpop.f32.mrb[0].mxu0
      %v3184 = vadd.f32 %v2991, %v3183
      %3185 = vmatprep.mubr.bf16.mxu0 %v703
      %3186 = vmatmul.mubr.bf16.gmra.mrb[0].mxu0 %v702
      %v3187 = vpop.f32.mrb[0].mxu0
      %v3188 = vadd.f32 %v2995, %v3187
      %v3189 = vpop.f32.mrb[0].mxu0
      %v3190 = vadd.f32 %v2997, %v3189
      %v3191 = vpop.f32.mrb[0].mxu0
      %v3192 = vadd.f32 %v2999, %v3191
      %v3193 = vpop.f32.mrb[0].mxu0
      %v3194 = vadd.f32 %v3001, %v3193
      %3195 = vmatprep.mubr.bf16.mxu0 %v709
      %3196 = vmatmul.mubr.bf16.gmra.mrb[0].mxu0 %v708
      %v3197 = vpop.f32.mrb[0].mxu0
      %v3198 = vadd.f32 %v3005, %v3197
      %v3199 = vpop.f32.mrb[0].mxu0
      %v3200 = vadd.f32 %v3007, %v3199
      %v3201 = vpop.f32.mrb[0].mxu0
      %v3202 = vadd.f32 %v3009, %v3201
      %v3203 = vpop.f32.mrb[0].mxu0
      %v3204 = vadd.f32 %v3011, %v3203
      %3205 = vmatprep.mubr.bf16.mxu0 %v715
      %3206 = vmatmul.mubr.bf16.gmra.mrb[0].mxu0 %v714
      %v3207 = vpop.f32.mrb[0].mxu0
      %v3208 = vadd.f32 %v3015, %v3207
      %v3209 = vpop.f32.mrb[0].mxu0
      %v3210 = vadd.f32 %v3017, %v3209
      %v3211 = vpop.f32.mrb[0].mxu0
      %v3212 = vadd.f32 %v3019, %v3211
      %v3213 = vpop.f32.mrb[0].mxu0
      %v3214 = vadd.f32 %v3021, %v3213
      %3215 = vmatprep.mubr.bf16.mxu0 %v721
      %3216 = vmatmul.mubr.bf16.gmra.mrb[0].mxu0 %v720
      %v3217 = vpop.f32.mrb[0].mxu0
      %v3218 = vadd.f32 %v3025, %v3217
      %v3219 = vpop.f32.mrb[0].mxu0
      %v3220 = vadd.f32 %v3027, %v3219
      %v3221 = vpop.f32.mrb[0].mxu0
      %v3222 = vadd.f32 %v3029, %v3221
      %v3223 = vpop.f32.mrb[0].mxu0
      %v3224 = vadd.f32 %v3031, %v3223
      %3225 = vmatprep.mubr.bf16.mxu0 %v727
      %3226 = vmatmul.mubr.bf16.gmra.mrb[0].mxu0 %v726
      %v3227 = vpop.f32.mrb[0].mxu0
      %v3228 = vadd.f32 %v3035, %v3227
      %v3229 = vpop.f32.mrb[0].mxu0
      %v3230 = vadd.f32 %v3037, %v3229
      %v3231 = vpop.f32.mrb[0].mxu0
      %v3232 = vadd.f32 %v3039, %v3231
      %v3233 = vpop.f32.mrb[0].mxu0
      %v3234 = vadd.f32 %v3041, %v3233
      %3235 = vmatprep.mubr.bf16.mxu0 %v733
      %3236 = vmatmul.mubr.bf16.gmra.mrb[0].mxu0 %v732
      %v3237 = vpop.f32.mrb[0].mxu0
      %v3238 = vadd.f32 %v3045, %v3237
      %v3239 = vpop.f32.mrb[0].mxu0
      %v3240 = vadd.f32 %v3047, %v3239
      %v3241 = vpop.f32.mrb[0].mxu0
      %v3242 = vadd.f32 %v3049, %v3241
      %v3243 = vpop.f32.mrb[0].mxu0
      %v3244 = vadd.f32 %v3051, %v3243
      %3245 = vmatprep.mubr.bf16.mxu0 %v739
      %3246 = vmatmul.mubr.bf16.gmra.mrb[0].mxu0 %v738
      %v3247 = vpop.f32.mrb[0].mxu0
      %v3248 = vadd.f32 %v3055, %v3247
      %v3249 = vpop.f32.mrb[0].mxu0
      %v3250 = vadd.f32 %v3057, %v3249
      %v3251 = vpop.f32.mrb[0].mxu0
      %v3252 = vadd.f32 %v3059, %v3251
      %v3253 = vpop.f32.mrb[0].mxu0
      %v3254 = vadd.f32 %v3061, %v3253
      %3255 = vmatprep.mubr.bf16.mxu0 %v745
      %3256 = vmatmul.mubr.bf16.gmra.mrb[0].mxu0 %v744
      %v3257 = vpop.f32.mrb[0].mxu0
      %v3258 = vadd.f32 %v3065, %v3257
      %v3259 = vpop.f32.mrb[0].mxu0
      %v3260 = vadd.f32 %v3067, %v3259
      %v3261 = vpop.f32.mrb[0].mxu0
      %v3262 = vadd.f32 %v3069, %v3261
      %v3263 = vpop.f32.mrb[0].mxu0
      %v3264 = vadd.f32 %v3071, %v3263
      %3265 = vmatprep.mubr.bf16.mxu0 %v751
      %3266 = vmatmul.mubr.bf16.gmra.mrb[0].mxu0 %v750
      %v3267 = vpop.f32.mrb[0].mxu0
      %v3268 = vadd.f32 %v3075, %v3267
      %v3269 = vpop.f32.mrb[0].mxu0
      %v3270 = vadd.f32 %v3077, %v3269
      %v3271 = vpop.f32.mrb[0].mxu0
      %v3272 = vadd.f32 %v3079, %v3271
      %v3273 = vpop.f32.mrb[0].mxu0
      %v3274 = vadd.f32 %v3081, %v3273
      %3275 = vmatprep.mubr.bf16.mxu0 %v757
      %3276 = vmatmul.mubr.bf16.gmra.mrb[0].mxu0 %v756
      %v3277 = vpop.f32.mrb[0].mxu0
      %v3278 = vadd.f32 %v3085, %v3277
      %v3279 = vpop.f32.mrb[0].mxu0
      %v3280 = vadd.f32 %v3087, %v3279
      %v3281 = vpop.f32.mrb[0].mxu0
      %v3282 = vadd.f32 %v3089, %v3281
      %v3283 = vpop.f32.mrb[0].mxu0
      %v3284 = vadd.f32 %v3091, %v3283
      %3285 = vmatprep.mubr.bf16.mxu0 %v763
      %3286 = vmatmul.mubr.bf16.gmra.mrb[0].mxu0 %v762
      %v3287 = vpop.f32.mrb[0].mxu0
      %v3288 = vadd.f32 %v3095, %v3287
      %v3289 = vpop.f32.mrb[0].mxu0
      %v3290 = vadd.f32 %v3097, %v3289
      %v3291 = vpop.f32.mrb[0].mxu0
      %v3292 = vadd.f32 %v3099, %v3291
      %v3293 = vpop.f32.mrb[0].mxu0
      %v3294 = vadd.f32 %v3101, %v3293
      %3295 = vdwg.mxu0
      %3296 = vmatprep.subr.bf16.mxu0 %v2527
      %3297 = vmatpush1.bf16.msra.mxu0 %v2526
      %3298 = vmatprep.subr.bf16.mxu0 %v2533
      %3299 = vmatpush1.bf16.msra.mxu0 %v2532
      %3300 = vmatprep.subr.bf16.mxu0 %v2539
      %3301 = vmatpush1.bf16.msra.mxu0 %v2538
      %3302 = vmatprep.subr.bf16.mxu0 %v2545
      %3303 = vmatpush1.bf16.msra.mxu0 %v2544
      %3304 = vmatprep.subr.bf16.mxu0 %v2551
      %3305 = vmatpush1.bf16.msra.mxu0 %v2550
      %3306 = vmatprep.subr.bf16.mxu0 %v2557
      %3307 = vmatpush1.bf16.msra.mxu0 %v2556
      %3308 = vmatprep.subr.bf16.mxu0 %v2563
      %3309 = vmatpush1.bf16.msra.mxu0 %v2562
      %3310 = vmatprep.subr.bf16.mxu0 %v2569
      %3311 = vmatpush1.bf16.msra.mxu0 %v2568
      %3312 = vmatprep.subr.bf16.mxu0 %v2575
      %3313 = vmatpush1.bf16.msra.mxu0 %v2574
      %3314 = vmatprep.subr.bf16.mxu0 %v2581
      %3315 = vmatpush1.bf16.msra.mxu0 %v2580
      %3316 = vmatprep.subr.bf16.mxu0 %v2587
      %3317 = vmatpush1.bf16.msra.mxu0 %v2586
      %3318 = vmatprep.subr.bf16.mxu0 %v2593
      %3319 = vmatpush1.bf16.msra.mxu0 %v2592
      %3320 = vmatprep.subr.bf16.mxu0 %v2599
      %3321 = vmatpush1.bf16.msra.mxu0 %v2598
      %3322 = vmatprep.subr.bf16.mxu0 %v2605
      %3323 = vmatpush1.bf16.msra.mxu0 %v2604
      %3324 = vmatprep.subr.bf16.mxu0 %v2611
      %3325 = vmatpush1.bf16.msra.mxu0 %v2610
      %3326 = vmatprep.subr.bf16.mxu0 %v2617
      %3327 = vmatpush1.bf16.msra.mxu0 %v2616
      %3328 = vmatprep.mubr.bf16.mxu0 %v675
      %3329 = vmatmul.mubr.bf16.gmra.mrb[0].mxu0 %v674
      %v3330 = vpop.f32.mrb[0].mxu0
      %v3331 = vadd.f32 %v3138, %v3330
      %v3332 = vpop.f32.mrb[0].mxu0
      %v3333 = vadd.f32 %v3140, %v3332
      %v3334 = vpop.f32.mrb[0].mxu0
      %v3335 = vadd.f32 %v3142, %v3334
      %v3336 = vpop.f32.mrb[0].mxu0
      %v3337 = vadd.f32 %v3144, %v3336
      %3338 = vmatprep.mubr.bf16.mxu0 %v681
      %3339 = vmatmul.mubr.bf16.gmra.mrb[0].mxu0 %v680
      %v3340 = vpop.f32.mrb[0].mxu0
      %v3341 = vadd.f32 %v3148, %v3340
      %v3342 = vpop.f32.mrb[0].mxu0
      %v3343 = vadd.f32 %v3150, %v3342
      %v3344 = vpop.f32.mrb[0].mxu0
      %v3345 = vadd.f32 %v3152, %v3344
      %v3346 = vpop.f32.mrb[0].mxu0
      %v3347 = vadd.f32 %v3154, %v3346
      %3348 = vmatprep.mubr.bf16.mxu0 %v687
      %3349 = vmatmul.mubr.bf16.gmra.mrb[0].mxu0 %v686
      %v3350 = vpop.f32.mrb[0].mxu0
      %v3351 = vadd.f32 %v3158, %v3350
      %v3352 = vpop.f32.mrb[0].mxu0
      %v3353 = vadd.f32 %v3160, %v3352
      %v3354 = vpop.f32.mrb[0].mxu0
      %v3355 = vadd.f32 %v3162, %v3354
      %v3356 = vpop.f32.mrb[0].mxu0
      %v3357 = vadd.f32 %v3164, %v3356
      %3358 = vmatprep.mubr.bf16.mxu0 %v693
      %3359 = vmatmul.mubr.bf16.gmra.mrb[0].mxu0 %v692
      %v3360 = vpop.f32.mrb[0].mxu0
      %v3361 = vadd.f32 %v3168, %v3360
      %v3362 = vpop.f32.mrb[0].mxu0
      %v3363 = vadd.f32 %v3170, %v3362
      %v3364 = vpop.f32.mrb[0].mxu0
      %v3365 = vadd.f32 %v3172, %v3364
      %v3366 = vpop.f32.mrb[0].mxu0
      %v3367 = vadd.f32 %v3174, %v3366
      %3368 = vmatprep.mubr.bf16.mxu0 %v699
      %3369 = vmatmul.mubr.bf16.gmra.mrb[0].mxu0 %v698
      %v3370 = vpop.f32.mrb[0].mxu0
      %v3371 = vadd.f32 %v3178, %v3370
      %v3372 = vpop.f32.mrb[0].mxu0
      %v3373 = vadd.f32 %v3180, %v3372
      %v3374 = vpop.f32.mrb[0].mxu0
      %v3375 = vadd.f32 %v3182, %v3374
      %v3376 = vpop.f32.mrb[0].mxu0
      %v3377 = vadd.f32 %v3184, %v3376
      %3378 = vmatprep.mubr.bf16.mxu0 %v705
      %3379 = vmatmul.mubr.bf16.gmra.mrb[0].mxu0 %v704
      %v3380 = vpop.f32.mrb[0].mxu0
      %v3381 = vadd.f32 %v3188, %v3380
      %v3382 = vpop.f32.mrb[0].mxu0
      %v3383 = vadd.f32 %v3190, %v3382
      %v3384 = vpop.f32.mrb[0].mxu0
      %v3385 = vadd.f32 %v3192, %v3384
      %v3386 = vpop.f32.mrb[0].mxu0
      %v3387 = vadd.f32 %v3194, %v3386
      %3388 = vmatprep.mubr.bf16.mxu0 %v711
      %3389 = vmatmul.mubr.bf16.gmra.mrb[0].mxu0 %v710
      %v3390 = vpop.f32.mrb[0].mxu0
      %v3391 = vadd.f32 %v3198, %v3390
      %v3392 = vpop.f32.mrb[0].mxu0
      %v3393 = vadd.f32 %v3200, %v3392
      %v3394 = vpop.f32.mrb[0].mxu0
      %v3395 = vadd.f32 %v3202, %v3394
      %v3396 = vpop.f32.mrb[0].mxu0
      %v3397 = vadd.f32 %v3204, %v3396
      %3398 = vmatprep.mubr.bf16.mxu0 %v717
      %3399 = vmatmul.mubr.bf16.gmra.mrb[0].mxu0 %v716
      %v3400 = vpop.f32.mrb[0].mxu0
      %v3401 = vadd.f32 %v3208, %v3400
      %v3402 = vpop.f32.mrb[0].mxu0
      %v3403 = vadd.f32 %v3210, %v3402
      %v3404 = vpop.f32.mrb[0].mxu0
      %v3405 = vadd.f32 %v3212, %v3404
      %v3406 = vpop.f32.mrb[0].mxu0
      %v3407 = vadd.f32 %v3214, %v3406
      %3408 = vmatprep.mubr.bf16.mxu0 %v723
      %3409 = vmatmul.mubr.bf16.gmra.mrb[0].mxu0 %v722
      %v3410 = vpop.f32.mrb[0].mxu0
      %v3411 = vadd.f32 %v3218, %v3410
      %v3412 = vpop.f32.mrb[0].mxu0
      %v3413 = vadd.f32 %v3220, %v3412
      %v3414 = vpop.f32.mrb[0].mxu0
      %v3415 = vadd.f32 %v3222, %v3414
      %v3416 = vpop.f32.mrb[0].mxu0
      %v3417 = vadd.f32 %v3224, %v3416
      %3418 = vmatprep.mubr.bf16.mxu0 %v729
      %3419 = vmatmul.mubr.bf16.gmra.mrb[0].mxu0 %v728
      %v3420 = vpop.f32.mrb[0].mxu0
      %v3421 = vadd.f32 %v3228, %v3420
      %v3422 = vpop.f32.mrb[0].mxu0
      %v3423 = vadd.f32 %v3230, %v3422
      %v3424 = vpop.f32.mrb[0].mxu0
      %v3425 = vadd.f32 %v3232, %v3424
      %v3426 = vpop.f32.mrb[0].mxu0
      %v3427 = vadd.f32 %v3234, %v3426
      %3428 = vmatprep.mubr.bf16.mxu0 %v735
      %3429 = vmatmul.mubr.bf16.gmra.mrb[0].mxu0 %v734
      %v3430 = vpop.f32.mrb[0].mxu0
      %v3431 = vadd.f32 %v3238, %v3430
      %v3432 = vpop.f32.mrb[0].mxu0
      %v3433 = vadd.f32 %v3240, %v3432
      %v3434 = vpop.f32.mrb[0].mxu0
      %v3435 = vadd.f32 %v3242, %v3434
      %v3436 = vpop.f32.mrb[0].mxu0
      %v3437 = vadd.f32 %v3244, %v3436
      %3438 = vmatprep.mubr.bf16.mxu0 %v741
      %3439 = vmatmul.mubr.bf16.gmra.mrb[0].mxu0 %v740
      %v3440 = vpop.f32.mrb[0].mxu0
      %v3441 = vadd.f32 %v3248, %v3440
      %v3442 = vpop.f32.mrb[0].mxu0
      %v3443 = vadd.f32 %v3250, %v3442
      %v3444 = vpop.f32.mrb[0].mxu0
      %v3445 = vadd.f32 %v3252, %v3444
      %v3446 = vpop.f32.mrb[0].mxu0
      %v3447 = vadd.f32 %v3254, %v3446
      %3448 = vmatprep.mubr.bf16.mxu0 %v747
      %3449 = vmatmul.mubr.bf16.gmra.mrb[0].mxu0 %v746
      %v3450 = vpop.f32.mrb[0].mxu0
      %v3451 = vadd.f32 %v3258, %v3450
      %v3452 = vpop.f32.mrb[0].mxu0
      %v3453 = vadd.f32 %v3260, %v3452
      %v3454 = vpop.f32.mrb[0].mxu0
      %v3455 = vadd.f32 %v3262, %v3454
      %v3456 = vpop.f32.mrb[0].mxu0
      %v3457 = vadd.f32 %v3264, %v3456
      %3458 = vmatprep.mubr.bf16.mxu0 %v753
      %3459 = vmatmul.mubr.bf16.gmra.mrb[0].mxu0 %v752
      %v3460 = vpop.f32.mrb[0].mxu0
      %v3461 = vadd.f32 %v3268, %v3460
      %v3462 = vpop.f32.mrb[0].mxu0
      %v3463 = vadd.f32 %v3270, %v3462
      %v3464 = vpop.f32.mrb[0].mxu0
      %v3465 = vadd.f32 %v3272, %v3464
      %v3466 = vpop.f32.mrb[0].mxu0
      %v3467 = vadd.f32 %v3274, %v3466
      %3468 = vmatprep.mubr.bf16.mxu0 %v759
      %3469 = vmatmul.mubr.bf16.gmra.mrb[0].mxu0 %v758
      %v3470 = vpop.f32.mrb[0].mxu0
      %v3471 = vadd.f32 %v3278, %v3470
      %v3472 = vpop.f32.mrb[0].mxu0
      %v3473 = vadd.f32 %v3280, %v3472
      %v3474 = vpop.f32.mrb[0].mxu0
      %v3475 = vadd.f32 %v3282, %v3474
      %v3476 = vpop.f32.mrb[0].mxu0
      %v3477 = vadd.f32 %v3284, %v3476
      %3478 = vmatprep.mubr.bf16.mxu0 %v765
      %3479 = vmatmul.mubr.bf16.gmra.mrb[0].mxu0 %v764
      %v3480 = vpop.f32.mrb[0].mxu0
      %v3481 = vadd.f32 %v3288, %v3480
      %v3482 = vpop.f32.mrb[0].mxu0
      %v3483 = vadd.f32 %v3290, %v3482
      %v3484 = vpop.f32.mrb[0].mxu0
      %v3485 = vadd.f32 %v3292, %v3484
      %v3486 = vpop.f32.mrb[0].mxu0
      %v3487 = vadd.f32 %v3294, %v3486
      %3488 = vdwg.mxu0
      %3489 = vmatprep.subr.bf16.mxu0 %v2337
      %3490 = vmatpush1.bf16.msra.mxu0 %v2336
      %3491 = vmatprep.subr.bf16.mxu0 %v2343
      %3492 = vmatpush1.bf16.msra.mxu0 %v2342
      %3493 = vmatprep.subr.bf16.mxu0 %v2349
      %3494 = vmatpush1.bf16.msra.mxu0 %v2348
      %3495 = vmatprep.subr.bf16.mxu0 %v2355
      %3496 = vmatpush1.bf16.msra.mxu0 %v2354
      %3497 = vmatprep.subr.bf16.mxu0 %v2361
      %3498 = vmatpush1.bf16.msra.mxu0 %v2360
      %3499 = vmatprep.subr.bf16.mxu0 %v2367
      %3500 = vmatpush1.bf16.msra.mxu0 %v2366
      %3501 = vmatprep.subr.bf16.mxu0 %v2373
      %3502 = vmatpush1.bf16.msra.mxu0 %v2372
      %3503 = vmatprep.subr.bf16.mxu0 %v2379
      %3504 = vmatpush1.bf16.msra.mxu0 %v2378
      %3505 = vmatprep.subr.bf16.mxu0 %v2385
      %3506 = vmatpush1.bf16.msra.mxu0 %v2384
      %3507 = vmatprep.subr.bf16.mxu0 %v2391
      %3508 = vmatpush1.bf16.msra.mxu0 %v2390
      %3509 = vmatprep.subr.bf16.mxu0 %v2397
      %3510 = vmatpush1.bf16.msra.mxu0 %v2396
      %3511 = vmatprep.subr.bf16.mxu0 %v2403
      %3512 = vmatpush1.bf16.msra.mxu0 %v2402
      %3513 = vmatprep.subr.bf16.mxu0 %v2409
      %3514 = vmatpush1.bf16.msra.mxu0 %v2408
      %3515 = vmatprep.subr.bf16.mxu0 %v2415
      %3516 = vmatpush1.bf16.msra.mxu0 %v2414
      %3517 = vmatprep.subr.bf16.mxu0 %v2421
      %3518 = vmatpush1.bf16.msra.mxu0 %v2420
      %3519 = vmatprep.subr.bf16.mxu0 %v2427
      %3520 = vmatpush1.bf16.msra.mxu0 %v2426
      %3521 = vmatprep.mubr.bf16.mxu0 %v671
      %3522 = vmatmul.mubr.bf16.gmra.mrb[0].mxu0 %v670
      %v3523 = vpop.f32.mrb[0].mxu0
      %v3524 = vadd.f32 %v1280, %v3523
      %v3525 = vpop.f32.mrb[0].mxu0
      %v3526 = vadd.f32 %v1281, %v3525
      %v3527 = vpop.f32.mrb[0].mxu0
      %v3528 = vadd.f32 %v1286, %v3527
      %v3529 = vpop.f32.mrb[0].mxu0
      %v3530 = vadd.f32 %v1287, %v3529
      %3531 = vmatprep.mubr.bf16.mxu0 %v677
      %3532 = vmatmul.mubr.bf16.gmra.mrb[0].mxu0 %v676
      %v3533 = vpop.f32.mrb[0].mxu0
      %v3534 = vadd.f32 %v1292, %v3533
      %v3535 = vpop.f32.mrb[0].mxu0
      %v3536 = vadd.f32 %v1293, %v3535
      %v3537 = vpop.f32.mrb[0].mxu0
      %v3538 = vadd.f32 %v1298, %v3537
      %v3539 = vpop.f32.mrb[0].mxu0
      %v3540 = vadd.f32 %v1299, %v3539
      %3541 = vmatprep.mubr.bf16.mxu0 %v683
      %3542 = vmatmul.mubr.bf16.gmra.mrb[0].mxu0 %v682
      %v3543 = vpop.f32.mrb[0].mxu0
      %v3544 = vadd.f32 %v1304, %v3543
      %v3545 = vpop.f32.mrb[0].mxu0
      %v3546 = vadd.f32 %v1305, %v3545
      %v3547 = vpop.f32.mrb[0].mxu0
      %v3548 = vadd.f32 %v1310, %v3547
      %v3549 = vpop.f32.mrb[0].mxu0
      %v3550 = vadd.f32 %v1311, %v3549
      %3551 = vmatprep.mubr.bf16.mxu0 %v689
      %3552 = vmatmul.mubr.bf16.gmra.mrb[0].mxu0 %v688
      %v3553 = vpop.f32.mrb[0].mxu0
      %v3554 = vadd.f32 %v1316, %v3553
      %v3555 = vpop.f32.mrb[0].mxu0
      %v3556 = vadd.f32 %v1317, %v3555
      %v3557 = vpop.f32.mrb[0].mxu0
      %v3558 = vadd.f32 %v1322, %v3557
      %v3559 = vpop.f32.mrb[0].mxu0
      %v3560 = vadd.f32 %v1323, %v3559
      %3561 = vmatprep.mubr.bf16.mxu0 %v695
      %3562 = vmatmul.mubr.bf16.gmra.mrb[0].mxu0 %v694
      %v3563 = vpop.f32.mrb[0].mxu0
      %v3564 = vadd.f32 %v1328, %v3563
      %v3565 = vpop.f32.mrb[0].mxu0
      %v3566 = vadd.f32 %v1329, %v3565
      %v3567 = vpop.f32.mrb[0].mxu0
      %v3568 = vadd.f32 %v1334, %v3567
      %v3569 = vpop.f32.mrb[0].mxu0
      %v3570 = vadd.f32 %v1335, %v3569
      %3571 = vmatprep.mubr.bf16.mxu0 %v701
      %3572 = vmatmul.mubr.bf16.gmra.mrb[0].mxu0 %v700
      %v3573 = vpop.f32.mrb[0].mxu0
      %v3574 = vadd.f32 %v1340, %v3573
      %v3575 = vpop.f32.mrb[0].mxu0
      %v3576 = vadd.f32 %v1341, %v3575
      %v3577 = vpop.f32.mrb[0].mxu0
      %v3578 = vadd.f32 %v1346, %v3577
      %v3579 = vpop.f32.mrb[0].mxu0
      %v3580 = vadd.f32 %v1347, %v3579
      %3581 = vmatprep.mubr.bf16.mxu0 %v707
      %3582 = vmatmul.mubr.bf16.gmra.mrb[0].mxu0 %v706
      %v3583 = vpop.f32.mrb[0].mxu0
      %v3584 = vadd.f32 %v1352, %v3583
      %v3585 = vpop.f32.mrb[0].mxu0
      %v3586 = vadd.f32 %v1353, %v3585
      %v3587 = vpop.f32.mrb[0].mxu0
      %v3588 = vadd.f32 %v1358, %v3587
      %v3589 = vpop.f32.mrb[0].mxu0
      %v3590 = vadd.f32 %v1359, %v3589
      %3591 = vmatprep.mubr.bf16.mxu0 %v713
      %3592 = vmatmul.mubr.bf16.gmra.mrb[0].mxu0 %v712
      %v3593 = vpop.f32.mrb[0].mxu0
      %v3594 = vadd.f32 %v1364, %v3593
      %v3595 = vpop.f32.mrb[0].mxu0
      %v3596 = vadd.f32 %v1365, %v3595
      %v3597 = vpop.f32.mrb[0].mxu0
      %v3598 = vadd.f32 %v1370, %v3597
      %v3599 = vpop.f32.mrb[0].mxu0
      %v3600 = vadd.f32 %v1371, %v3599
      %3601 = vmatprep.mubr.bf16.mxu0 %v719
      %3602 = vmatmul.mubr.bf16.gmra.mrb[0].mxu0 %v718
      %v3603 = vpop.f32.mrb[0].mxu0
      %v3604 = vadd.f32 %v1376, %v3603
      %v3605 = vpop.f32.mrb[0].mxu0
      %v3606 = vadd.f32 %v1377, %v3605
      %v3607 = vpop.f32.mrb[0].mxu0
      %v3608 = vadd.f32 %v1382, %v3607
      %v3609 = vpop.f32.mrb[0].mxu0
      %v3610 = vadd.f32 %v1383, %v3609
      %3611 = vmatprep.mubr.bf16.mxu0 %v725
      %3612 = vmatmul.mubr.bf16.gmra.mrb[0].mxu0 %v724
      %v3613 = vpop.f32.mrb[0].mxu0
      %v3614 = vadd.f32 %v1388, %v3613
      %v3615 = vpop.f32.mrb[0].mxu0
      %v3616 = vadd.f32 %v1389, %v3615
      %v3617 = vpop.f32.mrb[0].mxu0
      %v3618 = vadd.f32 %v1394, %v3617
      %v3619 = vpop.f32.mrb[0].mxu0
      %v3620 = vadd.f32 %v1395, %v3619
      %3621 = vmatprep.mubr.bf16.mxu0 %v731
      %3622 = vmatmul.mubr.bf16.gmra.mrb[0].mxu0 %v730
      %v3623 = vpop.f32.mrb[0].mxu0
      %v3624 = vadd.f32 %v1400, %v3623
      %v3625 = vpop.f32.mrb[0].mxu0
      %v3626 = vadd.f32 %v1401, %v3625
      %v3627 = vpop.f32.mrb[0].mxu0
      %v3628 = vadd.f32 %v1406, %v3627
      %v3629 = vpop.f32.mrb[0].mxu0
      %v3630 = vadd.f32 %v1407, %v3629
      %3631 = vmatprep.mubr.bf16.mxu0 %v737
      %3632 = vmatmul.mubr.bf16.gmra.mrb[0].mxu0 %v736
      %v3633 = vpop.f32.mrb[0].mxu0
      %v3634 = vadd.f32 %v1412, %v3633
      %v3635 = vpop.f32.mrb[0].mxu0
      %v3636 = vadd.f32 %v1413, %v3635
      %v3637 = vpop.f32.mrb[0].mxu0
      %v3638 = vadd.f32 %v1418, %v3637
      %v3639 = vpop.f32.mrb[0].mxu0
      %v3640 = vadd.f32 %v1419, %v3639
      %3641 = vmatprep.mubr.bf16.mxu0 %v743
      %3642 = vmatmul.mubr.bf16.gmra.mrb[0].mxu0 %v742
      %v3643 = vpop.f32.mrb[0].mxu0
      %v3644 = vadd.f32 %v1424, %v3643
      %v3645 = vpop.f32.mrb[0].mxu0
      %v3646 = vadd.f32 %v1425, %v3645
      %v3647 = vpop.f32.mrb[0].mxu0
      %v3648 = vadd.f32 %v1430, %v3647
      %v3649 = vpop.f32.mrb[0].mxu0
      %v3650 = vadd.f32 %v1431, %v3649
      %3651 = vmatprep.mubr.bf16.mxu0 %v749
      %3652 = vmatmul.mubr.bf16.gmra.mrb[0].mxu0 %v748
      %v3653 = vpop.f32.mrb[0].mxu0
      %v3654 = vadd.f32 %v1436, %v3653
      %v3655 = vpop.f32.mrb[0].mxu0
      %v3656 = vadd.f32 %v1437, %v3655
      %v3657 = vpop.f32.mrb[0].mxu0
      %v3658 = vadd.f32 %v1442, %v3657
      %v3659 = vpop.f32.mrb[0].mxu0
      %v3660 = vadd.f32 %v1443, %v3659
      %3661 = vmatprep.mubr.bf16.mxu0 %v755
      %3662 = vmatmul.mubr.bf16.gmra.mrb[0].mxu0 %v754
      %v3663 = vpop.f32.mrb[0].mxu0
      %v3664 = vadd.f32 %v1448, %v3663
      %v3665 = vpop.f32.mrb[0].mxu0
      %v3666 = vadd.f32 %v1449, %v3665
      %v3667 = vpop.f32.mrb[0].mxu0
      %v3668 = vadd.f32 %v1454, %v3667
      %v3669 = vpop.f32.mrb[0].mxu0
      %v3670 = vadd.f32 %v1455, %v3669
      %3671 = vmatprep.mubr.bf16.mxu0 %v761
      %3672 = vmatmul.mubr.bf16.gmra.mrb[0].mxu0 %v760
      %v3673 = vpop.f32.mrb[0].mxu0
      %v3674 = vadd.f32 %v1460, %v3673
      %v3675 = vpop.f32.mrb[0].mxu0
      %v3676 = vadd.f32 %v1461, %v3675
      %v3677 = vpop.f32.mrb[0].mxu0
      %v3678 = vadd.f32 %v1466, %v3677
      %v3679 = vpop.f32.mrb[0].mxu0
      %v3680 = vadd.f32 %v1467, %v3679
      %3681 = vdwg.mxu0
      %3682 = vmatprep.subr.bf16.mxu0 %v2433
      %3683 = vmatpush1.bf16.msra.mxu0 %v2432
      %3684 = vmatprep.subr.bf16.mxu0 %v2439
      %3685 = vmatpush1.bf16.msra.mxu0 %v2438
      %3686 = vmatprep.subr.bf16.mxu0 %v2445
      %3687 = vmatpush1.bf16.msra.mxu0 %v2444
      %3688 = vmatprep.subr.bf16.mxu0 %v2451
      %3689 = vmatpush1.bf16.msra.mxu0 %v2450
      %3690 = vmatprep.subr.bf16.mxu0 %v2457
      %3691 = vmatpush1.bf16.msra.mxu0 %v2456
      %3692 = vmatprep.subr.bf16.mxu0 %v2463
      %3693 = vmatpush1.bf16.msra.mxu0 %v2462
      %3694 = vmatprep.subr.bf16.mxu0 %v2469
      %3695 = vmatpush1.bf16.msra.mxu0 %v2468
      %3696 = vmatprep.subr.bf16.mxu0 %v2475
      %3697 = vmatpush1.bf16.msra.mxu0 %v2474
      %3698 = vmatprep.subr.bf16.mxu0 %v2481
      %3699 = vmatpush1.bf16.msra.mxu0 %v2480
      %3700 = vmatprep.subr.bf16.mxu0 %v2487
      %3701 = vmatpush1.bf16.msra.mxu0 %v2486
      %3702 = vmatprep.subr.bf16.mxu0 %v2493
      %3703 = vmatpush1.bf16.msra.mxu0 %v2492
      %3704 = vmatprep.subr.bf16.mxu0 %v2499
      %3705 = vmatpush1.bf16.msra.mxu0 %v2498
      %3706 = vmatprep.subr.bf16.mxu0 %v2505
      %3707 = vmatpush1.bf16.msra.mxu0 %v2504
      %3708 = vmatprep.subr.bf16.mxu0 %v2511
      %3709 = vmatpush1.bf16.msra.mxu0 %v2510
      %3710 = vmatprep.subr.bf16.mxu0 %v2517
      %3711 = vmatpush1.bf16.msra.mxu0 %v2516
      %3712 = vmatprep.subr.bf16.mxu0 %v2523
      %3713 = vmatpush1.bf16.msra.mxu0 %v2522
      %3714 = vmatprep.mubr.bf16.mxu0 %v673
      %3715 = vmatmul.mubr.bf16.gmra.mrb[0].mxu0 %v672
      %v3716 = vpop.f32.mrb[0].mxu0
      %v3717 = vadd.f32 %v3524, %v3716
      %v3718 = vpop.f32.mrb[0].mxu0
      %v3719 = vadd.f32 %v3526, %v3718
      %v3720 = vpop.f32.mrb[0].mxu0
      %v3721 = vadd.f32 %v3528, %v3720
      %v3722 = vpop.f32.mrb[0].mxu0
      %v3723 = vadd.f32 %v3530, %v3722
      %3724 = vmatprep.mubr.bf16.mxu0 %v679
      %3725 = vmatmul.mubr.bf16.gmra.mrb[0].mxu0 %v678
      %v3726 = vpop.f32.mrb[0].mxu0
      %v3727 = vadd.f32 %v3534, %v3726
      %v3728 = vpop.f32.mrb[0].mxu0
      %v3729 = vadd.f32 %v3536, %v3728
      %v3730 = vpop.f32.mrb[0].mxu0
      %v3731 = vadd.f32 %v3538, %v3730
      %v3732 = vpop.f32.mrb[0].mxu0
      %v3733 = vadd.f32 %v3540, %v3732
      %3734 = vmatprep.mubr.bf16.mxu0 %v685
      %3735 = vmatmul.mubr.bf16.gmra.mrb[0].mxu0 %v684
      %v3736 = vpop.f32.mrb[0].mxu0
      %v3737 = vadd.f32 %v3544, %v3736
      %v3738 = vpop.f32.mrb[0].mxu0
      %v3739 = vadd.f32 %v3546, %v3738
      %v3740 = vpop.f32.mrb[0].mxu0
      %v3741 = vadd.f32 %v3548, %v3740
      %v3742 = vpop.f32.mrb[0].mxu0
      %v3743 = vadd.f32 %v3550, %v3742
      %3744 = vmatprep.mubr.bf16.mxu0 %v691
      %3745 = vmatmul.mubr.bf16.gmra.mrb[0].mxu0 %v690
      %v3746 = vpop.f32.mrb[0].mxu0
      %v3747 = vadd.f32 %v3554, %v3746
      %v3748 = vpop.f32.mrb[0].mxu0
      %v3749 = vadd.f32 %v3556, %v3748
      %v3750 = vpop.f32.mrb[0].mxu0
      %v3751 = vadd.f32 %v3558, %v3750
      %v3752 = vpop.f32.mrb[0].mxu0
      %v3753 = vadd.f32 %v3560, %v3752
      %3754 = vmatprep.mubr.bf16.mxu0 %v697
      %3755 = vmatmul.mubr.bf16.gmra.mrb[0].mxu0 %v696
      %v3756 = vpop.f32.mrb[0].mxu0
      %v3757 = vadd.f32 %v3564, %v3756
      %v3758 = vpop.f32.mrb[0].mxu0
      %v3759 = vadd.f32 %v3566, %v3758
      %v3760 = vpop.f32.mrb[0].mxu0
      %v3761 = vadd.f32 %v3568, %v3760
      %v3762 = vpop.f32.mrb[0].mxu0
      %v3763 = vadd.f32 %v3570, %v3762
      %3764 = vmatprep.mubr.bf16.mxu0 %v703
      %3765 = vmatmul.mubr.bf16.gmra.mrb[0].mxu0 %v702
      %v3766 = vpop.f32.mrb[0].mxu0
      %v3767 = vadd.f32 %v3574, %v3766
      %v3768 = vpop.f32.mrb[0].mxu0
      %v3769 = vadd.f32 %v3576, %v3768
      %v3770 = vpop.f32.mrb[0].mxu0
      %v3771 = vadd.f32 %v3578, %v3770
      %v3772 = vpop.f32.mrb[0].mxu0
      %v3773 = vadd.f32 %v3580, %v3772
      %3774 = vmatprep.mubr.bf16.mxu0 %v709
      %3775 = vmatmul.mubr.bf16.gmra.mrb[0].mxu0 %v708
      %v3776 = vpop.f32.mrb[0].mxu0
      %v3777 = vadd.f32 %v3584, %v3776
      %v3778 = vpop.f32.mrb[0].mxu0
      %v3779 = vadd.f32 %v3586, %v3778
      %v3780 = vpop.f32.mrb[0].mxu0
      %v3781 = vadd.f32 %v3588, %v3780
      %v3782 = vpop.f32.mrb[0].mxu0
      %v3783 = vadd.f32 %v3590, %v3782
      %3784 = vmatprep.mubr.bf16.mxu0 %v715
      %3785 = vmatmul.mubr.bf16.gmra.mrb[0].mxu0 %v714
      %v3786 = vpop.f32.mrb[0].mxu0
      %v3787 = vadd.f32 %v3594, %v3786
      %v3788 = vpop.f32.mrb[0].mxu0
      %v3789 = vadd.f32 %v3596, %v3788
      %v3790 = vpop.f32.mrb[0].mxu0
      %v3791 = vadd.f32 %v3598, %v3790
      %v3792 = vpop.f32.mrb[0].mxu0
      %v3793 = vadd.f32 %v3600, %v3792
      %3794 = vmatprep.mubr.bf16.mxu0 %v721
      %3795 = vmatmul.mubr.bf16.gmra.mrb[0].mxu0 %v720
      %v3796 = vpop.f32.mrb[0].mxu0
      %v3797 = vadd.f32 %v3604, %v3796
      %v3798 = vpop.f32.mrb[0].mxu0
      %v3799 = vadd.f32 %v3606, %v3798
      %v3800 = vpop.f32.mrb[0].mxu0
      %v3801 = vadd.f32 %v3608, %v3800
      %v3802 = vpop.f32.mrb[0].mxu0
      %v3803 = vadd.f32 %v3610, %v3802
      %3804 = vmatprep.mubr.bf16.mxu0 %v727
      %3805 = vmatmul.mubr.bf16.gmra.mrb[0].mxu0 %v726
      %v3806 = vpop.f32.mrb[0].mxu0
      %v3807 = vadd.f32 %v3614, %v3806
      %v3808 = vpop.f32.mrb[0].mxu0
      %v3809 = vadd.f32 %v3616, %v3808
      %v3810 = vpop.f32.mrb[0].mxu0
      %v3811 = vadd.f32 %v3618, %v3810
      %v3812 = vpop.f32.mrb[0].mxu0
      %v3813 = vadd.f32 %v3620, %v3812
      %3814 = vmatprep.mubr.bf16.mxu0 %v733
      %3815 = vmatmul.mubr.bf16.gmra.mrb[0].mxu0 %v732
      %v3816 = vpop.f32.mrb[0].mxu0
      %v3817 = vadd.f32 %v3624, %v3816
      %v3818 = vpop.f32.mrb[0].mxu0
      %v3819 = vadd.f32 %v3626, %v3818
      %v3820 = vpop.f32.mrb[0].mxu0
      %v3821 = vadd.f32 %v3628, %v3820
      %v3822 = vpop.f32.mrb[0].mxu0
      %v3823 = vadd.f32 %v3630, %v3822
      %3824 = vmatprep.mubr.bf16.mxu0 %v739
      %3825 = vmatmul.mubr.bf16.gmra.mrb[0].mxu0 %v738
      %v3826 = vpop.f32.mrb[0].mxu0
      %v3827 = vadd.f32 %v3634, %v3826
      %v3828 = vpop.f32.mrb[0].mxu0
      %v3829 = vadd.f32 %v3636, %v3828
      %v3830 = vpop.f32.mrb[0].mxu0
      %v3831 = vadd.f32 %v3638, %v3830
      %v3832 = vpop.f32.mrb[0].mxu0
      %v3833 = vadd.f32 %v3640, %v3832
      %3834 = vmatprep.mubr.bf16.mxu0 %v745
      %3835 = vmatmul.mubr.bf16.gmra.mrb[0].mxu0 %v744
      %v3836 = vpop.f32.mrb[0].mxu0
      %v3837 = vadd.f32 %v3644, %v3836
      %v3838 = vpop.f32.mrb[0].mxu0
      %v3839 = vadd.f32 %v3646, %v3838
      %v3840 = vpop.f32.mrb[0].mxu0
      %v3841 = vadd.f32 %v3648, %v3840
      %v3842 = vpop.f32.mrb[0].mxu0
      %v3843 = vadd.f32 %v3650, %v3842
      %3844 = vmatprep.mubr.bf16.mxu0 %v751
      %3845 = vmatmul.mubr.bf16.gmra.mrb[0].mxu0 %v750
      %v3846 = vpop.f32.mrb[0].mxu0
      %v3847 = vadd.f32 %v3654, %v3846
      %v3848 = vpop.f32.mrb[0].mxu0
      %v3849 = vadd.f32 %v3656, %v3848
      %v3850 = vpop.f32.mrb[0].mxu0
      %v3851 = vadd.f32 %v3658, %v3850
      %v3852 = vpop.f32.mrb[0].mxu0
      %v3853 = vadd.f32 %v3660, %v3852
      %3854 = vmatprep.mubr.bf16.mxu0 %v757
      %3855 = vmatmul.mubr.bf16.gmra.mrb[0].mxu0 %v756
      %v3856 = vpop.f32.mrb[0].mxu0
      %v3857 = vadd.f32 %v3664, %v3856
      %v3858 = vpop.f32.mrb[0].mxu0
      %v3859 = vadd.f32 %v3666, %v3858
      %v3860 = vpop.f32.mrb[0].mxu0
      %v3861 = vadd.f32 %v3668, %v3860
      %v3862 = vpop.f32.mrb[0].mxu0
      %v3863 = vadd.f32 %v3670, %v3862
      %3864 = vmatprep.mubr.bf16.mxu0 %v763
      %3865 = vmatmul.mubr.bf16.gmra.mrb[0].mxu0 %v762
      %v3866 = vpop.f32.mrb[0].mxu0
      %v3867 = vadd.f32 %v3674, %v3866
      %v3868 = vpop.f32.mrb[0].mxu0
      %v3869 = vadd.f32 %v3676, %v3868
      %v3870 = vpop.f32.mrb[0].mxu0
      %v3871 = vadd.f32 %v3678, %v3870
      %v3872 = vpop.f32.mrb[0].mxu0
      %v3873 = vadd.f32 %v3680, %v3872
      %3874 = vdwg.mxu0
      %3875 = vmatprep.subr.bf16.mxu0 %v2529
      %3876 = vmatpush1.bf16.msra.mxu0 %v2528
      %3877 = vmatprep.subr.bf16.mxu0 %v2535
      %3878 = vmatpush1.bf16.msra.mxu0 %v2534
      %3879 = vmatprep.subr.bf16.mxu0 %v2541
      %3880 = vmatpush1.bf16.msra.mxu0 %v2540
      %3881 = vmatprep.subr.bf16.mxu0 %v2547
      %3882 = vmatpush1.bf16.msra.mxu0 %v2546
      %3883 = vmatprep.subr.bf16.mxu0 %v2553
      %3884 = vmatpush1.bf16.msra.mxu0 %v2552
      %3885 = vmatprep.subr.bf16.mxu0 %v2559
      %3886 = vmatpush1.bf16.msra.mxu0 %v2558
      %3887 = vmatprep.subr.bf16.mxu0 %v2565
      %3888 = vmatpush1.bf16.msra.mxu0 %v2564
      %3889 = vmatprep.subr.bf16.mxu0 %v2571
      %3890 = vmatpush1.bf16.msra.mxu0 %v2570
      %3891 = vmatprep.subr.bf16.mxu0 %v2577
      %3892 = vmatpush1.bf16.msra.mxu0 %v2576
      %3893 = vmatprep.subr.bf16.mxu0 %v2583
      %3894 = vmatpush1.bf16.msra.mxu0 %v2582
      %3895 = vmatprep.subr.bf16.mxu0 %v2589
      %3896 = vmatpush1.bf16.msra.mxu0 %v2588
      %3897 = vmatprep.subr.bf16.mxu0 %v2595
      %3898 = vmatpush1.bf16.msra.mxu0 %v2594
      %3899 = vmatprep.subr.bf16.mxu0 %v2601
      %3900 = vmatpush1.bf16.msra.mxu0 %v2600
      %3901 = vmatprep.subr.bf16.mxu0 %v2607
      %3902 = vmatpush1.bf16.msra.mxu0 %v2606
      %3903 = vmatprep.subr.bf16.mxu0 %v2613
      %3904 = vmatpush1.bf16.msra.mxu0 %v2612
      %3905 = vmatprep.subr.bf16.mxu0 %v2619
      %3906 = vmatpush1.bf16.msra.mxu0 %v2618
      %3907 = vmatprep.mubr.bf16.mxu0 %v675
      %3908 = vmatmul.mubr.bf16.gmra.mrb[0].mxu0 %v674
      %v3909 = vpop.f32.mrb[0].mxu0
      %v3910 = vadd.f32 %v3717, %v3909
      %v3911 = vpop.f32.mrb[0].mxu0
      %v3912 = vadd.f32 %v3719, %v3911
      %v3913 = vpop.f32.mrb[0].mxu0
      %v3914 = vadd.f32 %v3721, %v3913
      %v3915 = vpop.f32.mrb[0].mxu0
      %v3916 = vadd.f32 %v3723, %v3915
      %3917 = vmatprep.mubr.bf16.mxu0 %v681
      %3918 = vmatmul.mubr.bf16.gmra.mrb[0].mxu0 %v680
      %v3919 = vpop.f32.mrb[0].mxu0
      %v3920 = vadd.f32 %v3727, %v3919
      %v3921 = vpop.f32.mrb[0].mxu0
      %v3922 = vadd.f32 %v3729, %v3921
      %v3923 = vpop.f32.mrb[0].mxu0
      %v3924 = vadd.f32 %v3731, %v3923
      %v3925 = vpop.f32.mrb[0].mxu0
      %v3926 = vadd.f32 %v3733, %v3925
      %3927 = vmatprep.mubr.bf16.mxu0 %v687
      %3928 = vmatmul.mubr.bf16.gmra.mrb[0].mxu0 %v686
      %v3929 = vpop.f32.mrb[0].mxu0
      %v3930 = vadd.f32 %v3737, %v3929
      %v3931 = vpop.f32.mrb[0].mxu0
      %v3932 = vadd.f32 %v3739, %v3931
      %v3933 = vpop.f32.mrb[0].mxu0
      %v3934 = vadd.f32 %v3741, %v3933
      %v3935 = vpop.f32.mrb[0].mxu0
      %v3936 = vadd.f32 %v3743, %v3935
      %3937 = vmatprep.mubr.bf16.mxu0 %v693
      %3938 = vmatmul.mubr.bf16.gmra.mrb[0].mxu0 %v692
      %v3939 = vpop.f32.mrb[0].mxu0
      %v3940 = vadd.f32 %v3747, %v3939
      %v3941 = vpop.f32.mrb[0].mxu0
      %v3942 = vadd.f32 %v3749, %v3941
      %v3943 = vpop.f32.mrb[0].mxu0
      %v3944 = vadd.f32 %v3751, %v3943
      %v3945 = vpop.f32.mrb[0].mxu0
      %v3946 = vadd.f32 %v3753, %v3945
      %3947 = vmatprep.mubr.bf16.mxu0 %v699
      %3948 = vmatmul.mubr.bf16.gmra.mrb[0].mxu0 %v698
      %v3949 = vpop.f32.mrb[0].mxu0
      %v3950 = vadd.f32 %v3757, %v3949
      %v3951 = vpop.f32.mrb[0].mxu0
      %v3952 = vadd.f32 %v3759, %v3951
      %v3953 = vpop.f32.mrb[0].mxu0
      %v3954 = vadd.f32 %v3761, %v3953
      %v3955 = vpop.f32.mrb[0].mxu0
      %v3956 = vadd.f32 %v3763, %v3955
      %3957 = vmatprep.mubr.bf16.mxu0 %v705
      %3958 = vmatmul.mubr.bf16.gmra.mrb[0].mxu0 %v704
      %v3959 = vpop.f32.mrb[0].mxu0
      %v3960 = vadd.f32 %v3767, %v3959
      %v3961 = vpop.f32.mrb[0].mxu0
      %v3962 = vadd.f32 %v3769, %v3961
      %v3963 = vpop.f32.mrb[0].mxu0
      %v3964 = vadd.f32 %v3771, %v3963
      %v3965 = vpop.f32.mrb[0].mxu0
      %v3966 = vadd.f32 %v3773, %v3965
      %3967 = vmatprep.mubr.bf16.mxu0 %v711
      %3968 = vmatmul.mubr.bf16.gmra.mrb[0].mxu0 %v710
      %v3969 = vpop.f32.mrb[0].mxu0
      %v3970 = vadd.f32 %v3777, %v3969
      %v3971 = vpop.f32.mrb[0].mxu0
      %v3972 = vadd.f32 %v3779, %v3971
      %v3973 = vpop.f32.mrb[0].mxu0
      %v3974 = vadd.f32 %v3781, %v3973
      %v3975 = vpop.f32.mrb[0].mxu0
      %v3976 = vadd.f32 %v3783, %v3975
      %3977 = vmatprep.mubr.bf16.mxu0 %v717
      %3978 = vmatmul.mubr.bf16.gmra.mrb[0].mxu0 %v716
      %v3979 = vpop.f32.mrb[0].mxu0
      %v3980 = vadd.f32 %v3787, %v3979
      %v3981 = vpop.f32.mrb[0].mxu0
      %v3982 = vadd.f32 %v3789, %v3981
      %v3983 = vpop.f32.mrb[0].mxu0
      %v3984 = vadd.f32 %v3791, %v3983
      %v3985 = vpop.f32.mrb[0].mxu0
      %v3986 = vadd.f32 %v3793, %v3985
      %3987 = vmatprep.mubr.bf16.mxu0 %v723
      %3988 = vmatmul.mubr.bf16.gmra.mrb[0].mxu0 %v722
      %v3989 = vpop.f32.mrb[0].mxu0
      %v3990 = vadd.f32 %v3797, %v3989
      %v3991 = vpop.f32.mrb[0].mxu0
      %v3992 = vadd.f32 %v3799, %v3991
      %v3993 = vpop.f32.mrb[0].mxu0
      %v3994 = vadd.f32 %v3801, %v3993
      %v3995 = vpop.f32.mrb[0].mxu0
      %v3996 = vadd.f32 %v3803, %v3995
      %3997 = vmatprep.mubr.bf16.mxu0 %v729
      %3998 = vmatmul.mubr.bf16.gmra.mrb[0].mxu0 %v728
      %v3999 = vpop.f32.mrb[0].mxu0
      %v4000 = vadd.f32 %v3807, %v3999
      %v4001 = vpop.f32.mrb[0].mxu0
      %v4002 = vadd.f32 %v3809, %v4001
      %v4003 = vpop.f32.mrb[0].mxu0
      %v4004 = vadd.f32 %v3811, %v4003
      %v4005 = vpop.f32.mrb[0].mxu0
      %v4006 = vadd.f32 %v3813, %v4005
      %4007 = vmatprep.mubr.bf16.mxu0 %v735
      %4008 = vmatmul.mubr.bf16.gmra.mrb[0].mxu0 %v734
      %v4009 = vpop.f32.mrb[0].mxu0
      %v4010 = vadd.f32 %v3817, %v4009
      %v4011 = vpop.f32.mrb[0].mxu0
      %v4012 = vadd.f32 %v3819, %v4011
      %v4013 = vpop.f32.mrb[0].mxu0
      %v4014 = vadd.f32 %v3821, %v4013
      %v4015 = vpop.f32.mrb[0].mxu0
      %v4016 = vadd.f32 %v3823, %v4015
      %4017 = vmatprep.mubr.bf16.mxu0 %v741
      %4018 = vmatmul.mubr.bf16.gmra.mrb[0].mxu0 %v740
      %v4019 = vpop.f32.mrb[0].mxu0
      %v4020 = vadd.f32 %v3827, %v4019
      %v4021 = vpop.f32.mrb[0].mxu0
      %v4022 = vadd.f32 %v3829, %v4021
      %v4023 = vpop.f32.mrb[0].mxu0
      %v4024 = vadd.f32 %v3831, %v4023
      %v4025 = vpop.f32.mrb[0].mxu0
      %v4026 = vadd.f32 %v3833, %v4025
      %4027 = vmatprep.mubr.bf16.mxu0 %v747
      %4028 = vmatmul.mubr.bf16.gmra.mrb[0].mxu0 %v746
      %v4029 = vpop.f32.mrb[0].mxu0
      %v4030 = vadd.f32 %v3837, %v4029
      %v4031 = vpop.f32.mrb[0].mxu0
      %v4032 = vadd.f32 %v3839, %v4031
      %v4033 = vpop.f32.mrb[0].mxu0
      %v4034 = vadd.f32 %v3841, %v4033
      %v4035 = vpop.f32.mrb[0].mxu0
      %v4036 = vadd.f32 %v3843, %v4035
      %4037 = vmatprep.mubr.bf16.mxu0 %v753
      %4038 = vmatmul.mubr.bf16.gmra.mrb[0].mxu0 %v752
      %v4039 = vpop.f32.mrb[0].mxu0
      %v4040 = vadd.f32 %v3847, %v4039
      %v4041 = vpop.f32.mrb[0].mxu0
      %v4042 = vadd.f32 %v3849, %v4041
      %v4043 = vpop.f32.mrb[0].mxu0
      %v4044 = vadd.f32 %v3851, %v4043
      %v4045 = vpop.f32.mrb[0].mxu0
      %v4046 = vadd.f32 %v3853, %v4045
      %4047 = vmatprep.mubr.bf16.mxu0 %v759
      %4048 = vmatmul.mubr.bf16.gmra.mrb[0].mxu0 %v758
      %v4049 = vpop.f32.mrb[0].mxu0
      %v4050 = vadd.f32 %v3857, %v4049
      %v4051 = vpop.f32.mrb[0].mxu0
      %v4052 = vadd.f32 %v3859, %v4051
      %v4053 = vpop.f32.mrb[0].mxu0
      %v4054 = vadd.f32 %v3861, %v4053
      %v4055 = vpop.f32.mrb[0].mxu0
      %v4056 = vadd.f32 %v3863, %v4055
      %4057 = vmatprep.mubr.bf16.mxu0 %v765
      %4058 = vmatmul.mubr.bf16.gmra.mrb[0].mxu0 %v764
      %v4059 = vpop.f32.mrb[0].mxu0
      %v4060 = vadd.f32 %v3867, %v4059
      %v4061 = vpop.f32.mrb[0].mxu0
      %v4062 = vadd.f32 %v3869, %v4061
      %v4063 = vpop.f32.mrb[0].mxu0
      %v4064 = vadd.f32 %v3871, %v4063
      %v4065 = vpop.f32.mrb[0].mxu0
      %v4066 = vadd.f32 %v3873, %v4065
      %4067 = vdwg.mxu0
      %4068 = vmatprep.subr.bf16.mxu0 %v2339
      %4069 = vmatpush1.bf16.msra.mxu0 %v2338
      %4070 = vmatprep.subr.bf16.mxu0 %v2345
      %4071 = vmatpush1.bf16.msra.mxu0 %v2344
      %4072 = vmatprep.subr.bf16.mxu0 %v2351
      %4073 = vmatpush1.bf16.msra.mxu0 %v2350
      %4074 = vmatprep.subr.bf16.mxu0 %v2357
      %4075 = vmatpush1.bf16.msra.mxu0 %v2356
      %4076 = vmatprep.subr.bf16.mxu0 %v2363
      %4077 = vmatpush1.bf16.msra.mxu0 %v2362
      %4078 = vmatprep.subr.bf16.mxu0 %v2369
      %4079 = vmatpush1.bf16.msra.mxu0 %v2368
      %4080 = vmatprep.subr.bf16.mxu0 %v2375
      %4081 = vmatpush1.bf16.msra.mxu0 %v2374
      %4082 = vmatprep.subr.bf16.mxu0 %v2381
      %4083 = vmatpush1.bf16.msra.mxu0 %v2380
      %4084 = vmatprep.subr.bf16.mxu0 %v2387
      %4085 = vmatpush1.bf16.msra.mxu0 %v2386
      %4086 = vmatprep.subr.bf16.mxu0 %v2393
      %4087 = vmatpush1.bf16.msra.mxu0 %v2392
      %4088 = vmatprep.subr.bf16.mxu0 %v2399
      %4089 = vmatpush1.bf16.msra.mxu0 %v2398
      %4090 = vmatprep.subr.bf16.mxu0 %v2405
      %4091 = vmatpush1.bf16.msra.mxu0 %v2404
      %4092 = vmatprep.subr.bf16.mxu0 %v2411
      %4093 = vmatpush1.bf16.msra.mxu0 %v2410
      %4094 = vmatprep.subr.bf16.mxu0 %v2417
      %4095 = vmatpush1.bf16.msra.mxu0 %v2416
      %4096 = vmatprep.subr.bf16.mxu0 %v2423
      %4097 = vmatpush1.bf16.msra.mxu0 %v2422
      %4098 = vmatprep.subr.bf16.mxu0 %v2429
      %4099 = vmatpush1.bf16.msra.mxu0 %v2428
      %4100 = vmatprep.mubr.bf16.mxu0 %v671
      %4101 = vmatmul.mubr.bf16.gmra.mrb[0].mxu0 %v670
      %v4102 = vpop.f32.mrb[0].mxu0
      %v4103 = vadd.f32 %v1282, %v4102
      %v4104 = vpop.f32.mrb[0].mxu0
      %v4105 = vadd.f32 %v1283, %v4104
      %v4106 = vpop.f32.mrb[0].mxu0
      %v4107 = vadd.f32 %v1288, %v4106
      %v4108 = vpop.f32.mrb[0].mxu0
      %v4109 = vadd.f32 %v1289, %v4108
      %4110 = vmatprep.mubr.bf16.mxu0 %v677
      %4111 = vmatmul.mubr.bf16.gmra.mrb[0].mxu0 %v676
      %v4112 = vpop.f32.mrb[0].mxu0
      %v4113 = vadd.f32 %v1294, %v4112
      %v4114 = vpop.f32.mrb[0].mxu0
      %v4115 = vadd.f32 %v1295, %v4114
      %v4116 = vpop.f32.mrb[0].mxu0
      %v4117 = vadd.f32 %v1300, %v4116
      %v4118 = vpop.f32.mrb[0].mxu0
      %v4119 = vadd.f32 %v1301, %v4118
      %4120 = vmatprep.mubr.bf16.mxu0 %v683
      %4121 = vmatmul.mubr.bf16.gmra.mrb[0].mxu0 %v682
      %v4122 = vpop.f32.mrb[0].mxu0
      %v4123 = vadd.f32 %v1306, %v4122
      %v4124 = vpop.f32.mrb[0].mxu0
      %v4125 = vadd.f32 %v1307, %v4124
      %v4126 = vpop.f32.mrb[0].mxu0
      %v4127 = vadd.f32 %v1312, %v4126
      %v4128 = vpop.f32.mrb[0].mxu0
      %v4129 = vadd.f32 %v1313, %v4128
      %4130 = vmatprep.mubr.bf16.mxu0 %v689
      %4131 = vmatmul.mubr.bf16.gmra.mrb[0].mxu0 %v688
      %v4132 = vpop.f32.mrb[0].mxu0
      %v4133 = vadd.f32 %v1318, %v4132
      %v4134 = vpop.f32.mrb[0].mxu0
      %v4135 = vadd.f32 %v1319, %v4134
      %v4136 = vpop.f32.mrb[0].mxu0
      %v4137 = vadd.f32 %v1324, %v4136
      %v4138 = vpop.f32.mrb[0].mxu0
      %v4139 = vadd.f32 %v1325, %v4138
      %4140 = vmatprep.mubr.bf16.mxu0 %v695
      %4141 = vmatmul.mubr.bf16.gmra.mrb[0].mxu0 %v694
      %v4142 = vpop.f32.mrb[0].mxu0
      %v4143 = vadd.f32 %v1330, %v4142
      %v4144 = vpop.f32.mrb[0].mxu0
      %v4145 = vadd.f32 %v1331, %v4144
      %v4146 = vpop.f32.mrb[0].mxu0
      %v4147 = vadd.f32 %v1336, %v4146
      %v4148 = vpop.f32.mrb[0].mxu0
      %v4149 = vadd.f32 %v1337, %v4148
      %4150 = vmatprep.mubr.bf16.mxu0 %v701
      %4151 = vmatmul.mubr.bf16.gmra.mrb[0].mxu0 %v700
      %v4152 = vpop.f32.mrb[0].mxu0
      %v4153 = vadd.f32 %v1342, %v4152
      %v4154 = vpop.f32.mrb[0].mxu0
      %v4155 = vadd.f32 %v1343, %v4154
      %v4156 = vpop.f32.mrb[0].mxu0
      %v4157 = vadd.f32 %v1348, %v4156
      %v4158 = vpop.f32.mrb[0].mxu0
      %v4159 = vadd.f32 %v1349, %v4158
      %4160 = vmatprep.mubr.bf16.mxu0 %v707
      %4161 = vmatmul.mubr.bf16.gmra.mrb[0].mxu0 %v706
      %v4162 = vpop.f32.mrb[0].mxu0
      %v4163 = vadd.f32 %v1354, %v4162
      %v4164 = vpop.f32.mrb[0].mxu0
      %v4165 = vadd.f32 %v1355, %v4164
      %v4166 = vpop.f32.mrb[0].mxu0
      %v4167 = vadd.f32 %v1360, %v4166
      %v4168 = vpop.f32.mrb[0].mxu0
      %v4169 = vadd.f32 %v1361, %v4168
      %4170 = vmatprep.mubr.bf16.mxu0 %v713
      %4171 = vmatmul.mubr.bf16.gmra.mrb[0].mxu0 %v712
      %v4172 = vpop.f32.mrb[0].mxu0
      %v4173 = vadd.f32 %v1366, %v4172
      %v4174 = vpop.f32.mrb[0].mxu0
      %v4175 = vadd.f32 %v1367, %v4174
      %v4176 = vpop.f32.mrb[0].mxu0
      %v4177 = vadd.f32 %v1372, %v4176
      %v4178 = vpop.f32.mrb[0].mxu0
      %v4179 = vadd.f32 %v1373, %v4178
      %4180 = vmatprep.mubr.bf16.mxu0 %v719
      %4181 = vmatmul.mubr.bf16.gmra.mrb[0].mxu0 %v718
      %v4182 = vpop.f32.mrb[0].mxu0
      %v4183 = vadd.f32 %v1378, %v4182
      %v4184 = vpop.f32.mrb[0].mxu0
      %v4185 = vadd.f32 %v1379, %v4184
      %v4186 = vpop.f32.mrb[0].mxu0
      %v4187 = vadd.f32 %v1384, %v4186
      %v4188 = vpop.f32.mrb[0].mxu0
      %v4189 = vadd.f32 %v1385, %v4188
      %4190 = vmatprep.mubr.bf16.mxu0 %v725
      %4191 = vmatmul.mubr.bf16.gmra.mrb[0].mxu0 %v724
      %v4192 = vpop.f32.mrb[0].mxu0
      %v4193 = vadd.f32 %v1390, %v4192
      %v4194 = vpop.f32.mrb[0].mxu0
      %v4195 = vadd.f32 %v1391, %v4194
      %v4196 = vpop.f32.mrb[0].mxu0
      %v4197 = vadd.f32 %v1396, %v4196
      %v4198 = vpop.f32.mrb[0].mxu0
      %v4199 = vadd.f32 %v1397, %v4198
      %4200 = vmatprep.mubr.bf16.mxu0 %v731
      %4201 = vmatmul.mubr.bf16.gmra.mrb[0].mxu0 %v730
      %v4202 = vpop.f32.mrb[0].mxu0
      %v4203 = vadd.f32 %v1402, %v4202
      %v4204 = vpop.f32.mrb[0].mxu0
      %v4205 = vadd.f32 %v1403, %v4204
      %v4206 = vpop.f32.mrb[0].mxu0
      %v4207 = vadd.f32 %v1408, %v4206
      %v4208 = vpop.f32.mrb[0].mxu0
      %v4209 = vadd.f32 %v1409, %v4208
      %4210 = vmatprep.mubr.bf16.mxu0 %v737
      %4211 = vmatmul.mubr.bf16.gmra.mrb[0].mxu0 %v736
      %v4212 = vpop.f32.mrb[0].mxu0
      %v4213 = vadd.f32 %v1414, %v4212
      %v4214 = vpop.f32.mrb[0].mxu0
      %v4215 = vadd.f32 %v1415, %v4214
      %v4216 = vpop.f32.mrb[0].mxu0
      %v4217 = vadd.f32 %v1420, %v4216
      %v4218 = vpop.f32.mrb[0].mxu0
      %v4219 = vadd.f32 %v1421, %v4218
      %4220 = vmatprep.mubr.bf16.mxu0 %v743
      %4221 = vmatmul.mubr.bf16.gmra.mrb[0].mxu0 %v742
      %v4222 = vpop.f32.mrb[0].mxu0
      %v4223 = vadd.f32 %v1426, %v4222
      %v4224 = vpop.f32.mrb[0].mxu0
      %v4225 = vadd.f32 %v1427, %v4224
      %v4226 = vpop.f32.mrb[0].mxu0
      %v4227 = vadd.f32 %v1432, %v4226
      %v4228 = vpop.f32.mrb[0].mxu0
      %v4229 = vadd.f32 %v1433, %v4228
      %4230 = vmatprep.mubr.bf16.mxu0 %v749
      %4231 = vmatmul.mubr.bf16.gmra.mrb[0].mxu0 %v748
      %v4232 = vpop.f32.mrb[0].mxu0
      %v4233 = vadd.f32 %v1438, %v4232
      %v4234 = vpop.f32.mrb[0].mxu0
      %v4235 = vadd.f32 %v1439, %v4234
      %v4236 = vpop.f32.mrb[0].mxu0
      %v4237 = vadd.f32 %v1444, %v4236
      %v4238 = vpop.f32.mrb[0].mxu0
      %v4239 = vadd.f32 %v1445, %v4238
      %4240 = vmatprep.mubr.bf16.mxu0 %v755
      %4241 = vmatmul.mubr.bf16.gmra.mrb[0].mxu0 %v754
      %v4242 = vpop.f32.mrb[0].mxu0
      %v4243 = vadd.f32 %v1450, %v4242
      %v4244 = vpop.f32.mrb[0].mxu0
      %v4245 = vadd.f32 %v1451, %v4244
      %v4246 = vpop.f32.mrb[0].mxu0
      %v4247 = vadd.f32 %v1456, %v4246
      %v4248 = vpop.f32.mrb[0].mxu0
      %v4249 = vadd.f32 %v1457, %v4248
      %4250 = vmatprep.mubr.bf16.mxu0 %v761
      %4251 = vmatmul.mubr.bf16.gmra.mrb[0].mxu0 %v760
      %v4252 = vpop.f32.mrb[0].mxu0
      %v4253 = vadd.f32 %v1462, %v4252
      %v4254 = vpop.f32.mrb[0].mxu0
      %v4255 = vadd.f32 %v1463, %v4254
      %v4256 = vpop.f32.mrb[0].mxu0
      %v4257 = vadd.f32 %v1468, %v4256
      %v4258 = vpop.f32.mrb[0].mxu0
      %v4259 = vadd.f32 %v1469, %v4258
      %4260 = vdwg.mxu0
      %4261 = vmatprep.subr.bf16.mxu0 %v2435
      %4262 = vmatpush1.bf16.msra.mxu0 %v2434
      %4263 = vmatprep.subr.bf16.mxu0 %v2441
      %4264 = vmatpush1.bf16.msra.mxu0 %v2440
      %4265 = vmatprep.subr.bf16.mxu0 %v2447
      %4266 = vmatpush1.bf16.msra.mxu0 %v2446
      %4267 = vmatprep.subr.bf16.mxu0 %v2453
      %4268 = vmatpush1.bf16.msra.mxu0 %v2452
      %4269 = vmatprep.subr.bf16.mxu0 %v2459
      %4270 = vmatpush1.bf16.msra.mxu0 %v2458
      %4271 = vmatprep.subr.bf16.mxu0 %v2465
      %4272 = vmatpush1.bf16.msra.mxu0 %v2464
      %4273 = vmatprep.subr.bf16.mxu0 %v2471
      %4274 = vmatpush1.bf16.msra.mxu0 %v2470
      %4275 = vmatprep.subr.bf16.mxu0 %v2477
      %4276 = vmatpush1.bf16.msra.mxu0 %v2476
      %4277 = vmatprep.subr.bf16.mxu0 %v2483
      %4278 = vmatpush1.bf16.msra.mxu0 %v2482
      %4279 = vmatprep.subr.bf16.mxu0 %v2489
      %4280 = vmatpush1.bf16.msra.mxu0 %v2488
      %4281 = vmatprep.subr.bf16.mxu0 %v2495
      %4282 = vmatpush1.bf16.msra.mxu0 %v2494
      %4283 = vmatprep.subr.bf16.mxu0 %v2501
      %4284 = vmatpush1.bf16.msra.mxu0 %v2500
      %4285 = vmatprep.subr.bf16.mxu0 %v2507
      %4286 = vmatpush1.bf16.msra.mxu0 %v2506
      %4287 = vmatprep.subr.bf16.mxu0 %v2513
      %4288 = vmatpush1.bf16.msra.mxu0 %v2512
      %4289 = vmatprep.subr.bf16.mxu0 %v2519
      %4290 = vmatpush1.bf16.msra.mxu0 %v2518
      %4291 = vmatprep.subr.bf16.mxu0 %v2525
      %4292 = vmatpush1.bf16.msra.mxu0 %v2524
      %4293 = vmatprep.mubr.bf16.mxu0 %v673
      %4294 = vmatmul.mubr.bf16.gmra.mrb[0].mxu0 %v672
      %v4295 = vpop.f32.mrb[0].mxu0
      %v4296 = vadd.f32 %v4103, %v4295
      %v4297 = vpop.f32.mrb[0].mxu0
      %v4298 = vadd.f32 %v4105, %v4297
      %v4299 = vpop.f32.mrb[0].mxu0
      %v4300 = vadd.f32 %v4107, %v4299
      %v4301 = vpop.f32.mrb[0].mxu0
      %v4302 = vadd.f32 %v4109, %v4301
      %4303 = vmatprep.mubr.bf16.mxu0 %v679
      %4304 = vmatmul.mubr.bf16.gmra.mrb[0].mxu0 %v678
      %v4305 = vpop.f32.mrb[0].mxu0
      %v4306 = vadd.f32 %v4113, %v4305
      %v4307 = vpop.f32.mrb[0].mxu0
      %v4308 = vadd.f32 %v4115, %v4307
      %v4309 = vpop.f32.mrb[0].mxu0
      %v4310 = vadd.f32 %v4117, %v4309
      %v4311 = vpop.f32.mrb[0].mxu0
      %v4312 = vadd.f32 %v4119, %v4311
      %4313 = vmatprep.mubr.bf16.mxu0 %v685
      %4314 = vmatmul.mubr.bf16.gmra.mrb[0].mxu0 %v684
      %v4315 = vpop.f32.mrb[0].mxu0
      %v4316 = vadd.f32 %v4123, %v4315
      %v4317 = vpop.f32.mrb[0].mxu0
      %v4318 = vadd.f32 %v4125, %v4317
      %v4319 = vpop.f32.mrb[0].mxu0
      %v4320 = vadd.f32 %v4127, %v4319
      %v4321 = vpop.f32.mrb[0].mxu0
      %v4322 = vadd.f32 %v4129, %v4321
      %4323 = vmatprep.mubr.bf16.mxu0 %v691
      %4324 = vmatmul.mubr.bf16.gmra.mrb[0].mxu0 %v690
      %v4325 = vpop.f32.mrb[0].mxu0
      %v4326 = vadd.f32 %v4133, %v4325
      %v4327 = vpop.f32.mrb[0].mxu0
      %v4328 = vadd.f32 %v4135, %v4327
      %v4329 = vpop.f32.mrb[0].mxu0
      %v4330 = vadd.f32 %v4137, %v4329
      %v4331 = vpop.f32.mrb[0].mxu0
      %v4332 = vadd.f32 %v4139, %v4331
      %4333 = vmatprep.mubr.bf16.mxu0 %v697
      %4334 = vmatmul.mubr.bf16.gmra.mrb[0].mxu0 %v696
      %v4335 = vpop.f32.mrb[0].mxu0
      %v4336 = vadd.f32 %v4143, %v4335
      %v4337 = vpop.f32.mrb[0].mxu0
      %v4338 = vadd.f32 %v4145, %v4337
      %v4339 = vpop.f32.mrb[0].mxu0
      %v4340 = vadd.f32 %v4147, %v4339
      %v4341 = vpop.f32.mrb[0].mxu0
      %v4342 = vadd.f32 %v4149, %v4341
      %4343 = vmatprep.mubr.bf16.mxu0 %v703
      %4344 = vmatmul.mubr.bf16.gmra.mrb[0].mxu0 %v702
      %v4345 = vpop.f32.mrb[0].mxu0
      %v4346 = vadd.f32 %v4153, %v4345
      %v4347 = vpop.f32.mrb[0].mxu0
      %v4348 = vadd.f32 %v4155, %v4347
      %v4349 = vpop.f32.mrb[0].mxu0
      %v4350 = vadd.f32 %v4157, %v4349
      %v4351 = vpop.f32.mrb[0].mxu0
      %v4352 = vadd.f32 %v4159, %v4351
      %4353 = vmatprep.mubr.bf16.mxu0 %v709
      %4354 = vmatmul.mubr.bf16.gmra.mrb[0].mxu0 %v708
      %v4355 = vpop.f32.mrb[0].mxu0
      %v4356 = vadd.f32 %v4163, %v4355
      %v4357 = vpop.f32.mrb[0].mxu0
      %v4358 = vadd.f32 %v4165, %v4357
      %v4359 = vpop.f32.mrb[0].mxu0
      %v4360 = vadd.f32 %v4167, %v4359
      %v4361 = vpop.f32.mrb[0].mxu0
      %v4362 = vadd.f32 %v4169, %v4361
      %4363 = vmatprep.mubr.bf16.mxu0 %v715
      %4364 = vmatmul.mubr.bf16.gmra.mrb[0].mxu0 %v714
      %v4365 = vpop.f32.mrb[0].mxu0
      %v4366 = vadd.f32 %v4173, %v4365
      %v4367 = vpop.f32.mrb[0].mxu0
      %v4368 = vadd.f32 %v4175, %v4367
      %v4369 = vpop.f32.mrb[0].mxu0
      %v4370 = vadd.f32 %v4177, %v4369
      %v4371 = vpop.f32.mrb[0].mxu0
      %v4372 = vadd.f32 %v4179, %v4371
      %4373 = vmatprep.mubr.bf16.mxu0 %v721
      %4374 = vmatmul.mubr.bf16.gmra.mrb[0].mxu0 %v720
      %v4375 = vpop.f32.mrb[0].mxu0
      %v4376 = vadd.f32 %v4183, %v4375
      %v4377 = vpop.f32.mrb[0].mxu0
      %v4378 = vadd.f32 %v4185, %v4377
      %v4379 = vpop.f32.mrb[0].mxu0
      %v4380 = vadd.f32 %v4187, %v4379
      %v4381 = vpop.f32.mrb[0].mxu0
      %v4382 = vadd.f32 %v4189, %v4381
      %4383 = vmatprep.mubr.bf16.mxu0 %v727
      %4384 = vmatmul.mubr.bf16.gmra.mrb[0].mxu0 %v726
      %v4385 = vpop.f32.mrb[0].mxu0
      %v4386 = vadd.f32 %v4193, %v4385
      %v4387 = vpop.f32.mrb[0].mxu0
      %v4388 = vadd.f32 %v4195, %v4387
      %v4389 = vpop.f32.mrb[0].mxu0
      %v4390 = vadd.f32 %v4197, %v4389
      %v4391 = vpop.f32.mrb[0].mxu0
      %v4392 = vadd.f32 %v4199, %v4391
      %4393 = vmatprep.mubr.bf16.mxu0 %v733
      %4394 = vmatmul.mubr.bf16.gmra.mrb[0].mxu0 %v732
      %v4395 = vpop.f32.mrb[0].mxu0
      %v4396 = vadd.f32 %v4203, %v4395
      %v4397 = vpop.f32.mrb[0].mxu0
      %v4398 = vadd.f32 %v4205, %v4397
      %v4399 = vpop.f32.mrb[0].mxu0
      %v4400 = vadd.f32 %v4207, %v4399
      %v4401 = vpop.f32.mrb[0].mxu0
      %v4402 = vadd.f32 %v4209, %v4401
      %4403 = vmatprep.mubr.bf16.mxu0 %v739
      %4404 = vmatmul.mubr.bf16.gmra.mrb[0].mxu0 %v738
      %v4405 = vpop.f32.mrb[0].mxu0
      %v4406 = vadd.f32 %v4213, %v4405
      %v4407 = vpop.f32.mrb[0].mxu0
      %v4408 = vadd.f32 %v4215, %v4407
      %v4409 = vpop.f32.mrb[0].mxu0
      %v4410 = vadd.f32 %v4217, %v4409
      %v4411 = vpop.f32.mrb[0].mxu0
      %v4412 = vadd.f32 %v4219, %v4411
      %4413 = vmatprep.mubr.bf16.mxu0 %v745
      %4414 = vmatmul.mubr.bf16.gmra.mrb[0].mxu0 %v744
      %v4415 = vpop.f32.mrb[0].mxu0
      %v4416 = vadd.f32 %v4223, %v4415
      %v4417 = vpop.f32.mrb[0].mxu0
      %v4418 = vadd.f32 %v4225, %v4417
      %v4419 = vpop.f32.mrb[0].mxu0
      %v4420 = vadd.f32 %v4227, %v4419
      %v4421 = vpop.f32.mrb[0].mxu0
      %v4422 = vadd.f32 %v4229, %v4421
      %4423 = vmatprep.mubr.bf16.mxu0 %v751
      %4424 = vmatmul.mubr.bf16.gmra.mrb[0].mxu0 %v750
      %v4425 = vpop.f32.mrb[0].mxu0
      %v4426 = vadd.f32 %v4233, %v4425
      %v4427 = vpop.f32.mrb[0].mxu0
      %v4428 = vadd.f32 %v4235, %v4427
      %v4429 = vpop.f32.mrb[0].mxu0
      %v4430 = vadd.f32 %v4237, %v4429
      %v4431 = vpop.f32.mrb[0].mxu0
      %v4432 = vadd.f32 %v4239, %v4431
      %4433 = vmatprep.mubr.bf16.mxu0 %v757
      %4434 = vmatmul.mubr.bf16.gmra.mrb[0].mxu0 %v756
      %v4435 = vpop.f32.mrb[0].mxu0
      %v4436 = vadd.f32 %v4243, %v4435
      %v4437 = vpop.f32.mrb[0].mxu0
      %v4438 = vadd.f32 %v4245, %v4437
      %v4439 = vpop.f32.mrb[0].mxu0
      %v4440 = vadd.f32 %v4247, %v4439
      %v4441 = vpop.f32.mrb[0].mxu0
      %v4442 = vadd.f32 %v4249, %v4441
      %4443 = vmatprep.mubr.bf16.mxu0 %v763
      %4444 = vmatmul.mubr.bf16.gmra.mrb[0].mxu0 %v762
      %v4445 = vpop.f32.mrb[0].mxu0
      %v4446 = vadd.f32 %v4253, %v4445
      %v4447 = vpop.f32.mrb[0].mxu0
      %v4448 = vadd.f32 %v4255, %v4447
      %v4449 = vpop.f32.mrb[0].mxu0
      %v4450 = vadd.f32 %v4257, %v4449
      %v4451 = vpop.f32.mrb[0].mxu0
      %v4452 = vadd.f32 %v4259, %v4451
      %4453 = vdwg.mxu0
      %4454 = vmatprep.subr.bf16.mxu0 %v2531
      %4455 = vmatpush1.bf16.msra.mxu0 %v2530
      %4456 = vmatprep.subr.bf16.mxu0 %v2537
      %4457 = vmatpush1.bf16.msra.mxu0 %v2536
      %4458 = vmatprep.subr.bf16.mxu0 %v2543
      %4459 = vmatpush1.bf16.msra.mxu0 %v2542
      %4460 = vmatprep.subr.bf16.mxu0 %v2549
      %4461 = vmatpush1.bf16.msra.mxu0 %v2548
      %4462 = vmatprep.subr.bf16.mxu0 %v2555
      %4463 = vmatpush1.bf16.msra.mxu0 %v2554
      %4464 = vmatprep.subr.bf16.mxu0 %v2561
      %4465 = vmatpush1.bf16.msra.mxu0 %v2560
      %4466 = vmatprep.subr.bf16.mxu0 %v2567
      %4467 = vmatpush1.bf16.msra.mxu0 %v2566
      %4468 = vmatprep.subr.bf16.mxu0 %v2573
      %4469 = vmatpush1.bf16.msra.mxu0 %v2572
      %4470 = vmatprep.subr.bf16.mxu0 %v2579
      %4471 = vmatpush1.bf16.msra.mxu0 %v2578
      %4472 = vmatprep.subr.bf16.mxu0 %v2585
      %4473 = vmatpush1.bf16.msra.mxu0 %v2584
      %4474 = vmatprep.subr.bf16.mxu0 %v2591
      %4475 = vmatpush1.bf16.msra.mxu0 %v2590
      %4476 = vmatprep.subr.bf16.mxu0 %v2597
      %4477 = vmatpush1.bf16.msra.mxu0 %v2596
      %4478 = vmatprep.subr.bf16.mxu0 %v2603
      %4479 = vmatpush1.bf16.msra.mxu0 %v2602
      %4480 = vmatprep.subr.bf16.mxu0 %v2609
      %4481 = vmatpush1.bf16.msra.mxu0 %v2608
      %4482 = vmatprep.subr.bf16.mxu0 %v2615
      %4483 = vmatpush1.bf16.msra.mxu0 %v2614
      %4484 = vmatprep.subr.bf16.mxu0 %v2621
      %4485 = vmatpush1.bf16.msra.mxu0 %v2620
      %4486 = vmatprep.mubr.bf16.mxu0 %v675
      %4487 = vmatmul.mubr.bf16.gmra.mrb[0].mxu0 %v674
      %v4488 = vpop.f32.mrb[0].mxu0
      %v4489 = vadd.f32 %v4296, %v4488
      %v4490 = vpop.f32.mrb[0].mxu0
      %v4491 = vadd.f32 %v4298, %v4490
      %v4492 = vpop.f32.mrb[0].mxu0
      %v4493 = vadd.f32 %v4300, %v4492
      %v4494 = vpop.f32.mrb[0].mxu0
      %v4495 = vadd.f32 %v4302, %v4494
      %4496 = vmatprep.mubr.bf16.mxu0 %v681
      %4497 = vmatmul.mubr.bf16.gmra.mrb[0].mxu0 %v680
      %v4498 = vpop.f32.mrb[0].mxu0
      %v4499 = vadd.f32 %v4306, %v4498
      %v4500 = vpop.f32.mrb[0].mxu0
      %v4501 = vadd.f32 %v4308, %v4500
      %v4502 = vpop.f32.mrb[0].mxu0
      %v4503 = vadd.f32 %v4310, %v4502
      %v4504 = vpop.f32.mrb[0].mxu0
      %v4505 = vadd.f32 %v4312, %v4504
      %4506 = vmatprep.mubr.bf16.mxu0 %v687
      %4507 = vmatmul.mubr.bf16.gmra.mrb[0].mxu0 %v686
      %v4508 = vpop.f32.mrb[0].mxu0
      %v4509 = vadd.f32 %v4316, %v4508
      %v4510 = vpop.f32.mrb[0].mxu0
      %v4511 = vadd.f32 %v4318, %v4510
      %v4512 = vpop.f32.mrb[0].mxu0
      %v4513 = vadd.f32 %v4320, %v4512
      %v4514 = vpop.f32.mrb[0].mxu0
      %v4515 = vadd.f32 %v4322, %v4514
      %4516 = vmatprep.mubr.bf16.mxu0 %v693
      %4517 = vmatmul.mubr.bf16.gmra.mrb[0].mxu0 %v692
      %v4518 = vpop.f32.mrb[0].mxu0
      %v4519 = vadd.f32 %v4326, %v4518
      %v4520 = vpop.f32.mrb[0].mxu0
      %v4521 = vadd.f32 %v4328, %v4520
      %v4522 = vpop.f32.mrb[0].mxu0
      %v4523 = vadd.f32 %v4330, %v4522
      %v4524 = vpop.f32.mrb[0].mxu0
      %v4525 = vadd.f32 %v4332, %v4524
      %4526 = vmatprep.mubr.bf16.mxu0 %v699
      %4527 = vmatmul.mubr.bf16.gmra.mrb[0].mxu0 %v698
      %v4528 = vpop.f32.mrb[0].mxu0
      %v4529 = vadd.f32 %v4336, %v4528
      %v4530 = vpop.f32.mrb[0].mxu0
      %v4531 = vadd.f32 %v4338, %v4530
      %v4532 = vpop.f32.mrb[0].mxu0
      %v4533 = vadd.f32 %v4340, %v4532
      %v4534 = vpop.f32.mrb[0].mxu0
      %v4535 = vadd.f32 %v4342, %v4534
      %4536 = vmatprep.mubr.bf16.mxu0 %v705
      %4537 = vmatmul.mubr.bf16.gmra.mrb[0].mxu0 %v704
      %v4538 = vpop.f32.mrb[0].mxu0
      %v4539 = vadd.f32 %v4346, %v4538
      %v4540 = vpop.f32.mrb[0].mxu0
      %v4541 = vadd.f32 %v4348, %v4540
      %v4542 = vpop.f32.mrb[0].mxu0
      %v4543 = vadd.f32 %v4350, %v4542
      %v4544 = vpop.f32.mrb[0].mxu0
      %v4545 = vadd.f32 %v4352, %v4544
      %4546 = vmatprep.mubr.bf16.mxu0 %v711
      %4547 = vmatmul.mubr.bf16.gmra.mrb[0].mxu0 %v710
      %v4548 = vpop.f32.mrb[0].mxu0
      %v4549 = vadd.f32 %v4356, %v4548
      %v4550 = vpop.f32.mrb[0].mxu0
      %v4551 = vadd.f32 %v4358, %v4550
      %v4552 = vpop.f32.mrb[0].mxu0
      %v4553 = vadd.f32 %v4360, %v4552
      %v4554 = vpop.f32.mrb[0].mxu0
      %v4555 = vadd.f32 %v4362, %v4554
      %4556 = vmatprep.mubr.bf16.mxu0 %v717
      %4557 = vmatmul.mubr.bf16.gmra.mrb[0].mxu0 %v716
      %v4558 = vpop.f32.mrb[0].mxu0
      %v4559 = vadd.f32 %v4366, %v4558
      %v4560 = vpop.f32.mrb[0].mxu0
      %v4561 = vadd.f32 %v4368, %v4560
      %v4562 = vpop.f32.mrb[0].mxu0
      %v4563 = vadd.f32 %v4370, %v4562
      %v4564 = vpop.f32.mrb[0].mxu0
      %v4565 = vadd.f32 %v4372, %v4564
      %4566 = vmatprep.mubr.bf16.mxu0 %v723
      %4567 = vmatmul.mubr.bf16.gmra.mrb[0].mxu0 %v722
      %v4568 = vpop.f32.mrb[0].mxu0
      %v4569 = vadd.f32 %v4376, %v4568
      %v4570 = vpop.f32.mrb[0].mxu0
      %v4571 = vadd.f32 %v4378, %v4570
      %v4572 = vpop.f32.mrb[0].mxu0
      %v4573 = vadd.f32 %v4380, %v4572
      %v4574 = vpop.f32.mrb[0].mxu0
      %v4575 = vadd.f32 %v4382, %v4574
      %4576 = vmatprep.mubr.bf16.mxu0 %v729
      %4577 = vmatmul.mubr.bf16.gmra.mrb[0].mxu0 %v728
      %v4578 = vpop.f32.mrb[0].mxu0
      %v4579 = vadd.f32 %v4386, %v4578
      %v4580 = vpop.f32.mrb[0].mxu0
      %v4581 = vadd.f32 %v4388, %v4580
      %v4582 = vpop.f32.mrb[0].mxu0
      %v4583 = vadd.f32 %v4390, %v4582
      %v4584 = vpop.f32.mrb[0].mxu0
      %v4585 = vadd.f32 %v4392, %v4584
      %4586 = vmatprep.mubr.bf16.mxu0 %v735
      %4587 = vmatmul.mubr.bf16.gmra.mrb[0].mxu0 %v734
      %v4588 = vpop.f32.mrb[0].mxu0
      %v4589 = vadd.f32 %v4396, %v4588
      %v4590 = vpop.f32.mrb[0].mxu0
      %v4591 = vadd.f32 %v4398, %v4590
      %v4592 = vpop.f32.mrb[0].mxu0
      %v4593 = vadd.f32 %v4400, %v4592
      %v4594 = vpop.f32.mrb[0].mxu0
      %v4595 = vadd.f32 %v4402, %v4594
      %4596 = vmatprep.mubr.bf16.mxu0 %v741
      %4597 = vmatmul.mubr.bf16.gmra.mrb[0].mxu0 %v740
      %v4598 = vpop.f32.mrb[0].mxu0
      %v4599 = vadd.f32 %v4406, %v4598
      %v4600 = vpop.f32.mrb[0].mxu0
      %v4601 = vadd.f32 %v4408, %v4600
      %v4602 = vpop.f32.mrb[0].mxu0
      %v4603 = vadd.f32 %v4410, %v4602
      %v4604 = vpop.f32.mrb[0].mxu0
      %v4605 = vadd.f32 %v4412, %v4604
      %4606 = vmatprep.mubr.bf16.mxu0 %v747
      %4607 = vmatmul.mubr.bf16.gmra.mrb[0].mxu0 %v746
      %v4608 = vpop.f32.mrb[0].mxu0
      %v4609 = vadd.f32 %v4416, %v4608
      %v4610 = vpop.f32.mrb[0].mxu0
      %v4611 = vadd.f32 %v4418, %v4610
      %v4612 = vpop.f32.mrb[0].mxu0
      %v4613 = vadd.f32 %v4420, %v4612
      %v4614 = vpop.f32.mrb[0].mxu0
      %v4615 = vadd.f32 %v4422, %v4614
      %4616 = vmatprep.mubr.bf16.mxu0 %v753
      %4617 = vmatmul.mubr.bf16.gmra.mrb[0].mxu0 %v752
      %v4618 = vpop.f32.mrb[0].mxu0
      %v4619 = vadd.f32 %v4426, %v4618
      %v4620 = vpop.f32.mrb[0].mxu0
      %v4621 = vadd.f32 %v4428, %v4620
      %v4622 = vpop.f32.mrb[0].mxu0
      %v4623 = vadd.f32 %v4430, %v4622
      %v4624 = vpop.f32.mrb[0].mxu0
      %v4625 = vadd.f32 %v4432, %v4624
      %4626 = vmatprep.mubr.bf16.mxu0 %v759
      %4627 = vmatmul.mubr.bf16.gmra.mrb[0].mxu0 %v758
      %v4628 = vpop.f32.mrb[0].mxu0
      %v4629 = vadd.f32 %v4436, %v4628
      %v4630 = vpop.f32.mrb[0].mxu0
      %v4631 = vadd.f32 %v4438, %v4630
      %v4632 = vpop.f32.mrb[0].mxu0
      %v4633 = vadd.f32 %v4440, %v4632
      %v4634 = vpop.f32.mrb[0].mxu0
      %v4635 = vadd.f32 %v4442, %v4634
      %4636 = vmatprep.mubr.bf16.mxu0 %v765
      %4637 = vmatmul.mubr.bf16.gmra.mrb[0].mxu0 %v764
      %v4638 = vpop.f32.mrb[0].mxu0
      %v4639 = vadd.f32 %v4446, %v4638
      %v4640 = vpop.f32.mrb[0].mxu0
      %v4641 = vadd.f32 %v4448, %v4640
      %v4642 = vpop.f32.mrb[0].mxu0
      %v4643 = vadd.f32 %v4450, %v4642
      %v4644 = vpop.f32.mrb[0].mxu0
      %v4645 = vadd.f32 %v4452, %v4644
      %4646 = vdwg.mxu0
      %v4647 = vpack.c.bf16 %v3335, %v3331
      %v4648 = vpack.c.bf16 %v3337, %v3333
      %v4649 = vpack.c.bf16 %v3914, %v3910
      %v4650 = vpack.c.bf16 %v3916, %v3912
      %v4651 = vpack.c.bf16 %v4493, %v4489
      %v4652 = vpack.c.bf16 %v4495, %v4491
      %v4653 = vpack.c.bf16 %v3345, %v3341
      %v4654 = vpack.c.bf16 %v3347, %v3343
      %v4655 = vpack.c.bf16 %v3924, %v3920
      %v4656 = vpack.c.bf16 %v3926, %v3922
      %v4657 = vpack.c.bf16 %v4503, %v4499
      %v4658 = vpack.c.bf16 %v4505, %v4501
      %v4659 = vpack.c.bf16 %v3355, %v3351
      %v4660 = vpack.c.bf16 %v3357, %v3353
      %v4661 = vpack.c.bf16 %v3934, %v3930
      %v4662 = vpack.c.bf16 %v3936, %v3932
      %v4663 = vpack.c.bf16 %v4513, %v4509
      %v4664 = vpack.c.bf16 %v4515, %v4511
      %v4665 = vpack.c.bf16 %v3365, %v3361
      %v4666 = vpack.c.bf16 %v3367, %v3363
      %v4667 = vpack.c.bf16 %v3944, %v3940
      %v4668 = vpack.c.bf16 %v3946, %v3942
      %v4669 = vpack.c.bf16 %v4523, %v4519
      %v4670 = vpack.c.bf16 %v4525, %v4521
      %v4671 = vpack.c.bf16 %v3375, %v3371
      %v4672 = vpack.c.bf16 %v3377, %v3373
      %v4673 = vpack.c.bf16 %v3954, %v3950
      %v4674 = vpack.c.bf16 %v3956, %v3952
      %v4675 = vpack.c.bf16 %v4533, %v4529
      %v4676 = vpack.c.bf16 %v4535, %v4531
      %v4677 = vpack.c.bf16 %v3385, %v3381
      %v4678 = vpack.c.bf16 %v3387, %v3383
      %v4679 = vpack.c.bf16 %v3964, %v3960
      %v4680 = vpack.c.bf16 %v3966, %v3962
      %v4681 = vpack.c.bf16 %v4543, %v4539
      %v4682 = vpack.c.bf16 %v4545, %v4541
      %v4683 = vpack.c.bf16 %v3395, %v3391
      %v4684 = vpack.c.bf16 %v3397, %v3393
      %v4685 = vpack.c.bf16 %v3974, %v3970
      %v4686 = vpack.c.bf16 %v3976, %v3972
      %v4687 = vpack.c.bf16 %v4553, %v4549
      %v4688 = vpack.c.bf16 %v4555, %v4551
      %v4689 = vpack.c.bf16 %v3405, %v3401
      %v4690 = vpack.c.bf16 %v3407, %v3403
      %v4691 = vpack.c.bf16 %v3984, %v3980
      %v4692 = vpack.c.bf16 %v3986, %v3982
      %v4693 = vpack.c.bf16 %v4563, %v4559
      %v4694 = vpack.c.bf16 %v4565, %v4561
      %v4695 = vpack.c.bf16 %v3415, %v3411
      %v4696 = vpack.c.bf16 %v3417, %v3413
      %v4697 = vpack.c.bf16 %v3994, %v3990
      %v4698 = vpack.c.bf16 %v3996, %v3992
      %v4699 = vpack.c.bf16 %v4573, %v4569
      %v4700 = vpack.c.bf16 %v4575, %v4571
      %v4701 = vpack.c.bf16 %v3425, %v3421
      %v4702 = vpack.c.bf16 %v3427, %v3423
      %v4703 = vpack.c.bf16 %v4004, %v4000
      %v4704 = vpack.c.bf16 %v4006, %v4002
      %v4705 = vpack.c.bf16 %v4583, %v4579
      %v4706 = vpack.c.bf16 %v4585, %v4581
      %v4707 = vpack.c.bf16 %v3435, %v3431
      %v4708 = vpack.c.bf16 %v3437, %v3433
      %v4709 = vpack.c.bf16 %v4014, %v4010
      %v4710 = vpack.c.bf16 %v4016, %v4012
      %v4711 = vpack.c.bf16 %v4593, %v4589
      %v4712 = vpack.c.bf16 %v4595, %v4591
      %v4713 = vpack.c.bf16 %v3445, %v3441
      %v4714 = vpack.c.bf16 %v3447, %v3443
      %v4715 = vpack.c.bf16 %v4024, %v4020
      %v4716 = vpack.c.bf16 %v4026, %v4022
      %v4717 = vpack.c.bf16 %v4603, %v4599
      %v4718 = vpack.c.bf16 %v4605, %v4601
      %v4719 = vpack.c.bf16 %v3455, %v3451
      %v4720 = vpack.c.bf16 %v3457, %v3453
      %v4721 = vpack.c.bf16 %v4034, %v4030
      %v4722 = vpack.c.bf16 %v4036, %v4032
      %v4723 = vpack.c.bf16 %v4613, %v4609
      %v4724 = vpack.c.bf16 %v4615, %v4611
      %v4725 = vpack.c.bf16 %v3465, %v3461
      %v4726 = vpack.c.bf16 %v3467, %v3463
      %v4727 = vpack.c.bf16 %v4044, %v4040
      %v4728 = vpack.c.bf16 %v4046, %v4042
      %v4729 = vpack.c.bf16 %v4623, %v4619
      %v4730 = vpack.c.bf16 %v4625, %v4621
      %v4731 = vpack.c.bf16 %v3475, %v3471
      %v4732 = vpack.c.bf16 %v3477, %v3473
      %v4733 = vpack.c.bf16 %v4054, %v4050
      %v4734 = vpack.c.bf16 %v4056, %v4052
      %v4735 = vpack.c.bf16 %v4633, %v4629
      %v4736 = vpack.c.bf16 %v4635, %v4631
      %v4737 = vpack.c.bf16 %v3485, %v3481
      %v4738 = vpack.c.bf16 %v3487, %v3483
      %v4739 = vpack.c.bf16 %v4064, %v4060
      %v4740 = vpack.c.bf16 %v4066, %v4062
      %v4741 = vpack.c.bf16 %v4643, %v4639
      %v4742 = vpack.c.bf16 %v4645, %v4641
      %4743 = vst [vmem:[#allocation2] sm:$0xff] %v4647
      %4744 = vst [vmem:[#allocation2 + $0x8] sm:$0xff] %v4648
      %4745 = vst [vmem:[#allocation2 + $0x10] sm:$0xff] %v4649
      %4746 = vst [vmem:[#allocation2 + $0x18] sm:$0xff] %v4650
      %4747 = vst [vmem:[#allocation2 + $0x20] sm:$0xff] %v4651
      %4748 = vst [vmem:[#allocation2 + $0x28] sm:$0xff] %v4652
      %4749 = vst [vmem:[#allocation2 + $0x30] sm:$0xff] %v4653
      %4750 = vst [vmem:[#allocation2 + $0x38] sm:$0xff] %v4654
      %4751 = vst [vmem:[#allocation2 + $0x40] sm:$0xff] %v4655
      %4752 = vst [vmem:[#allocation2 + $0x48] sm:$0xff] %v4656
      %4753 = vst [vmem:[#allocation2 + $0x50] sm:$0xff] %v4657
      %4754 = vst [vmem:[#allocation2 + $0x58] sm:$0xff] %v4658
      %4755 = vst [vmem:[#allocation2 + $0x60] sm:$0xff] %v4659
      %4756 = vst [vmem:[#allocation2 + $0x68] sm:$0xff] %v4660
      %4757 = vst [vmem:[#allocation2 + $0x70] sm:$0xff] %v4661
      %4758 = vst [vmem:[#allocation2 + $0x78] sm:$0xff] %v4662
      %4759 = vst [vmem:[#allocation2 + $0x80] sm:$0xff] %v4663
      %4760 = vst [vmem:[#allocation2 + $0x88] sm:$0xff] %v4664
      %4761 = vst [vmem:[#allocation2 + $0x90] sm:$0xff] %v4665
      %4762 = vst [vmem:[#allocation2 + $0x98] sm:$0xff] %v4666
      %4763 = vst [vmem:[#allocation2 + $0xa0] sm:$0xff] %v4667
      %4764 = vst [vmem:[#allocation2 + $0xa8] sm:$0xff] %v4668
      %4765 = vst [vmem:[#allocation2 + $0xb0] sm:$0xff] %v4669
      %4766 = vst [vmem:[#allocation2 + $0xb8] sm:$0xff] %v4670
      %4767 = vst [vmem:[#allocation2 + $0xc0] sm:$0xff] %v4671
      %4768 = vst [vmem:[#allocation2 + $0xc8] sm:$0xff] %v4672
      %4769 = vst [vmem:[#allocation2 + $0xd0] sm:$0xff] %v4673
      %4770 = vst [vmem:[#allocation2 + $0xd8] sm:$0xff] %v4674
      %4771 = vst [vmem:[#allocation2 + $0xe0] sm:$0xff] %v4675
      %4772 = vst [vmem:[#allocation2 + $0xe8] sm:$0xff] %v4676
      %4773 = vst [vmem:[#allocation2 + $0xf0] sm:$0xff] %v4677
      %4774 = vst [vmem:[#allocation2 + $0xf8] sm:$0xff] %v4678
      %4775 = vst [vmem:[#allocation2 + $0x100] sm:$0xff] %v4679
      %4776 = vst [vmem:[#allocation2 + $0x108] sm:$0xff] %v4680
      %4777 = vst [vmem:[#allocation2 + $0x110] sm:$0xff] %v4681
      %4778 = vst [vmem:[#allocation2 + $0x118] sm:$0xff] %v4682
      %4779 = vst [vmem:[#allocation2 + $0x120] sm:$0xff] %v4683
      %4780 = vst [vmem:[#allocation2 + $0x128] sm:$0xff] %v4684
      %4781 = vst [vmem:[#allocation2 + $0x130] sm:$0xff] %v4685
      %4782 = vst [vmem:[#allocation2 + $0x138] sm:$0xff] %v4686
      %4783 = vst [vmem:[#allocation2 + $0x140] sm:$0xff] %v4687
      %4784 = vst [vmem:[#allocation2 + $0x148] sm:$0xff] %v4688
      %4785 = vst [vmem:[#allocation2 + $0x150] sm:$0xff] %v4689
      %4786 = vst [vmem:[#allocation2 + $0x158] sm:$0xff] %v4690
      %4787 = vst [vmem:[#allocation2 + $0x160] sm:$0xff] %v4691
      %4788 = vst [vmem:[#allocation2 + $0x168] sm:$0xff] %v4692
      %4789 = vst [vmem:[#allocation2 + $0x170] sm:$0xff] %v4693
      %4790 = vst [vmem:[#allocation2 + $0x178] sm:$0xff] %v4694
      %4791 = vst [vmem:[#allocation2 + $0x180] sm:$0xff] %v4695
      %4792 = vst [vmem:[#allocation2 + $0x188] sm:$0xff] %v4696
      %4793 = vst [vmem:[#allocation2 + $0x190] sm:$0xff] %v4697
      %4794 = vst [vmem:[#allocation2 + $0x198] sm:$0xff] %v4698
      %4795 = vst [vmem:[#allocation2 + $0x1a0] sm:$0xff] %v4699
      %4796 = vst [vmem:[#allocation2 + $0x1a8] sm:$0xff] %v4700
      %4797 = vst [vmem:[#allocation2 + $0x1b0] sm:$0xff] %v4701
      %4798 = vst [vmem:[#allocation2 + $0x1b8] sm:$0xff] %v4702
      %4799 = vst [vmem:[#allocation2 + $0x1c0] sm:$0xff] %v4703
      %4800 = vst [vmem:[#allocation2 + $0x1c8] sm:$0xff] %v4704
      %4801 = vst [vmem:[#allocation2 + $0x1d0] sm:$0xff] %v4705
      %4802 = vst [vmem:[#allocation2 + $0x1d8] sm:$0xff] %v4706
      %4803 = vst [vmem:[#allocation2 + $0x1e0] sm:$0xff] %v4707
      %4804 = vst [vmem:[#allocation2 + $0x1e8] sm:$0xff] %v4708
      %4805 = vst [vmem:[#allocation2 + $0x1f0] sm:$0xff] %v4709
      %4806 = vst [vmem:[#allocation2 + $0x1f8] sm:$0xff] %v4710
      %4807 = vst [vmem:[#allocation2 + $0x200] sm:$0xff] %v4711
      %4808 = vst [vmem:[#allocation2 + $0x208] sm:$0xff] %v4712
      %4809 = vst [vmem:[#allocation2 + $0x210] sm:$0xff] %v4713
      %4810 = vst [vmem:[#allocation2 + $0x218] sm:$0xff] %v4714
      %4811 = vst [vmem:[#allocation2 + $0x220] sm:$0xff] %v4715
      %4812 = vst [vmem:[#allocation2 + $0x228] sm:$0xff] %v4716
      %4813 = vst [vmem:[#allocation2 + $0x230] sm:$0xff] %v4717
      %4814 = vst [vmem:[#allocation2 + $0x238] sm:$0xff] %v4718
      %4815 = vst [vmem:[#allocation2 + $0x240] sm:$0xff] %v4719
      %4816 = vst [vmem:[#allocation2 + $0x248] sm:$0xff] %v4720
      %4817 = vst [vmem:[#allocation2 + $0x250] sm:$0xff] %v4721
      %4818 = vst [vmem:[#allocation2 + $0x258] sm:$0xff] %v4722
      %4819 = vst [vmem:[#allocation2 + $0x260] sm:$0xff] %v4723
      %4820 = vst [vmem:[#allocation2 + $0x268] sm:$0xff] %v4724
      %4821 = vst [vmem:[#allocation2 + $0x270] sm:$0xff] %v4725
      %4822 = vst [vmem:[#allocation2 + $0x278] sm:$0xff] %v4726
      %4823 = vst [vmem:[#allocation2 + $0x280] sm:$0xff] %v4727
      %4824 = vst [vmem:[#allocation2 + $0x288] sm:$0xff] %v4728
      %4825 = vst [vmem:[#allocation2 + $0x290] sm:$0xff] %v4729
      %4826 = vst [vmem:[#allocation2 + $0x298] sm:$0xff] %v4730
      %4827 = vst [vmem:[#allocation2 + $0x2a0] sm:$0xff] %v4731
      %4828 = vst [vmem:[#allocation2 + $0x2a8] sm:$0xff] %v4732
      %4829 = vst [vmem:[#allocation2 + $0x2b0] sm:$0xff] %v4733
      %4830 = vst [vmem:[#allocation2 + $0x2b8] sm:$0xff] %v4734
      %4831 = vst [vmem:[#allocation2 + $0x2c0] sm:$0xff] %v4735
      %4832 = vst [vmem:[#allocation2 + $0x2c8] sm:$0xff] %v4736
      %4833 = vst [vmem:[#allocation2 + $0x2d0] sm:$0xff] %v4737
      %4834 = vst [vmem:[#allocation2 + $0x2d8] sm:$0xff] %v4738
      %4835 = vst [vmem:[#allocation2 + $0x2e0] sm:$0xff] %v4739
      %4836 = vst [vmem:[#allocation2 + $0x2e8] sm:$0xff] %v4740
      %4837 = vst [vmem:[#allocation2 + $0x2f0] sm:$0xff] %v4741
      %4838 = vst [vmem:[#allocation2 + $0x2f8] sm:$0xff] %v4742
      %v4839 = vld [vmem:[#allocation2] sm:$0xff]
      %v4840 = vld [vmem:[#allocation2 + $0x8] sm:$0xff]
      %v4841 = vld [vmem:[#allocation2 + $0x10] sm:$0xff]
      %v4842 = vld [vmem:[#allocation2 + $0x18] sm:$0xff]
      %v4843 = vld [vmem:[#allocation2 + $0x20] sm:$0xff]
      %v4844 = vld [vmem:[#allocation2 + $0x28] sm:$0xff]
      %v4845 = vld [vmem:[#allocation2 + $0x30] sm:$0xff]
      %v4846 = vld [vmem:[#allocation2 + $0x38] sm:$0xff]
      %v4847 = vld [vmem:[#allocation2 + $0x40] sm:$0xff]
      %v4848 = vld [vmem:[#allocation2 + $0x48] sm:$0xff]
      %v4849 = vld [vmem:[#allocation2 + $0x50] sm:$0xff]
      %v4850 = vld [vmem:[#allocation2 + $0x58] sm:$0xff]
      %v4851 = vld [vmem:[#allocation2 + $0x60] sm:$0xff]
      %v4852 = vld [vmem:[#allocation2 + $0x68] sm:$0xff]
      %v4853 = vld [vmem:[#allocation2 + $0x70] sm:$0xff]
      %v4854 = vld [vmem:[#allocation2 + $0x78] sm:$0xff]
      %v4855 = vld [vmem:[#allocation2 + $0x80] sm:$0xff]
      %v4856 = vld [vmem:[#allocation2 + $0x88] sm:$0xff]
      %v4857 = vld [vmem:[#allocation2 + $0x90] sm:$0xff]
      %v4858 = vld [vmem:[#allocation2 + $0x98] sm:$0xff]
      %v4859 = vld [vmem:[#allocation2 + $0xa0] sm:$0xff]
      %v4860 = vld [vmem:[#allocation2 + $0xa8] sm:$0xff]
      %v4861 = vld [vmem:[#allocation2 + $0xb0] sm:$0xff]
      %v4862 = vld [vmem:[#allocation2 + $0xb8] sm:$0xff]
      %v4863 = vld [vmem:[#allocation2 + $0xc0] sm:$0xff]
      %v4864 = vld [vmem:[#allocation2 + $0xc8] sm:$0xff]
      %v4865 = vld [vmem:[#allocation2 + $0xd0] sm:$0xff]
      %v4866 = vld [vmem:[#allocation2 + $0xd8] sm:$0xff]
      %v4867 = vld [vmem:[#allocation2 + $0xe0] sm:$0xff]
      %v4868 = vld [vmem:[#allocation2 + $0xe8] sm:$0xff]
      %v4869 = vld [vmem:[#allocation2 + $0xf0] sm:$0xff]
      %v4870 = vld [vmem:[#allocation2 + $0xf8] sm:$0xff]
      %v4871 = vld [vmem:[#allocation2 + $0x100] sm:$0xff]
      %v4872 = vld [vmem:[#allocation2 + $0x108] sm:$0xff]
      %v4873 = vld [vmem:[#allocation2 + $0x110] sm:$0xff]
      %v4874 = vld [vmem:[#allocation2 + $0x118] sm:$0xff]
      %v4875 = vld [vmem:[#allocation2 + $0x120] sm:$0xff]
      %v4876 = vld [vmem:[#allocation2 + $0x128] sm:$0xff]
      %v4877 = vld [vmem:[#allocation2 + $0x130] sm:$0xff]
      %v4878 = vld [vmem:[#allocation2 + $0x138] sm:$0xff]
      %v4879 = vld [vmem:[#allocation2 + $0x140] sm:$0xff]
      %v4880 = vld [vmem:[#allocation2 + $0x148] sm:$0xff]
      %v4881 = vld [vmem:[#allocation2 + $0x150] sm:$0xff]
      %v4882 = vld [vmem:[#allocation2 + $0x158] sm:$0xff]
      %v4883 = vld [vmem:[#allocation2 + $0x160] sm:$0xff]
      %v4884 = vld [vmem:[#allocation2 + $0x168] sm:$0xff]
      %v4885 = vld [vmem:[#allocation2 + $0x170] sm:$0xff]
      %v4886 = vld [vmem:[#allocation2 + $0x178] sm:$0xff]
      %v4887 = vld [vmem:[#allocation2 + $0x180] sm:$0xff]
      %v4888 = vld [vmem:[#allocation2 + $0x188] sm:$0xff]
      %v4889 = vld [vmem:[#allocation2 + $0x190] sm:$0xff]
      %v4890 = vld [vmem:[#allocation2 + $0x198] sm:$0xff]
      %v4891 = vld [vmem:[#allocation2 + $0x1a0] sm:$0xff]
      %v4892 = vld [vmem:[#allocation2 + $0x1a8] sm:$0xff]
      %v4893 = vld [vmem:[#allocation2 + $0x1b0] sm:$0xff]
      %v4894 = vld [vmem:[#allocation2 + $0x1b8] sm:$0xff]
      %v4895 = vld [vmem:[#allocation2 + $0x1c0] sm:$0xff]
      %v4896 = vld [vmem:[#allocation2 + $0x1c8] sm:$0xff]
      %v4897 = vld [vmem:[#allocation2 + $0x1d0] sm:$0xff]
      %v4898 = vld [vmem:[#allocation2 + $0x1d8] sm:$0xff]
      %v4899 = vld [vmem:[#allocation2 + $0x1e0] sm:$0xff]
      %v4900 = vld [vmem:[#allocation2 + $0x1e8] sm:$0xff]
      %v4901 = vld [vmem:[#allocation2 + $0x1f0] sm:$0xff]
      %v4902 = vld [vmem:[#allocation2 + $0x1f8] sm:$0xff]
      %v4903 = vld [vmem:[#allocation2 + $0x200] sm:$0xff]
      %v4904 = vld [vmem:[#allocation2 + $0x208] sm:$0xff]
      %v4905 = vld [vmem:[#allocation2 + $0x210] sm:$0xff]
      %v4906 = vld [vmem:[#allocation2 + $0x218] sm:$0xff]
      %v4907 = vld [vmem:[#allocation2 + $0x220] sm:$0xff]
      %v4908 = vld [vmem:[#allocation2 + $0x228] sm:$0xff]
      %v4909 = vld [vmem:[#allocation2 + $0x230] sm:$0xff]
      %v4910 = vld [vmem:[#allocation2 + $0x238] sm:$0xff]
      %v4911 = vld [vmem:[#allocation2 + $0x240] sm:$0xff]
      %v4912 = vld [vmem:[#allocation2 + $0x248] sm:$0xff]
      %v4913 = vld [vmem:[#allocation2 + $0x250] sm:$0xff]
      %v4914 = vld [vmem:[#allocation2 + $0x258] sm:$0xff]
      %v4915 = vld [vmem:[#allocation2 + $0x260] sm:$0xff]
      %v4916 = vld [vmem:[#allocation2 + $0x268] sm:$0xff]
      %v4917 = vld [vmem:[#allocation2 + $0x270] sm:$0xff]
      %v4918 = vld [vmem:[#allocation2 + $0x278] sm:$0xff]
      %v4919 = vld [vmem:[#allocation2 + $0x280] sm:$0xff]
      %v4920 = vld [vmem:[#allocation2 + $0x288] sm:$0xff]
      %v4921 = vld [vmem:[#allocation2 + $0x290] sm:$0xff]
      %v4922 = vld [vmem:[#allocation2 + $0x298] sm:$0xff]
      %v4923 = vld [vmem:[#allocation2 + $0x2a0] sm:$0xff]
      %v4924 = vld [vmem:[#allocation2 + $0x2a8] sm:$0xff]
      %v4925 = vld [vmem:[#allocation2 + $0x2b0] sm:$0xff]
      %v4926 = vld [vmem:[#allocation2 + $0x2b8] sm:$0xff]
      %v4927 = vld [vmem:[#allocation2 + $0x2c0] sm:$0xff]
      %v4928 = vld [vmem:[#allocation2 + $0x2c8] sm:$0xff]
      %v4929 = vld [vmem:[#allocation2 + $0x2d0] sm:$0xff]
      %v4930 = vld [vmem:[#allocation2 + $0x2d8] sm:$0xff]
      %v4931 = vld [vmem:[#allocation2 + $0x2e0] sm:$0xff]
      %v4932 = vld [vmem:[#allocation2 + $0x2e8] sm:$0xff]
      %v4933 = vld [vmem:[#allocation2 + $0x2f0] sm:$0xff]
      %v4934 = vld [vmem:[#allocation2 + $0x2f8] sm:$0xff]
      %v4935 = vld [vmem:[%s462] sm:$0xff]
      %v4936 = vld [vmem:[%s462 + $0x8] sm:$0xff]
      %v4937 = vld [vmem:[%s462 + $0x10] sm:$0xff]
      %v4938 = vld [vmem:[%s462 + $0x18] sm:$0xff]
      %v4939 = vld [vmem:[%s462 + $0x20] sm:$0xff]
      %v4940 = vld [vmem:[%s462 + $0x28] sm:$0xff]
      %v4941 = vld [vmem:[%s462 + $0x30] sm:$0xff]
      %v4942 = vld [vmem:[%s462 + $0x38] sm:$0xff]
      %v4943 = vld [vmem:[%s462 + $0x40] sm:$0xff]
      %v4944 = vld [vmem:[%s462 + $0x48] sm:$0xff]
      %v4945 = vld [vmem:[%s462 + $0x50] sm:$0xff]
      %v4946 = vld [vmem:[%s462 + $0x58] sm:$0xff]
      %v4947 = vld [vmem:[%s462 + $0x60] sm:$0xff]
      %v4948 = vld [vmem:[%s462 + $0x68] sm:$0xff]
      %v4949 = vld [vmem:[%s462 + $0x70] sm:$0xff]
      %v4950 = vld [vmem:[%s462 + $0x78] sm:$0xff]
      %v4951 = vld [vmem:[%s462 + $0x80] sm:$0xff]
      %v4952 = vld [vmem:[%s462 + $0x88] sm:$0xff]
      %v4953 = vld [vmem:[%s462 + $0x90] sm:$0xff]
      %v4954 = vld [vmem:[%s462 + $0x98] sm:$0xff]
      %v4955 = vld [vmem:[%s462 + $0xa0] sm:$0xff]
      %v4956 = vld [vmem:[%s462 + $0xa8] sm:$0xff]
      %v4957 = vld [vmem:[%s462 + $0xb0] sm:$0xff]
      %v4958 = vld [vmem:[%s462 + $0xb8] sm:$0xff]
      %v4959 = vld [vmem:[%s462 + $0xc0] sm:$0xff]
      %v4960 = vld [vmem:[%s462 + $0xc8] sm:$0xff]
      %v4961 = vld [vmem:[%s462 + $0xd0] sm:$0xff]
      %v4962 = vld [vmem:[%s462 + $0xd8] sm:$0xff]
      %v4963 = vld [vmem:[%s462 + $0xe0] sm:$0xff]
      %v4964 = vld [vmem:[%s462 + $0xe8] sm:$0xff]
      %v4965 = vld [vmem:[%s462 + $0xf0] sm:$0xff]
      %v4966 = vld [vmem:[%s462 + $0xf8] sm:$0xff]
      %v4967 = vld [vmem:[%s462 + $0x100] sm:$0xff]
      %v4968 = vld [vmem:[%s462 + $0x108] sm:$0xff]
      %v4969 = vld [vmem:[%s462 + $0x110] sm:$0xff]
      %v4970 = vld [vmem:[%s462 + $0x118] sm:$0xff]
      %v4971 = vld [vmem:[%s462 + $0x120] sm:$0xff]
      %v4972 = vld [vmem:[%s462 + $0x128] sm:$0xff]
      %v4973 = vld [vmem:[%s462 + $0x130] sm:$0xff]
      %v4974 = vld [vmem:[%s462 + $0x138] sm:$0xff]
      %v4975 = vld [vmem:[%s462 + $0x140] sm:$0xff]
      %v4976 = vld [vmem:[%s462 + $0x148] sm:$0xff]
      %v4977 = vld [vmem:[%s462 + $0x150] sm:$0xff]
      %v4978 = vld [vmem:[%s462 + $0x158] sm:$0xff]
      %v4979 = vld [vmem:[%s462 + $0x160] sm:$0xff]
      %v4980 = vld [vmem:[%s462 + $0x168] sm:$0xff]
      %v4981 = vld [vmem:[%s462 + $0x170] sm:$0xff]
      %v4982 = vld [vmem:[%s462 + $0x178] sm:$0xff]
      %v4983 = vld [vmem:[%s462 + $0x180] sm:$0xff]
      %v4984 = vld [vmem:[%s462 + $0x188] sm:$0xff]
      %v4985 = vld [vmem:[%s462 + $0x190] sm:$0xff]
      %v4986 = vld [vmem:[%s462 + $0x198] sm:$0xff]
      %v4987 = vld [vmem:[%s462 + $0x1a0] sm:$0xff]
      %v4988 = vld [vmem:[%s462 + $0x1a8] sm:$0xff]
      %v4989 = vld [vmem:[%s462 + $0x1b0] sm:$0xff]
      %v4990 = vld [vmem:[%s462 + $0x1b8] sm:$0xff]
      %v4991 = vld [vmem:[%s462 + $0x1c0] sm:$0xff]
      %v4992 = vld [vmem:[%s462 + $0x1c8] sm:$0xff]
      %v4993 = vld [vmem:[%s462 + $0x1d0] sm:$0xff]
      %v4994 = vld [vmem:[%s462 + $0x1d8] sm:$0xff]
      %v4995 = vld [vmem:[%s462 + $0x1e0] sm:$0xff]
      %v4996 = vld [vmem:[%s462 + $0x1e8] sm:$0xff]
      %v4997 = vld [vmem:[%s462 + $0x1f0] sm:$0xff]
      %v4998 = vld [vmem:[%s462 + $0x1f8] sm:$0xff]
      %v4999 = vld [vmem:[%s462 + $0x200] sm:$0xff]
      %v5000 = vld [vmem:[%s462 + $0x208] sm:$0xff]
      %v5001 = vld [vmem:[%s462 + $0x210] sm:$0xff]
      %v5002 = vld [vmem:[%s462 + $0x218] sm:$0xff]
      %v5003 = vld [vmem:[%s462 + $0x220] sm:$0xff]
      %v5004 = vld [vmem:[%s462 + $0x228] sm:$0xff]
      %v5005 = vld [vmem:[%s462 + $0x230] sm:$0xff]
      %v5006 = vld [vmem:[%s462 + $0x238] sm:$0xff]
      %v5007 = vld [vmem:[%s462 + $0x240] sm:$0xff]
      %v5008 = vld [vmem:[%s462 + $0x248] sm:$0xff]
      %v5009 = vld [vmem:[%s462 + $0x250] sm:$0xff]
      %v5010 = vld [vmem:[%s462 + $0x258] sm:$0xff]
      %v5011 = vld [vmem:[%s462 + $0x260] sm:$0xff]
      %v5012 = vld [vmem:[%s462 + $0x268] sm:$0xff]
      %v5013 = vld [vmem:[%s462 + $0x270] sm:$0xff]
      %v5014 = vld [vmem:[%s462 + $0x278] sm:$0xff]
      %v5015 = vld [vmem:[%s462 + $0x280] sm:$0xff]
      %v5016 = vld [vmem:[%s462 + $0x288] sm:$0xff]
      %v5017 = vld [vmem:[%s462 + $0x290] sm:$0xff]
      %v5018 = vld [vmem:[%s462 + $0x298] sm:$0xff]
      %v5019 = vld [vmem:[%s462 + $0x2a0] sm:$0xff]
      %v5020 = vld [vmem:[%s462 + $0x2a8] sm:$0xff]
      %v5021 = vld [vmem:[%s462 + $0x2b0] sm:$0xff]
      %v5022 = vld [vmem:[%s462 + $0x2b8] sm:$0xff]
      %v5023 = vld [vmem:[%s462 + $0x2c0] sm:$0xff]
      %v5024 = vld [vmem:[%s462 + $0x2c8] sm:$0xff]
      %v5025 = vld [vmem:[%s462 + $0x2d0] sm:$0xff]
      %v5026 = vld [vmem:[%s462 + $0x2d8] sm:$0xff]
      %v5027 = vld [vmem:[%s462 + $0x2e0] sm:$0xff]
      %v5028 = vld [vmem:[%s462 + $0x2e8] sm:$0xff]
      %v5029 = vld [vmem:[%s462 + $0x2f0] sm:$0xff]
      %v5030 = vld [vmem:[%s462 + $0x2f8] sm:$0xff]
      %v5031 = vld [vmem:[%s462 + $0x300] sm:$0xff]
      %v5032 = vld [vmem:[%s462 + $0x308] sm:$0xff]
      %v5033 = vld [vmem:[%s462 + $0x310] sm:$0xff]
      %v5034 = vld [vmem:[%s462 + $0x318] sm:$0xff]
      %v5035 = vld [vmem:[%s462 + $0x320] sm:$0xff]
      %v5036 = vld [vmem:[%s462 + $0x328] sm:$0xff]
      %v5037 = vld [vmem:[%s462 + $0x330] sm:$0xff]
      %v5038 = vld [vmem:[%s462 + $0x338] sm:$0xff]
      %v5039 = vld [vmem:[%s462 + $0x340] sm:$0xff]
      %v5040 = vld [vmem:[%s462 + $0x348] sm:$0xff]
      %v5041 = vld [vmem:[%s462 + $0x350] sm:$0xff]
      %v5042 = vld [vmem:[%s462 + $0x358] sm:$0xff]
      %v5043 = vld [vmem:[%s462 + $0x360] sm:$0xff]
      %v5044 = vld [vmem:[%s462 + $0x368] sm:$0xff]
      %v5045 = vld [vmem:[%s462 + $0x370] sm:$0xff]
      %v5046 = vld [vmem:[%s462 + $0x378] sm:$0xff]
      %v5047 = vld [vmem:[%s462 + $0x380] sm:$0xff]
      %v5048 = vld [vmem:[%s462 + $0x388] sm:$0xff]
      %v5049 = vld [vmem:[%s462 + $0x390] sm:$0xff]
      %v5050 = vld [vmem:[%s462 + $0x398] sm:$0xff]
      %v5051 = vld [vmem:[%s462 + $0x3a0] sm:$0xff]
      %v5052 = vld [vmem:[%s462 + $0x3a8] sm:$0xff]
      %v5053 = vld [vmem:[%s462 + $0x3b0] sm:$0xff]
      %v5054 = vld [vmem:[%s462 + $0x3b8] sm:$0xff]
      %v5055 = vld [vmem:[%s462 + $0x3c0] sm:$0xff]
      %v5056 = vld [vmem:[%s462 + $0x3c8] sm:$0xff]
      %v5057 = vld [vmem:[%s462 + $0x3d0] sm:$0xff]
      %v5058 = vld [vmem:[%s462 + $0x3d8] sm:$0xff]
      %v5059 = vld [vmem:[%s462 + $0x3e0] sm:$0xff]
      %v5060 = vld [vmem:[%s462 + $0x3e8] sm:$0xff]
      %v5061 = vld [vmem:[%s462 + $0x3f0] sm:$0xff]
      %v5062 = vld [vmem:[%s462 + $0x3f8] sm:$0xff]
      %v5063 = vld [vmem:[%s462 + $0x400] sm:$0xff]
      %v5064 = vld [vmem:[%s462 + $0x408] sm:$0xff]
      %v5065 = vld [vmem:[%s462 + $0x410] sm:$0xff]
      %v5066 = vld [vmem:[%s462 + $0x418] sm:$0xff]
      %v5067 = vld [vmem:[%s462 + $0x420] sm:$0xff]
      %v5068 = vld [vmem:[%s462 + $0x428] sm:$0xff]
      %v5069 = vld [vmem:[%s462 + $0x430] sm:$0xff]
      %v5070 = vld [vmem:[%s462 + $0x438] sm:$0xff]
      %v5071 = vld [vmem:[%s462 + $0x440] sm:$0xff]
      %v5072 = vld [vmem:[%s462 + $0x448] sm:$0xff]
      %v5073 = vld [vmem:[%s462 + $0x450] sm:$0xff]
      %v5074 = vld [vmem:[%s462 + $0x458] sm:$0xff]
      %v5075 = vld [vmem:[%s462 + $0x460] sm:$0xff]
      %v5076 = vld [vmem:[%s462 + $0x468] sm:$0xff]
      %v5077 = vld [vmem:[%s462 + $0x470] sm:$0xff]
      %v5078 = vld [vmem:[%s462 + $0x478] sm:$0xff]
      %v5079 = vld [vmem:[%s462 + $0x480] sm:$0xff]
      %v5080 = vld [vmem:[%s462 + $0x488] sm:$0xff]
      %v5081 = vld [vmem:[%s462 + $0x490] sm:$0xff]
      %v5082 = vld [vmem:[%s462 + $0x498] sm:$0xff]
      %v5083 = vld [vmem:[%s462 + $0x4a0] sm:$0xff]
      %v5084 = vld [vmem:[%s462 + $0x4a8] sm:$0xff]
      %v5085 = vld [vmem:[%s462 + $0x4b0] sm:$0xff]
      %v5086 = vld [vmem:[%s462 + $0x4b8] sm:$0xff]
      %v5087 = vld [vmem:[%s462 + $0x4c0] sm:$0xff]
      %v5088 = vld [vmem:[%s462 + $0x4c8] sm:$0xff]
      %v5089 = vld [vmem:[%s462 + $0x4d0] sm:$0xff]
      %v5090 = vld [vmem:[%s462 + $0x4d8] sm:$0xff]
      %v5091 = vld [vmem:[%s462 + $0x4e0] sm:$0xff]
      %v5092 = vld [vmem:[%s462 + $0x4e8] sm:$0xff]
      %v5093 = vld [vmem:[%s462 + $0x4f0] sm:$0xff]
      %v5094 = vld [vmem:[%s462 + $0x4f8] sm:$0xff]
      %v5095 = vld [vmem:[%s462 + $0x500] sm:$0xff]
      %v5096 = vld [vmem:[%s462 + $0x508] sm:$0xff]
      %v5097 = vld [vmem:[%s462 + $0x510] sm:$0xff]
      %v5098 = vld [vmem:[%s462 + $0x518] sm:$0xff]
      %v5099 = vld [vmem:[%s462 + $0x520] sm:$0xff]
      %v5100 = vld [vmem:[%s462 + $0x528] sm:$0xff]
      %v5101 = vld [vmem:[%s462 + $0x530] sm:$0xff]
      %v5102 = vld [vmem:[%s462 + $0x538] sm:$0xff]
      %v5103 = vld [vmem:[%s462 + $0x540] sm:$0xff]
      %v5104 = vld [vmem:[%s462 + $0x548] sm:$0xff]
      %v5105 = vld [vmem:[%s462 + $0x550] sm:$0xff]
      %v5106 = vld [vmem:[%s462 + $0x558] sm:$0xff]
      %v5107 = vld [vmem:[%s462 + $0x560] sm:$0xff]
      %v5108 = vld [vmem:[%s462 + $0x568] sm:$0xff]
      %v5109 = vld [vmem:[%s462 + $0x570] sm:$0xff]
      %v5110 = vld [vmem:[%s462 + $0x578] sm:$0xff]
      %v5111 = vld [vmem:[%s462 + $0x580] sm:$0xff]
      %v5112 = vld [vmem:[%s462 + $0x588] sm:$0xff]
      %v5113 = vld [vmem:[%s462 + $0x590] sm:$0xff]
      %v5114 = vld [vmem:[%s462 + $0x598] sm:$0xff]
      %v5115 = vld [vmem:[%s462 + $0x5a0] sm:$0xff]
      %v5116 = vld [vmem:[%s462 + $0x5a8] sm:$0xff]
      %v5117 = vld [vmem:[%s462 + $0x5b0] sm:$0xff]
      %v5118 = vld [vmem:[%s462 + $0x5b8] sm:$0xff]
      %v5119 = vld [vmem:[%s462 + $0x5c0] sm:$0xff]
      %v5120 = vld [vmem:[%s462 + $0x5c8] sm:$0xff]
      %v5121 = vld [vmem:[%s462 + $0x5d0] sm:$0xff]
      %v5122 = vld [vmem:[%s462 + $0x5d8] sm:$0xff]
      %v5123 = vld [vmem:[%s462 + $0x5e0] sm:$0xff]
      %v5124 = vld [vmem:[%s462 + $0x5e8] sm:$0xff]
      %v5125 = vld [vmem:[%s462 + $0x5f0] sm:$0xff]
      %v5126 = vld [vmem:[%s462 + $0x5f8] sm:$0xff]
      %v5127 = vpack.c.bf16 %v4941, %v4935
      %v5128 = vpack.c.bf16 %v4942, %v4936
      %v5129 = vpack.c.bf16 %v4943, %v4937
      %v5130 = vpack.c.bf16 %v4944, %v4938
      %v5131 = vpack.c.bf16 %v4945, %v4939
      %v5132 = vpack.c.bf16 %v4946, %v4940
      %v5133 = vpack.c.bf16 %v4953, %v4947
      %v5134 = vpack.c.bf16 %v4954, %v4948
      %v5135 = vpack.c.bf16 %v4955, %v4949
      %v5136 = vpack.c.bf16 %v4956, %v4950
      %v5137 = vpack.c.bf16 %v4957, %v4951
      %v5138 = vpack.c.bf16 %v4958, %v4952
      %v5139 = vpack.c.bf16 %v4965, %v4959
      %v5140 = vpack.c.bf16 %v4966, %v4960
      %v5141 = vpack.c.bf16 %v4967, %v4961
      %v5142 = vpack.c.bf16 %v4968, %v4962
      %v5143 = vpack.c.bf16 %v4969, %v4963
      %v5144 = vpack.c.bf16 %v4970, %v4964
      %v5145 = vpack.c.bf16 %v4977, %v4971
      %v5146 = vpack.c.bf16 %v4978, %v4972
      %v5147 = vpack.c.bf16 %v4979, %v4973
      %v5148 = vpack.c.bf16 %v4980, %v4974
      %v5149 = vpack.c.bf16 %v4981, %v4975
      %v5150 = vpack.c.bf16 %v4982, %v4976
      %v5151 = vpack.c.bf16 %v4989, %v4983
      %v5152 = vpack.c.bf16 %v4990, %v4984
      %v5153 = vpack.c.bf16 %v4991, %v4985
      %v5154 = vpack.c.bf16 %v4992, %v4986
      %v5155 = vpack.c.bf16 %v4993, %v4987
      %v5156 = vpack.c.bf16 %v4994, %v4988
      %v5157 = vpack.c.bf16 %v5001, %v4995
      %v5158 = vpack.c.bf16 %v5002, %v4996
      %v5159 = vpack.c.bf16 %v5003, %v4997
      %v5160 = vpack.c.bf16 %v5004, %v4998
      %v5161 = vpack.c.bf16 %v5005, %v4999
      %v5162 = vpack.c.bf16 %v5006, %v5000
      %v5163 = vpack.c.bf16 %v5013, %v5007
      %v5164 = vpack.c.bf16 %v5014, %v5008
      %v5165 = vpack.c.bf16 %v5015, %v5009
      %v5166 = vpack.c.bf16 %v5016, %v5010
      %v5167 = vpack.c.bf16 %v5017, %v5011
      %v5168 = vpack.c.bf16 %v5018, %v5012
      %v5169 = vpack.c.bf16 %v5025, %v5019
      %v5170 = vpack.c.bf16 %v5026, %v5020
      %v5171 = vpack.c.bf16 %v5027, %v5021
      %v5172 = vpack.c.bf16 %v5028, %v5022
      %v5173 = vpack.c.bf16 %v5029, %v5023
      %v5174 = vpack.c.bf16 %v5030, %v5024
      %v5175 = vpack.c.bf16 %v5037, %v5031
      %v5176 = vpack.c.bf16 %v5038, %v5032
      %v5177 = vpack.c.bf16 %v5039, %v5033
      %v5178 = vpack.c.bf16 %v5040, %v5034
      %v5179 = vpack.c.bf16 %v5041, %v5035
      %v5180 = vpack.c.bf16 %v5042, %v5036
      %v5181 = vpack.c.bf16 %v5049, %v5043
      %v5182 = vpack.c.bf16 %v5050, %v5044
      %v5183 = vpack.c.bf16 %v5051, %v5045
      %v5184 = vpack.c.bf16 %v5052, %v5046
      %v5185 = vpack.c.bf16 %v5053, %v5047
      %v5186 = vpack.c.bf16 %v5054, %v5048
      %v5187 = vpack.c.bf16 %v5061, %v5055
      %v5188 = vpack.c.bf16 %v5062, %v5056
      %v5189 = vpack.c.bf16 %v5063, %v5057
      %v5190 = vpack.c.bf16 %v5064, %v5058
      %v5191 = vpack.c.bf16 %v5065, %v5059
      %v5192 = vpack.c.bf16 %v5066, %v5060
      %v5193 = vpack.c.bf16 %v5073, %v5067
      %v5194 = vpack.c.bf16 %v5074, %v5068
      %v5195 = vpack.c.bf16 %v5075, %v5069
      %v5196 = vpack.c.bf16 %v5076, %v5070
      %v5197 = vpack.c.bf16 %v5077, %v5071
      %v5198 = vpack.c.bf16 %v5078, %v5072
      %v5199 = vpack.c.bf16 %v5085, %v5079
      %v5200 = vpack.c.bf16 %v5086, %v5080
      %v5201 = vpack.c.bf16 %v5087, %v5081
      %v5202 = vpack.c.bf16 %v5088, %v5082
      %v5203 = vpack.c.bf16 %v5089, %v5083
      %v5204 = vpack.c.bf16 %v5090, %v5084
      %v5205 = vpack.c.bf16 %v5097, %v5091
      %v5206 = vpack.c.bf16 %v5098, %v5092
      %v5207 = vpack.c.bf16 %v5099, %v5093
      %v5208 = vpack.c.bf16 %v5100, %v5094
      %v5209 = vpack.c.bf16 %v5101, %v5095
      %v5210 = vpack.c.bf16 %v5102, %v5096
      %v5211 = vpack.c.bf16 %v5109, %v5103
      %v5212 = vpack.c.bf16 %v5110, %v5104
      %v5213 = vpack.c.bf16 %v5111, %v5105
      %v5214 = vpack.c.bf16 %v5112, %v5106
      %v5215 = vpack.c.bf16 %v5113, %v5107
      %v5216 = vpack.c.bf16 %v5114, %v5108
      %v5217 = vpack.c.bf16 %v5121, %v5115
      %v5218 = vpack.c.bf16 %v5122, %v5116
      %v5219 = vpack.c.bf16 %v5123, %v5117
      %v5220 = vpack.c.bf16 %v5124, %v5118
      %v5221 = vpack.c.bf16 %v5125, %v5119
      %v5222 = vpack.c.bf16 %v5126, %v5120
      %5223 = vmatprep.subr.bf16.mxu0 %v4840
      %5224 = vmatpush1.bf16.xpose.msra.mxu0 %v4839
      %5225 = vmatprep.subr.bf16.mxu0 %v4846
      %5226 = vmatpush1.bf16.xpose.msra.mxu0 %v4845
      %5227 = vmatprep.subr.bf16.mxu0 %v4852
      %5228 = vmatpush1.bf16.xpose.msra.mxu0 %v4851
      %5229 = vmatprep.subr.bf16.mxu0 %v4858
      %5230 = vmatpush1.bf16.xpose.msra.mxu0 %v4857
      %5231 = vmatprep.subr.bf16.mxu0 %v4864
      %5232 = vmatpush1.bf16.xpose.msra.mxu0 %v4863
      %5233 = vmatprep.subr.bf16.mxu0 %v4870
      %5234 = vmatpush1.bf16.xpose.msra.mxu0 %v4869
      %5235 = vmatprep.subr.bf16.mxu0 %v4876
      %5236 = vmatpush1.bf16.xpose.msra.mxu0 %v4875
      %5237 = vmatprep.subr.bf16.mxu0 %v4882
      %5238 = vmatpush1.bf16.xpose.msra.mxu0 %v4881
      %5239 = vmatprep.subr.bf16.mxu0 %v4888
      %5240 = vmatpush1.bf16.xpose.msra.mxu0 %v4887
      %5241 = vmatprep.subr.bf16.mxu0 %v4894
      %5242 = vmatpush1.bf16.xpose.msra.mxu0 %v4893
      %5243 = vmatprep.subr.bf16.mxu0 %v4900
      %5244 = vmatpush1.bf16.xpose.msra.mxu0 %v4899
      %5245 = vmatprep.subr.bf16.mxu0 %v4906
      %5246 = vmatpush1.bf16.xpose.msra.mxu0 %v4905
      %5247 = vmatprep.subr.bf16.mxu0 %v4912
      %5248 = vmatpush1.bf16.xpose.msra.mxu0 %v4911
      %5249 = vmatprep.subr.bf16.mxu0 %v4918
      %5250 = vmatpush1.bf16.xpose.msra.mxu0 %v4917
      %5251 = vmatprep.subr.bf16.mxu0 %v4924
      %5252 = vmatpush1.bf16.xpose.msra.mxu0 %v4923
      %5253 = vmatprep.subr.bf16.mxu0 %v4930
      %5254 = vmatpush1.bf16.xpose.msra.mxu0 %v4929
      %5255 = vmatprep.mubr.bf16.mxu0 %v5128
      %5256 = vmatmul.mubr.bf16.gmra.mrb[0].mxu0 %v5127
      %v5257 = vpop.f32.mrb[0].mxu0
      %v5258 = vadd.f32 0.0, %v5257
      %v5259 = vpop.f32.mrb[0].mxu0
      %v5260 = vadd.f32 0.0, %v5259
      %v5261 = vpop.f32.mrb[0].mxu0
      %v5262 = vadd.f32 0.0, %v5261
      %v5263 = vpop.f32.mrb[0].mxu0
      %v5264 = vadd.f32 0.0, %v5263
      %5265 = vmatprep.mubr.bf16.mxu0 %v5134
      %5266 = vmatmul.mubr.bf16.gmra.mrb[0].mxu0 %v5133
      %v5267 = vpop.f32.mrb[0].mxu0
      %v5268 = vadd.f32 0.0, %v5267
      %v5269 = vpop.f32.mrb[0].mxu0
      %v5270 = vadd.f32 0.0, %v5269
      %v5271 = vpop.f32.mrb[0].mxu0
      %v5272 = vadd.f32 0.0, %v5271
      %v5273 = vpop.f32.mrb[0].mxu0
      %v5274 = vadd.f32 0.0, %v5273
      %5275 = vmatprep.mubr.bf16.mxu0 %v5140
      %5276 = vmatmul.mubr.bf16.gmra.mrb[0].mxu0 %v5139
      %v5277 = vpop.f32.mrb[0].mxu0
      %v5278 = vadd.f32 0.0, %v5277
      %v5279 = vpop.f32.mrb[0].mxu0
      %v5280 = vadd.f32 0.0, %v5279
      %v5281 = vpop.f32.mrb[0].mxu0
      %v5282 = vadd.f32 0.0, %v5281
      %v5283 = vpop.f32.mrb[0].mxu0
      %v5284 = vadd.f32 0.0, %v5283
      %5285 = vmatprep.mubr.bf16.mxu0 %v5146
      %5286 = vmatmul.mubr.bf16.gmra.mrb[0].mxu0 %v5145
      %v5287 = vpop.f32.mrb[0].mxu0
      %v5288 = vadd.f32 0.0, %v5287
      %v5289 = vpop.f32.mrb[0].mxu0
      %v5290 = vadd.f32 0.0, %v5289
      %v5291 = vpop.f32.mrb[0].mxu0
      %v5292 = vadd.f32 0.0, %v5291
      %v5293 = vpop.f32.mrb[0].mxu0
      %v5294 = vadd.f32 0.0, %v5293
      %5295 = vmatprep.mubr.bf16.mxu0 %v5152
      %5296 = vmatmul.mubr.bf16.gmra.mrb[0].mxu0 %v5151
      %v5297 = vpop.f32.mrb[0].mxu0
      %v5298 = vadd.f32 0.0, %v5297
      %v5299 = vpop.f32.mrb[0].mxu0
      %v5300 = vadd.f32 0.0, %v5299
      %v5301 = vpop.f32.mrb[0].mxu0
      %v5302 = vadd.f32 0.0, %v5301
      %v5303 = vpop.f32.mrb[0].mxu0
      %v5304 = vadd.f32 0.0, %v5303
      %5305 = vmatprep.mubr.bf16.mxu0 %v5158
      %5306 = vmatmul.mubr.bf16.gmra.mrb[0].mxu0 %v5157
      %v5307 = vpop.f32.mrb[0].mxu0
      %v5308 = vadd.f32 0.0, %v5307
      %v5309 = vpop.f32.mrb[0].mxu0
      %v5310 = vadd.f32 0.0, %v5309
      %v5311 = vpop.f32.mrb[0].mxu0
      %v5312 = vadd.f32 0.0, %v5311
      %v5313 = vpop.f32.mrb[0].mxu0
      %v5314 = vadd.f32 0.0, %v5313
      %5315 = vmatprep.mubr.bf16.mxu0 %v5164
      %5316 = vmatmul.mubr.bf16.gmra.mrb[0].mxu0 %v5163
      %v5317 = vpop.f32.mrb[0].mxu0
      %v5318 = vadd.f32 0.0, %v5317
      %v5319 = vpop.f32.mrb[0].mxu0
      %v5320 = vadd.f32 0.0, %v5319
      %v5321 = vpop.f32.mrb[0].mxu0
      %v5322 = vadd.f32 0.0, %v5321
      %v5323 = vpop.f32.mrb[0].mxu0
      %v5324 = vadd.f32 0.0, %v5323
      %5325 = vmatprep.mubr.bf16.mxu0 %v5170
      %5326 = vmatmul.mubr.bf16.gmra.mrb[0].mxu0 %v5169
      %v5327 = vpop.f32.mrb[0].mxu0
      %v5328 = vadd.f32 0.0, %v5327
      %v5329 = vpop.f32.mrb[0].mxu0
      %v5330 = vadd.f32 0.0, %v5329
      %v5331 = vpop.f32.mrb[0].mxu0
      %v5332 = vadd.f32 0.0, %v5331
      %v5333 = vpop.f32.mrb[0].mxu0
      %v5334 = vadd.f32 0.0, %v5333
      %5335 = vmatprep.mubr.bf16.mxu0 %v5176
      %5336 = vmatmul.mubr.bf16.gmra.mrb[0].mxu0 %v5175
      %v5337 = vpop.f32.mrb[0].mxu0
      %v5338 = vadd.f32 0.0, %v5337
      %v5339 = vpop.f32.mrb[0].mxu0
      %v5340 = vadd.f32 0.0, %v5339
      %v5341 = vpop.f32.mrb[0].mxu0
      %v5342 = vadd.f32 0.0, %v5341
      %v5343 = vpop.f32.mrb[0].mxu0
      %v5344 = vadd.f32 0.0, %v5343
      %5345 = vmatprep.mubr.bf16.mxu0 %v5182
      %5346 = vmatmul.mubr.bf16.gmra.mrb[0].mxu0 %v5181
      %v5347 = vpop.f32.mrb[0].mxu0
      %v5348 = vadd.f32 0.0, %v5347
      %v5349 = vpop.f32.mrb[0].mxu0
      %v5350 = vadd.f32 0.0, %v5349
      %v5351 = vpop.f32.mrb[0].mxu0
      %v5352 = vadd.f32 0.0, %v5351
      %v5353 = vpop.f32.mrb[0].mxu0
      %v5354 = vadd.f32 0.0, %v5353
      %5355 = vmatprep.mubr.bf16.mxu0 %v5188
      %5356 = vmatmul.mubr.bf16.gmra.mrb[0].mxu0 %v5187
      %v5357 = vpop.f32.mrb[0].mxu0
      %v5358 = vadd.f32 0.0, %v5357
      %v5359 = vpop.f32.mrb[0].mxu0
      %v5360 = vadd.f32 0.0, %v5359
      %v5361 = vpop.f32.mrb[0].mxu0
      %v5362 = vadd.f32 0.0, %v5361
      %v5363 = vpop.f32.mrb[0].mxu0
      %v5364 = vadd.f32 0.0, %v5363
      %5365 = vmatprep.mubr.bf16.mxu0 %v5194
      %5366 = vmatmul.mubr.bf16.gmra.mrb[0].mxu0 %v5193
      %v5367 = vpop.f32.mrb[0].mxu0
      %v5368 = vadd.f32 0.0, %v5367
      %v5369 = vpop.f32.mrb[0].mxu0
      %v5370 = vadd.f32 0.0, %v5369
      %v5371 = vpop.f32.mrb[0].mxu0
      %v5372 = vadd.f32 0.0, %v5371
      %v5373 = vpop.f32.mrb[0].mxu0
      %v5374 = vadd.f32 0.0, %v5373
      %5375 = vmatprep.mubr.bf16.mxu0 %v5200
      %5376 = vmatmul.mubr.bf16.gmra.mrb[0].mxu0 %v5199
      %v5377 = vpop.f32.mrb[0].mxu0
      %v5378 = vadd.f32 0.0, %v5377
      %v5379 = vpop.f32.mrb[0].mxu0
      %v5380 = vadd.f32 0.0, %v5379
      %v5381 = vpop.f32.mrb[0].mxu0
      %v5382 = vadd.f32 0.0, %v5381
      %v5383 = vpop.f32.mrb[0].mxu0
      %v5384 = vadd.f32 0.0, %v5383
      %5385 = vmatprep.mubr.bf16.mxu0 %v5206
      %5386 = vmatmul.mubr.bf16.gmra.mrb[0].mxu0 %v5205
      %v5387 = vpop.f32.mrb[0].mxu0
      %v5388 = vadd.f32 0.0, %v5387
      %v5389 = vpop.f32.mrb[0].mxu0
      %v5390 = vadd.f32 0.0, %v5389
      %v5391 = vpop.f32.mrb[0].mxu0
      %v5392 = vadd.f32 0.0, %v5391
      %v5393 = vpop.f32.mrb[0].mxu0
      %v5394 = vadd.f32 0.0, %v5393
      %5395 = vmatprep.mubr.bf16.mxu0 %v5212
      %5396 = vmatmul.mubr.bf16.gmra.mrb[0].mxu0 %v5211
      %v5397 = vpop.f32.mrb[0].mxu0
      %v5398 = vadd.f32 0.0, %v5397
      %v5399 = vpop.f32.mrb[0].mxu0
      %v5400 = vadd.f32 0.0, %v5399
      %v5401 = vpop.f32.mrb[0].mxu0
      %v5402 = vadd.f32 0.0, %v5401
      %v5403 = vpop.f32.mrb[0].mxu0
      %v5404 = vadd.f32 0.0, %v5403
      %5405 = vmatprep.mubr.bf16.mxu0 %v5218
      %5406 = vmatmul.mubr.bf16.gmra.mrb[0].mxu0 %v5217
      %v5407 = vpop.f32.mrb[0].mxu0
      %v5408 = vadd.f32 0.0, %v5407
      %v5409 = vpop.f32.mrb[0].mxu0
      %v5410 = vadd.f32 0.0, %v5409
      %v5411 = vpop.f32.mrb[0].mxu0
      %v5412 = vadd.f32 0.0, %v5411
      %v5413 = vpop.f32.mrb[0].mxu0
      %v5414 = vadd.f32 0.0, %v5413
      %5415 = vdwg.mxu0
      %5416 = vmatprep.subr.bf16.mxu0 %v4842
      %5417 = vmatpush1.bf16.xpose.msra.mxu0 %v4841
      %5418 = vmatprep.subr.bf16.mxu0 %v4848
      %5419 = vmatpush1.bf16.xpose.msra.mxu0 %v4847
      %5420 = vmatprep.subr.bf16.mxu0 %v4854
      %5421 = vmatpush1.bf16.xpose.msra.mxu0 %v4853
      %5422 = vmatprep.subr.bf16.mxu0 %v4860
      %5423 = vmatpush1.bf16.xpose.msra.mxu0 %v4859
      %5424 = vmatprep.subr.bf16.mxu0 %v4866
      %5425 = vmatpush1.bf16.xpose.msra.mxu0 %v4865
      %5426 = vmatprep.subr.bf16.mxu0 %v4872
      %5427 = vmatpush1.bf16.xpose.msra.mxu0 %v4871
      %5428 = vmatprep.subr.bf16.mxu0 %v4878
      %5429 = vmatpush1.bf16.xpose.msra.mxu0 %v4877
      %5430 = vmatprep.subr.bf16.mxu0 %v4884
      %5431 = vmatpush1.bf16.xpose.msra.mxu0 %v4883
      %5432 = vmatprep.subr.bf16.mxu0 %v4890
      %5433 = vmatpush1.bf16.xpose.msra.mxu0 %v4889
      %5434 = vmatprep.subr.bf16.mxu0 %v4896
      %5435 = vmatpush1.bf16.xpose.msra.mxu0 %v4895
      %5436 = vmatprep.subr.bf16.mxu0 %v4902
      %5437 = vmatpush1.bf16.xpose.msra.mxu0 %v4901
      %5438 = vmatprep.subr.bf16.mxu0 %v4908
      %5439 = vmatpush1.bf16.xpose.msra.mxu0 %v4907
      %5440 = vmatprep.subr.bf16.mxu0 %v4914
      %5441 = vmatpush1.bf16.xpose.msra.mxu0 %v4913
      %5442 = vmatprep.subr.bf16.mxu0 %v4920
      %5443 = vmatpush1.bf16.xpose.msra.mxu0 %v4919
      %5444 = vmatprep.subr.bf16.mxu0 %v4926
      %5445 = vmatpush1.bf16.xpose.msra.mxu0 %v4925
      %5446 = vmatprep.subr.bf16.mxu0 %v4932
      %5447 = vmatpush1.bf16.xpose.msra.mxu0 %v4931
      %5448 = vmatprep.mubr.bf16.mxu0 %v5130
      %5449 = vmatmul.mubr.bf16.gmra.mrb[0].mxu0 %v5129
      %v5450 = vpop.f32.mrb[0].mxu0
      %v5451 = vadd.f32 %v5258, %v5450
      %v5452 = vpop.f32.mrb[0].mxu0
      %v5453 = vadd.f32 %v5260, %v5452
      %v5454 = vpop.f32.mrb[0].mxu0
      %v5455 = vadd.f32 %v5262, %v5454
      %v5456 = vpop.f32.mrb[0].mxu0
      %v5457 = vadd.f32 %v5264, %v5456
      %5458 = vmatprep.mubr.bf16.mxu0 %v5136
      %5459 = vmatmul.mubr.bf16.gmra.mrb[0].mxu0 %v5135
      %v5460 = vpop.f32.mrb[0].mxu0
      %v5461 = vadd.f32 %v5268, %v5460
      %v5462 = vpop.f32.mrb[0].mxu0
      %v5463 = vadd.f32 %v5270, %v5462
      %v5464 = vpop.f32.mrb[0].mxu0
      %v5465 = vadd.f32 %v5272, %v5464
      %v5466 = vpop.f32.mrb[0].mxu0
      %v5467 = vadd.f32 %v5274, %v5466
      %5468 = vmatprep.mubr.bf16.mxu0 %v5142
      %5469 = vmatmul.mubr.bf16.gmra.mrb[0].mxu0 %v5141
      %v5470 = vpop.f32.mrb[0].mxu0
      %v5471 = vadd.f32 %v5278, %v5470
      %v5472 = vpop.f32.mrb[0].mxu0
      %v5473 = vadd.f32 %v5280, %v5472
      %v5474 = vpop.f32.mrb[0].mxu0
      %v5475 = vadd.f32 %v5282, %v5474
      %v5476 = vpop.f32.mrb[0].mxu0
      %v5477 = vadd.f32 %v5284, %v5476
      %5478 = vmatprep.mubr.bf16.mxu0 %v5148
      %5479 = vmatmul.mubr.bf16.gmra.mrb[0].mxu0 %v5147
      %v5480 = vpop.f32.mrb[0].mxu0
      %v5481 = vadd.f32 %v5288, %v5480
      %v5482 = vpop.f32.mrb[0].mxu0
      %v5483 = vadd.f32 %v5290, %v5482
      %v5484 = vpop.f32.mrb[0].mxu0
      %v5485 = vadd.f32 %v5292, %v5484
      %v5486 = vpop.f32.mrb[0].mxu0
      %v5487 = vadd.f32 %v5294, %v5486
      %5488 = vmatprep.mubr.bf16.mxu0 %v5154
      %5489 = vmatmul.mubr.bf16.gmra.mrb[0].mxu0 %v5153
      %v5490 = vpop.f32.mrb[0].mxu0
      %v5491 = vadd.f32 %v5298, %v5490
      %v5492 = vpop.f32.mrb[0].mxu0
      %v5493 = vadd.f32 %v5300, %v5492
      %v5494 = vpop.f32.mrb[0].mxu0
      %v5495 = vadd.f32 %v5302, %v5494
      %v5496 = vpop.f32.mrb[0].mxu0
      %v5497 = vadd.f32 %v5304, %v5496
      %5498 = vmatprep.mubr.bf16.mxu0 %v5160
      %5499 = vmatmul.mubr.bf16.gmra.mrb[0].mxu0 %v5159
      %v5500 = vpop.f32.mrb[0].mxu0
      %v5501 = vadd.f32 %v5308, %v5500
      %v5502 = vpop.f32.mrb[0].mxu0
      %v5503 = vadd.f32 %v5310, %v5502
      %v5504 = vpop.f32.mrb[0].mxu0
      %v5505 = vadd.f32 %v5312, %v5504
      %v5506 = vpop.f32.mrb[0].mxu0
      %v5507 = vadd.f32 %v5314, %v5506
      %5508 = vmatprep.mubr.bf16.mxu0 %v5166
      %5509 = vmatmul.mubr.bf16.gmra.mrb[0].mxu0 %v5165
      %v5510 = vpop.f32.mrb[0].mxu0
      %v5511 = vadd.f32 %v5318, %v5510
      %v5512 = vpop.f32.mrb[0].mxu0
      %v5513 = vadd.f32 %v5320, %v5512
      %v5514 = vpop.f32.mrb[0].mxu0
      %v5515 = vadd.f32 %v5322, %v5514
      %v5516 = vpop.f32.mrb[0].mxu0
      %v5517 = vadd.f32 %v5324, %v5516
      %5518 = vmatprep.mubr.bf16.mxu0 %v5172
      %5519 = vmatmul.mubr.bf16.gmra.mrb[0].mxu0 %v5171
      %v5520 = vpop.f32.mrb[0].mxu0
      %v5521 = vadd.f32 %v5328, %v5520
      %v5522 = vpop.f32.mrb[0].mxu0
      %v5523 = vadd.f32 %v5330, %v5522
      %v5524 = vpop.f32.mrb[0].mxu0
      %v5525 = vadd.f32 %v5332, %v5524
      %v5526 = vpop.f32.mrb[0].mxu0
      %v5527 = vadd.f32 %v5334, %v5526
      %5528 = vmatprep.mubr.bf16.mxu0 %v5178
      %5529 = vmatmul.mubr.bf16.gmra.mrb[0].mxu0 %v5177
      %v5530 = vpop.f32.mrb[0].mxu0
      %v5531 = vadd.f32 %v5338, %v5530
      %v5532 = vpop.f32.mrb[0].mxu0
      %v5533 = vadd.f32 %v5340, %v5532
      %v5534 = vpop.f32.mrb[0].mxu0
      %v5535 = vadd.f32 %v5342, %v5534
      %v5536 = vpop.f32.mrb[0].mxu0
      %v5537 = vadd.f32 %v5344, %v5536
      %5538 = vmatprep.mubr.bf16.mxu0 %v5184
      %5539 = vmatmul.mubr.bf16.gmra.mrb[0].mxu0 %v5183
      %v5540 = vpop.f32.mrb[0].mxu0
      %v5541 = vadd.f32 %v5348, %v5540
      %v5542 = vpop.f32.mrb[0].mxu0
      %v5543 = vadd.f32 %v5350, %v5542
      %v5544 = vpop.f32.mrb[0].mxu0
      %v5545 = vadd.f32 %v5352, %v5544
      %v5546 = vpop.f32.mrb[0].mxu0
      %v5547 = vadd.f32 %v5354, %v5546
      %5548 = vmatprep.mubr.bf16.mxu0 %v5190
      %5549 = vmatmul.mubr.bf16.gmra.mrb[0].mxu0 %v5189
      %v5550 = vpop.f32.mrb[0].mxu0
      %v5551 = vadd.f32 %v5358, %v5550
      %v5552 = vpop.f32.mrb[0].mxu0
      %v5553 = vadd.f32 %v5360, %v5552
      %v5554 = vpop.f32.mrb[0].mxu0
      %v5555 = vadd.f32 %v5362, %v5554
      %v5556 = vpop.f32.mrb[0].mxu0
      %v5557 = vadd.f32 %v5364, %v5556
      %5558 = vmatprep.mubr.bf16.mxu0 %v5196
      %5559 = vmatmul.mubr.bf16.gmra.mrb[0].mxu0 %v5195
      %v5560 = vpop.f32.mrb[0].mxu0
      %v5561 = vadd.f32 %v5368, %v5560
      %v5562 = vpop.f32.mrb[0].mxu0
      %v5563 = vadd.f32 %v5370, %v5562
      %v5564 = vpop.f32.mrb[0].mxu0
      %v5565 = vadd.f32 %v5372, %v5564
      %v5566 = vpop.f32.mrb[0].mxu0
      %v5567 = vadd.f32 %v5374, %v5566
      %5568 = vmatprep.mubr.bf16.mxu0 %v5202
      %5569 = vmatmul.mubr.bf16.gmra.mrb[0].mxu0 %v5201
      %v5570 = vpop.f32.mrb[0].mxu0
      %v5571 = vadd.f32 %v5378, %v5570
      %v5572 = vpop.f32.mrb[0].mxu0
      %v5573 = vadd.f32 %v5380, %v5572
      %v5574 = vpop.f32.mrb[0].mxu0
      %v5575 = vadd.f32 %v5382, %v5574
      %v5576 = vpop.f32.mrb[0].mxu0
      %v5577 = vadd.f32 %v5384, %v5576
      %5578 = vmatprep.mubr.bf16.mxu0 %v5208
      %5579 = vmatmul.mubr.bf16.gmra.mrb[0].mxu0 %v5207
      %v5580 = vpop.f32.mrb[0].mxu0
      %v5581 = vadd.f32 %v5388, %v5580
      %v5582 = vpop.f32.mrb[0].mxu0
      %v5583 = vadd.f32 %v5390, %v5582
      %v5584 = vpop.f32.mrb[0].mxu0
      %v5585 = vadd.f32 %v5392, %v5584
      %v5586 = vpop.f32.mrb[0].mxu0
      %v5587 = vadd.f32 %v5394, %v5586
      %5588 = vmatprep.mubr.bf16.mxu0 %v5214
      %5589 = vmatmul.mubr.bf16.gmra.mrb[0].mxu0 %v5213
      %v5590 = vpop.f32.mrb[0].mxu0
      %v5591 = vadd.f32 %v5398, %v5590
      %v5592 = vpop.f32.mrb[0].mxu0
      %v5593 = vadd.f32 %v5400, %v5592
      %v5594 = vpop.f32.mrb[0].mxu0
      %v5595 = vadd.f32 %v5402, %v5594
      %v5596 = vpop.f32.mrb[0].mxu0
      %v5597 = vadd.f32 %v5404, %v5596
      %5598 = vmatprep.mubr.bf16.mxu0 %v5220
      %5599 = vmatmul.mubr.bf16.gmra.mrb[0].mxu0 %v5219
      %v5600 = vpop.f32.mrb[0].mxu0
      %v5601 = vadd.f32 %v5408, %v5600
      %v5602 = vpop.f32.mrb[0].mxu0
      %v5603 = vadd.f32 %v5410, %v5602
      %v5604 = vpop.f32.mrb[0].mxu0
      %v5605 = vadd.f32 %v5412, %v5604
      %v5606 = vpop.f32.mrb[0].mxu0
      %v5607 = vadd.f32 %v5414, %v5606
      %5608 = vdwg.mxu0
      %5609 = vmatprep.subr.bf16.mxu0 %v4844
      %5610 = vmatpush1.bf16.xpose.msra.mxu0 %v4843
      %5611 = vmatprep.subr.bf16.mxu0 %v4850
      %5612 = vmatpush1.bf16.xpose.msra.mxu0 %v4849
      %5613 = vmatprep.subr.bf16.mxu0 %v4856
      %5614 = vmatpush1.bf16.xpose.msra.mxu0 %v4855
      %5615 = vmatprep.subr.bf16.mxu0 %v4862
      %5616 = vmatpush1.bf16.xpose.msra.mxu0 %v4861
      %5617 = vmatprep.subr.bf16.mxu0 %v4868
      %5618 = vmatpush1.bf16.xpose.msra.mxu0 %v4867
      %5619 = vmatprep.subr.bf16.mxu0 %v4874
      %5620 = vmatpush1.bf16.xpose.msra.mxu0 %v4873
      %5621 = vmatprep.subr.bf16.mxu0 %v4880
      %5622 = vmatpush1.bf16.xpose.msra.mxu0 %v4879
      %5623 = vmatprep.subr.bf16.mxu0 %v4886
      %5624 = vmatpush1.bf16.xpose.msra.mxu0 %v4885
      %5625 = vmatprep.subr.bf16.mxu0 %v4892
      %5626 = vmatpush1.bf16.xpose.msra.mxu0 %v4891
      %5627 = vmatprep.subr.bf16.mxu0 %v4898
      %5628 = vmatpush1.bf16.xpose.msra.mxu0 %v4897
      %5629 = vmatprep.subr.bf16.mxu0 %v4904
      %5630 = vmatpush1.bf16.xpose.msra.mxu0 %v4903
      %5631 = vmatprep.subr.bf16.mxu0 %v4910
      %5632 = vmatpush1.bf16.xpose.msra.mxu0 %v4909
      %5633 = vmatprep.subr.bf16.mxu0 %v4916
      %5634 = vmatpush1.bf16.xpose.msra.mxu0 %v4915
      %5635 = vmatprep.subr.bf16.mxu0 %v4922
      %5636 = vmatpush1.bf16.xpose.msra.mxu0 %v4921
      %5637 = vmatprep.subr.bf16.mxu0 %v4928
      %5638 = vmatpush1.bf16.xpose.msra.mxu0 %v4927
      %5639 = vmatprep.subr.bf16.mxu0 %v4934
      %5640 = vmatpush1.bf16.xpose.msra.mxu0 %v4933
      %5641 = vmatprep.mubr.bf16.mxu0 %v5132
      %5642 = vmatmul.mubr.bf16.gmra.mrb[0].mxu0 %v5131
      %v5643 = vpop.f32.mrb[0].mxu0
      %v5644 = vadd.f32 %v5451, %v5643
      %v5645 = vpop.f32.mrb[0].mxu0
      %v5646 = vadd.f32 %v5453, %v5645
      %v5647 = vpop.f32.mrb[0].mxu0
      %v5648 = vadd.f32 %v5455, %v5647
      %v5649 = vpop.f32.mrb[0].mxu0
      %v5650 = vadd.f32 %v5457, %v5649
      %5651 = vmatprep.mubr.bf16.mxu0 %v5138
      %5652 = vmatmul.mubr.bf16.gmra.mrb[0].mxu0 %v5137
      %v5653 = vpop.f32.mrb[0].mxu0
      %v5654 = vadd.f32 %v5461, %v5653
      %v5655 = vpop.f32.mrb[0].mxu0
      %v5656 = vadd.f32 %v5463, %v5655
      %v5657 = vpop.f32.mrb[0].mxu0
      %v5658 = vadd.f32 %v5465, %v5657
      %v5659 = vpop.f32.mrb[0].mxu0
      %v5660 = vadd.f32 %v5467, %v5659
      %5661 = vmatprep.mubr.bf16.mxu0 %v5144
      %5662 = vmatmul.mubr.bf16.gmra.mrb[0].mxu0 %v5143
      %v5663 = vpop.f32.mrb[0].mxu0
      %v5664 = vadd.f32 %v5471, %v5663
      %v5665 = vpop.f32.mrb[0].mxu0
      %v5666 = vadd.f32 %v5473, %v5665
      %v5667 = vpop.f32.mrb[0].mxu0
      %v5668 = vadd.f32 %v5475, %v5667
      %v5669 = vpop.f32.mrb[0].mxu0
      %v5670 = vadd.f32 %v5477, %v5669
      %5671 = vmatprep.mubr.bf16.mxu0 %v5150
      %5672 = vmatmul.mubr.bf16.gmra.mrb[0].mxu0 %v5149
      %v5673 = vpop.f32.mrb[0].mxu0
      %v5674 = vadd.f32 %v5481, %v5673
      %v5675 = vpop.f32.mrb[0].mxu0
      %v5676 = vadd.f32 %v5483, %v5675
      %v5677 = vpop.f32.mrb[0].mxu0
      %v5678 = vadd.f32 %v5485, %v5677
      %v5679 = vpop.f32.mrb[0].mxu0
      %v5680 = vadd.f32 %v5487, %v5679
      %5681 = vmatprep.mubr.bf16.mxu0 %v5156
      %5682 = vmatmul.mubr.bf16.gmra.mrb[0].mxu0 %v5155
      %v5683 = vpop.f32.mrb[0].mxu0
      %v5684 = vadd.f32 %v5491, %v5683
      %v5685 = vpop.f32.mrb[0].mxu0
      %v5686 = vadd.f32 %v5493, %v5685
      %v5687 = vpop.f32.mrb[0].mxu0
      %v5688 = vadd.f32 %v5495, %v5687
      %v5689 = vpop.f32.mrb[0].mxu0
      %v5690 = vadd.f32 %v5497, %v5689
      %5691 = vmatprep.mubr.bf16.mxu0 %v5162
      %5692 = vmatmul.mubr.bf16.gmra.mrb[0].mxu0 %v5161
      %v5693 = vpop.f32.mrb[0].mxu0
      %v5694 = vadd.f32 %v5501, %v5693
      %v5695 = vpop.f32.mrb[0].mxu0
      %v5696 = vadd.f32 %v5503, %v5695
      %v5697 = vpop.f32.mrb[0].mxu0
      %v5698 = vadd.f32 %v5505, %v5697
      %v5699 = vpop.f32.mrb[0].mxu0
      %v5700 = vadd.f32 %v5507, %v5699
      %5701 = vmatprep.mubr.bf16.mxu0 %v5168
      %5702 = vmatmul.mubr.bf16.gmra.mrb[0].mxu0 %v5167
      %v5703 = vpop.f32.mrb[0].mxu0
      %v5704 = vadd.f32 %v5511, %v5703
      %v5705 = vpop.f32.mrb[0].mxu0
      %v5706 = vadd.f32 %v5513, %v5705
      %v5707 = vpop.f32.mrb[0].mxu0
      %v5708 = vadd.f32 %v5515, %v5707
      %v5709 = vpop.f32.mrb[0].mxu0
      %v5710 = vadd.f32 %v5517, %v5709
      %5711 = vmatprep.mubr.bf16.mxu0 %v5174
      %5712 = vmatmul.mubr.bf16.gmra.mrb[0].mxu0 %v5173
      %v5713 = vpop.f32.mrb[0].mxu0
      %v5714 = vadd.f32 %v5521, %v5713
      %v5715 = vpop.f32.mrb[0].mxu0
      %v5716 = vadd.f32 %v5523, %v5715
      %v5717 = vpop.f32.mrb[0].mxu0
      %v5718 = vadd.f32 %v5525, %v5717
      %v5719 = vpop.f32.mrb[0].mxu0
      %v5720 = vadd.f32 %v5527, %v5719
      %5721 = vmatprep.mubr.bf16.mxu0 %v5180
      %5722 = vmatmul.mubr.bf16.gmra.mrb[0].mxu0 %v5179
      %v5723 = vpop.f32.mrb[0].mxu0
      %v5724 = vadd.f32 %v5531, %v5723
      %v5725 = vpop.f32.mrb[0].mxu0
      %v5726 = vadd.f32 %v5533, %v5725
      %v5727 = vpop.f32.mrb[0].mxu0
      %v5728 = vadd.f32 %v5535, %v5727
      %v5729 = vpop.f32.mrb[0].mxu0
      %v5730 = vadd.f32 %v5537, %v5729
      %5731 = vmatprep.mubr.bf16.mxu0 %v5186
      %5732 = vmatmul.mubr.bf16.gmra.mrb[0].mxu0 %v5185
      %v5733 = vpop.f32.mrb[0].mxu0
      %v5734 = vadd.f32 %v5541, %v5733
      %v5735 = vpop.f32.mrb[0].mxu0
      %v5736 = vadd.f32 %v5543, %v5735
      %v5737 = vpop.f32.mrb[0].mxu0
      %v5738 = vadd.f32 %v5545, %v5737
      %v5739 = vpop.f32.mrb[0].mxu0
      %v5740 = vadd.f32 %v5547, %v5739
      %5741 = vmatprep.mubr.bf16.mxu0 %v5192
      %5742 = vmatmul.mubr.bf16.gmra.mrb[0].mxu0 %v5191
      %v5743 = vpop.f32.mrb[0].mxu0
      %v5744 = vadd.f32 %v5551, %v5743
      %v5745 = vpop.f32.mrb[0].mxu0
      %v5746 = vadd.f32 %v5553, %v5745
      %v5747 = vpop.f32.mrb[0].mxu0
      %v5748 = vadd.f32 %v5555, %v5747
      %v5749 = vpop.f32.mrb[0].mxu0
      %v5750 = vadd.f32 %v5557, %v5749
      %5751 = vmatprep.mubr.bf16.mxu0 %v5198
      %5752 = vmatmul.mubr.bf16.gmra.mrb[0].mxu0 %v5197
      %v5753 = vpop.f32.mrb[0].mxu0
      %v5754 = vadd.f32 %v5561, %v5753
      %v5755 = vpop.f32.mrb[0].mxu0
      %v5756 = vadd.f32 %v5563, %v5755
      %v5757 = vpop.f32.mrb[0].mxu0
      %v5758 = vadd.f32 %v5565, %v5757
      %v5759 = vpop.f32.mrb[0].mxu0
      %v5760 = vadd.f32 %v5567, %v5759
      %5761 = vmatprep.mubr.bf16.mxu0 %v5204
      %5762 = vmatmul.mubr.bf16.gmra.mrb[0].mxu0 %v5203
      %v5763 = vpop.f32.mrb[0].mxu0
      %v5764 = vadd.f32 %v5571, %v5763
      %v5765 = vpop.f32.mrb[0].mxu0
      %v5766 = vadd.f32 %v5573, %v5765
      %v5767 = vpop.f32.mrb[0].mxu0
      %v5768 = vadd.f32 %v5575, %v5767
      %v5769 = vpop.f32.mrb[0].mxu0
      %v5770 = vadd.f32 %v5577, %v5769
      %5771 = vmatprep.mubr.bf16.mxu0 %v5210
      %5772 = vmatmul.mubr.bf16.gmra.mrb[0].mxu0 %v5209
      %v5773 = vpop.f32.mrb[0].mxu0
      %v5774 = vadd.f32 %v5581, %v5773
      %v5775 = vpop.f32.mrb[0].mxu0
      %v5776 = vadd.f32 %v5583, %v5775
      %v5777 = vpop.f32.mrb[0].mxu0
      %v5778 = vadd.f32 %v5585, %v5777
      %v5779 = vpop.f32.mrb[0].mxu0
      %v5780 = vadd.f32 %v5587, %v5779
      %5781 = vmatprep.mubr.bf16.mxu0 %v5216
      %5782 = vmatmul.mubr.bf16.gmra.mrb[0].mxu0 %v5215
      %v5783 = vpop.f32.mrb[0].mxu0
      %v5784 = vadd.f32 %v5591, %v5783
      %v5785 = vpop.f32.mrb[0].mxu0
      %v5786 = vadd.f32 %v5593, %v5785
      %v5787 = vpop.f32.mrb[0].mxu0
      %v5788 = vadd.f32 %v5595, %v5787
      %v5789 = vpop.f32.mrb[0].mxu0
      %v5790 = vadd.f32 %v5597, %v5789
      %5791 = vmatprep.mubr.bf16.mxu0 %v5222
      %5792 = vmatmul.mubr.bf16.gmra.mrb[0].mxu0 %v5221
      %v5793 = vpop.f32.mrb[0].mxu0
      %v5794 = vadd.f32 %v5601, %v5793
      %v5795 = vpop.f32.mrb[0].mxu0
      %v5796 = vadd.f32 %v5603, %v5795
      %v5797 = vpop.f32.mrb[0].mxu0
      %v5798 = vadd.f32 %v5605, %v5797
      %v5799 = vpop.f32.mrb[0].mxu0
      %v5800 = vadd.f32 %v5607, %v5799
      %5801 = vdwg.mxu0
      %v5802 = vld [vmem:[%s467] sm:$0x3]
      %vm5803 = vcmp.gt.f32.partialorder %v5802, 0.0
      %v5804 = vsel %vm5803, 1, 0
      %v5805 = vlaneseq
      %v5806 = vshrl.u32 %v5805, 7
      %v5807 = vsub.s32 0, %v5806
      %v5808 = vrot.slane %v5804, %v5807
      %v5809 = vlaneseq
      %v5810 = vshrl.u32 %v5809, 7
      %v5811 = vsub.s32 1, %v5810
      %v5812 = vrot.slane %v5804, %v5811
      %vm5813 = vcmp.eq.s32.totalorder %v5808, 1
      %vm5814 = vcmp.eq.s32.totalorder %v5812, 1
      %v5815 = vsel %vm5813, -1e-05, %v5644
      %v5816 = vsel %vm5814, -1e-05, %v5646
      %v5817 = vsel %vm5813, -1e-05, %v5648
      %v5818 = vsel %vm5814, -1e-05, %v5650
      %v5819 = vsel %vm5813, -1e-05, %v5654
      %v5820 = vsel %vm5814, -1e-05, %v5656
      %v5821 = vsel %vm5813, -1e-05, %v5658
      %v5822 = vsel %vm5814, -1e-05, %v5660
      %v5823 = vsel %vm5813, -1e-05, %v5664
      %v5824 = vsel %vm5814, -1e-05, %v5666
      %v5825 = vsel %vm5813, -1e-05, %v5668
      %v5826 = vsel %vm5814, -1e-05, %v5670
      %v5827 = vsel %vm5813, -1e-05, %v5674
      %v5828 = vsel %vm5814, -1e-05, %v5676
      %v5829 = vsel %vm5813, -1e-05, %v5678
      %v5830 = vsel %vm5814, -1e-05, %v5680
      %v5831 = vsel %vm5813, -1e-05, %v5684
      %v5832 = vsel %vm5814, -1e-05, %v5686
      %v5833 = vsel %vm5813, -1e-05, %v5688
      %v5834 = vsel %vm5814, -1e-05, %v5690
      %v5835 = vsel %vm5813, -1e-05, %v5694
      %v5836 = vsel %vm5814, -1e-05, %v5696
      %v5837 = vsel %vm5813, -1e-05, %v5698
      %v5838 = vsel %vm5814, -1e-05, %v5700
      %v5839 = vsel %vm5813, -1e-05, %v5704
      %v5840 = vsel %vm5814, -1e-05, %v5706
      %v5841 = vsel %vm5813, -1e-05, %v5708
      %v5842 = vsel %vm5814, -1e-05, %v5710
      %v5843 = vsel %vm5813, -1e-05, %v5714
      %v5844 = vsel %vm5814, -1e-05, %v5716
      %v5845 = vsel %vm5813, -1e-05, %v5718
      %v5846 = vsel %vm5814, -1e-05, %v5720
      %v5847 = vsel %vm5813, -1e-05, %v5724
      %v5848 = vsel %vm5814, -1e-05, %v5726
      %v5849 = vsel %vm5813, -1e-05, %v5728
      %v5850 = vsel %vm5814, -1e-05, %v5730
      %v5851 = vsel %vm5813, -1e-05, %v5734
      %v5852 = vsel %vm5814, -1e-05, %v5736
      %v5853 = vsel %vm5813, -1e-05, %v5738
      %v5854 = vsel %vm5814, -1e-05, %v5740
      %v5855 = vsel %vm5813, -1e-05, %v5744
      %v5856 = vsel %vm5814, -1e-05, %v5746
      %v5857 = vsel %vm5813, -1e-05, %v5748
      %v5858 = vsel %vm5814, -1e-05, %v5750
      %v5859 = vsel %vm5813, -1e-05, %v5754
      %v5860 = vsel %vm5814, -1e-05, %v5756
      %v5861 = vsel %vm5813, -1e-05, %v5758
      %v5862 = vsel %vm5814, -1e-05, %v5760
      %v5863 = vsel %vm5813, -1e-05, %v5764
      %v5864 = vsel %vm5814, -1e-05, %v5766
      %v5865 = vsel %vm5813, -1e-05, %v5768
      %v5866 = vsel %vm5814, -1e-05, %v5770
      %v5867 = vsel %vm5813, -1e-05, %v5774
      %v5868 = vsel %vm5814, -1e-05, %v5776
      %v5869 = vsel %vm5813, -1e-05, %v5778
      %v5870 = vsel %vm5814, -1e-05, %v5780
      %v5871 = vsel %vm5813, -1e-05, %v5784
      %v5872 = vsel %vm5814, -1e-05, %v5786
      %v5873 = vsel %vm5813, -1e-05, %v5788
      %v5874 = vsel %vm5814, -1e-05, %v5790
      %v5875 = vsel %vm5813, -1e-05, %v5794
      %v5876 = vsel %vm5814, -1e-05, %v5796
      %v5877 = vsel %vm5813, -1e-05, %v5798
      %v5878 = vsel %vm5814, -1e-05, %v5800
      %v5879 = vld [vmem:[%s5] sm:$0xff]
      %v5880 = vld [vmem:[%s5 + $0x8] sm:$0xff]
      %v5881 = vld [vmem:[%s5 + $0x10] sm:$0xff]
      %v5882 = vld [vmem:[%s5 + $0x18] sm:$0xff]
      %v5883 = vld [vmem:[%s5 + $0x20] sm:$0xff]
      %v5884 = vld [vmem:[%s5 + $0x28] sm:$0xff]
      %v5885 = vld [vmem:[%s5 + $0x30] sm:$0xff]
      %v5886 = vld [vmem:[%s5 + $0x38] sm:$0xff]
      %v5887 = vld [vmem:[%s5 + $0x40] sm:$0xff]
      %v5888 = vld [vmem:[%s5 + $0x48] sm:$0xff]
      %v5889 = vld [vmem:[%s5 + $0x50] sm:$0xff]
      %v5890 = vld [vmem:[%s5 + $0x58] sm:$0xff]
      %v5891 = vld [vmem:[%s5 + $0x60] sm:$0xff]
      %v5892 = vld [vmem:[%s5 + $0x68] sm:$0xff]
      %v5893 = vld [vmem:[%s5 + $0x70] sm:$0xff]
      %v5894 = vld [vmem:[%s5 + $0x78] sm:$0xff]
      %v5895 = vld [vmem:[%s5 + $0x80] sm:$0xff]
      %v5896 = vld [vmem:[%s5 + $0x88] sm:$0xff]
      %v5897 = vld [vmem:[%s5 + $0x90] sm:$0xff]
      %v5898 = vld [vmem:[%s5 + $0x98] sm:$0xff]
      %v5899 = vld [vmem:[%s5 + $0xa0] sm:$0xff]
      %v5900 = vld [vmem:[%s5 + $0xa8] sm:$0xff]
      %v5901 = vld [vmem:[%s5 + $0xb0] sm:$0xff]
      %v5902 = vld [vmem:[%s5 + $0xb8] sm:$0xff]
      %v5903 = vld [vmem:[%s5 + $0xc0] sm:$0xff]
      %v5904 = vld [vmem:[%s5 + $0xc8] sm:$0xff]
      %v5905 = vld [vmem:[%s5 + $0xd0] sm:$0xff]
      %v5906 = vld [vmem:[%s5 + $0xd8] sm:$0xff]
      %v5907 = vld [vmem:[%s5 + $0xe0] sm:$0xff]
      %v5908 = vld [vmem:[%s5 + $0xe8] sm:$0xff]
      %v5909 = vld [vmem:[%s5 + $0xf0] sm:$0xff]
      %v5910 = vld [vmem:[%s5 + $0xf8] sm:$0xff]
      %v5911 = vld [vmem:[%s6] sm:$0x3]
      %5913 = vset.pattern.permute.xlu0 0
      %5914 = vperm.xlu0 %5913, %v5879
      %v5915 = vpop.permute.xlu0 %5914
      %5918 = vset.pattern.permute.xlu0 0
      %5919 = vperm.xlu0 %5918, %v5880
      %v5920 = vpop.permute.xlu0 %5919
      %5923 = vset.pattern.permute.xlu0 0
      %5924 = vperm.xlu0 %5923, %v5881
      %v5925 = vpop.permute.xlu0 %5924
      %5928 = vset.pattern.permute.xlu0 0
      %5929 = vperm.xlu0 %5928, %v5882
      %v5930 = vpop.permute.xlu0 %5929
      %5933 = vset.pattern.permute.xlu0 0
      %5934 = vperm.xlu0 %5933, %v5883
      %v5935 = vpop.permute.xlu0 %5934
      %5938 = vset.pattern.permute.xlu0 0
      %5939 = vperm.xlu0 %5938, %v5884
      %v5940 = vpop.permute.xlu0 %5939
      %5943 = vset.pattern.permute.xlu0 0
      %5944 = vperm.xlu0 %5943, %v5885
      %v5945 = vpop.permute.xlu0 %5944
      %5948 = vset.pattern.permute.xlu0 0
      %5949 = vperm.xlu0 %5948, %v5886
      %v5950 = vpop.permute.xlu0 %5949
      %5953 = vset.pattern.permute.xlu0 0
      %5954 = vperm.xlu0 %5953, %v5887
      %v5955 = vpop.permute.xlu0 %5954
      %5958 = vset.pattern.permute.xlu0 0
      %5959 = vperm.xlu0 %5958, %v5888
      %v5960 = vpop.permute.xlu0 %5959
      %5963 = vset.pattern.permute.xlu0 0
      %5964 = vperm.xlu0 %5963, %v5889
      %v5965 = vpop.permute.xlu0 %5964
      %5968 = vset.pattern.permute.xlu0 0
      %5969 = vperm.xlu0 %5968, %v5890
      %v5970 = vpop.permute.xlu0 %5969
      %5973 = vset.pattern.permute.xlu0 0
      %5974 = vperm.xlu0 %5973, %v5891
      %v5975 = vpop.permute.xlu0 %5974
      %5978 = vset.pattern.permute.xlu0 0
      %5979 = vperm.xlu0 %5978, %v5892
      %v5980 = vpop.permute.xlu0 %5979
      %5983 = vset.pattern.permute.xlu0 0
      %5984 = vperm.xlu0 %5983, %v5893
      %v5985 = vpop.permute.xlu0 %5984
      %5988 = vset.pattern.permute.xlu0 0
      %5989 = vperm.xlu0 %5988, %v5894
      %v5990 = vpop.permute.xlu0 %5989
      %5993 = vset.pattern.permute.xlu0 0
      %5994 = vperm.xlu0 %5993, %v5895
      %v5995 = vpop.permute.xlu0 %5994
      %5998 = vset.pattern.permute.xlu0 0
      %5999 = vperm.xlu0 %5998, %v5896
      %v6000 = vpop.permute.xlu0 %5999
      %6003 = vset.pattern.permute.xlu0 0
      %6004 = vperm.xlu0 %6003, %v5897
      %v6005 = vpop.permute.xlu0 %6004
      %6008 = vset.pattern.permute.xlu0 0
      %6009 = vperm.xlu0 %6008, %v5898
      %v6010 = vpop.permute.xlu0 %6009
      %6013 = vset.pattern.permute.xlu0 0
      %6014 = vperm.xlu0 %6013, %v5899
      %v6015 = vpop.permute.xlu0 %6014
      %6018 = vset.pattern.permute.xlu0 0
      %6019 = vperm.xlu0 %6018, %v5900
      %v6020 = vpop.permute.xlu0 %6019
      %6023 = vset.pattern.permute.xlu0 0
      %6024 = vperm.xlu0 %6023, %v5901
      %v6025 = vpop.permute.xlu0 %6024
      %6028 = vset.pattern.permute.xlu0 0
      %6029 = vperm.xlu0 %6028, %v5902
      %v6030 = vpop.permute.xlu0 %6029
      %6033 = vset.pattern.permute.xlu0 0
      %6034 = vperm.xlu0 %6033, %v5903
      %v6035 = vpop.permute.xlu0 %6034
      %6038 = vset.pattern.permute.xlu0 0
      %6039 = vperm.xlu0 %6038, %v5904
      %v6040 = vpop.permute.xlu0 %6039
      %6043 = vset.pattern.permute.xlu0 0
      %6044 = vperm.xlu0 %6043, %v5905
      %v6045 = vpop.permute.xlu0 %6044
      %6048 = vset.pattern.permute.xlu0 0
      %6049 = vperm.xlu0 %6048, %v5906
      %v6050 = vpop.permute.xlu0 %6049
      %6053 = vset.pattern.permute.xlu0 0
      %6054 = vperm.xlu0 %6053, %v5907
      %v6055 = vpop.permute.xlu0 %6054
      %6058 = vset.pattern.permute.xlu0 0
      %6059 = vperm.xlu0 %6058, %v5908
      %v6060 = vpop.permute.xlu0 %6059
      %6063 = vset.pattern.permute.xlu0 0
      %6064 = vperm.xlu0 %6063, %v5909
      %v6065 = vpop.permute.xlu0 %6064
      %6068 = vset.pattern.permute.xlu0 0
      %6069 = vperm.xlu0 %6068, %v5910
      %v6070 = vpop.permute.xlu0 %6069
      %v6073 = vlaneseq
      %v6074 = vshrl.u32 %v6073, 7
      %v6075 = vsub.s32 0, %v6074
      %v6076 = vrot.slane %v5911, %v6075
      %v6077 = vlaneseq
      %v6078 = vshrl.u32 %v6077, 7
      %v6079 = vsub.s32 1, %v6078
      %v6080 = vrot.slane %v5911, %v6079
      %vm6083 = vcmp.ne.f32.partialorder %v5915, %v6076
      %vm6084 = vcmp.ne.f32.partialorder %v5915, %v6080
      %vm6085 = vcmp.ne.f32.partialorder %v5920, %v6076
      %vm6086 = vcmp.ne.f32.partialorder %v5920, %v6080
      %vm6087 = vcmp.ne.f32.partialorder %v5925, %v6076
      %vm6088 = vcmp.ne.f32.partialorder %v5925, %v6080
      %vm6089 = vcmp.ne.f32.partialorder %v5930, %v6076
      %vm6090 = vcmp.ne.f32.partialorder %v5930, %v6080
      %vm6091 = vcmp.ne.f32.partialorder %v5935, %v6076
      %vm6092 = vcmp.ne.f32.partialorder %v5935, %v6080
      %vm6093 = vcmp.ne.f32.partialorder %v5940, %v6076
      %vm6094 = vcmp.ne.f32.partialorder %v5940, %v6080
      %vm6095 = vcmp.ne.f32.partialorder %v5945, %v6076
      %vm6096 = vcmp.ne.f32.partialorder %v5945, %v6080
      %vm6097 = vcmp.ne.f32.partialorder %v5950, %v6076
      %vm6098 = vcmp.ne.f32.partialorder %v5950, %v6080
      %vm6099 = vcmp.ne.f32.partialorder %v5955, %v6076
      %vm6100 = vcmp.ne.f32.partialorder %v5955, %v6080
      %vm6101 = vcmp.ne.f32.partialorder %v5960, %v6076
      %vm6102 = vcmp.ne.f32.partialorder %v5960, %v6080
      %vm6103 = vcmp.ne.f32.partialorder %v5965, %v6076
      %vm6104 = vcmp.ne.f32.partialorder %v5965, %v6080
      %vm6105 = vcmp.ne.f32.partialorder %v5970, %v6076
      %vm6106 = vcmp.ne.f32.partialorder %v5970, %v6080
      %vm6107 = vcmp.ne.f32.partialorder %v5975, %v6076
      %vm6108 = vcmp.ne.f32.partialorder %v5975, %v6080
      %vm6109 = vcmp.ne.f32.partialorder %v5980, %v6076
      %vm6110 = vcmp.ne.f32.partialorder %v5980, %v6080
      %vm6111 = vcmp.ne.f32.partialorder %v5985, %v6076
      %vm6112 = vcmp.ne.f32.partialorder %v5985, %v6080
      %vm6113 = vcmp.ne.f32.partialorder %v5990, %v6076
      %vm6114 = vcmp.ne.f32.partialorder %v5990, %v6080
      %vm6115 = vcmp.ne.f32.partialorder %v5995, %v6076
      %vm6116 = vcmp.ne.f32.partialorder %v5995, %v6080
      %vm6117 = vcmp.ne.f32.partialorder %v6000, %v6076
      %vm6118 = vcmp.ne.f32.partialorder %v6000, %v6080
      %vm6119 = vcmp.ne.f32.partialorder %v6005, %v6076
      %vm6120 = vcmp.ne.f32.partialorder %v6005, %v6080
      %vm6121 = vcmp.ne.f32.partialorder %v6010, %v6076
      %vm6122 = vcmp.ne.f32.partialorder %v6010, %v6080
      %vm6123 = vcmp.ne.f32.partialorder %v6015, %v6076
      %vm6124 = vcmp.ne.f32.partialorder %v6015, %v6080
      %vm6125 = vcmp.ne.f32.partialorder %v6020, %v6076
      %vm6126 = vcmp.ne.f32.partialorder %v6020, %v6080
      %vm6127 = vcmp.ne.f32.partialorder %v6025, %v6076
      %vm6128 = vcmp.ne.f32.partialorder %v6025, %v6080
      %vm6129 = vcmp.ne.f32.partialorder %v6030, %v6076
      %vm6130 = vcmp.ne.f32.partialorder %v6030, %v6080
      %vm6131 = vcmp.ne.f32.partialorder %v6035, %v6076
      %vm6132 = vcmp.ne.f32.partialorder %v6035, %v6080
      %vm6133 = vcmp.ne.f32.partialorder %v6040, %v6076
      %vm6134 = vcmp.ne.f32.partialorder %v6040, %v6080
      %vm6135 = vcmp.ne.f32.partialorder %v6045, %v6076
      %vm6136 = vcmp.ne.f32.partialorder %v6045, %v6080
      %vm6137 = vcmp.ne.f32.partialorder %v6050, %v6076
      %vm6138 = vcmp.ne.f32.partialorder %v6050, %v6080
      %vm6139 = vcmp.ne.f32.partialorder %v6055, %v6076
      %vm6140 = vcmp.ne.f32.partialorder %v6055, %v6080
      %vm6141 = vcmp.ne.f32.partialorder %v6060, %v6076
      %vm6142 = vcmp.ne.f32.partialorder %v6060, %v6080
      %vm6143 = vcmp.ne.f32.partialorder %v6065, %v6076
      %vm6144 = vcmp.ne.f32.partialorder %v6065, %v6080
      %vm6145 = vcmp.ne.f32.partialorder %v6070, %v6076
      %vm6146 = vcmp.ne.f32.partialorder %v6070, %v6080
      %v6147 = vsel %vm6083, -1e+30, %v5815
      %v6148 = vsel %vm6084, -1e+30, %v5816
      %v6149 = vsel %vm6085, -1e+30, %v5817
      %v6150 = vsel %vm6086, -1e+30, %v5818
      %v6151 = vsel %vm6087, -1e+30, %v5819
      %v6152 = vsel %vm6088, -1e+30, %v5820
      %v6153 = vsel %vm6089, -1e+30, %v5821
      %v6154 = vsel %vm6090, -1e+30, %v5822
      %v6155 = vsel %vm6091, -1e+30, %v5823
      %v6156 = vsel %vm6092, -1e+30, %v5824
      %v6157 = vsel %vm6093, -1e+30, %v5825
      %v6158 = vsel %vm6094, -1e+30, %v5826
      %v6159 = vsel %vm6095, -1e+30, %v5827
      %v6160 = vsel %vm6096, -1e+30, %v5828
      %v6161 = vsel %vm6097, -1e+30, %v5829
      %v6162 = vsel %vm6098, -1e+30, %v5830
      %v6163 = vsel %vm6099, -1e+30, %v5831
      %v6164 = vsel %vm6100, -1e+30, %v5832
      %v6165 = vsel %vm6101, -1e+30, %v5833
      %v6166 = vsel %vm6102, -1e+30, %v5834
      %v6167 = vsel %vm6103, -1e+30, %v5835
      %v6168 = vsel %vm6104, -1e+30, %v5836
      %v6169 = vsel %vm6105, -1e+30, %v5837
      %v6170 = vsel %vm6106, -1e+30, %v5838
      %v6171 = vsel %vm6107, -1e+30, %v5839
      %v6172 = vsel %vm6108, -1e+30, %v5840
      %v6173 = vsel %vm6109, -1e+30, %v5841
      %v6174 = vsel %vm6110, -1e+30, %v5842
      %v6175 = vsel %vm6111, -1e+30, %v5843
      %v6176 = vsel %vm6112, -1e+30, %v5844
      %v6177 = vsel %vm6113, -1e+30, %v5845
      %v6178 = vsel %vm6114, -1e+30, %v5846
      %v6179 = vsel %vm6115, -1e+30, %v5847
      %v6180 = vsel %vm6116, -1e+30, %v5848
      %v6181 = vsel %vm6117, -1e+30, %v5849
      %v6182 = vsel %vm6118, -1e+30, %v5850
      %v6183 = vsel %vm6119, -1e+30, %v5851
      %v6184 = vsel %vm6120, -1e+30, %v5852
      %v6185 = vsel %vm6121, -1e+30, %v5853
      %v6186 = vsel %vm6122, -1e+30, %v5854
      %v6187 = vsel %vm6123, -1e+30, %v5855
      %v6188 = vsel %vm6124, -1e+30, %v5856
      %v6189 = vsel %vm6125, -1e+30, %v5857
      %v6190 = vsel %vm6126, -1e+30, %v5858
      %v6191 = vsel %vm6127, -1e+30, %v5859
      %v6192 = vsel %vm6128, -1e+30, %v5860
      %v6193 = vsel %vm6129, -1e+30, %v5861
      %v6194 = vsel %vm6130, -1e+30, %v5862
      %v6195 = vsel %vm6131, -1e+30, %v5863
      %v6196 = vsel %vm6132, -1e+30, %v5864
      %v6197 = vsel %vm6133, -1e+30, %v5865
      %v6198 = vsel %vm6134, -1e+30, %v5866
      %v6199 = vsel %vm6135, -1e+30, %v5867
      %v6200 = vsel %vm6136, -1e+30, %v5868
      %v6201 = vsel %vm6137, -1e+30, %v5869
      %v6202 = vsel %vm6138, -1e+30, %v5870
      %v6203 = vsel %vm6139, -1e+30, %v5871
      %v6204 = vsel %vm6140, -1e+30, %v5872
      %v6205 = vsel %vm6141, -1e+30, %v5873
      %v6206 = vsel %vm6142, -1e+30, %v5874
      %v6207 = vsel %vm6143, -1e+30, %v5875
      %v6208 = vsel %vm6144, -1e+30, %v5876
      %v6209 = vsel %vm6145, -1e+30, %v5877
      %v6210 = vsel %vm6146, -1e+30, %v5878
      %v6211 = vmax.f32 %v6147, %v6148
      %6212 = vmax.xlane.f32.xlu0 %v6211
      %v6213 = vpop.xlane.xlu0 %6212
      %v6214 = vmax.f32 %v6149, %v6150
      %6215 = vmax.xlane.f32.xlu0 %v6214
      %v6216 = vpop.xlane.xlu0 %6215
      %v6217 = vmax.f32 %v6151, %v6152
      %6218 = vmax.xlane.f32.xlu0 %v6217
      %v6219 = vpop.xlane.xlu0 %6218
      %v6220 = vmax.f32 %v6153, %v6154
      %6221 = vmax.xlane.f32.xlu0 %v6220
      %v6222 = vpop.xlane.xlu0 %6221
      %v6223 = vmax.f32 %v6155, %v6156
      %6224 = vmax.xlane.f32.xlu0 %v6223
      %v6225 = vpop.xlane.xlu0 %6224
      %v6226 = vmax.f32 %v6157, %v6158
      %6227 = vmax.xlane.f32.xlu0 %v6226
      %v6228 = vpop.xlane.xlu0 %6227
      %v6229 = vmax.f32 %v6159, %v6160
      %6230 = vmax.xlane.f32.xlu0 %v6229
      %v6231 = vpop.xlane.xlu0 %6230
      %v6232 = vmax.f32 %v6161, %v6162
      %6233 = vmax.xlane.f32.xlu0 %v6232
      %v6234 = vpop.xlane.xlu0 %6233
      %v6235 = vmax.f32 %v6163, %v6164
      %6236 = vmax.xlane.f32.xlu0 %v6235
      %v6237 = vpop.xlane.xlu0 %6236
      %v6238 = vmax.f32 %v6165, %v6166
      %6239 = vmax.xlane.f32.xlu0 %v6238
      %v6240 = vpop.xlane.xlu0 %6239
      %v6241 = vmax.f32 %v6167, %v6168
      %6242 = vmax.xlane.f32.xlu0 %v6241
      %v6243 = vpop.xlane.xlu0 %6242
      %v6244 = vmax.f32 %v6169, %v6170
      %6245 = vmax.xlane.f32.xlu0 %v6244
      %v6246 = vpop.xlane.xlu0 %6245
      %v6247 = vmax.f32 %v6171, %v6172
      %6248 = vmax.xlane.f32.xlu0 %v6247
      %v6249 = vpop.xlane.xlu0 %6248
      %v6250 = vmax.f32 %v6173, %v6174
      %6251 = vmax.xlane.f32.xlu0 %v6250
      %v6252 = vpop.xlane.xlu0 %6251
      %v6253 = vmax.f32 %v6175, %v6176
      %6254 = vmax.xlane.f32.xlu0 %v6253
      %v6255 = vpop.xlane.xlu0 %6254
      %v6256 = vmax.f32 %v6177, %v6178
      %6257 = vmax.xlane.f32.xlu0 %v6256
      %v6258 = vpop.xlane.xlu0 %6257
      %v6259 = vmax.f32 %v6179, %v6180
      %6260 = vmax.xlane.f32.xlu0 %v6259
      %v6261 = vpop.xlane.xlu0 %6260
      %v6262 = vmax.f32 %v6181, %v6182
      %6263 = vmax.xlane.f32.xlu0 %v6262
      %v6264 = vpop.xlane.xlu0 %6263
      %v6265 = vmax.f32 %v6183, %v6184
      %6266 = vmax.xlane.f32.xlu0 %v6265
      %v6267 = vpop.xlane.xlu0 %6266
      %v6268 = vmax.f32 %v6185, %v6186
      %6269 = vmax.xlane.f32.xlu0 %v6268
      %v6270 = vpop.xlane.xlu0 %6269
      %v6271 = vmax.f32 %v6187, %v6188
      %6272 = vmax.xlane.f32.xlu0 %v6271
      %v6273 = vpop.xlane.xlu0 %6272
      %v6274 = vmax.f32 %v6189, %v6190
      %6275 = vmax.xlane.f32.xlu0 %v6274
      %v6276 = vpop.xlane.xlu0 %6275
      %v6277 = vmax.f32 %v6191, %v6192
      %6278 = vmax.xlane.f32.xlu0 %v6277
      %v6279 = vpop.xlane.xlu0 %6278
      %v6280 = vmax.f32 %v6193, %v6194
      %6281 = vmax.xlane.f32.xlu0 %v6280
      %v6282 = vpop.xlane.xlu0 %6281
      %v6283 = vmax.f32 %v6195, %v6196
      %6284 = vmax.xlane.f32.xlu0 %v6283
      %v6285 = vpop.xlane.xlu0 %6284
      %v6286 = vmax.f32 %v6197, %v6198
      %6287 = vmax.xlane.f32.xlu0 %v6286
      %v6288 = vpop.xlane.xlu0 %6287
      %v6289 = vmax.f32 %v6199, %v6200
      %6290 = vmax.xlane.f32.xlu0 %v6289
      %v6291 = vpop.xlane.xlu0 %6290
      %v6292 = vmax.f32 %v6201, %v6202
      %6293 = vmax.xlane.f32.xlu0 %v6292
      %v6294 = vpop.xlane.xlu0 %6293
      %v6295 = vmax.f32 %v6203, %v6204
      %6296 = vmax.xlane.f32.xlu0 %v6295
      %v6297 = vpop.xlane.xlu0 %6296
      %v6298 = vmax.f32 %v6205, %v6206
      %6299 = vmax.xlane.f32.xlu0 %v6298
      %v6300 = vpop.xlane.xlu0 %6299
      %v6301 = vmax.f32 %v6207, %v6208
      %6302 = vmax.xlane.f32.xlu0 %v6301
      %v6303 = vpop.xlane.xlu0 %6302
      %v6304 = vmax.f32 %v6209, %v6210
      %6305 = vmax.xlane.f32.xlu0 %v6304
      %v6306 = vpop.xlane.xlu0 %6305
      %v6307 = vsub.f32 %v6147, %v6213
      %v6308 = vsub.f32 %v6148, %v6213
      %v6309 = vsub.f32 %v6149, %v6216
      %v6310 = vsub.f32 %v6150, %v6216
      %v6311 = vsub.f32 %v6151, %v6219
      %v6312 = vsub.f32 %v6152, %v6219
      %v6313 = vsub.f32 %v6153, %v6222
      %v6314 = vsub.f32 %v6154, %v6222
      %v6315 = vsub.f32 %v6155, %v6225
      %v6316 = vsub.f32 %v6156, %v6225
      %v6317 = vsub.f32 %v6157, %v6228
      %v6318 = vsub.f32 %v6158, %v6228
      %v6319 = vsub.f32 %v6159, %v6231
      %v6320 = vsub.f32 %v6160, %v6231
      %v6321 = vsub.f32 %v6161, %v6234
      %v6322 = vsub.f32 %v6162, %v6234
      %v6323 = vsub.f32 %v6163, %v6237
      %v6324 = vsub.f32 %v6164, %v6237
      %v6325 = vsub.f32 %v6165, %v6240
      %v6326 = vsub.f32 %v6166, %v6240
      %v6327 = vsub.f32 %v6167, %v6243
      %v6328 = vsub.f32 %v6168, %v6243
      %v6329 = vsub.f32 %v6169, %v6246
      %v6330 = vsub.f32 %v6170, %v6246
      %v6331 = vsub.f32 %v6171, %v6249
      %v6332 = vsub.f32 %v6172, %v6249
      %v6333 = vsub.f32 %v6173, %v6252
      %v6334 = vsub.f32 %v6174, %v6252
      %v6335 = vsub.f32 %v6175, %v6255
      %v6336 = vsub.f32 %v6176, %v6255
      %v6337 = vsub.f32 %v6177, %v6258
      %v6338 = vsub.f32 %v6178, %v6258
      %v6339 = vsub.f32 %v6179, %v6261
      %v6340 = vsub.f32 %v6180, %v6261
      %v6341 = vsub.f32 %v6181, %v6264
      %v6342 = vsub.f32 %v6182, %v6264
      %v6343 = vsub.f32 %v6183, %v6267
      %v6344 = vsub.f32 %v6184, %v6267
      %v6345 = vsub.f32 %v6185, %v6270
      %v6346 = vsub.f32 %v6186, %v6270
      %v6347 = vsub.f32 %v6187, %v6273
      %v6348 = vsub.f32 %v6188, %v6273
      %v6349 = vsub.f32 %v6189, %v6276
      %v6350 = vsub.f32 %v6190, %v6276
      %v6351 = vsub.f32 %v6191, %v6279
      %v6352 = vsub.f32 %v6192, %v6279
      %v6353 = vsub.f32 %v6193, %v6282
      %v6354 = vsub.f32 %v6194, %v6282
      %v6355 = vsub.f32 %v6195, %v6285
      %v6356 = vsub.f32 %v6196, %v6285
      %v6357 = vsub.f32 %v6197, %v6288
      %v6358 = vsub.f32 %v6198, %v6288
      %v6359 = vsub.f32 %v6199, %v6291
      %v6360 = vsub.f32 %v6200, %v6291
      %v6361 = vsub.f32 %v6201, %v6294
      %v6362 = vsub.f32 %v6202, %v6294
      %v6363 = vsub.f32 %v6203, %v6297
      %v6364 = vsub.f32 %v6204, %v6297
      %v6365 = vsub.f32 %v6205, %v6300
      %v6366 = vsub.f32 %v6206, %v6300
      %v6367 = vsub.f32 %v6207, %v6303
      %v6368 = vsub.f32 %v6208, %v6303
      %v6369 = vsub.f32 %v6209, %v6306
      %v6370 = vsub.f32 %v6210, %v6306
      %v6371 = vmul.f32 %v6307, 1.442695
      %v6372 = vpow.pop %v6371
      %v6373 = vmul.f32 %v6308, 1.442695
      %v6374 = vpow.pop %v6373
      %v6375 = vmul.f32 %v6309, 1.442695
      %v6376 = vpow.pop %v6375
      %v6377 = vmul.f32 %v6310, 1.442695
      %v6378 = vpow.pop %v6377
      %v6379 = vmul.f32 %v6311, 1.442695
      %v6380 = vpow.pop %v6379
      %v6381 = vmul.f32 %v6312, 1.442695
      %v6382 = vpow.pop %v6381
      %v6383 = vmul.f32 %v6313, 1.442695
      %v6384 = vpow.pop %v6383
      %v6385 = vmul.f32 %v6314, 1.442695
      %v6386 = vpow.pop %v6385
      %v6387 = vmul.f32 %v6315, 1.442695
      %v6388 = vpow.pop %v6387
      %v6389 = vmul.f32 %v6316, 1.442695
      %v6390 = vpow.pop %v6389
      %v6391 = vmul.f32 %v6317, 1.442695
      %v6392 = vpow.pop %v6391
      %v6393 = vmul.f32 %v6318, 1.442695
      %v6394 = vpow.pop %v6393
      %v6395 = vmul.f32 %v6319, 1.442695
      %v6396 = vpow.pop %v6395
      %v6397 = vmul.f32 %v6320, 1.442695
      %v6398 = vpow.pop %v6397
      %v6399 = vmul.f32 %v6321, 1.442695
      %v6400 = vpow.pop %v6399
      %v6401 = vmul.f32 %v6322, 1.442695
      %v6402 = vpow.pop %v6401
      %v6403 = vmul.f32 %v6323, 1.442695
      %v6404 = vpow.pop %v6403
      %v6405 = vmul.f32 %v6324, 1.442695
      %v6406 = vpow.pop %v6405
      %v6407 = vmul.f32 %v6325, 1.442695
      %v6408 = vpow.pop %v6407
      %v6409 = vmul.f32 %v6326, 1.442695
      %v6410 = vpow.pop %v6409
      %v6411 = vmul.f32 %v6327, 1.442695
      %v6412 = vpow.pop %v6411
      %v6413 = vmul.f32 %v6328, 1.442695
      %v6414 = vpow.pop %v6413
      %v6415 = vmul.f32 %v6329, 1.442695
      %v6416 = vpow.pop %v6415
      %v6417 = vmul.f32 %v6330, 1.442695
      %v6418 = vpow.pop %v6417
      %v6419 = vmul.f32 %v6331, 1.442695
      %v6420 = vpow.pop %v6419
      %v6421 = vmul.f32 %v6332, 1.442695
      %v6422 = vpow.pop %v6421
      %v6423 = vmul.f32 %v6333, 1.442695
      %v6424 = vpow.pop %v6423
      %v6425 = vmul.f32 %v6334, 1.442695
      %v6426 = vpow.pop %v6425
      %v6427 = vmul.f32 %v6335, 1.442695
      %v6428 = vpow.pop %v6427
      %v6429 = vmul.f32 %v6336, 1.442695
      %v6430 = vpow.pop %v6429
      %v6431 = vmul.f32 %v6337, 1.442695
      %v6432 = vpow.pop %v6431
      %v6433 = vmul.f32 %v6338, 1.442695
      %v6434 = vpow.pop %v6433
      %v6435 = vmul.f32 %v6339, 1.442695
      %v6436 = vpow.pop %v6435
      %v6437 = vmul.f32 %v6340, 1.442695
      %v6438 = vpow.pop %v6437
      %v6439 = vmul.f32 %v6341, 1.442695
      %v6440 = vpow.pop %v6439
      %v6441 = vmul.f32 %v6342, 1.442695
      %v6442 = vpow.pop %v6441
      %v6443 = vmul.f32 %v6343, 1.442695
      %v6444 = vpow.pop %v6443
      %v6445 = vmul.f32 %v6344, 1.442695
      %v6446 = vpow.pop %v6445
      %v6447 = vmul.f32 %v6345, 1.442695
      %v6448 = vpow.pop %v6447
      %v6449 = vmul.f32 %v6346, 1.442695
      %v6450 = vpow.pop %v6449
      %v6451 = vmul.f32 %v6347, 1.442695
      %v6452 = vpow.pop %v6451
      %v6453 = vmul.f32 %v6348, 1.442695
      %v6454 = vpow.pop %v6453
      %v6455 = vmul.f32 %v6349, 1.442695
      %v6456 = vpow.pop %v6455
      %v6457 = vmul.f32 %v6350, 1.442695
      %v6458 = vpow.pop %v6457
      %v6459 = vmul.f32 %v6351, 1.442695
      %v6460 = vpow.pop %v6459
      %v6461 = vmul.f32 %v6352, 1.442695
      %v6462 = vpow.pop %v6461
      %v6463 = vmul.f32 %v6353, 1.442695
      %v6464 = vpow.pop %v6463
      %v6465 = vmul.f32 %v6354, 1.442695
      %v6466 = vpow.pop %v6465
      %v6467 = vmul.f32 %v6355, 1.442695
      %v6468 = vpow.pop %v6467
      %v6469 = vmul.f32 %v6356, 1.442695
      %v6470 = vpow.pop %v6469
      %v6471 = vmul.f32 %v6357, 1.442695
      %v6472 = vpow.pop %v6471
      %v6473 = vmul.f32 %v6358, 1.442695
      %v6474 = vpow.pop %v6473
      %v6475 = vmul.f32 %v6359, 1.442695
      %v6476 = vpow.pop %v6475
      %v6477 = vmul.f32 %v6360, 1.442695
      %v6478 = vpow.pop %v6477
      %v6479 = vmul.f32 %v6361, 1.442695
      %v6480 = vpow.pop %v6479
      %v6481 = vmul.f32 %v6362, 1.442695
      %v6482 = vpow.pop %v6481
      %v6483 = vmul.f32 %v6363, 1.442695
      %v6484 = vpow.pop %v6483
      %v6485 = vmul.f32 %v6364, 1.442695
      %v6486 = vpow.pop %v6485
      %v6487 = vmul.f32 %v6365, 1.442695
      %v6488 = vpow.pop %v6487
      %v6489 = vmul.f32 %v6366, 1.442695
      %v6490 = vpow.pop %v6489
      %v6491 = vmul.f32 %v6367, 1.442695
      %v6492 = vpow.pop %v6491
      %v6493 = vmul.f32 %v6368, 1.442695
      %v6494 = vpow.pop %v6493
      %v6495 = vmul.f32 %v6369, 1.442695
      %v6496 = vpow.pop %v6495
      %v6497 = vmul.f32 %v6370, 1.442695
      %v6498 = vpow.pop %v6497
      %v6499 = vadd.f32 %v6372, %v6374
      %6500 = vadd.xlane.f32.xlu0 %v6499
      %v6501 = vpop.xlane.xlu0 %6500
      %v6502 = vadd.f32 %v6376, %v6378
      %6503 = vadd.xlane.f32.xlu0 %v6502
      %v6504 = vpop.xlane.xlu0 %6503
      %v6505 = vadd.f32 %v6380, %v6382
      %6506 = vadd.xlane.f32.xlu0 %v6505
      %v6507 = vpop.xlane.xlu0 %6506
      %v6508 = vadd.f32 %v6384, %v6386
      %6509 = vadd.xlane.f32.xlu0 %v6508
      %v6510 = vpop.xlane.xlu0 %6509
      %v6511 = vadd.f32 %v6388, %v6390
      %6512 = vadd.xlane.f32.xlu0 %v6511
      %v6513 = vpop.xlane.xlu0 %6512
      %v6514 = vadd.f32 %v6392, %v6394
      %6515 = vadd.xlane.f32.xlu0 %v6514
      %v6516 = vpop.xlane.xlu0 %6515
      %v6517 = vadd.f32 %v6396, %v6398
      %6518 = vadd.xlane.f32.xlu0 %v6517
      %v6519 = vpop.xlane.xlu0 %6518
      %v6520 = vadd.f32 %v6400, %v6402
      %6521 = vadd.xlane.f32.xlu0 %v6520
      %v6522 = vpop.xlane.xlu0 %6521
      %v6523 = vadd.f32 %v6404, %v6406
      %6524 = vadd.xlane.f32.xlu0 %v6523
      %v6525 = vpop.xlane.xlu0 %6524
      %v6526 = vadd.f32 %v6408, %v6410
      %6527 = vadd.xlane.f32.xlu0 %v6526
      %v6528 = vpop.xlane.xlu0 %6527
      %v6529 = vadd.f32 %v6412, %v6414
      %6530 = vadd.xlane.f32.xlu0 %v6529
      %v6531 = vpop.xlane.xlu0 %6530
      %v6532 = vadd.f32 %v6416, %v6418
      %6533 = vadd.xlane.f32.xlu0 %v6532
      %v6534 = vpop.xlane.xlu0 %6533
      %v6535 = vadd.f32 %v6420, %v6422
      %6536 = vadd.xlane.f32.xlu0 %v6535
      %v6537 = vpop.xlane.xlu0 %6536
      %v6538 = vadd.f32 %v6424, %v6426
      %6539 = vadd.xlane.f32.xlu0 %v6538
      %v6540 = vpop.xlane.xlu0 %6539
      %v6541 = vadd.f32 %v6428, %v6430
      %6542 = vadd.xlane.f32.xlu0 %v6541
      %v6543 = vpop.xlane.xlu0 %6542
      %v6544 = vadd.f32 %v6432, %v6434
      %6545 = vadd.xlane.f32.xlu0 %v6544
      %v6546 = vpop.xlane.xlu0 %6545
      %v6547 = vadd.f32 %v6436, %v6438
      %6548 = vadd.xlane.f32.xlu0 %v6547
      %v6549 = vpop.xlane.xlu0 %6548
      %v6550 = vadd.f32 %v6440, %v6442
      %6551 = vadd.xlane.f32.xlu0 %v6550
      %v6552 = vpop.xlane.xlu0 %6551
      %v6553 = vadd.f32 %v6444, %v6446
      %6554 = vadd.xlane.f32.xlu0 %v6553
      %v6555 = vpop.xlane.xlu0 %6554
      %v6556 = vadd.f32 %v6448, %v6450
      %6557 = vadd.xlane.f32.xlu0 %v6556
      %v6558 = vpop.xlane.xlu0 %6557
      %v6559 = vadd.f32 %v6452, %v6454
      %6560 = vadd.xlane.f32.xlu0 %v6559
      %v6561 = vpop.xlane.xlu0 %6560
      %v6562 = vadd.f32 %v6456, %v6458
      %6563 = vadd.xlane.f32.xlu0 %v6562
      %v6564 = vpop.xlane.xlu0 %6563
      %v6565 = vadd.f32 %v6460, %v6462
      %6566 = vadd.xlane.f32.xlu0 %v6565
      %v6567 = vpop.xlane.xlu0 %6566
      %v6568 = vadd.f32 %v6464, %v6466
      %6569 = vadd.xlane.f32.xlu0 %v6568
      %v6570 = vpop.xlane.xlu0 %6569
      %v6571 = vadd.f32 %v6468, %v6470
      %6572 = vadd.xlane.f32.xlu0 %v6571
      %v6573 = vpop.xlane.xlu0 %6572
      %v6574 = vadd.f32 %v6472, %v6474
      %6575 = vadd.xlane.f32.xlu0 %v6574
      %v6576 = vpop.xlane.xlu0 %6575
      %v6577 = vadd.f32 %v6476, %v6478
      %6578 = vadd.xlane.f32.xlu0 %v6577
      %v6579 = vpop.xlane.xlu0 %6578
      %v6580 = vadd.f32 %v6480, %v6482
      %6581 = vadd.xlane.f32.xlu0 %v6580
      %v6582 = vpop.xlane.xlu0 %6581
      %v6583 = vadd.f32 %v6484, %v6486
      %6584 = vadd.xlane.f32.xlu0 %v6583
      %v6585 = vpop.xlane.xlu0 %6584
      %v6586 = vadd.f32 %v6488, %v6490
      %6587 = vadd.xlane.f32.xlu0 %v6586
      %v6588 = vpop.xlane.xlu0 %6587
      %v6589 = vadd.f32 %v6492, %v6494
      %6590 = vadd.xlane.f32.xlu0 %v6589
      %v6591 = vpop.xlane.xlu0 %6590
      %v6592 = vadd.f32 %v6496, %v6498
      %6593 = vadd.xlane.f32.xlu0 %v6592
      %v6594 = vpop.xlane.xlu0 %6593
      %v6595 = vrcp.pop %v6501
      %v6596 = vrcp.pop %v6504
      %v6597 = vrcp.pop %v6507
      %v6598 = vrcp.pop %v6510
      %v6599 = vrcp.pop %v6513
      %v6600 = vrcp.pop %v6516
      %v6601 = vrcp.pop %v6519
      %v6602 = vrcp.pop %v6522
      %v6603 = vrcp.pop %v6525
      %v6604 = vrcp.pop %v6528
      %v6605 = vrcp.pop %v6531
      %v6606 = vrcp.pop %v6534
      %v6607 = vrcp.pop %v6537
      %v6608 = vrcp.pop %v6540
      %v6609 = vrcp.pop %v6543
      %v6610 = vrcp.pop %v6546
      %v6611 = vrcp.pop %v6549
      %v6612 = vrcp.pop %v6552
      %v6613 = vrcp.pop %v6555
      %v6614 = vrcp.pop %v6558
      %v6615 = vrcp.pop %v6561
      %v6616 = vrcp.pop %v6564
      %v6617 = vrcp.pop %v6567
      %v6618 = vrcp.pop %v6570
      %v6619 = vrcp.pop %v6573
      %v6620 = vrcp.pop %v6576
      %v6621 = vrcp.pop %v6579
      %v6622 = vrcp.pop %v6582
      %v6623 = vrcp.pop %v6585
      %v6624 = vrcp.pop %v6588
      %v6625 = vrcp.pop %v6591
      %v6626 = vrcp.pop %v6594
      %v6627 = vmul.f32 %v6372, %v6595
      %v6628 = vmul.f32 %v6374, %v6595
      %v6629 = vmul.f32 %v6376, %v6596
      %v6630 = vmul.f32 %v6378, %v6596
      %v6631 = vmul.f32 %v6380, %v6597
      %v6632 = vmul.f32 %v6382, %v6597
      %v6633 = vmul.f32 %v6384, %v6598
      %v6634 = vmul.f32 %v6386, %v6598
      %v6635 = vmul.f32 %v6388, %v6599
      %v6636 = vmul.f32 %v6390, %v6599
      %v6637 = vmul.f32 %v6392, %v6600
      %v6638 = vmul.f32 %v6394, %v6600
      %v6639 = vmul.f32 %v6396, %v6601
      %v6640 = vmul.f32 %v6398, %v6601
      %v6641 = vmul.f32 %v6400, %v6602
      %v6642 = vmul.f32 %v6402, %v6602
      %v6643 = vmul.f32 %v6404, %v6603
      %v6644 = vmul.f32 %v6406, %v6603
      %v6645 = vmul.f32 %v6408, %v6604
      %v6646 = vmul.f32 %v6410, %v6604
      %v6647 = vmul.f32 %v6412, %v6605
      %v6648 = vmul.f32 %v6414, %v6605
      %v6649 = vmul.f32 %v6416, %v6606
      %v6650 = vmul.f32 %v6418, %v6606
      %v6651 = vmul.f32 %v6420, %v6607
      %v6652 = vmul.f32 %v6422, %v6607
      %v6653 = vmul.f32 %v6424, %v6608
      %v6654 = vmul.f32 %v6426, %v6608
      %v6655 = vmul.f32 %v6428, %v6609
      %v6656 = vmul.f32 %v6430, %v6609
      %v6657 = vmul.f32 %v6432, %v6610
      %v6658 = vmul.f32 %v6434, %v6610
      %v6659 = vmul.f32 %v6436, %v6611
      %v6660 = vmul.f32 %v6438, %v6611
      %v6661 = vmul.f32 %v6440, %v6612
      %v6662 = vmul.f32 %v6442, %v6612
      %v6663 = vmul.f32 %v6444, %v6613
      %v6664 = vmul.f32 %v6446, %v6613
      %v6665 = vmul.f32 %v6448, %v6614
      %v6666 = vmul.f32 %v6450, %v6614
      %v6667 = vmul.f32 %v6452, %v6615
      %v6668 = vmul.f32 %v6454, %v6615
      %v6669 = vmul.f32 %v6456, %v6616
      %v6670 = vmul.f32 %v6458, %v6616
      %v6671 = vmul.f32 %v6460, %v6617
      %v6672 = vmul.f32 %v6462, %v6617
      %v6673 = vmul.f32 %v6464, %v6618
      %v6674 = vmul.f32 %v6466, %v6618
      %v6675 = vmul.f32 %v6468, %v6619
      %v6676 = vmul.f32 %v6470, %v6619
      %v6677 = vmul.f32 %v6472, %v6620
      %v6678 = vmul.f32 %v6474, %v6620
      %v6679 = vmul.f32 %v6476, %v6621
      %v6680 = vmul.f32 %v6478, %v6621
      %v6681 = vmul.f32 %v6480, %v6622
      %v6682 = vmul.f32 %v6482, %v6622
      %v6683 = vmul.f32 %v6484, %v6623
      %v6684 = vmul.f32 %v6486, %v6623
      %v6685 = vmul.f32 %v6488, %v6624
      %v6686 = vmul.f32 %v6490, %v6624
      %v6687 = vmul.f32 %v6492, %v6625
      %v6688 = vmul.f32 %v6494, %v6625
      %v6689 = vmul.f32 %v6496, %v6626
      %v6690 = vmul.f32 %v6498, %v6626
      %v6691 = vpack.c.bf16 %v6629, %v6627
      %v6692 = vpack.c.bf16 %v6630, %v6628
      %v6693 = vpack.c.bf16 %v6633, %v6631
      %v6694 = vpack.c.bf16 %v6634, %v6632
      %v6695 = vpack.c.bf16 %v6637, %v6635
      %v6696 = vpack.c.bf16 %v6638, %v6636
      %v6697 = vpack.c.bf16 %v6641, %v6639
      %v6698 = vpack.c.bf16 %v6642, %v6640
      %v6699 = vpack.c.bf16 %v6645, %v6643
      %v6700 = vpack.c.bf16 %v6646, %v6644
      %v6701 = vpack.c.bf16 %v6649, %v6647
      %v6702 = vpack.c.bf16 %v6650, %v6648
      %v6703 = vpack.c.bf16 %v6653, %v6651
      %v6704 = vpack.c.bf16 %v6654, %v6652
      %v6705 = vpack.c.bf16 %v6657, %v6655
      %v6706 = vpack.c.bf16 %v6658, %v6656
      %v6707 = vpack.c.bf16 %v6661, %v6659
      %v6708 = vpack.c.bf16 %v6662, %v6660
      %v6709 = vpack.c.bf16 %v6665, %v6663
      %v6710 = vpack.c.bf16 %v6666, %v6664
      %v6711 = vpack.c.bf16 %v6669, %v6667
      %v6712 = vpack.c.bf16 %v6670, %v6668
      %v6713 = vpack.c.bf16 %v6673, %v6671
      %v6714 = vpack.c.bf16 %v6674, %v6672
      %v6715 = vpack.c.bf16 %v6677, %v6675
      %v6716 = vpack.c.bf16 %v6678, %v6676
      %v6717 = vpack.c.bf16 %v6681, %v6679
      %v6718 = vpack.c.bf16 %v6682, %v6680
      %v6719 = vpack.c.bf16 %v6685, %v6683
      %v6720 = vpack.c.bf16 %v6686, %v6684
      %v6721 = vpack.c.bf16 %v6689, %v6687
      %v6722 = vpack.c.bf16 %v6690, %v6688
      %6723 = vmatprep.subr.bf16.mxu0 %v4840
      %6724 = vmatpush1.bf16.msra.mxu0 %v4839
      %6725 = vmatprep.subr.bf16.mxu0 %v4846
      %6726 = vmatpush1.bf16.msra.mxu0 %v4845
      %6727 = vmatprep.subr.bf16.mxu0 %v4852
      %6728 = vmatpush1.bf16.msra.mxu0 %v4851
      %6729 = vmatprep.subr.bf16.mxu0 %v4858
      %6730 = vmatpush1.bf16.msra.mxu0 %v4857
      %6731 = vmatprep.subr.bf16.mxu0 %v4864
      %6732 = vmatpush1.bf16.msra.mxu0 %v4863
      %6733 = vmatprep.subr.bf16.mxu0 %v4870
      %6734 = vmatpush1.bf16.msra.mxu0 %v4869
      %6735 = vmatprep.subr.bf16.mxu0 %v4876
      %6736 = vmatpush1.bf16.msra.mxu0 %v4875
      %6737 = vmatprep.subr.bf16.mxu0 %v4882
      %6738 = vmatpush1.bf16.msra.mxu0 %v4881
      %6739 = vmatprep.subr.bf16.mxu0 %v4888
      %6740 = vmatpush1.bf16.msra.mxu0 %v4887
      %6741 = vmatprep.subr.bf16.mxu0 %v4894
      %6742 = vmatpush1.bf16.msra.mxu0 %v4893
      %6743 = vmatprep.subr.bf16.mxu0 %v4900
      %6744 = vmatpush1.bf16.msra.mxu0 %v4899
      %6745 = vmatprep.subr.bf16.mxu0 %v4906
      %6746 = vmatpush1.bf16.msra.mxu0 %v4905
      %6747 = vmatprep.subr.bf16.mxu0 %v4912
      %6748 = vmatpush1.bf16.msra.mxu0 %v4911
      %6749 = vmatprep.subr.bf16.mxu0 %v4918
      %6750 = vmatpush1.bf16.msra.mxu0 %v4917
      %6751 = vmatprep.subr.bf16.mxu0 %v4924
      %6752 = vmatpush1.bf16.msra.mxu0 %v4923
      %6753 = vmatprep.subr.bf16.mxu0 %v4930
      %6754 = vmatpush1.bf16.msra.mxu0 %v4929
      %6755 = vmatprep.mubr.bf16.mxu0 %v6692
      %6756 = vmatmul.mubr.bf16.gmra.mrb[0].mxu0 %v6691
      %v6757 = vpop.f32.mrb[0].mxu0
      %v6758 = vadd.f32 0.0, %v6757
      %v6759 = vpop.f32.mrb[0].mxu0
      %v6760 = vadd.f32 0.0, %v6759
      %v6761 = vpop.f32.mrb[0].mxu0
      %v6762 = vadd.f32 0.0, %v6761
      %v6763 = vpop.f32.mrb[0].mxu0
      %v6764 = vadd.f32 0.0, %v6763
      %6765 = vmatprep.mubr.bf16.mxu0 %v6694
      %6766 = vmatmul.mubr.bf16.gmra.mrb[0].mxu0 %v6693
      %v6767 = vpop.f32.mrb[0].mxu0
      %v6768 = vadd.f32 0.0, %v6767
      %v6769 = vpop.f32.mrb[0].mxu0
      %v6770 = vadd.f32 0.0, %v6769
      %v6771 = vpop.f32.mrb[0].mxu0
      %v6772 = vadd.f32 0.0, %v6771
      %v6773 = vpop.f32.mrb[0].mxu0
      %v6774 = vadd.f32 0.0, %v6773
      %6775 = vmatprep.mubr.bf16.mxu0 %v6696
      %6776 = vmatmul.mubr.bf16.gmra.mrb[0].mxu0 %v6695
      %v6777 = vpop.f32.mrb[0].mxu0
      %v6778 = vadd.f32 0.0, %v6777
      %v6779 = vpop.f32.mrb[0].mxu0
      %v6780 = vadd.f32 0.0, %v6779
      %v6781 = vpop.f32.mrb[0].mxu0
      %v6782 = vadd.f32 0.0, %v6781
      %v6783 = vpop.f32.mrb[0].mxu0
      %v6784 = vadd.f32 0.0, %v6783
      %6785 = vmatprep.mubr.bf16.mxu0 %v6698
      %6786 = vmatmul.mubr.bf16.gmra.mrb[0].mxu0 %v6697
      %v6787 = vpop.f32.mrb[0].mxu0
      %v6788 = vadd.f32 0.0, %v6787
      %v6789 = vpop.f32.mrb[0].mxu0
      %v6790 = vadd.f32 0.0, %v6789
      %v6791 = vpop.f32.mrb[0].mxu0
      %v6792 = vadd.f32 0.0, %v6791
      %v6793 = vpop.f32.mrb[0].mxu0
      %v6794 = vadd.f32 0.0, %v6793
      %6795 = vmatprep.mubr.bf16.mxu0 %v6700
      %6796 = vmatmul.mubr.bf16.gmra.mrb[0].mxu0 %v6699
      %v6797 = vpop.f32.mrb[0].mxu0
      %v6798 = vadd.f32 0.0, %v6797
      %v6799 = vpop.f32.mrb[0].mxu0
      %v6800 = vadd.f32 0.0, %v6799
      %v6801 = vpop.f32.mrb[0].mxu0
      %v6802 = vadd.f32 0.0, %v6801
      %v6803 = vpop.f32.mrb[0].mxu0
      %v6804 = vadd.f32 0.0, %v6803
      %6805 = vmatprep.mubr.bf16.mxu0 %v6702
      %6806 = vmatmul.mubr.bf16.gmra.mrb[0].mxu0 %v6701
      %v6807 = vpop.f32.mrb[0].mxu0
      %v6808 = vadd.f32 0.0, %v6807
      %v6809 = vpop.f32.mrb[0].mxu0
      %v6810 = vadd.f32 0.0, %v6809
      %v6811 = vpop.f32.mrb[0].mxu0
      %v6812 = vadd.f32 0.0, %v6811
      %v6813 = vpop.f32.mrb[0].mxu0
      %v6814 = vadd.f32 0.0, %v6813
      %6815 = vmatprep.mubr.bf16.mxu0 %v6704
      %6816 = vmatmul.mubr.bf16.gmra.mrb[0].mxu0 %v6703
      %v6817 = vpop.f32.mrb[0].mxu0
      %v6818 = vadd.f32 0.0, %v6817
      %v6819 = vpop.f32.mrb[0].mxu0
      %v6820 = vadd.f32 0.0, %v6819
      %v6821 = vpop.f32.mrb[0].mxu0
      %v6822 = vadd.f32 0.0, %v6821
      %v6823 = vpop.f32.mrb[0].mxu0
      %v6824 = vadd.f32 0.0, %v6823
      %6825 = vmatprep.mubr.bf16.mxu0 %v6706
      %6826 = vmatmul.mubr.bf16.gmra.mrb[0].mxu0 %v6705
      %v6827 = vpop.f32.mrb[0].mxu0
      %v6828 = vadd.f32 0.0, %v6827
      %v6829 = vpop.f32.mrb[0].mxu0
      %v6830 = vadd.f32 0.0, %v6829
      %v6831 = vpop.f32.mrb[0].mxu0
      %v6832 = vadd.f32 0.0, %v6831
      %v6833 = vpop.f32.mrb[0].mxu0
      %v6834 = vadd.f32 0.0, %v6833
      %6835 = vmatprep.mubr.bf16.mxu0 %v6708
      %6836 = vmatmul.mubr.bf16.gmra.mrb[0].mxu0 %v6707
      %v6837 = vpop.f32.mrb[0].mxu0
      %v6838 = vadd.f32 0.0, %v6837
      %v6839 = vpop.f32.mrb[0].mxu0
      %v6840 = vadd.f32 0.0, %v6839
      %v6841 = vpop.f32.mrb[0].mxu0
      %v6842 = vadd.f32 0.0, %v6841
      %v6843 = vpop.f32.mrb[0].mxu0
      %v6844 = vadd.f32 0.0, %v6843
      %6845 = vmatprep.mubr.bf16.mxu0 %v6710
      %6846 = vmatmul.mubr.bf16.gmra.mrb[0].mxu0 %v6709
      %v6847 = vpop.f32.mrb[0].mxu0
      %v6848 = vadd.f32 0.0, %v6847
      %v6849 = vpop.f32.mrb[0].mxu0
      %v6850 = vadd.f32 0.0, %v6849
      %v6851 = vpop.f32.mrb[0].mxu0
      %v6852 = vadd.f32 0.0, %v6851
      %v6853 = vpop.f32.mrb[0].mxu0
      %v6854 = vadd.f32 0.0, %v6853
      %6855 = vmatprep.mubr.bf16.mxu0 %v6712
      %6856 = vmatmul.mubr.bf16.gmra.mrb[0].mxu0 %v6711
      %v6857 = vpop.f32.mrb[0].mxu0
      %v6858 = vadd.f32 0.0, %v6857
      %v6859 = vpop.f32.mrb[0].mxu0
      %v6860 = vadd.f32 0.0, %v6859
      %v6861 = vpop.f32.mrb[0].mxu0
      %v6862 = vadd.f32 0.0, %v6861
      %v6863 = vpop.f32.mrb[0].mxu0
      %v6864 = vadd.f32 0.0, %v6863
      %6865 = vmatprep.mubr.bf16.mxu0 %v6714
      %6866 = vmatmul.mubr.bf16.gmra.mrb[0].mxu0 %v6713
      %v6867 = vpop.f32.mrb[0].mxu0
      %v6868 = vadd.f32 0.0, %v6867
      %v6869 = vpop.f32.mrb[0].mxu0
      %v6870 = vadd.f32 0.0, %v6869
      %v6871 = vpop.f32.mrb[0].mxu0
      %v6872 = vadd.f32 0.0, %v6871
      %v6873 = vpop.f32.mrb[0].mxu0
      %v6874 = vadd.f32 0.0, %v6873
      %6875 = vmatprep.mubr.bf16.mxu0 %v6716
      %6876 = vmatmul.mubr.bf16.gmra.mrb[0].mxu0 %v6715
      %v6877 = vpop.f32.mrb[0].mxu0
      %v6878 = vadd.f32 0.0, %v6877
      %v6879 = vpop.f32.mrb[0].mxu0
      %v6880 = vadd.f32 0.0, %v6879
      %v6881 = vpop.f32.mrb[0].mxu0
      %v6882 = vadd.f32 0.0, %v6881
      %v6883 = vpop.f32.mrb[0].mxu0
      %v6884 = vadd.f32 0.0, %v6883
      %6885 = vmatprep.mubr.bf16.mxu0 %v6718
      %6886 = vmatmul.mubr.bf16.gmra.mrb[0].mxu0 %v6717
      %v6887 = vpop.f32.mrb[0].mxu0
      %v6888 = vadd.f32 0.0, %v6887
      %v6889 = vpop.f32.mrb[0].mxu0
      %v6890 = vadd.f32 0.0, %v6889
      %v6891 = vpop.f32.mrb[0].mxu0
      %v6892 = vadd.f32 0.0, %v6891
      %v6893 = vpop.f32.mrb[0].mxu0
      %v6894 = vadd.f32 0.0, %v6893
      %6895 = vmatprep.mubr.bf16.mxu0 %v6720
      %6896 = vmatmul.mubr.bf16.gmra.mrb[0].mxu0 %v6719
      %v6897 = vpop.f32.mrb[0].mxu0
      %v6898 = vadd.f32 0.0, %v6897
      %v6899 = vpop.f32.mrb[0].mxu0
      %v6900 = vadd.f32 0.0, %v6899
      %v6901 = vpop.f32.mrb[0].mxu0
      %v6902 = vadd.f32 0.0, %v6901
      %v6903 = vpop.f32.mrb[0].mxu0
      %v6904 = vadd.f32 0.0, %v6903
      %6905 = vmatprep.mubr.bf16.mxu0 %v6722
      %6906 = vmatmul.mubr.bf16.gmra.mrb[0].mxu0 %v6721
      %v6907 = vpop.f32.mrb[0].mxu0
      %v6908 = vadd.f32 0.0, %v6907
      %v6909 = vpop.f32.mrb[0].mxu0
      %v6910 = vadd.f32 0.0, %v6909
      %v6911 = vpop.f32.mrb[0].mxu0
      %v6912 = vadd.f32 0.0, %v6911
      %v6913 = vpop.f32.mrb[0].mxu0
      %v6914 = vadd.f32 0.0, %v6913
      %6915 = vdwg.mxu0
      %6916 = vmatprep.subr.bf16.mxu0 %v4842
      %6917 = vmatpush1.bf16.msra.mxu0 %v4841
      %6918 = vmatprep.subr.bf16.mxu0 %v4848
      %6919 = vmatpush1.bf16.msra.mxu0 %v4847
      %6920 = vmatprep.subr.bf16.mxu0 %v4854
      %6921 = vmatpush1.bf16.msra.mxu0 %v4853
      %6922 = vmatprep.subr.bf16.mxu0 %v4860
      %6923 = vmatpush1.bf16.msra.mxu0 %v4859
      %6924 = vmatprep.subr.bf16.mxu0 %v4866
      %6925 = vmatpush1.bf16.msra.mxu0 %v4865
      %6926 = vmatprep.subr.bf16.mxu0 %v4872
      %6927 = vmatpush1.bf16.msra.mxu0 %v4871
      %6928 = vmatprep.subr.bf16.mxu0 %v4878
      %6929 = vmatpush1.bf16.msra.mxu0 %v4877
      %6930 = vmatprep.subr.bf16.mxu0 %v4884
      %6931 = vmatpush1.bf16.msra.mxu0 %v4883
      %6932 = vmatprep.subr.bf16.mxu0 %v4890
      %6933 = vmatpush1.bf16.msra.mxu0 %v4889
      %6934 = vmatprep.subr.bf16.mxu0 %v4896
      %6935 = vmatpush1.bf16.msra.mxu0 %v4895
      %6936 = vmatprep.subr.bf16.mxu0 %v4902
      %6937 = vmatpush1.bf16.msra.mxu0 %v4901
      %6938 = vmatprep.subr.bf16.mxu0 %v4908
      %6939 = vmatpush1.bf16.msra.mxu0 %v4907
      %6940 = vmatprep.subr.bf16.mxu0 %v4914
      %6941 = vmatpush1.bf16.msra.mxu0 %v4913
      %6942 = vmatprep.subr.bf16.mxu0 %v4920
      %6943 = vmatpush1.bf16.msra.mxu0 %v4919
      %6944 = vmatprep.subr.bf16.mxu0 %v4926
      %6945 = vmatpush1.bf16.msra.mxu0 %v4925
      %6946 = vmatprep.subr.bf16.mxu0 %v4932
      %6947 = vmatpush1.bf16.msra.mxu0 %v4931
      %6948 = vmatprep.mubr.bf16.mxu0 %v6692
      %6949 = vmatmul.mubr.bf16.gmra.mrb[0].mxu0 %v6691
      %v6950 = vpop.f32.mrb[0].mxu0
      %v6951 = vadd.f32 0.0, %v6950
      %v6952 = vpop.f32.mrb[0].mxu0
      %v6953 = vadd.f32 0.0, %v6952
      %v6954 = vpop.f32.mrb[0].mxu0
      %v6955 = vadd.f32 0.0, %v6954
      %v6956 = vpop.f32.mrb[0].mxu0
      %v6957 = vadd.f32 0.0, %v6956
      %6958 = vmatprep.mubr.bf16.mxu0 %v6694
      %6959 = vmatmul.mubr.bf16.gmra.mrb[0].mxu0 %v6693
      %v6960 = vpop.f32.mrb[0].mxu0
      %v6961 = vadd.f32 0.0, %v6960
      %v6962 = vpop.f32.mrb[0].mxu0
      %v6963 = vadd.f32 0.0, %v6962
      %v6964 = vpop.f32.mrb[0].mxu0
      %v6965 = vadd.f32 0.0, %v6964
      %v6966 = vpop.f32.mrb[0].mxu0
      %v6967 = vadd.f32 0.0, %v6966
      %6968 = vmatprep.mubr.bf16.mxu0 %v6696
      %6969 = vmatmul.mubr.bf16.gmra.mrb[0].mxu0 %v6695
      %v6970 = vpop.f32.mrb[0].mxu0
      %v6971 = vadd.f32 0.0, %v6970
      %v6972 = vpop.f32.mrb[0].mxu0
      %v6973 = vadd.f32 0.0, %v6972
      %v6974 = vpop.f32.mrb[0].mxu0
      %v6975 = vadd.f32 0.0, %v6974
      %v6976 = vpop.f32.mrb[0].mxu0
      %v6977 = vadd.f32 0.0, %v6976
      %6978 = vmatprep.mubr.bf16.mxu0 %v6698
      %6979 = vmatmul.mubr.bf16.gmra.mrb[0].mxu0 %v6697
      %v6980 = vpop.f32.mrb[0].mxu0
      %v6981 = vadd.f32 0.0, %v6980
      %v6982 = vpop.f32.mrb[0].mxu0
      %v6983 = vadd.f32 0.0, %v6982
      %v6984 = vpop.f32.mrb[0].mxu0
      %v6985 = vadd.f32 0.0, %v6984
      %v6986 = vpop.f32.mrb[0].mxu0
      %v6987 = vadd.f32 0.0, %v6986
      %6988 = vmatprep.mubr.bf16.mxu0 %v6700
      %6989 = vmatmul.mubr.bf16.gmra.mrb[0].mxu0 %v6699
      %v6990 = vpop.f32.mrb[0].mxu0
      %v6991 = vadd.f32 0.0, %v6990
      %v6992 = vpop.f32.mrb[0].mxu0
      %v6993 = vadd.f32 0.0, %v6992
      %v6994 = vpop.f32.mrb[0].mxu0
      %v6995 = vadd.f32 0.0, %v6994
      %v6996 = vpop.f32.mrb[0].mxu0
      %v6997 = vadd.f32 0.0, %v6996
      %6998 = vmatprep.mubr.bf16.mxu0 %v6702
      %6999 = vmatmul.mubr.bf16.gmra.mrb[0].mxu0 %v6701
      %v7000 = vpop.f32.mrb[0].mxu0
      %v7001 = vadd.f32 0.0, %v7000
      %v7002 = vpop.f32.mrb[0].mxu0
      %v7003 = vadd.f32 0.0, %v7002
      %v7004 = vpop.f32.mrb[0].mxu0
      %v7005 = vadd.f32 0.0, %v7004
      %v7006 = vpop.f32.mrb[0].mxu0
      %v7007 = vadd.f32 0.0, %v7006
      %7008 = vmatprep.mubr.bf16.mxu0 %v6704
      %7009 = vmatmul.mubr.bf16.gmra.mrb[0].mxu0 %v6703
      %v7010 = vpop.f32.mrb[0].mxu0
      %v7011 = vadd.f32 0.0, %v7010
      %v7012 = vpop.f32.mrb[0].mxu0
      %v7013 = vadd.f32 0.0, %v7012
      %v7014 = vpop.f32.mrb[0].mxu0
      %v7015 = vadd.f32 0.0, %v7014
      %v7016 = vpop.f32.mrb[0].mxu0
      %v7017 = vadd.f32 0.0, %v7016
      %7018 = vmatprep.mubr.bf16.mxu0 %v6706
      %7019 = vmatmul.mubr.bf16.gmra.mrb[0].mxu0 %v6705
      %v7020 = vpop.f32.mrb[0].mxu0
      %v7021 = vadd.f32 0.0, %v7020
      %v7022 = vpop.f32.mrb[0].mxu0
      %v7023 = vadd.f32 0.0, %v7022
      %v7024 = vpop.f32.mrb[0].mxu0
      %v7025 = vadd.f32 0.0, %v7024
      %v7026 = vpop.f32.mrb[0].mxu0
      %v7027 = vadd.f32 0.0, %v7026
      %7028 = vmatprep.mubr.bf16.mxu0 %v6708
      %7029 = vmatmul.mubr.bf16.gmra.mrb[0].mxu0 %v6707
      %v7030 = vpop.f32.mrb[0].mxu0
      %v7031 = vadd.f32 0.0, %v7030
      %v7032 = vpop.f32.mrb[0].mxu0
      %v7033 = vadd.f32 0.0, %v7032
      %v7034 = vpop.f32.mrb[0].mxu0
      %v7035 = vadd.f32 0.0, %v7034
      %v7036 = vpop.f32.mrb[0].mxu0
      %v7037 = vadd.f32 0.0, %v7036
      %7038 = vmatprep.mubr.bf16.mxu0 %v6710
      %7039 = vmatmul.mubr.bf16.gmra.mrb[0].mxu0 %v6709
      %v7040 = vpop.f32.mrb[0].mxu0
      %v7041 = vadd.f32 0.0, %v7040
      %v7042 = vpop.f32.mrb[0].mxu0
      %v7043 = vadd.f32 0.0, %v7042
      %v7044 = vpop.f32.mrb[0].mxu0
      %v7045 = vadd.f32 0.0, %v7044
      %v7046 = vpop.f32.mrb[0].mxu0
      %v7047 = vadd.f32 0.0, %v7046
      %7048 = vmatprep.mubr.bf16.mxu0 %v6712
      %7049 = vmatmul.mubr.bf16.gmra.mrb[0].mxu0 %v6711
      %v7050 = vpop.f32.mrb[0].mxu0
      %v7051 = vadd.f32 0.0, %v7050
      %v7052 = vpop.f32.mrb[0].mxu0
      %v7053 = vadd.f32 0.0, %v7052
      %v7054 = vpop.f32.mrb[0].mxu0
      %v7055 = vadd.f32 0.0, %v7054
      %v7056 = vpop.f32.mrb[0].mxu0
      %v7057 = vadd.f32 0.0, %v7056
      %7058 = vmatprep.mubr.bf16.mxu0 %v6714
      %7059 = vmatmul.mubr.bf16.gmra.mrb[0].mxu0 %v6713
      %v7060 = vpop.f32.mrb[0].mxu0
      %v7061 = vadd.f32 0.0, %v7060
      %v7062 = vpop.f32.mrb[0].mxu0
      %v7063 = vadd.f32 0.0, %v7062
      %v7064 = vpop.f32.mrb[0].mxu0
      %v7065 = vadd.f32 0.0, %v7064
      %v7066 = vpop.f32.mrb[0].mxu0
      %v7067 = vadd.f32 0.0, %v7066
      %7068 = vmatprep.mubr.bf16.mxu0 %v6716
      %7069 = vmatmul.mubr.bf16.gmra.mrb[0].mxu0 %v6715
      %v7070 = vpop.f32.mrb[0].mxu0
      %v7071 = vadd.f32 0.0, %v7070
      %v7072 = vpop.f32.mrb[0].mxu0
      %v7073 = vadd.f32 0.0, %v7072
      %v7074 = vpop.f32.mrb[0].mxu0
      %v7075 = vadd.f32 0.0, %v7074
      %v7076 = vpop.f32.mrb[0].mxu0
      %v7077 = vadd.f32 0.0, %v7076
      %7078 = vmatprep.mubr.bf16.mxu0 %v6718
      %7079 = vmatmul.mubr.bf16.gmra.mrb[0].mxu0 %v6717
      %v7080 = vpop.f32.mrb[0].mxu0
      %v7081 = vadd.f32 0.0, %v7080
      %v7082 = vpop.f32.mrb[0].mxu0
      %v7083 = vadd.f32 0.0, %v7082
      %v7084 = vpop.f32.mrb[0].mxu0
      %v7085 = vadd.f32 0.0, %v7084
      %v7086 = vpop.f32.mrb[0].mxu0
      %v7087 = vadd.f32 0.0, %v7086
      %7088 = vmatprep.mubr.bf16.mxu0 %v6720
      %7089 = vmatmul.mubr.bf16.gmra.mrb[0].mxu0 %v6719
      %v7090 = vpop.f32.mrb[0].mxu0
      %v7091 = vadd.f32 0.0, %v7090
      %v7092 = vpop.f32.mrb[0].mxu0
      %v7093 = vadd.f32 0.0, %v7092
      %v7094 = vpop.f32.mrb[0].mxu0
      %v7095 = vadd.f32 0.0, %v7094
      %v7096 = vpop.f32.mrb[0].mxu0
      %v7097 = vadd.f32 0.0, %v7096
      %7098 = vmatprep.mubr.bf16.mxu0 %v6722
      %7099 = vmatmul.mubr.bf16.gmra.mrb[0].mxu0 %v6721
      %v7100 = vpop.f32.mrb[0].mxu0
      %v7101 = vadd.f32 0.0, %v7100
      %v7102 = vpop.f32.mrb[0].mxu0
      %v7103 = vadd.f32 0.0, %v7102
      %v7104 = vpop.f32.mrb[0].mxu0
      %v7105 = vadd.f32 0.0, %v7104
      %v7106 = vpop.f32.mrb[0].mxu0
      %v7107 = vadd.f32 0.0, %v7106
      %7108 = vdwg.mxu0
      %7109 = vmatprep.subr.bf16.mxu0 %v4844
      %7110 = vmatpush1.bf16.msra.mxu0 %v4843
      %7111 = vmatprep.subr.bf16.mxu0 %v4850
      %7112 = vmatpush1.bf16.msra.mxu0 %v4849
      %7113 = vmatprep.subr.bf16.mxu0 %v4856
      %7114 = vmatpush1.bf16.msra.mxu0 %v4855
      %7115 = vmatprep.subr.bf16.mxu0 %v4862
      %7116 = vmatpush1.bf16.msra.mxu0 %v4861
      %7117 = vmatprep.subr.bf16.mxu0 %v4868
      %7118 = vmatpush1.bf16.msra.mxu0 %v4867
      %7119 = vmatprep.subr.bf16.mxu0 %v4874
      %7120 = vmatpush1.bf16.msra.mxu0 %v4873
      %7121 = vmatprep.subr.bf16.mxu0 %v4880
      %7122 = vmatpush1.bf16.msra.mxu0 %v4879
      %7123 = vmatprep.subr.bf16.mxu0 %v4886
      %7124 = vmatpush1.bf16.msra.mxu0 %v4885
      %7125 = vmatprep.subr.bf16.mxu0 %v4892
      %7126 = vmatpush1.bf16.msra.mxu0 %v4891
      %7127 = vmatprep.subr.bf16.mxu0 %v4898
      %7128 = vmatpush1.bf16.msra.mxu0 %v4897
      %7129 = vmatprep.subr.bf16.mxu0 %v4904
      %7130 = vmatpush1.bf16.msra.mxu0 %v4903
      %7131 = vmatprep.subr.bf16.mxu0 %v4910
      %7132 = vmatpush1.bf16.msra.mxu0 %v4909
      %7133 = vmatprep.subr.bf16.mxu0 %v4916
      %7134 = vmatpush1.bf16.msra.mxu0 %v4915
      %7135 = vmatprep.subr.bf16.mxu0 %v4922
      %7136 = vmatpush1.bf16.msra.mxu0 %v4921
      %7137 = vmatprep.subr.bf16.mxu0 %v4928
      %7138 = vmatpush1.bf16.msra.mxu0 %v4927
      %7139 = vmatprep.subr.bf16.mxu0 %v4934
      %7140 = vmatpush1.bf16.msra.mxu0 %v4933
      %7141 = vmatprep.mubr.bf16.mxu0 %v6692
      %7142 = vmatmul.mubr.bf16.gmra.mrb[0].mxu0 %v6691
      %v7143 = vpop.f32.mrb[0].mxu0
      %v7144 = vadd.f32 0.0, %v7143
      %v7145 = vpop.f32.mrb[0].mxu0
      %v7146 = vadd.f32 0.0, %v7145
      %v7147 = vpop.f32.mrb[0].mxu0
      %v7148 = vadd.f32 0.0, %v7147
      %v7149 = vpop.f32.mrb[0].mxu0
      %v7150 = vadd.f32 0.0, %v7149
      %7151 = vmatprep.mubr.bf16.mxu0 %v6694
      %7152 = vmatmul.mubr.bf16.gmra.mrb[0].mxu0 %v6693
      %v7153 = vpop.f32.mrb[0].mxu0
      %v7154 = vadd.f32 0.0, %v7153
      %v7155 = vpop.f32.mrb[0].mxu0
      %v7156 = vadd.f32 0.0, %v7155
      %v7157 = vpop.f32.mrb[0].mxu0
      %v7158 = vadd.f32 0.0, %v7157
      %v7159 = vpop.f32.mrb[0].mxu0
      %v7160 = vadd.f32 0.0, %v7159
      %7161 = vmatprep.mubr.bf16.mxu0 %v6696
      %7162 = vmatmul.mubr.bf16.gmra.mrb[0].mxu0 %v6695
      %v7163 = vpop.f32.mrb[0].mxu0
      %v7164 = vadd.f32 0.0, %v7163
      %v7165 = vpop.f32.mrb[0].mxu0
      %v7166 = vadd.f32 0.0, %v7165
      %v7167 = vpop.f32.mrb[0].mxu0
      %v7168 = vadd.f32 0.0, %v7167
      %v7169 = vpop.f32.mrb[0].mxu0
      %v7170 = vadd.f32 0.0, %v7169
      %7171 = vmatprep.mubr.bf16.mxu0 %v6698
      %7172 = vmatmul.mubr.bf16.gmra.mrb[0].mxu0 %v6697
      %v7173 = vpop.f32.mrb[0].mxu0
      %v7174 = vadd.f32 0.0, %v7173
      %v7175 = vpop.f32.mrb[0].mxu0
      %v7176 = vadd.f32 0.0, %v7175
      %v7177 = vpop.f32.mrb[0].mxu0
      %v7178 = vadd.f32 0.0, %v7177
      %v7179 = vpop.f32.mrb[0].mxu0
      %v7180 = vadd.f32 0.0, %v7179
      %7181 = vmatprep.mubr.bf16.mxu0 %v6700
      %7182 = vmatmul.mubr.bf16.gmra.mrb[0].mxu0 %v6699
      %v7183 = vpop.f32.mrb[0].mxu0
      %v7184 = vadd.f32 0.0, %v7183
      %v7185 = vpop.f32.mrb[0].mxu0
      %v7186 = vadd.f32 0.0, %v7185
      %v7187 = vpop.f32.mrb[0].mxu0
      %v7188 = vadd.f32 0.0, %v7187
      %v7189 = vpop.f32.mrb[0].mxu0
      %v7190 = vadd.f32 0.0, %v7189
      %7191 = vmatprep.mubr.bf16.mxu0 %v6702
      %7192 = vmatmul.mubr.bf16.gmra.mrb[0].mxu0 %v6701
      %v7193 = vpop.f32.mrb[0].mxu0
      %v7194 = vadd.f32 0.0, %v7193
      %v7195 = vpop.f32.mrb[0].mxu0
      %v7196 = vadd.f32 0.0, %v7195
      %v7197 = vpop.f32.mrb[0].mxu0
      %v7198 = vadd.f32 0.0, %v7197
      %v7199 = vpop.f32.mrb[0].mxu0
      %v7200 = vadd.f32 0.0, %v7199
      %7201 = vmatprep.mubr.bf16.mxu0 %v6704
      %7202 = vmatmul.mubr.bf16.gmra.mrb[0].mxu0 %v6703
      %v7203 = vpop.f32.mrb[0].mxu0
      %v7204 = vadd.f32 0.0, %v7203
      %v7205 = vpop.f32.mrb[0].mxu0
      %v7206 = vadd.f32 0.0, %v7205
      %v7207 = vpop.f32.mrb[0].mxu0
      %v7208 = vadd.f32 0.0, %v7207
      %v7209 = vpop.f32.mrb[0].mxu0
      %v7210 = vadd.f32 0.0, %v7209
      %7211 = vmatprep.mubr.bf16.mxu0 %v6706
      %7212 = vmatmul.mubr.bf16.gmra.mrb[0].mxu0 %v6705
      %v7213 = vpop.f32.mrb[0].mxu0
      %v7214 = vadd.f32 0.0, %v7213
      %v7215 = vpop.f32.mrb[0].mxu0
      %v7216 = vadd.f32 0.0, %v7215
      %v7217 = vpop.f32.mrb[0].mxu0
      %v7218 = vadd.f32 0.0, %v7217
      %v7219 = vpop.f32.mrb[0].mxu0
      %v7220 = vadd.f32 0.0, %v7219
      %7221 = vmatprep.mubr.bf16.mxu0 %v6708
      %7222 = vmatmul.mubr.bf16.gmra.mrb[0].mxu0 %v6707
      %v7223 = vpop.f32.mrb[0].mxu0
      %v7224 = vadd.f32 0.0, %v7223
      %v7225 = vpop.f32.mrb[0].mxu0
      %v7226 = vadd.f32 0.0, %v7225
      %v7227 = vpop.f32.mrb[0].mxu0
      %v7228 = vadd.f32 0.0, %v7227
      %v7229 = vpop.f32.mrb[0].mxu0
      %v7230 = vadd.f32 0.0, %v7229
      %7231 = vmatprep.mubr.bf16.mxu0 %v6710
      %7232 = vmatmul.mubr.bf16.gmra.mrb[0].mxu0 %v6709
      %v7233 = vpop.f32.mrb[0].mxu0
      %v7234 = vadd.f32 0.0, %v7233
      %v7235 = vpop.f32.mrb[0].mxu0
      %v7236 = vadd.f32 0.0, %v7235
      %v7237 = vpop.f32.mrb[0].mxu0
      %v7238 = vadd.f32 0.0, %v7237
      %v7239 = vpop.f32.mrb[0].mxu0
      %v7240 = vadd.f32 0.0, %v7239
      %7241 = vmatprep.mubr.bf16.mxu0 %v6712
      %7242 = vmatmul.mubr.bf16.gmra.mrb[0].mxu0 %v6711
      %v7243 = vpop.f32.mrb[0].mxu0
      %v7244 = vadd.f32 0.0, %v7243
      %v7245 = vpop.f32.mrb[0].mxu0
      %v7246 = vadd.f32 0.0, %v7245
      %v7247 = vpop.f32.mrb[0].mxu0
      %v7248 = vadd.f32 0.0, %v7247
      %v7249 = vpop.f32.mrb[0].mxu0
      %v7250 = vadd.f32 0.0, %v7249
      %7251 = vmatprep.mubr.bf16.mxu0 %v6714
      %7252 = vmatmul.mubr.bf16.gmra.mrb[0].mxu0 %v6713
      %v7253 = vpop.f32.mrb[0].mxu0
      %v7254 = vadd.f32 0.0, %v7253
      %v7255 = vpop.f32.mrb[0].mxu0
      %v7256 = vadd.f32 0.0, %v7255
      %v7257 = vpop.f32.mrb[0].mxu0
      %v7258 = vadd.f32 0.0, %v7257
      %v7259 = vpop.f32.mrb[0].mxu0
      %v7260 = vadd.f32 0.0, %v7259
      %7261 = vmatprep.mubr.bf16.mxu0 %v6716
      %7262 = vmatmul.mubr.bf16.gmra.mrb[0].mxu0 %v6715
      %v7263 = vpop.f32.mrb[0].mxu0
      %v7264 = vadd.f32 0.0, %v7263
      %v7265 = vpop.f32.mrb[0].mxu0
      %v7266 = vadd.f32 0.0, %v7265
      %v7267 = vpop.f32.mrb[0].mxu0
      %v7268 = vadd.f32 0.0, %v7267
      %v7269 = vpop.f32.mrb[0].mxu0
      %v7270 = vadd.f32 0.0, %v7269
      %7271 = vmatprep.mubr.bf16.mxu0 %v6718
      %7272 = vmatmul.mubr.bf16.gmra.mrb[0].mxu0 %v6717
      %v7273 = vpop.f32.mrb[0].mxu0
      %v7274 = vadd.f32 0.0, %v7273
      %v7275 = vpop.f32.mrb[0].mxu0
      %v7276 = vadd.f32 0.0, %v7275
      %v7277 = vpop.f32.mrb[0].mxu0
      %v7278 = vadd.f32 0.0, %v7277
      %v7279 = vpop.f32.mrb[0].mxu0
      %v7280 = vadd.f32 0.0, %v7279
      %7281 = vmatprep.mubr.bf16.mxu0 %v6720
      %7282 = vmatmul.mubr.bf16.gmra.mrb[0].mxu0 %v6719
      %v7283 = vpop.f32.mrb[0].mxu0
      %v7284 = vadd.f32 0.0, %v7283
      %v7285 = vpop.f32.mrb[0].mxu0
      %v7286 = vadd.f32 0.0, %v7285
      %v7287 = vpop.f32.mrb[0].mxu0
      %v7288 = vadd.f32 0.0, %v7287
      %v7289 = vpop.f32.mrb[0].mxu0
      %v7290 = vadd.f32 0.0, %v7289
      %7291 = vmatprep.mubr.bf16.mxu0 %v6722
      %7292 = vmatmul.mubr.bf16.gmra.mrb[0].mxu0 %v6721
      %v7293 = vpop.f32.mrb[0].mxu0
      %v7294 = vadd.f32 0.0, %v7293
      %v7295 = vpop.f32.mrb[0].mxu0
      %v7296 = vadd.f32 0.0, %v7295
      %v7297 = vpop.f32.mrb[0].mxu0
      %v7298 = vadd.f32 0.0, %v7297
      %v7299 = vpop.f32.mrb[0].mxu0
      %v7300 = vadd.f32 0.0, %v7299
      %7301 = vdwg.mxu0
      %v7302 = vld [vmem:[%s473] sm:$0xff]
      %v7303 = vld [vmem:[%s473 + $0x8] sm:$0xff]
      %v7304 = vld [vmem:[%s473 + $0x10] sm:$0xff]
      %v7305 = vld [vmem:[%s473 + $0x18] sm:$0xff]
      %v7306 = vld [vmem:[%s473 + $0x20] sm:$0xff]
      %v7307 = vld [vmem:[%s473 + $0x28] sm:$0xff]
      %v7308 = vld [vmem:[%s473 + $0x30] sm:$0xff]
      %v7309 = vld [vmem:[%s473 + $0x38] sm:$0xff]
      %v7310 = vld [vmem:[%s473 + $0x40] sm:$0xff]
      %v7311 = vld [vmem:[%s473 + $0x48] sm:$0xff]
      %v7312 = vld [vmem:[%s473 + $0x50] sm:$0xff]
      %v7313 = vld [vmem:[%s473 + $0x58] sm:$0xff]
      %v7314 = vld [vmem:[%s473 + $0x60] sm:$0xff]
      %v7315 = vld [vmem:[%s473 + $0x68] sm:$0xff]
      %v7316 = vld [vmem:[%s473 + $0x70] sm:$0xff]
      %v7317 = vld [vmem:[%s473 + $0x78] sm:$0xff]
      %v7318 = vld [vmem:[%s473 + $0x80] sm:$0xff]
      %v7319 = vld [vmem:[%s473 + $0x88] sm:$0xff]
      %v7320 = vld [vmem:[%s473 + $0x90] sm:$0xff]
      %v7321 = vld [vmem:[%s473 + $0x98] sm:$0xff]
      %v7322 = vld [vmem:[%s473 + $0xa0] sm:$0xff]
      %v7323 = vld [vmem:[%s473 + $0xa8] sm:$0xff]
      %v7324 = vld [vmem:[%s473 + $0xb0] sm:$0xff]
      %v7325 = vld [vmem:[%s473 + $0xb8] sm:$0xff]
      %v7326 = vld [vmem:[%s473 + $0xc0] sm:$0xff]
      %v7327 = vld [vmem:[%s473 + $0xc8] sm:$0xff]
      %v7328 = vld [vmem:[%s473 + $0xd0] sm:$0xff]
      %v7329 = vld [vmem:[%s473 + $0xd8] sm:$0xff]
      %v7330 = vld [vmem:[%s473 + $0xe0] sm:$0xff]
      %v7331 = vld [vmem:[%s473 + $0xe8] sm:$0xff]
      %v7332 = vld [vmem:[%s473 + $0xf0] sm:$0xff]
      %v7333 = vld [vmem:[%s473 + $0xf8] sm:$0xff]
      %vm7334 = vcmp.gt.f32.partialorder %v7302, 0.0
      %vm7335 = vcmp.gt.f32.partialorder %v7303, 0.0
      %vm7336 = vcmp.gt.f32.partialorder %v7304, 0.0
      %vm7337 = vcmp.gt.f32.partialorder %v7305, 0.0
      %vm7338 = vcmp.gt.f32.partialorder %v7306, 0.0
      %vm7339 = vcmp.gt.f32.partialorder %v7307, 0.0
      %vm7340 = vcmp.gt.f32.partialorder %v7308, 0.0
      %vm7341 = vcmp.gt.f32.partialorder %v7309, 0.0
      %vm7342 = vcmp.gt.f32.partialorder %v7310, 0.0
      %vm7343 = vcmp.gt.f32.partialorder %v7311, 0.0
      %vm7344 = vcmp.gt.f32.partialorder %v7312, 0.0
      %vm7345 = vcmp.gt.f32.partialorder %v7313, 0.0
      %vm7346 = vcmp.gt.f32.partialorder %v7314, 0.0
      %vm7347 = vcmp.gt.f32.partialorder %v7315, 0.0
      %vm7348 = vcmp.gt.f32.partialorder %v7316, 0.0
      %vm7349 = vcmp.gt.f32.partialorder %v7317, 0.0
      %vm7350 = vcmp.gt.f32.partialorder %v7318, 0.0
      %vm7351 = vcmp.gt.f32.partialorder %v7319, 0.0
      %vm7352 = vcmp.gt.f32.partialorder %v7320, 0.0
      %vm7353 = vcmp.gt.f32.partialorder %v7321, 0.0
      %vm7354 = vcmp.gt.f32.partialorder %v7322, 0.0
      %vm7355 = vcmp.gt.f32.partialorder %v7323, 0.0
      %vm7356 = vcmp.gt.f32.partialorder %v7324, 0.0
      %vm7357 = vcmp.gt.f32.partialorder %v7325, 0.0
      %vm7358 = vcmp.gt.f32.partialorder %v7326, 0.0
      %vm7359 = vcmp.gt.f32.partialorder %v7327, 0.0
      %vm7360 = vcmp.gt.f32.partialorder %v7328, 0.0
      %vm7361 = vcmp.gt.f32.partialorder %v7329, 0.0
      %vm7362 = vcmp.gt.f32.partialorder %v7330, 0.0
      %vm7363 = vcmp.gt.f32.partialorder %v7331, 0.0
      %vm7364 = vcmp.gt.f32.partialorder %v7332, 0.0
      %vm7365 = vcmp.gt.f32.partialorder %v7333, 0.0
      %v7366 = vsel %vm7334, 1, 0
      %v7367 = vsel %vm7335, 1, 0
      %v7368 = vsel %vm7336, 1, 0
      %v7369 = vsel %vm7337, 1, 0
      %v7370 = vsel %vm7338, 1, 0
      %v7371 = vsel %vm7339, 1, 0
      %v7372 = vsel %vm7340, 1, 0
      %v7373 = vsel %vm7341, 1, 0
      %v7374 = vsel %vm7342, 1, 0
      %v7375 = vsel %vm7343, 1, 0
      %v7376 = vsel %vm7344, 1, 0
      %v7377 = vsel %vm7345, 1, 0
      %v7378 = vsel %vm7346, 1, 0
      %v7379 = vsel %vm7347, 1, 0
      %v7380 = vsel %vm7348, 1, 0
      %v7381 = vsel %vm7349, 1, 0
      %v7382 = vsel %vm7350, 1, 0
      %v7383 = vsel %vm7351, 1, 0
      %v7384 = vsel %vm7352, 1, 0
      %v7385 = vsel %vm7353, 1, 0
      %v7386 = vsel %vm7354, 1, 0
      %v7387 = vsel %vm7355, 1, 0
      %v7388 = vsel %vm7356, 1, 0
      %v7389 = vsel %vm7357, 1, 0
      %v7390 = vsel %vm7358, 1, 0
      %v7391 = vsel %vm7359, 1, 0
      %v7392 = vsel %vm7360, 1, 0
      %v7393 = vsel %vm7361, 1, 0
      %v7394 = vsel %vm7362, 1, 0
      %v7395 = vsel %vm7363, 1, 0
      %v7396 = vsel %vm7364, 1, 0
      %v7397 = vsel %vm7365, 1, 0
      %7398 = vset.pattern.permute.xlu0 0
      %7399 = vperm.xlu0 %7398, %v7366
      %v7400 = vpop.permute.xlu0 %7399
      %7401 = vset.pattern.permute.xlu0 0
      %7402 = vperm.xlu0 %7401, %v7367
      %v7403 = vpop.permute.xlu0 %7402
      %7404 = vset.pattern.permute.xlu0 0
      %7405 = vperm.xlu0 %7404, %v7368
      %v7406 = vpop.permute.xlu0 %7405
      %7407 = vset.pattern.permute.xlu0 0
      %7408 = vperm.xlu0 %7407, %v7369
      %v7409 = vpop.permute.xlu0 %7408
      %7410 = vset.pattern.permute.xlu0 0
      %7411 = vperm.xlu0 %7410, %v7370
      %v7412 = vpop.permute.xlu0 %7411
      %7413 = vset.pattern.permute.xlu0 0
      %7414 = vperm.xlu0 %7413, %v7371
      %v7415 = vpop.permute.xlu0 %7414
      %7416 = vset.pattern.permute.xlu0 0
      %7417 = vperm.xlu0 %7416, %v7372
      %v7418 = vpop.permute.xlu0 %7417
      %7419 = vset.pattern.permute.xlu0 0
      %7420 = vperm.xlu0 %7419, %v7373
      %v7421 = vpop.permute.xlu0 %7420
      %7422 = vset.pattern.permute.xlu0 0
      %7423 = vperm.xlu0 %7422, %v7374
      %v7424 = vpop.permute.xlu0 %7423
      %7425 = vset.pattern.permute.xlu0 0
      %7426 = vperm.xlu0 %7425, %v7375
      %v7427 = vpop.permute.xlu0 %7426
      %7428 = vset.pattern.permute.xlu0 0
      %7429 = vperm.xlu0 %7428, %v7376
      %v7430 = vpop.permute.xlu0 %7429
      %7431 = vset.pattern.permute.xlu0 0
      %7432 = vperm.xlu0 %7431, %v7377
      %v7433 = vpop.permute.xlu0 %7432
      %7434 = vset.pattern.permute.xlu0 0
      %7435 = vperm.xlu0 %7434, %v7378
      %v7436 = vpop.permute.xlu0 %7435
      %7437 = vset.pattern.permute.xlu0 0
      %7438 = vperm.xlu0 %7437, %v7379
      %v7439 = vpop.permute.xlu0 %7438
      %7440 = vset.pattern.permute.xlu0 0
      %7441 = vperm.xlu0 %7440, %v7380
      %v7442 = vpop.permute.xlu0 %7441
      %7443 = vset.pattern.permute.xlu0 0
      %7444 = vperm.xlu0 %7443, %v7381
      %v7445 = vpop.permute.xlu0 %7444
      %7446 = vset.pattern.permute.xlu0 0
      %7447 = vperm.xlu0 %7446, %v7382
      %v7448 = vpop.permute.xlu0 %7447
      %7449 = vset.pattern.permute.xlu0 0
      %7450 = vperm.xlu0 %7449, %v7383
      %v7451 = vpop.permute.xlu0 %7450
      %7452 = vset.pattern.permute.xlu0 0
      %7453 = vperm.xlu0 %7452, %v7384
      %v7454 = vpop.permute.xlu0 %7453
      %7455 = vset.pattern.permute.xlu0 0
      %7456 = vperm.xlu0 %7455, %v7385
      %v7457 = vpop.permute.xlu0 %7456
      %7458 = vset.pattern.permute.xlu0 0
      %7459 = vperm.xlu0 %7458, %v7386
      %v7460 = vpop.permute.xlu0 %7459
      %7461 = vset.pattern.permute.xlu0 0
      %7462 = vperm.xlu0 %7461, %v7387
      %v7463 = vpop.permute.xlu0 %7462
      %7464 = vset.pattern.permute.xlu0 0
      %7465 = vperm.xlu0 %7464, %v7388
      %v7466 = vpop.permute.xlu0 %7465
      %7467 = vset.pattern.permute.xlu0 0
      %7468 = vperm.xlu0 %7467, %v7389
      %v7469 = vpop.permute.xlu0 %7468
      %7470 = vset.pattern.permute.xlu0 0
      %7471 = vperm.xlu0 %7470, %v7390
      %v7472 = vpop.permute.xlu0 %7471
      %7473 = vset.pattern.permute.xlu0 0
      %7474 = vperm.xlu0 %7473, %v7391
      %v7475 = vpop.permute.xlu0 %7474
      %7476 = vset.pattern.permute.xlu0 0
      %7477 = vperm.xlu0 %7476, %v7392
      %v7478 = vpop.permute.xlu0 %7477
      %7479 = vset.pattern.permute.xlu0 0
      %7480 = vperm.xlu0 %7479, %v7393
      %v7481 = vpop.permute.xlu0 %7480
      %7482 = vset.pattern.permute.xlu0 0
      %7483 = vperm.xlu0 %7482, %v7394
      %v7484 = vpop.permute.xlu0 %7483
      %7485 = vset.pattern.permute.xlu0 0
      %7486 = vperm.xlu0 %7485, %v7395
      %v7487 = vpop.permute.xlu0 %7486
      %7488 = vset.pattern.permute.xlu0 0
      %7489 = vperm.xlu0 %7488, %v7396
      %v7490 = vpop.permute.xlu0 %7489
      %7491 = vset.pattern.permute.xlu0 0
      %7492 = vperm.xlu0 %7491, %v7397
      %v7493 = vpop.permute.xlu0 %7492
      %vm7494 = vcmp.eq.s32.totalorder %v7400, 1
      %vm7495 = vcmp.eq.s32.totalorder %v7403, 1
      %vm7496 = vcmp.eq.s32.totalorder %v7406, 1
      %vm7497 = vcmp.eq.s32.totalorder %v7409, 1
      %vm7498 = vcmp.eq.s32.totalorder %v7412, 1
      %vm7499 = vcmp.eq.s32.totalorder %v7415, 1
      %vm7500 = vcmp.eq.s32.totalorder %v7418, 1
      %vm7501 = vcmp.eq.s32.totalorder %v7421, 1
      %vm7502 = vcmp.eq.s32.totalorder %v7424, 1
      %vm7503 = vcmp.eq.s32.totalorder %v7427, 1
      %vm7504 = vcmp.eq.s32.totalorder %v7430, 1
      %vm7505 = vcmp.eq.s32.totalorder %v7433, 1
      %vm7506 = vcmp.eq.s32.totalorder %v7436, 1
      %vm7507 = vcmp.eq.s32.totalorder %v7439, 1
      %vm7508 = vcmp.eq.s32.totalorder %v7442, 1
      %vm7509 = vcmp.eq.s32.totalorder %v7445, 1
      %vm7510 = vcmp.eq.s32.totalorder %v7448, 1
      %vm7511 = vcmp.eq.s32.totalorder %v7451, 1
      %vm7512 = vcmp.eq.s32.totalorder %v7454, 1
      %vm7513 = vcmp.eq.s32.totalorder %v7457, 1
      %vm7514 = vcmp.eq.s32.totalorder %v7460, 1
      %vm7515 = vcmp.eq.s32.totalorder %v7463, 1
      %vm7516 = vcmp.eq.s32.totalorder %v7466, 1
      %vm7517 = vcmp.eq.s32.totalorder %v7469, 1
      %vm7518 = vcmp.eq.s32.totalorder %v7472, 1
      %vm7519 = vcmp.eq.s32.totalorder %v7475, 1
      %vm7520 = vcmp.eq.s32.totalorder %v7478, 1
      %vm7521 = vcmp.eq.s32.totalorder %v7481, 1
      %vm7522 = vcmp.eq.s32.totalorder %v7484, 1
      %vm7523 = vcmp.eq.s32.totalorder %v7487, 1
      %vm7524 = vcmp.eq.s32.totalorder %v7490, 1
      %vm7525 = vcmp.eq.s32.totalorder %v7493, 1
      %v7526 = vsel %vm7494, -100000.0, %v6758
      %v7527 = vsel %vm7494, -100000.0, %v6760
      %v7528 = vsel %vm7494, -100000.0, %v6951
      %v7529 = vsel %vm7494, -100000.0, %v6953
      %v7530 = vsel %vm7494, -100000.0, %v7144
      %v7531 = vsel %vm7494, -100000.0, %v7146
      %v7532 = vsel %vm7495, -100000.0, %v6762
      %v7533 = vsel %vm7495, -100000.0, %v6764
      %v7534 = vsel %vm7495, -100000.0, %v6955
      %v7535 = vsel %vm7495, -100000.0, %v6957
      %v7536 = vsel %vm7495, -100000.0, %v7148
      %v7537 = vsel %vm7495, -100000.0, %v7150
      %v7538 = vsel %vm7496, -100000.0, %v6768
      %v7539 = vsel %vm7496, -100000.0, %v6770
      %v7540 = vsel %vm7496, -100000.0, %v6961
      %v7541 = vsel %vm7496, -100000.0, %v6963
      %v7542 = vsel %vm7496, -100000.0, %v7154
      %v7543 = vsel %vm7496, -100000.0, %v7156
      %v7544 = vsel %vm7497, -100000.0, %v6772
      %v7545 = vsel %vm7497, -100000.0, %v6774
      %v7546 = vsel %vm7497, -100000.0, %v6965
      %v7547 = vsel %vm7497, -100000.0, %v6967
      %v7548 = vsel %vm7497, -100000.0, %v7158
      %v7549 = vsel %vm7497, -100000.0, %v7160
      %v7550 = vsel %vm7498, -100000.0, %v6778
      %v7551 = vsel %vm7498, -100000.0, %v6780
      %v7552 = vsel %vm7498, -100000.0, %v6971
      %v7553 = vsel %vm7498, -100000.0, %v6973
      %v7554 = vsel %vm7498, -100000.0, %v7164
      %v7555 = vsel %vm7498, -100000.0, %v7166
      %v7556 = vsel %vm7499, -100000.0, %v6782
      %v7557 = vsel %vm7499, -100000.0, %v6784
      %v7558 = vsel %vm7499, -100000.0, %v6975
      %v7559 = vsel %vm7499, -100000.0, %v6977
      %v7560 = vsel %vm7499, -100000.0, %v7168
      %v7561 = vsel %vm7499, -100000.0, %v7170
      %v7562 = vsel %vm7500, -100000.0, %v6788
      %v7563 = vsel %vm7500, -100000.0, %v6790
      %v7564 = vsel %vm7500, -100000.0, %v6981
      %v7565 = vsel %vm7500, -100000.0, %v6983
      %v7566 = vsel %vm7500, -100000.0, %v7174
      %v7567 = vsel %vm7500, -100000.0, %v7176
      %v7568 = vsel %vm7501, -100000.0, %v6792
      %v7569 = vsel %vm7501, -100000.0, %v6794
      %v7570 = vsel %vm7501, -100000.0, %v6985
      %v7571 = vsel %vm7501, -100000.0, %v6987
      %v7572 = vsel %vm7501, -100000.0, %v7178
      %v7573 = vsel %vm7501, -100000.0, %v7180
      %v7574 = vsel %vm7502, -100000.0, %v6798
      %v7575 = vsel %vm7502, -100000.0, %v6800
      %v7576 = vsel %vm7502, -100000.0, %v6991
      %v7577 = vsel %vm7502, -100000.0, %v6993
      %v7578 = vsel %vm7502, -100000.0, %v7184
      %v7579 = vsel %vm7502, -100000.0, %v7186
      %v7580 = vsel %vm7503, -100000.0, %v6802
      %v7581 = vsel %vm7503, -100000.0, %v6804
      %v7582 = vsel %vm7503, -100000.0, %v6995
      %v7583 = vsel %vm7503, -100000.0, %v6997
      %v7584 = vsel %vm7503, -100000.0, %v7188
      %v7585 = vsel %vm7503, -100000.0, %v7190
      %v7586 = vsel %vm7504, -100000.0, %v6808
      %v7587 = vsel %vm7504, -100000.0, %v6810
      %v7588 = vsel %vm7504, -100000.0, %v7001
      %v7589 = vsel %vm7504, -100000.0, %v7003
      %v7590 = vsel %vm7504, -100000.0, %v7194
      %v7591 = vsel %vm7504, -100000.0, %v7196
      %v7592 = vsel %vm7505, -100000.0, %v6812
      %v7593 = vsel %vm7505, -100000.0, %v6814
      %v7594 = vsel %vm7505, -100000.0, %v7005
      %v7595 = vsel %vm7505, -100000.0, %v7007
      %v7596 = vsel %vm7505, -100000.0, %v7198
      %v7597 = vsel %vm7505, -100000.0, %v7200
      %v7598 = vsel %vm7506, -100000.0, %v6818
      %v7599 = vsel %vm7506, -100000.0, %v6820
      %v7600 = vsel %vm7506, -100000.0, %v7011
      %v7601 = vsel %vm7506, -100000.0, %v7013
      %v7602 = vsel %vm7506, -100000.0, %v7204
      %v7603 = vsel %vm7506, -100000.0, %v7206
      %v7604 = vsel %vm7507, -100000.0, %v6822
      %v7605 = vsel %vm7507, -100000.0, %v6824
      %v7606 = vsel %vm7507, -100000.0, %v7015
      %v7607 = vsel %vm7507, -100000.0, %v7017
      %v7608 = vsel %vm7507, -100000.0, %v7208
      %v7609 = vsel %vm7507, -100000.0, %v7210
      %v7610 = vsel %vm7508, -100000.0, %v6828
      %v7611 = vsel %vm7508, -100000.0, %v6830
      %v7612 = vsel %vm7508, -100000.0, %v7021
      %v7613 = vsel %vm7508, -100000.0, %v7023
      %v7614 = vsel %vm7508, -100000.0, %v7214
      %v7615 = vsel %vm7508, -100000.0, %v7216
      %v7616 = vsel %vm7509, -100000.0, %v6832
      %v7617 = vsel %vm7509, -100000.0, %v6834
      %v7618 = vsel %vm7509, -100000.0, %v7025
      %v7619 = vsel %vm7509, -100000.0, %v7027
      %v7620 = vsel %vm7509, -100000.0, %v7218
      %v7621 = vsel %vm7509, -100000.0, %v7220
      %v7622 = vsel %vm7510, -100000.0, %v6838
      %v7623 = vsel %vm7510, -100000.0, %v6840
      %v7624 = vsel %vm7510, -100000.0, %v7031
      %v7625 = vsel %vm7510, -100000.0, %v7033
      %v7626 = vsel %vm7510, -100000.0, %v7224
      %v7627 = vsel %vm7510, -100000.0, %v7226
      %v7628 = vsel %vm7511, -100000.0, %v6842
      %v7629 = vsel %vm7511, -100000.0, %v6844
      %v7630 = vsel %vm7511, -100000.0, %v7035
      %v7631 = vsel %vm7511, -100000.0, %v7037
      %v7632 = vsel %vm7511, -100000.0, %v7228
      %v7633 = vsel %vm7511, -100000.0, %v7230
      %v7634 = vsel %vm7512, -100000.0, %v6848
      %v7635 = vsel %vm7512, -100000.0, %v6850
      %v7636 = vsel %vm7512, -100000.0, %v7041
      %v7637 = vsel %vm7512, -100000.0, %v7043
      %v7638 = vsel %vm7512, -100000.0, %v7234
      %v7639 = vsel %vm7512, -100000.0, %v7236
      %v7640 = vsel %vm7513, -100000.0, %v6852
      %v7641 = vsel %vm7513, -100000.0, %v6854
      %v7642 = vsel %vm7513, -100000.0, %v7045
      %v7643 = vsel %vm7513, -100000.0, %v7047
      %v7644 = vsel %vm7513, -100000.0, %v7238
      %v7645 = vsel %vm7513, -100000.0, %v7240
      %v7646 = vsel %vm7514, -100000.0, %v6858
      %v7647 = vsel %vm7514, -100000.0, %v6860
      %v7648 = vsel %vm7514, -100000.0, %v7051
      %v7649 = vsel %vm7514, -100000.0, %v7053
      %v7650 = vsel %vm7514, -100000.0, %v7244
      %v7651 = vsel %vm7514, -100000.0, %v7246
      %v7652 = vsel %vm7515, -100000.0, %v6862
      %v7653 = vsel %vm7515, -100000.0, %v6864
      %v7654 = vsel %vm7515, -100000.0, %v7055
      %v7655 = vsel %vm7515, -100000.0, %v7057
      %v7656 = vsel %vm7515, -100000.0, %v7248
      %v7657 = vsel %vm7515, -100000.0, %v7250
      %v7658 = vsel %vm7516, -100000.0, %v6868
      %v7659 = vsel %vm7516, -100000.0, %v6870
      %v7660 = vsel %vm7516, -100000.0, %v7061
      %v7661 = vsel %vm7516, -100000.0, %v7063
      %v7662 = vsel %vm7516, -100000.0, %v7254
      %v7663 = vsel %vm7516, -100000.0, %v7256
      %v7664 = vsel %vm7517, -100000.0, %v6872
      %v7665 = vsel %vm7517, -100000.0, %v6874
      %v7666 = vsel %vm7517, -100000.0, %v7065
      %v7667 = vsel %vm7517, -100000.0, %v7067
      %v7668 = vsel %vm7517, -100000.0, %v7258
      %v7669 = vsel %vm7517, -100000.0, %v7260
      %v7670 = vsel %vm7518, -100000.0, %v6878
      %v7671 = vsel %vm7518, -100000.0, %v6880
      %v7672 = vsel %vm7518, -100000.0, %v7071
      %v7673 = vsel %vm7518, -100000.0, %v7073
      %v7674 = vsel %vm7518, -100000.0, %v7264
      %v7675 = vsel %vm7518, -100000.0, %v7266
      %v7676 = vsel %vm7519, -100000.0, %v6882
      %v7677 = vsel %vm7519, -100000.0, %v6884
      %v7678 = vsel %vm7519, -100000.0, %v7075
      %v7679 = vsel %vm7519, -100000.0, %v7077
      %v7680 = vsel %vm7519, -100000.0, %v7268
      %v7681 = vsel %vm7519, -100000.0, %v7270
      %v7682 = vsel %vm7520, -100000.0, %v6888
      %v7683 = vsel %vm7520, -100000.0, %v6890
      %v7684 = vsel %vm7520, -100000.0, %v7081
      %v7685 = vsel %vm7520, -100000.0, %v7083
      %v7686 = vsel %vm7520, -100000.0, %v7274
      %v7687 = vsel %vm7520, -100000.0, %v7276
      %v7688 = vsel %vm7521, -100000.0, %v6892
      %v7689 = vsel %vm7521, -100000.0, %v6894
      %v7690 = vsel %vm7521, -100000.0, %v7085
      %v7691 = vsel %vm7521, -100000.0, %v7087
      %v7692 = vsel %vm7521, -100000.0, %v7278
      %v7693 = vsel %vm7521, -100000.0, %v7280
      %v7694 = vsel %vm7522, -100000.0, %v6898
      %v7695 = vsel %vm7522, -100000.0, %v6900
      %v7696 = vsel %vm7522, -100000.0, %v7091
      %v7697 = vsel %vm7522, -100000.0, %v7093
      %v7698 = vsel %vm7522, -100000.0, %v7284
      %v7699 = vsel %vm7522, -100000.0, %v7286
      %v7700 = vsel %vm7523, -100000.0, %v6902
      %v7701 = vsel %vm7523, -100000.0, %v6904
      %v7702 = vsel %vm7523, -100000.0, %v7095
      %v7703 = vsel %vm7523, -100000.0, %v7097
      %v7704 = vsel %vm7523, -100000.0, %v7288
      %v7705 = vsel %vm7523, -100000.0, %v7290
      %v7706 = vsel %vm7524, -100000.0, %v6908
      %v7707 = vsel %vm7524, -100000.0, %v6910
      %v7708 = vsel %vm7524, -100000.0, %v7101
      %v7709 = vsel %vm7524, -100000.0, %v7103
      %v7710 = vsel %vm7524, -100000.0, %v7294
      %v7711 = vsel %vm7524, -100000.0, %v7296
      %v7712 = vsel %vm7525, -100000.0, %v6912
      %v7713 = vsel %vm7525, -100000.0, %v6914
      %v7714 = vsel %vm7525, -100000.0, %v7105
      %v7715 = vsel %vm7525, -100000.0, %v7107
      %v7716 = vsel %vm7525, -100000.0, %v7298
      %v7717 = vsel %vm7525, -100000.0, %v7300
      %v7718 = vrot.slane %v7526, 4
      %v7719 = vmax.f32 %v7526, %v7718
      %v7720 = vrot.slane %v7719, 2
      %v7721 = vmax.f32 %v7719, %v7720
      %v7722 = vrot.slane %v7721, 1
      %v7723 = vmax.f32 %v7721, %v7722
      %v7724 = vrot.slane %v7527, 4
      %v7725 = vmax.f32 %v7527, %v7724
      %v7726 = vrot.slane %v7725, 2
      %v7727 = vmax.f32 %v7725, %v7726
      %v7728 = vrot.slane %v7727, 1
      %v7729 = vmax.f32 %v7727, %v7728
      %v7730 = vrot.slane %v7528, 4
      %v7731 = vmax.f32 %v7528, %v7730
      %v7732 = vrot.slane %v7731, 2
      %v7733 = vmax.f32 %v7731, %v7732
      %v7734 = vrot.slane %v7733, 1
      %v7735 = vmax.f32 %v7733, %v7734
      %v7736 = vrot.slane %v7529, 4
      %v7737 = vmax.f32 %v7529, %v7736
      %v7738 = vrot.slane %v7737, 2
      %v7739 = vmax.f32 %v7737, %v7738
      %v7740 = vrot.slane %v7739, 1
      %v7741 = vmax.f32 %v7739, %v7740
      %v7742 = vrot.slane %v7530, 4
      %v7743 = vmax.f32 %v7530, %v7742
      %v7744 = vrot.slane %v7743, 2
      %v7745 = vmax.f32 %v7743, %v7744
      %v7746 = vrot.slane %v7745, 1
      %v7747 = vmax.f32 %v7745, %v7746
      %v7748 = vrot.slane %v7531, 4
      %v7749 = vmax.f32 %v7531, %v7748
      %v7750 = vrot.slane %v7749, 2
      %v7751 = vmax.f32 %v7749, %v7750
      %v7752 = vrot.slane %v7751, 1
      %v7753 = vmax.f32 %v7751, %v7752
      %v7754 = vrot.slane %v7532, 4
      %v7755 = vmax.f32 %v7532, %v7754
      %v7756 = vrot.slane %v7755, 2
      %v7757 = vmax.f32 %v7755, %v7756
      %v7758 = vrot.slane %v7757, 1
      %v7759 = vmax.f32 %v7757, %v7758
      %v7760 = vrot.slane %v7533, 4
      %v7761 = vmax.f32 %v7533, %v7760
      %v7762 = vrot.slane %v7761, 2
      %v7763 = vmax.f32 %v7761, %v7762
      %v7764 = vrot.slane %v7763, 1
      %v7765 = vmax.f32 %v7763, %v7764
      %v7766 = vrot.slane %v7534, 4
      %v7767 = vmax.f32 %v7534, %v7766
      %v7768 = vrot.slane %v7767, 2
      %v7769 = vmax.f32 %v7767, %v7768
      %v7770 = vrot.slane %v7769, 1
      %v7771 = vmax.f32 %v7769, %v7770
      %v7772 = vrot.slane %v7535, 4
      %v7773 = vmax.f32 %v7535, %v7772
      %v7774 = vrot.slane %v7773, 2
      %v7775 = vmax.f32 %v7773, %v7774
      %v7776 = vrot.slane %v7775, 1
      %v7777 = vmax.f32 %v7775, %v7776
      %v7778 = vrot.slane %v7536, 4
      %v7779 = vmax.f32 %v7536, %v7778
      %v7780 = vrot.slane %v7779, 2
      %v7781 = vmax.f32 %v7779, %v7780
      %v7782 = vrot.slane %v7781, 1
      %v7783 = vmax.f32 %v7781, %v7782
      %v7784 = vrot.slane %v7537, 4
      %v7785 = vmax.f32 %v7537, %v7784
      %v7786 = vrot.slane %v7785, 2
      %v7787 = vmax.f32 %v7785, %v7786
      %v7788 = vrot.slane %v7787, 1
      %v7789 = vmax.f32 %v7787, %v7788
      %v7790 = vrot.slane %v7538, 4
      %v7791 = vmax.f32 %v7538, %v7790
      %v7792 = vrot.slane %v7791, 2
      %v7793 = vmax.f32 %v7791, %v7792
      %v7794 = vrot.slane %v7793, 1
      %v7795 = vmax.f32 %v7793, %v7794
      %v7796 = vrot.slane %v7539, 4
      %v7797 = vmax.f32 %v7539, %v7796
      %v7798 = vrot.slane %v7797, 2
      %v7799 = vmax.f32 %v7797, %v7798
      %v7800 = vrot.slane %v7799, 1
      %v7801 = vmax.f32 %v7799, %v7800
      %v7802 = vrot.slane %v7540, 4
      %v7803 = vmax.f32 %v7540, %v7802
      %v7804 = vrot.slane %v7803, 2
      %v7805 = vmax.f32 %v7803, %v7804
      %v7806 = vrot.slane %v7805, 1
      %v7807 = vmax.f32 %v7805, %v7806
      %v7808 = vrot.slane %v7541, 4
      %v7809 = vmax.f32 %v7541, %v7808
      %v7810 = vrot.slane %v7809, 2
      %v7811 = vmax.f32 %v7809, %v7810
      %v7812 = vrot.slane %v7811, 1
      %v7813 = vmax.f32 %v7811, %v7812
      %v7814 = vrot.slane %v7542, 4
      %v7815 = vmax.f32 %v7542, %v7814
      %v7816 = vrot.slane %v7815, 2
      %v7817 = vmax.f32 %v7815, %v7816
      %v7818 = vrot.slane %v7817, 1
      %v7819 = vmax.f32 %v7817, %v7818
      %v7820 = vrot.slane %v7543, 4
      %v7821 = vmax.f32 %v7543, %v7820
      %v7822 = vrot.slane %v7821, 2
      %v7823 = vmax.f32 %v7821, %v7822
      %v7824 = vrot.slane %v7823, 1
      %v7825 = vmax.f32 %v7823, %v7824
      %v7826 = vrot.slane %v7544, 4
      %v7827 = vmax.f32 %v7544, %v7826
      %v7828 = vrot.slane %v7827, 2
      %v7829 = vmax.f32 %v7827, %v7828
      %v7830 = vrot.slane %v7829, 1
      %v7831 = vmax.f32 %v7829, %v7830
      %v7832 = vrot.slane %v7545, 4
      %v7833 = vmax.f32 %v7545, %v7832
      %v7834 = vrot.slane %v7833, 2
      %v7835 = vmax.f32 %v7833, %v7834
      %v7836 = vrot.slane %v7835, 1
      %v7837 = vmax.f32 %v7835, %v7836
      %v7838 = vrot.slane %v7546, 4
      %v7839 = vmax.f32 %v7546, %v7838
      %v7840 = vrot.slane %v7839, 2
      %v7841 = vmax.f32 %v7839, %v7840
      %v7842 = vrot.slane %v7841, 1
      %v7843 = vmax.f32 %v7841, %v7842
      %v7844 = vrot.slane %v7547, 4
      %v7845 = vmax.f32 %v7547, %v7844
      %v7846 = vrot.slane %v7845, 2
      %v7847 = vmax.f32 %v7845, %v7846
      %v7848 = vrot.slane %v7847, 1
      %v7849 = vmax.f32 %v7847, %v7848
      %v7850 = vrot.slane %v7548, 4
      %v7851 = vmax.f32 %v7548, %v7850
      %v7852 = vrot.slane %v7851, 2
      %v7853 = vmax.f32 %v7851, %v7852
      %v7854 = vrot.slane %v7853, 1
      %v7855 = vmax.f32 %v7853, %v7854
      %v7856 = vrot.slane %v7549, 4
      %v7857 = vmax.f32 %v7549, %v7856
      %v7858 = vrot.slane %v7857, 2
      %v7859 = vmax.f32 %v7857, %v7858
      %v7860 = vrot.slane %v7859, 1
      %v7861 = vmax.f32 %v7859, %v7860
      %v7862 = vrot.slane %v7550, 4
      %v7863 = vmax.f32 %v7550, %v7862
      %v7864 = vrot.slane %v7863, 2
      %v7865 = vmax.f32 %v7863, %v7864
      %v7866 = vrot.slane %v7865, 1
      %v7867 = vmax.f32 %v7865, %v7866
      %v7868 = vrot.slane %v7551, 4
      %v7869 = vmax.f32 %v7551, %v7868
      %v7870 = vrot.slane %v7869, 2
      %v7871 = vmax.f32 %v7869, %v7870
      %v7872 = vrot.slane %v7871, 1
      %v7873 = vmax.f32 %v7871, %v7872
      %v7874 = vrot.slane %v7552, 4
      %v7875 = vmax.f32 %v7552, %v7874
      %v7876 = vrot.slane %v7875, 2
      %v7877 = vmax.f32 %v7875, %v7876
      %v7878 = vrot.slane %v7877, 1
      %v7879 = vmax.f32 %v7877, %v7878
      %v7880 = vrot.slane %v7553, 4
      %v7881 = vmax.f32 %v7553, %v7880
      %v7882 = vrot.slane %v7881, 2
      %v7883 = vmax.f32 %v7881, %v7882
      %v7884 = vrot.slane %v7883, 1
      %v7885 = vmax.f32 %v7883, %v7884
      %v7886 = vrot.slane %v7554, 4
      %v7887 = vmax.f32 %v7554, %v7886
      %v7888 = vrot.slane %v7887, 2
      %v7889 = vmax.f32 %v7887, %v7888
      %v7890 = vrot.slane %v7889, 1
      %v7891 = vmax.f32 %v7889, %v7890
      %v7892 = vrot.slane %v7555, 4
      %v7893 = vmax.f32 %v7555, %v7892
      %v7894 = vrot.slane %v7893, 2
      %v7895 = vmax.f32 %v7893, %v7894
      %v7896 = vrot.slane %v7895, 1
      %v7897 = vmax.f32 %v7895, %v7896
      %v7898 = vrot.slane %v7556, 4
      %v7899 = vmax.f32 %v7556, %v7898
      %v7900 = vrot.slane %v7899, 2
      %v7901 = vmax.f32 %v7899, %v7900
      %v7902 = vrot.slane %v7901, 1
      %v7903 = vmax.f32 %v7901, %v7902
      %v7904 = vrot.slane %v7557, 4
      %v7905 = vmax.f32 %v7557, %v7904
      %v7906 = vrot.slane %v7905, 2
      %v7907 = vmax.f32 %v7905, %v7906
      %v7908 = vrot.slane %v7907, 1
      %v7909 = vmax.f32 %v7907, %v7908
      %v7910 = vrot.slane %v7558, 4
      %v7911 = vmax.f32 %v7558, %v7910
      %v7912 = vrot.slane %v7911, 2
      %v7913 = vmax.f32 %v7911, %v7912
      %v7914 = vrot.slane %v7913, 1
      %v7915 = vmax.f32 %v7913, %v7914
      %v7916 = vrot.slane %v7559, 4
      %v7917 = vmax.f32 %v7559, %v7916
      %v7918 = vrot.slane %v7917, 2
      %v7919 = vmax.f32 %v7917, %v7918
      %v7920 = vrot.slane %v7919, 1
      %v7921 = vmax.f32 %v7919, %v7920
      %v7922 = vrot.slane %v7560, 4
      %v7923 = vmax.f32 %v7560, %v7922
      %v7924 = vrot.slane %v7923, 2
      %v7925 = vmax.f32 %v7923, %v7924
      %v7926 = vrot.slane %v7925, 1
      %v7927 = vmax.f32 %v7925, %v7926
      %v7928 = vrot.slane %v7561, 4
      %v7929 = vmax.f32 %v7561, %v7928
      %v7930 = vrot.slane %v7929, 2
      %v7931 = vmax.f32 %v7929, %v7930
      %v7932 = vrot.slane %v7931, 1
      %v7933 = vmax.f32 %v7931, %v7932
      %v7934 = vrot.slane %v7562, 4
      %v7935 = vmax.f32 %v7562, %v7934
      %v7936 = vrot.slane %v7935, 2
      %v7937 = vmax.f32 %v7935, %v7936
      %v7938 = vrot.slane %v7937, 1
      %v7939 = vmax.f32 %v7937, %v7938
      %v7940 = vrot.slane %v7563, 4
      %v7941 = vmax.f32 %v7563, %v7940
      %v7942 = vrot.slane %v7941, 2
      %v7943 = vmax.f32 %v7941, %v7942
      %v7944 = vrot.slane %v7943, 1
      %v7945 = vmax.f32 %v7943, %v7944
      %v7946 = vrot.slane %v7564, 4
      %v7947 = vmax.f32 %v7564, %v7946
      %v7948 = vrot.slane %v7947, 2
      %v7949 = vmax.f32 %v7947, %v7948
      %v7950 = vrot.slane %v7949, 1
      %v7951 = vmax.f32 %v7949, %v7950
      %v7952 = vrot.slane %v7565, 4
      %v7953 = vmax.f32 %v7565, %v7952
      %v7954 = vrot.slane %v7953, 2
      %v7955 = vmax.f32 %v7953, %v7954
      %v7956 = vrot.slane %v7955, 1
      %v7957 = vmax.f32 %v7955, %v7956
      %v7958 = vrot.slane %v7566, 4
      %v7959 = vmax.f32 %v7566, %v7958
      %v7960 = vrot.slane %v7959, 2
      %v7961 = vmax.f32 %v7959, %v7960
      %v7962 = vrot.slane %v7961, 1
      %v7963 = vmax.f32 %v7961, %v7962
      %v7964 = vrot.slane %v7567, 4
      %v7965 = vmax.f32 %v7567, %v7964
      %v7966 = vrot.slane %v7965, 2
      %v7967 = vmax.f32 %v7965, %v7966
      %v7968 = vrot.slane %v7967, 1
      %v7969 = vmax.f32 %v7967, %v7968
      %v7970 = vrot.slane %v7568, 4
      %v7971 = vmax.f32 %v7568, %v7970
      %v7972 = vrot.slane %v7971, 2
      %v7973 = vmax.f32 %v7971, %v7972
      %v7974 = vrot.slane %v7973, 1
      %v7975 = vmax.f32 %v7973, %v7974
      %v7976 = vrot.slane %v7569, 4
      %v7977 = vmax.f32 %v7569, %v7976
      %v7978 = vrot.slane %v7977, 2
      %v7979 = vmax.f32 %v7977, %v7978
      %v7980 = vrot.slane %v7979, 1
      %v7981 = vmax.f32 %v7979, %v7980
      %v7982 = vrot.slane %v7570, 4
      %v7983 = vmax.f32 %v7570, %v7982
      %v7984 = vrot.slane %v7983, 2
      %v7985 = vmax.f32 %v7983, %v7984
      %v7986 = vrot.slane %v7985, 1
      %v7987 = vmax.f32 %v7985, %v7986
      %v7988 = vrot.slane %v7571, 4
      %v7989 = vmax.f32 %v7571, %v7988
      %v7990 = vrot.slane %v7989, 2
      %v7991 = vmax.f32 %v7989, %v7990
      %v7992 = vrot.slane %v7991, 1
      %v7993 = vmax.f32 %v7991, %v7992
      %v7994 = vrot.slane %v7572, 4
      %v7995 = vmax.f32 %v7572, %v7994
      %v7996 = vrot.slane %v7995, 2
      %v7997 = vmax.f32 %v7995, %v7996
      %v7998 = vrot.slane %v7997, 1
      %v7999 = vmax.f32 %v7997, %v7998
      %v8000 = vrot.slane %v7573, 4
      %v8001 = vmax.f32 %v7573, %v8000
      %v8002 = vrot.slane %v8001, 2
      %v8003 = vmax.f32 %v8001, %v8002
      %v8004 = vrot.slane %v8003, 1
      %v8005 = vmax.f32 %v8003, %v8004
      %v8006 = vrot.slane %v7574, 4
      %v8007 = vmax.f32 %v7574, %v8006
      %v8008 = vrot.slane %v8007, 2
      %v8009 = vmax.f32 %v8007, %v8008
      %v8010 = vrot.slane %v8009, 1
      %v8011 = vmax.f32 %v8009, %v8010
      %v8012 = vrot.slane %v7575, 4
      %v8013 = vmax.f32 %v7575, %v8012
      %v8014 = vrot.slane %v8013, 2
      %v8015 = vmax.f32 %v8013, %v8014
      %v8016 = vrot.slane %v8015, 1
      %v8017 = vmax.f32 %v8015, %v8016
      %v8018 = vrot.slane %v7576, 4
      %v8019 = vmax.f32 %v7576, %v8018
      %v8020 = vrot.slane %v8019, 2
      %v8021 = vmax.f32 %v8019, %v8020
      %v8022 = vrot.slane %v8021, 1
      %v8023 = vmax.f32 %v8021, %v8022
      %v8024 = vrot.slane %v7577, 4
      %v8025 = vmax.f32 %v7577, %v8024
      %v8026 = vrot.slane %v8025, 2
      %v8027 = vmax.f32 %v8025, %v8026
      %v8028 = vrot.slane %v8027, 1
      %v8029 = vmax.f32 %v8027, %v8028
      %v8030 = vrot.slane %v7578, 4
      %v8031 = vmax.f32 %v7578, %v8030
      %v8032 = vrot.slane %v8031, 2
      %v8033 = vmax.f32 %v8031, %v8032
      %v8034 = vrot.slane %v8033, 1
      %v8035 = vmax.f32 %v8033, %v8034
      %v8036 = vrot.slane %v7579, 4
      %v8037 = vmax.f32 %v7579, %v8036
      %v8038 = vrot.slane %v8037, 2
      %v8039 = vmax.f32 %v8037, %v8038
      %v8040 = vrot.slane %v8039, 1
      %v8041 = vmax.f32 %v8039, %v8040
      %v8042 = vrot.slane %v7580, 4
      %v8043 = vmax.f32 %v7580, %v8042
      %v8044 = vrot.slane %v8043, 2
      %v8045 = vmax.f32 %v8043, %v8044
      %v8046 = vrot.slane %v8045, 1
      %v8047 = vmax.f32 %v8045, %v8046
      %v8048 = vrot.slane %v7581, 4
      %v8049 = vmax.f32 %v7581, %v8048
      %v8050 = vrot.slane %v8049, 2
      %v8051 = vmax.f32 %v8049, %v8050
      %v8052 = vrot.slane %v8051, 1
      %v8053 = vmax.f32 %v8051, %v8052
      %v8054 = vrot.slane %v7582, 4
      %v8055 = vmax.f32 %v7582, %v8054
      %v8056 = vrot.slane %v8055, 2
      %v8057 = vmax.f32 %v8055, %v8056
      %v8058 = vrot.slane %v8057, 1
      %v8059 = vmax.f32 %v8057, %v8058
      %v8060 = vrot.slane %v7583, 4
      %v8061 = vmax.f32 %v7583, %v8060
      %v8062 = vrot.slane %v8061, 2
      %v8063 = vmax.f32 %v8061, %v8062
      %v8064 = vrot.slane %v8063, 1
      %v8065 = vmax.f32 %v8063, %v8064
      %v8066 = vrot.slane %v7584, 4
      %v8067 = vmax.f32 %v7584, %v8066
      %v8068 = vrot.slane %v8067, 2
      %v8069 = vmax.f32 %v8067, %v8068
      %v8070 = vrot.slane %v8069, 1
      %v8071 = vmax.f32 %v8069, %v8070
      %v8072 = vrot.slane %v7585, 4
      %v8073 = vmax.f32 %v7585, %v8072
      %v8074 = vrot.slane %v8073, 2
      %v8075 = vmax.f32 %v8073, %v8074
      %v8076 = vrot.slane %v8075, 1
      %v8077 = vmax.f32 %v8075, %v8076
      %v8078 = vrot.slane %v7586, 4
      %v8079 = vmax.f32 %v7586, %v8078
      %v8080 = vrot.slane %v8079, 2
      %v8081 = vmax.f32 %v8079, %v8080
      %v8082 = vrot.slane %v8081, 1
      %v8083 = vmax.f32 %v8081, %v8082
      %v8084 = vrot.slane %v7587, 4
      %v8085 = vmax.f32 %v7587, %v8084
      %v8086 = vrot.slane %v8085, 2
      %v8087 = vmax.f32 %v8085, %v8086
      %v8088 = vrot.slane %v8087, 1
      %v8089 = vmax.f32 %v8087, %v8088
      %v8090 = vrot.slane %v7588, 4
      %v8091 = vmax.f32 %v7588, %v8090
      %v8092 = vrot.slane %v8091, 2
      %v8093 = vmax.f32 %v8091, %v8092
      %v8094 = vrot.slane %v8093, 1
      %v8095 = vmax.f32 %v8093, %v8094
      %v8096 = vrot.slane %v7589, 4
      %v8097 = vmax.f32 %v7589, %v8096
      %v8098 = vrot.slane %v8097, 2
      %v8099 = vmax.f32 %v8097, %v8098
      %v8100 = vrot.slane %v8099, 1
      %v8101 = vmax.f32 %v8099, %v8100
      %v8102 = vrot.slane %v7590, 4
      %v8103 = vmax.f32 %v7590, %v8102
      %v8104 = vrot.slane %v8103, 2
      %v8105 = vmax.f32 %v8103, %v8104
      %v8106 = vrot.slane %v8105, 1
      %v8107 = vmax.f32 %v8105, %v8106
      %v8108 = vrot.slane %v7591, 4
      %v8109 = vmax.f32 %v7591, %v8108
      %v8110 = vrot.slane %v8109, 2
      %v8111 = vmax.f32 %v8109, %v8110
      %v8112 = vrot.slane %v8111, 1
      %v8113 = vmax.f32 %v8111, %v8112
      %v8114 = vrot.slane %v7592, 4
      %v8115 = vmax.f32 %v7592, %v8114
      %v8116 = vrot.slane %v8115, 2
      %v8117 = vmax.f32 %v8115, %v8116
      %v8118 = vrot.slane %v8117, 1
      %v8119 = vmax.f32 %v8117, %v8118
      %v8120 = vrot.slane %v7593, 4
      %v8121 = vmax.f32 %v7593, %v8120
      %v8122 = vrot.slane %v8121, 2
      %v8123 = vmax.f32 %v8121, %v8122
      %v8124 = vrot.slane %v8123, 1
      %v8125 = vmax.f32 %v8123, %v8124
      %v8126 = vrot.slane %v7594, 4
      %v8127 = vmax.f32 %v7594, %v8126
      %v8128 = vrot.slane %v8127, 2
      %v8129 = vmax.f32 %v8127, %v8128
      %v8130 = vrot.slane %v8129, 1
      %v8131 = vmax.f32 %v8129, %v8130
      %v8132 = vrot.slane %v7595, 4
      %v8133 = vmax.f32 %v7595, %v8132
      %v8134 = vrot.slane %v8133, 2
      %v8135 = vmax.f32 %v8133, %v8134
      %v8136 = vrot.slane %v8135, 1
      %v8137 = vmax.f32 %v8135, %v8136
      %v8138 = vrot.slane %v7596, 4
      %v8139 = vmax.f32 %v7596, %v8138
      %v8140 = vrot.slane %v8139, 2
      %v8141 = vmax.f32 %v8139, %v8140
      %v8142 = vrot.slane %v8141, 1
      %v8143 = vmax.f32 %v8141, %v8142
      %v8144 = vrot.slane %v7597, 4
      %v8145 = vmax.f32 %v7597, %v8144
      %v8146 = vrot.slane %v8145, 2
      %v8147 = vmax.f32 %v8145, %v8146
      %v8148 = vrot.slane %v8147, 1
      %v8149 = vmax.f32 %v8147, %v8148
      %v8150 = vrot.slane %v7598, 4
      %v8151 = vmax.f32 %v7598, %v8150
      %v8152 = vrot.slane %v8151, 2
      %v8153 = vmax.f32 %v8151, %v8152
      %v8154 = vrot.slane %v8153, 1
      %v8155 = vmax.f32 %v8153, %v8154
      %v8156 = vrot.slane %v7599, 4
      %v8157 = vmax.f32 %v7599, %v8156
      %v8158 = vrot.slane %v8157, 2
      %v8159 = vmax.f32 %v8157, %v8158
      %v8160 = vrot.slane %v8159, 1
      %v8161 = vmax.f32 %v8159, %v8160
      %v8162 = vrot.slane %v7600, 4
      %v8163 = vmax.f32 %v7600, %v8162
      %v8164 = vrot.slane %v8163, 2
      %v8165 = vmax.f32 %v8163, %v8164
      %v8166 = vrot.slane %v8165, 1
      %v8167 = vmax.f32 %v8165, %v8166
      %v8168 = vrot.slane %v7601, 4
      %v8169 = vmax.f32 %v7601, %v8168
      %v8170 = vrot.slane %v8169, 2
      %v8171 = vmax.f32 %v8169, %v8170
      %v8172 = vrot.slane %v8171, 1
      %v8173 = vmax.f32 %v8171, %v8172
      %v8174 = vrot.slane %v7602, 4
      %v8175 = vmax.f32 %v7602, %v8174
      %v8176 = vrot.slane %v8175, 2
      %v8177 = vmax.f32 %v8175, %v8176
      %v8178 = vrot.slane %v8177, 1
      %v8179 = vmax.f32 %v8177, %v8178
      %v8180 = vrot.slane %v7603, 4
      %v8181 = vmax.f32 %v7603, %v8180
      %v8182 = vrot.slane %v8181, 2
      %v8183 = vmax.f32 %v8181, %v8182
      %v8184 = vrot.slane %v8183, 1
      %v8185 = vmax.f32 %v8183, %v8184
      %v8186 = vrot.slane %v7604, 4
      %v8187 = vmax.f32 %v7604, %v8186
      %v8188 = vrot.slane %v8187, 2
      %v8189 = vmax.f32 %v8187, %v8188
      %v8190 = vrot.slane %v8189, 1
      %v8191 = vmax.f32 %v8189, %v8190
      %v8192 = vrot.slane %v7605, 4
      %v8193 = vmax.f32 %v7605, %v8192
      %v8194 = vrot.slane %v8193, 2
      %v8195 = vmax.f32 %v8193, %v8194
      %v8196 = vrot.slane %v8195, 1
      %v8197 = vmax.f32 %v8195, %v8196
      %v8198 = vrot.slane %v7606, 4
      %v8199 = vmax.f32 %v7606, %v8198
      %v8200 = vrot.slane %v8199, 2
      %v8201 = vmax.f32 %v8199, %v8200
      %v8202 = vrot.slane %v8201, 1
      %v8203 = vmax.f32 %v8201, %v8202
      %v8204 = vrot.slane %v7607, 4
      %v8205 = vmax.f32 %v7607, %v8204
      %v8206 = vrot.slane %v8205, 2
      %v8207 = vmax.f32 %v8205, %v8206
      %v8208 = vrot.slane %v8207, 1
      %v8209 = vmax.f32 %v8207, %v8208
      %v8210 = vrot.slane %v7608, 4
      %v8211 = vmax.f32 %v7608, %v8210
      %v8212 = vrot.slane %v8211, 2
      %v8213 = vmax.f32 %v8211, %v8212
      %v8214 = vrot.slane %v8213, 1
      %v8215 = vmax.f32 %v8213, %v8214
      %v8216 = vrot.slane %v7609, 4
      %v8217 = vmax.f32 %v7609, %v8216
      %v8218 = vrot.slane %v8217, 2
      %v8219 = vmax.f32 %v8217, %v8218
      %v8220 = vrot.slane %v8219, 1
      %v8221 = vmax.f32 %v8219, %v8220
      %v8222 = vrot.slane %v7610, 4
      %v8223 = vmax.f32 %v7610, %v8222
      %v8224 = vrot.slane %v8223, 2
      %v8225 = vmax.f32 %v8223, %v8224
      %v8226 = vrot.slane %v8225, 1
      %v8227 = vmax.f32 %v8225, %v8226
      %v8228 = vrot.slane %v7611, 4
      %v8229 = vmax.f32 %v7611, %v8228
      %v8230 = vrot.slane %v8229, 2
      %v8231 = vmax.f32 %v8229, %v8230
      %v8232 = vrot.slane %v8231, 1
      %v8233 = vmax.f32 %v8231, %v8232
      %v8234 = vrot.slane %v7612, 4
      %v8235 = vmax.f32 %v7612, %v8234
      %v8236 = vrot.slane %v8235, 2
      %v8237 = vmax.f32 %v8235, %v8236
      %v8238 = vrot.slane %v8237, 1
      %v8239 = vmax.f32 %v8237, %v8238
      %v8240 = vrot.slane %v7613, 4
      %v8241 = vmax.f32 %v7613, %v8240
      %v8242 = vrot.slane %v8241, 2
      %v8243 = vmax.f32 %v8241, %v8242
      %v8244 = vrot.slane %v8243, 1
      %v8245 = vmax.f32 %v8243, %v8244
      %v8246 = vrot.slane %v7614, 4
      %v8247 = vmax.f32 %v7614, %v8246
      %v8248 = vrot.slane %v8247, 2
      %v8249 = vmax.f32 %v8247, %v8248
      %v8250 = vrot.slane %v8249, 1
      %v8251 = vmax.f32 %v8249, %v8250
      %v8252 = vrot.slane %v7615, 4
      %v8253 = vmax.f32 %v7615, %v8252
      %v8254 = vrot.slane %v8253, 2
      %v8255 = vmax.f32 %v8253, %v8254
      %v8256 = vrot.slane %v8255, 1
      %v8257 = vmax.f32 %v8255, %v8256
      %v8258 = vrot.slane %v7616, 4
      %v8259 = vmax.f32 %v7616, %v8258
      %v8260 = vrot.slane %v8259, 2
      %v8261 = vmax.f32 %v8259, %v8260
      %v8262 = vrot.slane %v8261, 1
      %v8263 = vmax.f32 %v8261, %v8262
      %v8264 = vrot.slane %v7617, 4
      %v8265 = vmax.f32 %v7617, %v8264
      %v8266 = vrot.slane %v8265, 2
      %v8267 = vmax.f32 %v8265, %v8266
      %v8268 = vrot.slane %v8267, 1
      %v8269 = vmax.f32 %v8267, %v8268
      %v8270 = vrot.slane %v7618, 4
      %v8271 = vmax.f32 %v7618, %v8270
      %v8272 = vrot.slane %v8271, 2
      %v8273 = vmax.f32 %v8271, %v8272
      %v8274 = vrot.slane %v8273, 1
      %v8275 = vmax.f32 %v8273, %v8274
      %v8276 = vrot.slane %v7619, 4
      %v8277 = vmax.f32 %v7619, %v8276
      %v8278 = vrot.slane %v8277, 2
      %v8279 = vmax.f32 %v8277, %v8278
      %v8280 = vrot.slane %v8279, 1
      %v8281 = vmax.f32 %v8279, %v8280
      %v8282 = vrot.slane %v7620, 4
      %v8283 = vmax.f32 %v7620, %v8282
      %v8284 = vrot.slane %v8283, 2
      %v8285 = vmax.f32 %v8283, %v8284
      %v8286 = vrot.slane %v8285, 1
      %v8287 = vmax.f32 %v8285, %v8286
      %v8288 = vrot.slane %v7621, 4
      %v8289 = vmax.f32 %v7621, %v8288
      %v8290 = vrot.slane %v8289, 2
      %v8291 = vmax.f32 %v8289, %v8290
      %v8292 = vrot.slane %v8291, 1
      %v8293 = vmax.f32 %v8291, %v8292
      %v8294 = vrot.slane %v7622, 4
      %v8295 = vmax.f32 %v7622, %v8294
      %v8296 = vrot.slane %v8295, 2
      %v8297 = vmax.f32 %v8295, %v8296
      %v8298 = vrot.slane %v8297, 1
      %v8299 = vmax.f32 %v8297, %v8298
      %v8300 = vrot.slane %v7623, 4
      %v8301 = vmax.f32 %v7623, %v8300
      %v8302 = vrot.slane %v8301, 2
      %v8303 = vmax.f32 %v8301, %v8302
      %v8304 = vrot.slane %v8303, 1
      %v8305 = vmax.f32 %v8303, %v8304
      %v8306 = vrot.slane %v7624, 4
      %v8307 = vmax.f32 %v7624, %v8306
      %v8308 = vrot.slane %v8307, 2
      %v8309 = vmax.f32 %v8307, %v8308
      %v8310 = vrot.slane %v8309, 1
      %v8311 = vmax.f32 %v8309, %v8310
      %v8312 = vrot.slane %v7625, 4
      %v8313 = vmax.f32 %v7625, %v8312
      %v8314 = vrot.slane %v8313, 2
      %v8315 = vmax.f32 %v8313, %v8314
      %v8316 = vrot.slane %v8315, 1
      %v8317 = vmax.f32 %v8315, %v8316
      %v8318 = vrot.slane %v7626, 4
      %v8319 = vmax.f32 %v7626, %v8318
      %v8320 = vrot.slane %v8319, 2
      %v8321 = vmax.f32 %v8319, %v8320
      %v8322 = vrot.slane %v8321, 1
      %v8323 = vmax.f32 %v8321, %v8322
      %v8324 = vrot.slane %v7627, 4
      %v8325 = vmax.f32 %v7627, %v8324
      %v8326 = vrot.slane %v8325, 2
      %v8327 = vmax.f32 %v8325, %v8326
      %v8328 = vrot.slane %v8327, 1
      %v8329 = vmax.f32 %v8327, %v8328
      %v8330 = vrot.slane %v7628, 4
      %v8331 = vmax.f32 %v7628, %v8330
      %v8332 = vrot.slane %v8331, 2
      %v8333 = vmax.f32 %v8331, %v8332
      %v8334 = vrot.slane %v8333, 1
      %v8335 = vmax.f32 %v8333, %v8334
      %v8336 = vrot.slane %v7629, 4
      %v8337 = vmax.f32 %v7629, %v8336
      %v8338 = vrot.slane %v8337, 2
      %v8339 = vmax.f32 %v8337, %v8338
      %v8340 = vrot.slane %v8339, 1
      %v8341 = vmax.f32 %v8339, %v8340
      %v8342 = vrot.slane %v7630, 4
      %v8343 = vmax.f32 %v7630, %v8342
      %v8344 = vrot.slane %v8343, 2
      %v8345 = vmax.f32 %v8343, %v8344
      %v8346 = vrot.slane %v8345, 1
      %v8347 = vmax.f32 %v8345, %v8346
      %v8348 = vrot.slane %v7631, 4
      %v8349 = vmax.f32 %v7631, %v8348
      %v8350 = vrot.slane %v8349, 2
      %v8351 = vmax.f32 %v8349, %v8350
      %v8352 = vrot.slane %v8351, 1
      %v8353 = vmax.f32 %v8351, %v8352
      %v8354 = vrot.slane %v7632, 4
      %v8355 = vmax.f32 %v7632, %v8354
      %v8356 = vrot.slane %v8355, 2
      %v8357 = vmax.f32 %v8355, %v8356
      %v8358 = vrot.slane %v8357, 1
      %v8359 = vmax.f32 %v8357, %v8358
      %v8360 = vrot.slane %v7633, 4
      %v8361 = vmax.f32 %v7633, %v8360
      %v8362 = vrot.slane %v8361, 2
      %v8363 = vmax.f32 %v8361, %v8362
      %v8364 = vrot.slane %v8363, 1
      %v8365 = vmax.f32 %v8363, %v8364
      %v8366 = vrot.slane %v7634, 4
      %v8367 = vmax.f32 %v7634, %v8366
      %v8368 = vrot.slane %v8367, 2
      %v8369 = vmax.f32 %v8367, %v8368
      %v8370 = vrot.slane %v8369, 1
      %v8371 = vmax.f32 %v8369, %v8370
      %v8372 = vrot.slane %v7635, 4
      %v8373 = vmax.f32 %v7635, %v8372
      %v8374 = vrot.slane %v8373, 2
      %v8375 = vmax.f32 %v8373, %v8374
      %v8376 = vrot.slane %v8375, 1
      %v8377 = vmax.f32 %v8375, %v8376
      %v8378 = vrot.slane %v7636, 4
      %v8379 = vmax.f32 %v7636, %v8378
      %v8380 = vrot.slane %v8379, 2
      %v8381 = vmax.f32 %v8379, %v8380
      %v8382 = vrot.slane %v8381, 1
      %v8383 = vmax.f32 %v8381, %v8382
      %v8384 = vrot.slane %v7637, 4
      %v8385 = vmax.f32 %v7637, %v8384
      %v8386 = vrot.slane %v8385, 2
      %v8387 = vmax.f32 %v8385, %v8386
      %v8388 = vrot.slane %v8387, 1
      %v8389 = vmax.f32 %v8387, %v8388
      %v8390 = vrot.slane %v7638, 4
      %v8391 = vmax.f32 %v7638, %v8390
      %v8392 = vrot.slane %v8391, 2
      %v8393 = vmax.f32 %v8391, %v8392
      %v8394 = vrot.slane %v8393, 1
      %v8395 = vmax.f32 %v8393, %v8394
      %v8396 = vrot.slane %v7639, 4
      %v8397 = vmax.f32 %v7639, %v8396
      %v8398 = vrot.slane %v8397, 2
      %v8399 = vmax.f32 %v8397, %v8398
      %v8400 = vrot.slane %v8399, 1
      %v8401 = vmax.f32 %v8399, %v8400
      %v8402 = vrot.slane %v7640, 4
      %v8403 = vmax.f32 %v7640, %v8402
      %v8404 = vrot.slane %v8403, 2
      %v8405 = vmax.f32 %v8403, %v8404
      %v8406 = vrot.slane %v8405, 1
      %v8407 = vmax.f32 %v8405, %v8406
      %v8408 = vrot.slane %v7641, 4
      %v8409 = vmax.f32 %v7641, %v8408
      %v8410 = vrot.slane %v8409, 2
      %v8411 = vmax.f32 %v8409, %v8410
      %v8412 = vrot.slane %v8411, 1
      %v8413 = vmax.f32 %v8411, %v8412
      %v8414 = vrot.slane %v7642, 4
      %v8415 = vmax.f32 %v7642, %v8414
      %v8416 = vrot.slane %v8415, 2
      %v8417 = vmax.f32 %v8415, %v8416
      %v8418 = vrot.slane %v8417, 1
      %v8419 = vmax.f32 %v8417, %v8418
      %v8420 = vrot.slane %v7643, 4
      %v8421 = vmax.f32 %v7643, %v8420
      %v8422 = vrot.slane %v8421, 2
      %v8423 = vmax.f32 %v8421, %v8422
      %v8424 = vrot.slane %v8423, 1
      %v8425 = vmax.f32 %v8423, %v8424
      %v8426 = vrot.slane %v7644, 4
      %v8427 = vmax.f32 %v7644, %v8426
      %v8428 = vrot.slane %v8427, 2
      %v8429 = vmax.f32 %v8427, %v8428
      %v8430 = vrot.slane %v8429, 1
      %v8431 = vmax.f32 %v8429, %v8430
      %v8432 = vrot.slane %v7645, 4
      %v8433 = vmax.f32 %v7645, %v8432
      %v8434 = vrot.slane %v8433, 2
      %v8435 = vmax.f32 %v8433, %v8434
      %v8436 = vrot.slane %v8435, 1
      %v8437 = vmax.f32 %v8435, %v8436
      %v8438 = vrot.slane %v7646, 4
      %v8439 = vmax.f32 %v7646, %v8438
      %v8440 = vrot.slane %v8439, 2
      %v8441 = vmax.f32 %v8439, %v8440
      %v8442 = vrot.slane %v8441, 1
      %v8443 = vmax.f32 %v8441, %v8442
      %v8444 = vrot.slane %v7647, 4
      %v8445 = vmax.f32 %v7647, %v8444
      %v8446 = vrot.slane %v8445, 2
      %v8447 = vmax.f32 %v8445, %v8446
      %v8448 = vrot.slane %v8447, 1
      %v8449 = vmax.f32 %v8447, %v8448
      %v8450 = vrot.slane %v7648, 4
      %v8451 = vmax.f32 %v7648, %v8450
      %v8452 = vrot.slane %v8451, 2
      %v8453 = vmax.f32 %v8451, %v8452
      %v8454 = vrot.slane %v8453, 1
      %v8455 = vmax.f32 %v8453, %v8454
      %v8456 = vrot.slane %v7649, 4
      %v8457 = vmax.f32 %v7649, %v8456
      %v8458 = vrot.slane %v8457, 2
      %v8459 = vmax.f32 %v8457, %v8458
      %v8460 = vrot.slane %v8459, 1
      %v8461 = vmax.f32 %v8459, %v8460
      %v8462 = vrot.slane %v7650, 4
      %v8463 = vmax.f32 %v7650, %v8462
      %v8464 = vrot.slane %v8463, 2
      %v8465 = vmax.f32 %v8463, %v8464
      %v8466 = vrot.slane %v8465, 1
      %v8467 = vmax.f32 %v8465, %v8466
      %v8468 = vrot.slane %v7651, 4
      %v8469 = vmax.f32 %v7651, %v8468
      %v8470 = vrot.slane %v8469, 2
      %v8471 = vmax.f32 %v8469, %v8470
      %v8472 = vrot.slane %v8471, 1
      %v8473 = vmax.f32 %v8471, %v8472
      %v8474 = vrot.slane %v7652, 4
      %v8475 = vmax.f32 %v7652, %v8474
      %v8476 = vrot.slane %v8475, 2
      %v8477 = vmax.f32 %v8475, %v8476
      %v8478 = vrot.slane %v8477, 1
      %v8479 = vmax.f32 %v8477, %v8478
      %v8480 = vrot.slane %v7653, 4
      %v8481 = vmax.f32 %v7653, %v8480
      %v8482 = vrot.slane %v8481, 2
      %v8483 = vmax.f32 %v8481, %v8482
      %v8484 = vrot.slane %v8483, 1
      %v8485 = vmax.f32 %v8483, %v8484
      %v8486 = vrot.slane %v7654, 4
      %v8487 = vmax.f32 %v7654, %v8486
      %v8488 = vrot.slane %v8487, 2
      %v8489 = vmax.f32 %v8487, %v8488
      %v8490 = vrot.slane %v8489, 1
      %v8491 = vmax.f32 %v8489, %v8490
      %v8492 = vrot.slane %v7655, 4
      %v8493 = vmax.f32 %v7655, %v8492
      %v8494 = vrot.slane %v8493, 2
      %v8495 = vmax.f32 %v8493, %v8494
      %v8496 = vrot.slane %v8495, 1
      %v8497 = vmax.f32 %v8495, %v8496
      %v8498 = vrot.slane %v7656, 4
      %v8499 = vmax.f32 %v7656, %v8498
      %v8500 = vrot.slane %v8499, 2
      %v8501 = vmax.f32 %v8499, %v8500
      %v8502 = vrot.slane %v8501, 1
      %v8503 = vmax.f32 %v8501, %v8502
      %v8504 = vrot.slane %v7657, 4
      %v8505 = vmax.f32 %v7657, %v8504
      %v8506 = vrot.slane %v8505, 2
      %v8507 = vmax.f32 %v8505, %v8506
      %v8508 = vrot.slane %v8507, 1
      %v8509 = vmax.f32 %v8507, %v8508
      %v8510 = vrot.slane %v7658, 4
      %v8511 = vmax.f32 %v7658, %v8510
      %v8512 = vrot.slane %v8511, 2
      %v8513 = vmax.f32 %v8511, %v8512
      %v8514 = vrot.slane %v8513, 1
      %v8515 = vmax.f32 %v8513, %v8514
      %v8516 = vrot.slane %v7659, 4
      %v8517 = vmax.f32 %v7659, %v8516
      %v8518 = vrot.slane %v8517, 2
      %v8519 = vmax.f32 %v8517, %v8518
      %v8520 = vrot.slane %v8519, 1
      %v8521 = vmax.f32 %v8519, %v8520
      %v8522 = vrot.slane %v7660, 4
      %v8523 = vmax.f32 %v7660, %v8522
      %v8524 = vrot.slane %v8523, 2
      %v8525 = vmax.f32 %v8523, %v8524
      %v8526 = vrot.slane %v8525, 1
      %v8527 = vmax.f32 %v8525, %v8526
      %v8528 = vrot.slane %v7661, 4
      %v8529 = vmax.f32 %v7661, %v8528
      %v8530 = vrot.slane %v8529, 2
      %v8531 = vmax.f32 %v8529, %v8530
      %v8532 = vrot.slane %v8531, 1
      %v8533 = vmax.f32 %v8531, %v8532
      %v8534 = vrot.slane %v7662, 4
      %v8535 = vmax.f32 %v7662, %v8534
      %v8536 = vrot.slane %v8535, 2
      %v8537 = vmax.f32 %v8535, %v8536
      %v8538 = vrot.slane %v8537, 1
      %v8539 = vmax.f32 %v8537, %v8538
      %v8540 = vrot.slane %v7663, 4
      %v8541 = vmax.f32 %v7663, %v8540
      %v8542 = vrot.slane %v8541, 2
      %v8543 = vmax.f32 %v8541, %v8542
      %v8544 = vrot.slane %v8543, 1
      %v8545 = vmax.f32 %v8543, %v8544
      %v8546 = vrot.slane %v7664, 4
      %v8547 = vmax.f32 %v7664, %v8546
      %v8548 = vrot.slane %v8547, 2
      %v8549 = vmax.f32 %v8547, %v8548
      %v8550 = vrot.slane %v8549, 1
      %v8551 = vmax.f32 %v8549, %v8550
      %v8552 = vrot.slane %v7665, 4
      %v8553 = vmax.f32 %v7665, %v8552
      %v8554 = vrot.slane %v8553, 2
      %v8555 = vmax.f32 %v8553, %v8554
      %v8556 = vrot.slane %v8555, 1
      %v8557 = vmax.f32 %v8555, %v8556
      %v8558 = vrot.slane %v7666, 4
      %v8559 = vmax.f32 %v7666, %v8558
      %v8560 = vrot.slane %v8559, 2
      %v8561 = vmax.f32 %v8559, %v8560
      %v8562 = vrot.slane %v8561, 1
      %v8563 = vmax.f32 %v8561, %v8562
      %v8564 = vrot.slane %v7667, 4
      %v8565 = vmax.f32 %v7667, %v8564
      %v8566 = vrot.slane %v8565, 2
      %v8567 = vmax.f32 %v8565, %v8566
      %v8568 = vrot.slane %v8567, 1
      %v8569 = vmax.f32 %v8567, %v8568
      %v8570 = vrot.slane %v7668, 4
      %v8571 = vmax.f32 %v7668, %v8570
      %v8572 = vrot.slane %v8571, 2
      %v8573 = vmax.f32 %v8571, %v8572
      %v8574 = vrot.slane %v8573, 1
      %v8575 = vmax.f32 %v8573, %v8574
      %v8576 = vrot.slane %v7669, 4
      %v8577 = vmax.f32 %v7669, %v8576
      %v8578 = vrot.slane %v8577, 2
      %v8579 = vmax.f32 %v8577, %v8578
      %v8580 = vrot.slane %v8579, 1
      %v8581 = vmax.f32 %v8579, %v8580
      %v8582 = vrot.slane %v7670, 4
      %v8583 = vmax.f32 %v7670, %v8582
      %v8584 = vrot.slane %v8583, 2
      %v8585 = vmax.f32 %v8583, %v8584
      %v8586 = vrot.slane %v8585, 1
      %v8587 = vmax.f32 %v8585, %v8586
      %v8588 = vrot.slane %v7671, 4
      %v8589 = vmax.f32 %v7671, %v8588
      %v8590 = vrot.slane %v8589, 2
      %v8591 = vmax.f32 %v8589, %v8590
      %v8592 = vrot.slane %v8591, 1
      %v8593 = vmax.f32 %v8591, %v8592
      %v8594 = vrot.slane %v7672, 4
      %v8595 = vmax.f32 %v7672, %v8594
      %v8596 = vrot.slane %v8595, 2
      %v8597 = vmax.f32 %v8595, %v8596
      %v8598 = vrot.slane %v8597, 1
      %v8599 = vmax.f32 %v8597, %v8598
      %v8600 = vrot.slane %v7673, 4
      %v8601 = vmax.f32 %v7673, %v8600
      %v8602 = vrot.slane %v8601, 2
      %v8603 = vmax.f32 %v8601, %v8602
      %v8604 = vrot.slane %v8603, 1
      %v8605 = vmax.f32 %v8603, %v8604
      %v8606 = vrot.slane %v7674, 4
      %v8607 = vmax.f32 %v7674, %v8606
      %v8608 = vrot.slane %v8607, 2
      %v8609 = vmax.f32 %v8607, %v8608
      %v8610 = vrot.slane %v8609, 1
      %v8611 = vmax.f32 %v8609, %v8610
      %v8612 = vrot.slane %v7675, 4
      %v8613 = vmax.f32 %v7675, %v8612
      %v8614 = vrot.slane %v8613, 2
      %v8615 = vmax.f32 %v8613, %v8614
      %v8616 = vrot.slane %v8615, 1
      %v8617 = vmax.f32 %v8615, %v8616
      %v8618 = vrot.slane %v7676, 4
      %v8619 = vmax.f32 %v7676, %v8618
      %v8620 = vrot.slane %v8619, 2
      %v8621 = vmax.f32 %v8619, %v8620
      %v8622 = vrot.slane %v8621, 1
      %v8623 = vmax.f32 %v8621, %v8622
      %v8624 = vrot.slane %v7677, 4
      %v8625 = vmax.f32 %v7677, %v8624
      %v8626 = vrot.slane %v8625, 2
      %v8627 = vmax.f32 %v8625, %v8626
      %v8628 = vrot.slane %v8627, 1
      %v8629 = vmax.f32 %v8627, %v8628
      %v8630 = vrot.slane %v7678, 4
      %v8631 = vmax.f32 %v7678, %v8630
      %v8632 = vrot.slane %v8631, 2
      %v8633 = vmax.f32 %v8631, %v8632
      %v8634 = vrot.slane %v8633, 1
      %v8635 = vmax.f32 %v8633, %v8634
      %v8636 = vrot.slane %v7679, 4
      %v8637 = vmax.f32 %v7679, %v8636
      %v8638 = vrot.slane %v8637, 2
      %v8639 = vmax.f32 %v8637, %v8638
      %v8640 = vrot.slane %v8639, 1
      %v8641 = vmax.f32 %v8639, %v8640
      %v8642 = vrot.slane %v7680, 4
      %v8643 = vmax.f32 %v7680, %v8642
      %v8644 = vrot.slane %v8643, 2
      %v8645 = vmax.f32 %v8643, %v8644
      %v8646 = vrot.slane %v8645, 1
      %v8647 = vmax.f32 %v8645, %v8646
      %v8648 = vrot.slane %v7681, 4
      %v8649 = vmax.f32 %v7681, %v8648
      %v8650 = vrot.slane %v8649, 2
      %v8651 = vmax.f32 %v8649, %v8650
      %v8652 = vrot.slane %v8651, 1
      %v8653 = vmax.f32 %v8651, %v8652
      %v8654 = vrot.slane %v7682, 4
      %v8655 = vmax.f32 %v7682, %v8654
      %v8656 = vrot.slane %v8655, 2
      %v8657 = vmax.f32 %v8655, %v8656
      %v8658 = vrot.slane %v8657, 1
      %v8659 = vmax.f32 %v8657, %v8658
      %v8660 = vrot.slane %v7683, 4
      %v8661 = vmax.f32 %v7683, %v8660
      %v8662 = vrot.slane %v8661, 2
      %v8663 = vmax.f32 %v8661, %v8662
      %v8664 = vrot.slane %v8663, 1
      %v8665 = vmax.f32 %v8663, %v8664
      %v8666 = vrot.slane %v7684, 4
      %v8667 = vmax.f32 %v7684, %v8666
      %v8668 = vrot.slane %v8667, 2
      %v8669 = vmax.f32 %v8667, %v8668
      %v8670 = vrot.slane %v8669, 1
      %v8671 = vmax.f32 %v8669, %v8670
      %v8672 = vrot.slane %v7685, 4
      %v8673 = vmax.f32 %v7685, %v8672
      %v8674 = vrot.slane %v8673, 2
      %v8675 = vmax.f32 %v8673, %v8674
      %v8676 = vrot.slane %v8675, 1
      %v8677 = vmax.f32 %v8675, %v8676
      %v8678 = vrot.slane %v7686, 4
      %v8679 = vmax.f32 %v7686, %v8678
      %v8680 = vrot.slane %v8679, 2
      %v8681 = vmax.f32 %v8679, %v8680
      %v8682 = vrot.slane %v8681, 1
      %v8683 = vmax.f32 %v8681, %v8682
      %v8684 = vrot.slane %v7687, 4
      %v8685 = vmax.f32 %v7687, %v8684
      %v8686 = vrot.slane %v8685, 2
      %v8687 = vmax.f32 %v8685, %v8686
      %v8688 = vrot.slane %v8687, 1
      %v8689 = vmax.f32 %v8687, %v8688
      %v8690 = vrot.slane %v7688, 4
      %v8691 = vmax.f32 %v7688, %v8690
      %v8692 = vrot.slane %v8691, 2
      %v8693 = vmax.f32 %v8691, %v8692
      %v8694 = vrot.slane %v8693, 1
      %v8695 = vmax.f32 %v8693, %v8694
      %v8696 = vrot.slane %v7689, 4
      %v8697 = vmax.f32 %v7689, %v8696
      %v8698 = vrot.slane %v8697, 2
      %v8699 = vmax.f32 %v8697, %v8698
      %v8700 = vrot.slane %v8699, 1
      %v8701 = vmax.f32 %v8699, %v8700
      %v8702 = vrot.slane %v7690, 4
      %v8703 = vmax.f32 %v7690, %v8702
      %v8704 = vrot.slane %v8703, 2
      %v8705 = vmax.f32 %v8703, %v8704
      %v8706 = vrot.slane %v8705, 1
      %v8707 = vmax.f32 %v8705, %v8706
      %v8708 = vrot.slane %v7691, 4
      %v8709 = vmax.f32 %v7691, %v8708
      %v8710 = vrot.slane %v8709, 2
      %v8711 = vmax.f32 %v8709, %v8710
      %v8712 = vrot.slane %v8711, 1
      %v8713 = vmax.f32 %v8711, %v8712
      %v8714 = vrot.slane %v7692, 4
      %v8715 = vmax.f32 %v7692, %v8714
      %v8716 = vrot.slane %v8715, 2
      %v8717 = vmax.f32 %v8715, %v8716
      %v8718 = vrot.slane %v8717, 1
      %v8719 = vmax.f32 %v8717, %v8718
      %v8720 = vrot.slane %v7693, 4
      %v8721 = vmax.f32 %v7693, %v8720
      %v8722 = vrot.slane %v8721, 2
      %v8723 = vmax.f32 %v8721, %v8722
      %v8724 = vrot.slane %v8723, 1
      %v8725 = vmax.f32 %v8723, %v8724
      %v8726 = vrot.slane %v7694, 4
      %v8727 = vmax.f32 %v7694, %v8726
      %v8728 = vrot.slane %v8727, 2
      %v8729 = vmax.f32 %v8727, %v8728
      %v8730 = vrot.slane %v8729, 1
      %v8731 = vmax.f32 %v8729, %v8730
      %v8732 = vrot.slane %v7695, 4
      %v8733 = vmax.f32 %v7695, %v8732
      %v8734 = vrot.slane %v8733, 2
      %v8735 = vmax.f32 %v8733, %v8734
      %v8736 = vrot.slane %v8735, 1
      %v8737 = vmax.f32 %v8735, %v8736
      %v8738 = vrot.slane %v7696, 4
      %v8739 = vmax.f32 %v7696, %v8738
      %v8740 = vrot.slane %v8739, 2
      %v8741 = vmax.f32 %v8739, %v8740
      %v8742 = vrot.slane %v8741, 1
      %v8743 = vmax.f32 %v8741, %v8742
      %v8744 = vrot.slane %v7697, 4
      %v8745 = vmax.f32 %v7697, %v8744
      %v8746 = vrot.slane %v8745, 2
      %v8747 = vmax.f32 %v8745, %v8746
      %v8748 = vrot.slane %v8747, 1
      %v8749 = vmax.f32 %v8747, %v8748
      %v8750 = vrot.slane %v7698, 4
      %v8751 = vmax.f32 %v7698, %v8750
      %v8752 = vrot.slane %v8751, 2
      %v8753 = vmax.f32 %v8751, %v8752
      %v8754 = vrot.slane %v8753, 1
      %v8755 = vmax.f32 %v8753, %v8754
      %v8756 = vrot.slane %v7699, 4
      %v8757 = vmax.f32 %v7699, %v8756
      %v8758 = vrot.slane %v8757, 2
      %v8759 = vmax.f32 %v8757, %v8758
      %v8760 = vrot.slane %v8759, 1
      %v8761 = vmax.f32 %v8759, %v8760
      %v8762 = vrot.slane %v7700, 4
      %v8763 = vmax.f32 %v7700, %v8762
      %v8764 = vrot.slane %v8763, 2
      %v8765 = vmax.f32 %v8763, %v8764
      %v8766 = vrot.slane %v8765, 1
      %v8767 = vmax.f32 %v8765, %v8766
      %v8768 = vrot.slane %v7701, 4
      %v8769 = vmax.f32 %v7701, %v8768
      %v8770 = vrot.slane %v8769, 2
      %v8771 = vmax.f32 %v8769, %v8770
      %v8772 = vrot.slane %v8771, 1
      %v8773 = vmax.f32 %v8771, %v8772
      %v8774 = vrot.slane %v7702, 4
      %v8775 = vmax.f32 %v7702, %v8774
      %v8776 = vrot.slane %v8775, 2
      %v8777 = vmax.f32 %v8775, %v8776
      %v8778 = vrot.slane %v8777, 1
      %v8779 = vmax.f32 %v8777, %v8778
      %v8780 = vrot.slane %v7703, 4
      %v8781 = vmax.f32 %v7703, %v8780
      %v8782 = vrot.slane %v8781, 2
      %v8783 = vmax.f32 %v8781, %v8782
      %v8784 = vrot.slane %v8783, 1
      %v8785 = vmax.f32 %v8783, %v8784
      %v8786 = vrot.slane %v7704, 4
      %v8787 = vmax.f32 %v7704, %v8786
      %v8788 = vrot.slane %v8787, 2
      %v8789 = vmax.f32 %v8787, %v8788
      %v8790 = vrot.slane %v8789, 1
      %v8791 = vmax.f32 %v8789, %v8790
      %v8792 = vrot.slane %v7705, 4
      %v8793 = vmax.f32 %v7705, %v8792
      %v8794 = vrot.slane %v8793, 2
      %v8795 = vmax.f32 %v8793, %v8794
      %v8796 = vrot.slane %v8795, 1
      %v8797 = vmax.f32 %v8795, %v8796
      %v8798 = vrot.slane %v7706, 4
      %v8799 = vmax.f32 %v7706, %v8798
      %v8800 = vrot.slane %v8799, 2
      %v8801 = vmax.f32 %v8799, %v8800
      %v8802 = vrot.slane %v8801, 1
      %v8803 = vmax.f32 %v8801, %v8802
      %v8804 = vrot.slane %v7707, 4
      %v8805 = vmax.f32 %v7707, %v8804
      %v8806 = vrot.slane %v8805, 2
      %v8807 = vmax.f32 %v8805, %v8806
      %v8808 = vrot.slane %v8807, 1
      %v8809 = vmax.f32 %v8807, %v8808
      %v8810 = vrot.slane %v7708, 4
      %v8811 = vmax.f32 %v7708, %v8810
      %v8812 = vrot.slane %v8811, 2
      %v8813 = vmax.f32 %v8811, %v8812
      %v8814 = vrot.slane %v8813, 1
      %v8815 = vmax.f32 %v8813, %v8814
      %v8816 = vrot.slane %v7709, 4
      %v8817 = vmax.f32 %v7709, %v8816
      %v8818 = vrot.slane %v8817, 2
      %v8819 = vmax.f32 %v8817, %v8818
      %v8820 = vrot.slane %v8819, 1
      %v8821 = vmax.f32 %v8819, %v8820
      %v8822 = vrot.slane %v7710, 4
      %v8823 = vmax.f32 %v7710, %v8822
      %v8824 = vrot.slane %v8823, 2
      %v8825 = vmax.f32 %v8823, %v8824
      %v8826 = vrot.slane %v8825, 1
      %v8827 = vmax.f32 %v8825, %v8826
      %v8828 = vrot.slane %v7711, 4
      %v8829 = vmax.f32 %v7711, %v8828
      %v8830 = vrot.slane %v8829, 2
      %v8831 = vmax.f32 %v8829, %v8830
      %v8832 = vrot.slane %v8831, 1
      %v8833 = vmax.f32 %v8831, %v8832
      %v8834 = vrot.slane %v7712, 4
      %v8835 = vmax.f32 %v7712, %v8834
      %v8836 = vrot.slane %v8835, 2
      %v8837 = vmax.f32 %v8835, %v8836
      %v8838 = vrot.slane %v8837, 1
      %v8839 = vmax.f32 %v8837, %v8838
      %v8840 = vrot.slane %v7713, 4
      %v8841 = vmax.f32 %v7713, %v8840
      %v8842 = vrot.slane %v8841, 2
      %v8843 = vmax.f32 %v8841, %v8842
      %v8844 = vrot.slane %v8843, 1
      %v8845 = vmax.f32 %v8843, %v8844
      %v8846 = vrot.slane %v7714, 4
      %v8847 = vmax.f32 %v7714, %v8846
      %v8848 = vrot.slane %v8847, 2
      %v8849 = vmax.f32 %v8847, %v8848
      %v8850 = vrot.slane %v8849, 1
      %v8851 = vmax.f32 %v8849, %v8850
      %v8852 = vrot.slane %v7715, 4
      %v8853 = vmax.f32 %v7715, %v8852
      %v8854 = vrot.slane %v8853, 2
      %v8855 = vmax.f32 %v8853, %v8854
      %v8856 = vrot.slane %v8855, 1
      %v8857 = vmax.f32 %v8855, %v8856
      %v8858 = vrot.slane %v7716, 4
      %v8859 = vmax.f32 %v7716, %v8858
      %v8860 = vrot.slane %v8859, 2
      %v8861 = vmax.f32 %v8859, %v8860
      %v8862 = vrot.slane %v8861, 1
      %v8863 = vmax.f32 %v8861, %v8862
      %v8864 = vrot.slane %v7717, 4
      %v8865 = vmax.f32 %v7717, %v8864
      %v8866 = vrot.slane %v8865, 2
      %v8867 = vmax.f32 %v8865, %v8866
      %v8868 = vrot.slane %v8867, 1
      %v8869 = vmax.f32 %v8867, %v8868
      %v8870 = vld [vmem:[%s9] sm:$0x3f]
      %v8871 = vld [vmem:[#allocation3] sm:$0x1]
      %8873 = vset.pattern.permute.xlu0 0
      %8874 = vperm.xlu0 %8873, %v8871
      %v8875 = vpop.permute.xlu0 %8874
      %v8877 = vlaneseq
      %v8878 = vshrl.u32 %v8877, 7
      %v8879 = vsub.s32 0, %v8878
      %v8880 = vrot.slane %v8875, %v8879
      %v8882 = vlaneseq
      %v8883 = vshrl.u32 %v8882, 7
      %v8884 = vsub.s32 0, %v8883
      %v8885 = vrot.slane %v8870, %v8884
      %v8886 = vlaneseq
      %v8887 = vshrl.u32 %v8886, 7
      %v8888 = vsub.s32 1, %v8887
      %v8889 = vrot.slane %v8870, %v8888
      %v8890 = vlaneseq
      %v8891 = vshrl.u32 %v8890, 7
      %v8892 = vsub.s32 2, %v8891
      %v8893 = vrot.slane %v8870, %v8892
      %v8894 = vlaneseq
      %v8895 = vshrl.u32 %v8894, 7
      %v8896 = vsub.s32 3, %v8895
      %v8897 = vrot.slane %v8870, %v8896
      %v8898 = vlaneseq
      %v8899 = vshrl.u32 %v8898, 7
      %v8900 = vsub.s32 4, %v8899
      %v8901 = vrot.slane %v8870, %v8900
      %v8902 = vlaneseq
      %v8903 = vshrl.u32 %v8902, 7
      %v8904 = vsub.s32 5, %v8903
      %v8905 = vrot.slane %v8870, %v8904
      %vm9104 = vcmask 1041409
      %v9105 = vsel %vm9104, %v7759, %v7723
      %vm9106 = vcmask 1042434
      %v9107 = vsel %vm9106, %v7795, %v9105
      %vm9108 = vcmask 1043459
      %v9109 = vsel %vm9108, %v7831, %v9107
      %vm9110 = vcmask 1044484
      %v9111 = vsel %vm9110, %v7867, %v9109
      %vm9112 = vcmask 1045509
      %v9113 = vsel %vm9112, %v7903, %v9111
      %vm9114 = vcmask 1046534
      %v9115 = vsel %vm9114, %v7939, %v9113
      %vm9116 = vcmask 1047559
      %v9117 = vsel %vm9116, %v7975, %v9115
      %v9118 = vsel %vm9104, %v7765, %v7729
      %v9119 = vsel %vm9106, %v7801, %v9118
      %v9120 = vsel %vm9108, %v7837, %v9119
      %v9121 = vsel %vm9110, %v7873, %v9120
      %v9122 = vsel %vm9112, %v7909, %v9121
      %v9123 = vsel %vm9114, %v7945, %v9122
      %v9124 = vsel %vm9116, %v7981, %v9123
      %v9125 = vsel %vm9104, %v7771, %v7735
      %v9126 = vsel %vm9106, %v7807, %v9125
      %v9127 = vsel %vm9108, %v7843, %v9126
      %v9128 = vsel %vm9110, %v7879, %v9127
      %v9129 = vsel %vm9112, %v7915, %v9128
      %v9130 = vsel %vm9114, %v7951, %v9129
      %v9131 = vsel %vm9116, %v7987, %v9130
      %v9132 = vsel %vm9104, %v7777, %v7741
      %v9133 = vsel %vm9106, %v7813, %v9132
      %v9134 = vsel %vm9108, %v7849, %v9133
      %v9135 = vsel %vm9110, %v7885, %v9134
      %v9136 = vsel %vm9112, %v7921, %v9135
      %v9137 = vsel %vm9114, %v7957, %v9136
      %v9138 = vsel %vm9116, %v7993, %v9137
      %v9139 = vsel %vm9104, %v7783, %v7747
      %v9140 = vsel %vm9106, %v7819, %v9139
      %v9141 = vsel %vm9108, %v7855, %v9140
      %v9142 = vsel %vm9110, %v7891, %v9141
      %v9143 = vsel %vm9112, %v7927, %v9142
      %v9144 = vsel %vm9114, %v7963, %v9143
      %v9145 = vsel %vm9116, %v7999, %v9144
      %v9146 = vsel %vm9104, %v7789, %v7753
      %v9147 = vsel %vm9106, %v7825, %v9146
      %v9148 = vsel %vm9108, %v7861, %v9147
      %v9149 = vsel %vm9110, %v7897, %v9148
      %v9150 = vsel %vm9112, %v7933, %v9149
      %v9151 = vsel %vm9114, %v7969, %v9150
      %v9152 = vsel %vm9116, %v8005, %v9151
      %v9153 = vsel %vm9104, %v8047, %v8011
      %v9154 = vsel %vm9106, %v8083, %v9153
      %v9155 = vsel %vm9108, %v8119, %v9154
      %v9156 = vsel %vm9110, %v8155, %v9155
      %v9157 = vsel %vm9112, %v8191, %v9156
      %v9158 = vsel %vm9114, %v8227, %v9157
      %v9159 = vsel %vm9116, %v8263, %v9158
      %v9160 = vsel %vm9104, %v8053, %v8017
      %v9161 = vsel %vm9106, %v8089, %v9160
      %v9162 = vsel %vm9108, %v8125, %v9161
      %v9163 = vsel %vm9110, %v8161, %v9162
      %v9164 = vsel %vm9112, %v8197, %v9163
      %v9165 = vsel %vm9114, %v8233, %v9164
      %v9166 = vsel %vm9116, %v8269, %v9165
      %v9167 = vsel %vm9104, %v8059, %v8023
      %v9168 = vsel %vm9106, %v8095, %v9167
      %v9169 = vsel %vm9108, %v8131, %v9168
      %v9170 = vsel %vm9110, %v8167, %v9169
      %v9171 = vsel %vm9112, %v8203, %v9170
      %v9172 = vsel %vm9114, %v8239, %v9171
      %v9173 = vsel %vm9116, %v8275, %v9172
      %v9174 = vsel %vm9104, %v8065, %v8029
      %v9175 = vsel %vm9106, %v8101, %v9174
      %v9176 = vsel %vm9108, %v8137, %v9175
      %v9177 = vsel %vm9110, %v8173, %v9176
      %v9178 = vsel %vm9112, %v8209, %v9177
      %v9179 = vsel %vm9114, %v8245, %v9178
      %v9180 = vsel %vm9116, %v8281, %v9179
      %v9181 = vsel %vm9104, %v8071, %v8035
      %v9182 = vsel %vm9106, %v8107, %v9181
      %v9183 = vsel %vm9108, %v8143, %v9182
      %v9184 = vsel %vm9110, %v8179, %v9183
      %v9185 = vsel %vm9112, %v8215, %v9184
      %v9186 = vsel %vm9114, %v8251, %v9185
      %v9187 = vsel %vm9116, %v8287, %v9186
      %v9188 = vsel %vm9104, %v8077, %v8041
      %v9189 = vsel %vm9106, %v8113, %v9188
      %v9190 = vsel %vm9108, %v8149, %v9189
      %v9191 = vsel %vm9110, %v8185, %v9190
      %v9192 = vsel %vm9112, %v8221, %v9191
      %v9193 = vsel %vm9114, %v8257, %v9192
      %v9194 = vsel %vm9116, %v8293, %v9193
      %v9195 = vsel %vm9104, %v8335, %v8299
      %v9196 = vsel %vm9106, %v8371, %v9195
      %v9197 = vsel %vm9108, %v8407, %v9196
      %v9198 = vsel %vm9110, %v8443, %v9197
      %v9199 = vsel %vm9112, %v8479, %v9198
      %v9200 = vsel %vm9114, %v8515, %v9199
      %v9201 = vsel %vm9116, %v8551, %v9200
      %v9202 = vsel %vm9104, %v8341, %v8305
      %v9203 = vsel %vm9106, %v8377, %v9202
      %v9204 = vsel %vm9108, %v8413, %v9203
      %v9205 = vsel %vm9110, %v8449, %v9204
      %v9206 = vsel %vm9112, %v8485, %v9205
      %v9207 = vsel %vm9114, %v8521, %v9206
      %v9208 = vsel %vm9116, %v8557, %v9207
      %v9209 = vsel %vm9104, %v8347, %v8311
      %v9210 = vsel %vm9106, %v8383, %v9209
      %v9211 = vsel %vm9108, %v8419, %v9210
      %v9212 = vsel %vm9110, %v8455, %v9211
      %v9213 = vsel %vm9112, %v8491, %v9212
      %v9214 = vsel %vm9114, %v8527, %v9213
      %v9215 = vsel %vm9116, %v8563, %v9214
      %v9216 = vsel %vm9104, %v8353, %v8317
      %v9217 = vsel %vm9106, %v8389, %v9216
      %v9218 = vsel %vm9108, %v8425, %v9217
      %v9219 = vsel %vm9110, %v8461, %v9218
      %v9220 = vsel %vm9112, %v8497, %v9219
      %v9221 = vsel %vm9114, %v8533, %v9220
      %v9222 = vsel %vm9116, %v8569, %v9221
      %v9223 = vsel %vm9104, %v8359, %v8323
      %v9224 = vsel %vm9106, %v8395, %v9223
      %v9225 = vsel %vm9108, %v8431, %v9224
      %v9226 = vsel %vm9110, %v8467, %v9225
      %v9227 = vsel %vm9112, %v8503, %v9226
      %v9228 = vsel %vm9114, %v8539, %v9227
      %v9229 = vsel %vm9116, %v8575, %v9228
      %v9230 = vsel %vm9104, %v8365, %v8329
      %v9231 = vsel %vm9106, %v8401, %v9230
      %v9232 = vsel %vm9108, %v8437, %v9231
      %v9233 = vsel %vm9110, %v8473, %v9232
      %v9234 = vsel %vm9112, %v8509, %v9233
      %v9235 = vsel %vm9114, %v8545, %v9234
      %v9236 = vsel %vm9116, %v8581, %v9235
      %v9237 = vsel %vm9104, %v8623, %v8587
      %v9238 = vsel %vm9106, %v8659, %v9237
      %v9239 = vsel %vm9108, %v8695, %v9238
      %v9240 = vsel %vm9110, %v8731, %v9239
      %v9241 = vsel %vm9112, %v8767, %v9240
      %v9242 = vsel %vm9114, %v8803, %v9241
      %v9243 = vsel %vm9116, %v8839, %v9242
      %v9244 = vsel %vm9104, %v8629, %v8593
      %v9245 = vsel %vm9106, %v8665, %v9244
      %v9246 = vsel %vm9108, %v8701, %v9245
      %v9247 = vsel %vm9110, %v8737, %v9246
      %v9248 = vsel %vm9112, %v8773, %v9247
      %v9249 = vsel %vm9114, %v8809, %v9248
      %v9250 = vsel %vm9116, %v8845, %v9249
      %v9251 = vsel %vm9104, %v8635, %v8599
      %v9252 = vsel %vm9106, %v8671, %v9251
      %v9253 = vsel %vm9108, %v8707, %v9252
      %v9254 = vsel %vm9110, %v8743, %v9253
      %v9255 = vsel %vm9112, %v8779, %v9254
      %v9256 = vsel %vm9114, %v8815, %v9255
      %v9257 = vsel %vm9116, %v8851, %v9256
      %v9258 = vsel %vm9104, %v8641, %v8605
      %v9259 = vsel %vm9106, %v8677, %v9258
      %v9260 = vsel %vm9108, %v8713, %v9259
      %v9261 = vsel %vm9110, %v8749, %v9260
      %v9262 = vsel %vm9112, %v8785, %v9261
      %v9263 = vsel %vm9114, %v8821, %v9262
      %v9264 = vsel %vm9116, %v8857, %v9263
      %v9265 = vsel %vm9104, %v8647, %v8611
      %v9266 = vsel %vm9106, %v8683, %v9265
      %v9267 = vsel %vm9108, %v8719, %v9266
      %v9268 = vsel %vm9110, %v8755, %v9267
      %v9269 = vsel %vm9112, %v8791, %v9268
      %v9270 = vsel %vm9114, %v8827, %v9269
      %v9271 = vsel %vm9116, %v8863, %v9270
      %v9272 = vsel %vm9104, %v8653, %v8617
      %v9273 = vsel %vm9106, %v8689, %v9272
      %v9274 = vsel %vm9108, %v8725, %v9273
      %v9275 = vsel %vm9110, %v8761, %v9274
      %v9276 = vsel %vm9112, %v8797, %v9275
      %v9277 = vsel %vm9114, %v8833, %v9276
      %v9278 = vsel %vm9116, %v8869, %v9277
      %9303 = vmatprep.subr.mxu0 %v9124
      %9304 = vmatpush1.xpose.msra.mxu0 %v9117
      %9305 = vmatprep.subr.mxu0 %v9166
      %9306 = vmatpush1.xpose.msra.mxu0 %v9159
      %9307 = vmatprep.subr.mxu0 %v9208
      %9308 = vmatpush1.xpose.msra.mxu0 %v9201
      %9309 = vmatprep.subr.mxu0 %v9250
      %9310 = vmatpush1.xpose.msra.mxu0 %v9243
      %9311 = vmatprep.subr.mxu0 0.0
      %9312 = vmatpush1.xpose.msra.mxu0 0.0
      %9313 = vmatprep.subr.mxu0 0.0
      %9314 = vmatpush1.xpose.msra.mxu0 0.0
      %9315 = vmatprep.subr.mxu0 0.0
      %9316 = vmatpush1.xpose.msra.mxu0 0.0
      %9317 = vmatprep.subr.mxu0 0.0
      %9318 = vmatpush1.xpose.msra.mxu0 0.0
      %9319 = vmatprep.subr.mxu0 0.0
      %9320 = vmatpush1.xpose.msra.mxu0 0.0
      %9321 = vmatprep.subr.mxu0 0.0
      %9322 = vmatpush1.xpose.msra.mxu0 0.0
      %9323 = vmatprep.subr.mxu0 0.0
      %9324 = vmatpush1.xpose.msra.mxu0 0.0
      %9325 = vmatprep.subr.mxu0 0.0
      %9326 = vmatpush1.xpose.msra.mxu0 0.0
      %9327 = vmatprep.subr.mxu0 0.0
      %9328 = vmatpush1.xpose.msra.mxu0 0.0
      %9329 = vmatprep.subr.mxu0 0.0
      %9330 = vmatpush1.xpose.msra.mxu0 0.0
      %9331 = vmatprep.subr.mxu0 0.0
      %9332 = vmatpush1.xpose.msra.mxu0 0.0
      %9333 = vmatprep.subr.mxu0 0.0
      %9334 = vmatpush1.xpose.msra.mxu0 0.0
      %9335 = vmatprep.subr.mxu0 0.0
      %9336 = vmatpush1.xpose.msra.mxu0 0.0
      %9337 = vmatprep.subr.mxu0 0.0
      %9338 = vmatpush1.xpose.msra.mxu0 0.0
      %9339 = vmatprep.subr.mxu0 0.0
      %9340 = vmatpush1.xpose.msra.mxu0 0.0
      %9341 = vmatprep.subr.mxu0 0.0
      %9342 = vmatpush1.xpose.msra.mxu0 0.0
      %9343 = vmatprep.subr.mxu0 0.0
      %9344 = vmatpush1.xpose.msra.mxu0 0.0
      %9345 = vmatprep.subr.mxu0 0.0
      %9346 = vmatpush1.xpose.msra.mxu0 0.0
      %9347 = vmatprep.subr.mxu0 0.0
      %9348 = vmatpush1.xpose.msra.mxu0 0.0
      %9349 = vmatprep.subr.mxu0 0.0
      %9350 = vmatpush1.xpose.msra.mxu0 0.0
      %9351 = vmatprep.subr.mxu0 0.0
      %9352 = vmatpush1.xpose.msra.mxu0 0.0
      %9353 = vmatprep.subr.mxu0 0.0
      %9354 = vmatpush1.xpose.msra.mxu0 0.0
      %9355 = vmatprep.subr.mxu0 0.0
      %9356 = vmatpush1.xpose.msra.mxu0 0.0
      %9357 = vmatprep.subr.mxu0 0.0
      %9358 = vmatpush1.xpose.msra.mxu0 0.0
      %9359 = vmatprep.subr.mxu0 0.0
      %9360 = vmatpush1.xpose.msra.mxu0 0.0
      %9361 = vmatprep.subr.mxu0 0.0
      %9362 = vmatpush1.xpose.msra.mxu0 0.0
      %9363 = vmatprep.subr.mxu0 0.0
      %9364 = vmatpush1.xpose.msra.mxu0 0.0
      %9365 = vmatprep.subr.mxu0 0.0
      %9366 = vmatpush1.xpose.msra.mxu0 0.0
      %9367 = vmatprep.mubr.f32.mxu0 %v8889
      %9368 = vmatmul.mubr.f32.gmra.mrb[0].mxu0 %v8885
      %v9369 = vpop.f32.mrb[0].mxu0
      %v9370 = vadd.f32 %v8880, %v9369
      %v9371 = vpop.f32.mrb[0].mxu0
      %9372 = vdwg.mxu0
      %9373 = vmatprep.subr.mxu0 %v9138
      %9374 = vmatpush1.xpose.msra.mxu0 %v9131
      %9375 = vmatprep.subr.mxu0 %v9180
      %9376 = vmatpush1.xpose.msra.mxu0 %v9173
      %9377 = vmatprep.subr.mxu0 %v9222
      %9378 = vmatpush1.xpose.msra.mxu0 %v9215
      %9379 = vmatprep.subr.mxu0 %v9264
      %9380 = vmatpush1.xpose.msra.mxu0 %v9257
      %9381 = vmatprep.subr.mxu0 0.0
      %9382 = vmatpush1.xpose.msra.mxu0 0.0
      %9383 = vmatprep.subr.mxu0 0.0
      %9384 = vmatpush1.xpose.msra.mxu0 0.0
      %9385 = vmatprep.subr.mxu0 0.0
      %9386 = vmatpush1.xpose.msra.mxu0 0.0
      %9387 = vmatprep.subr.mxu0 0.0
      %9388 = vmatpush1.xpose.msra.mxu0 0.0
      %9389 = vmatprep.subr.mxu0 0.0
      %9390 = vmatpush1.xpose.msra.mxu0 0.0
      %9391 = vmatprep.subr.mxu0 0.0
      %9392 = vmatpush1.xpose.msra.mxu0 0.0
      %9393 = vmatprep.subr.mxu0 0.0
      %9394 = vmatpush1.xpose.msra.mxu0 0.0
      %9395 = vmatprep.subr.mxu0 0.0
      %9396 = vmatpush1.xpose.msra.mxu0 0.0
      %9397 = vmatprep.subr.mxu0 0.0
      %9398 = vmatpush1.xpose.msra.mxu0 0.0
      %9399 = vmatprep.subr.mxu0 0.0
      %9400 = vmatpush1.xpose.msra.mxu0 0.0
      %9401 = vmatprep.subr.mxu0 0.0
      %9402 = vmatpush1.xpose.msra.mxu0 0.0
      %9403 = vmatprep.subr.mxu0 0.0
      %9404 = vmatpush1.xpose.msra.mxu0 0.0
      %9405 = vmatprep.subr.mxu0 0.0
      %9406 = vmatpush1.xpose.msra.mxu0 0.0
      %9407 = vmatprep.subr.mxu0 0.0
      %9408 = vmatpush1.xpose.msra.mxu0 0.0
      %9409 = vmatprep.subr.mxu0 0.0
      %9410 = vmatpush1.xpose.msra.mxu0 0.0
      %9411 = vmatprep.subr.mxu0 0.0
      %9412 = vmatpush1.xpose.msra.mxu0 0.0
      %9413 = vmatprep.subr.mxu0 0.0
      %9414 = vmatpush1.xpose.msra.mxu0 0.0
      %9415 = vmatprep.subr.mxu0 0.0
      %9416 = vmatpush1.xpose.msra.mxu0 0.0
      %9417 = vmatprep.subr.mxu0 0.0
      %9418 = vmatpush1.xpose.msra.mxu0 0.0
      %9419 = vmatprep.subr.mxu0 0.0
      %9420 = vmatpush1.xpose.msra.mxu0 0.0
      %9421 = vmatprep.subr.mxu0 0.0
      %9422 = vmatpush1.xpose.msra.mxu0 0.0
      %9423 = vmatprep.subr.mxu0 0.0
      %9424 = vmatpush1.xpose.msra.mxu0 0.0
      %9425 = vmatprep.subr.mxu0 0.0
      %9426 = vmatpush1.xpose.msra.mxu0 0.0
      %9427 = vmatprep.subr.mxu0 0.0
      %9428 = vmatpush1.xpose.msra.mxu0 0.0
      %9429 = vmatprep.subr.mxu0 0.0
      %9430 = vmatpush1.xpose.msra.mxu0 0.0
      %9431 = vmatprep.subr.mxu0 0.0
      %9432 = vmatpush1.xpose.msra.mxu0 0.0
      %9433 = vmatprep.subr.mxu0 0.0
      %9434 = vmatpush1.xpose.msra.mxu0 0.0
      %9435 = vmatprep.subr.mxu0 0.0
      %9436 = vmatpush1.xpose.msra.mxu0 0.0
      %9437 = vmatprep.mubr.f32.mxu0 %v8897
      %9438 = vmatmul.mubr.f32.gmra.mrb[0].mxu0 %v8893
      %v9439 = vpop.f32.mrb[0].mxu0
      %v9440 = vadd.f32 %v9370, %v9439
      %v9441 = vpop.f32.mrb[0].mxu0
      %9442 = vdwg.mxu0
      %9443 = vmatprep.subr.mxu0 %v9152
      %9444 = vmatpush1.xpose.msra.mxu0 %v9145
      %9445 = vmatprep.subr.mxu0 %v9194
      %9446 = vmatpush1.xpose.msra.mxu0 %v9187
      %9447 = vmatprep.subr.mxu0 %v9236
      %9448 = vmatpush1.xpose.msra.mxu0 %v9229
      %9449 = vmatprep.subr.mxu0 %v9278
      %9450 = vmatpush1.xpose.msra.mxu0 %v9271
      %9451 = vmatprep.subr.mxu0 0.0
      %9452 = vmatpush1.xpose.msra.mxu0 0.0
      %9453 = vmatprep.subr.mxu0 0.0
      %9454 = vmatpush1.xpose.msra.mxu0 0.0
      %9455 = vmatprep.subr.mxu0 0.0
      %9456 = vmatpush1.xpose.msra.mxu0 0.0
      %9457 = vmatprep.subr.mxu0 0.0
      %9458 = vmatpush1.xpose.msra.mxu0 0.0
      %9459 = vmatprep.subr.mxu0 0.0
      %9460 = vmatpush1.xpose.msra.mxu0 0.0
      %9461 = vmatprep.subr.mxu0 0.0
      %9462 = vmatpush1.xpose.msra.mxu0 0.0
      %9463 = vmatprep.subr.mxu0 0.0
      %9464 = vmatpush1.xpose.msra.mxu0 0.0
      %9465 = vmatprep.subr.mxu0 0.0
      %9466 = vmatpush1.xpose.msra.mxu0 0.0
      %9467 = vmatprep.subr.mxu0 0.0
      %9468 = vmatpush1.xpose.msra.mxu0 0.0
      %9469 = vmatprep.subr.mxu0 0.0
      %9470 = vmatpush1.xpose.msra.mxu0 0.0
      %9471 = vmatprep.subr.mxu0 0.0
      %9472 = vmatpush1.xpose.msra.mxu0 0.0
      %9473 = vmatprep.subr.mxu0 0.0
      %9474 = vmatpush1.xpose.msra.mxu0 0.0
      %9475 = vmatprep.subr.mxu0 0.0
      %9476 = vmatpush1.xpose.msra.mxu0 0.0
      %9477 = vmatprep.subr.mxu0 0.0
      %9478 = vmatpush1.xpose.msra.mxu0 0.0
      %9479 = vmatprep.subr.mxu0 0.0
      %9480 = vmatpush1.xpose.msra.mxu0 0.0
      %9481 = vmatprep.subr.mxu0 0.0
      %9482 = vmatpush1.xpose.msra.mxu0 0.0
      %9483 = vmatprep.subr.mxu0 0.0
      %9484 = vmatpush1.xpose.msra.mxu0 0.0
      %9485 = vmatprep.subr.mxu0 0.0
      %9486 = vmatpush1.xpose.msra.mxu0 0.0
      %9487 = vmatprep.subr.mxu0 0.0
      %9488 = vmatpush1.xpose.msra.mxu0 0.0
      %9489 = vmatprep.subr.mxu0 0.0
      %9490 = vmatpush1.xpose.msra.mxu0 0.0
      %9491 = vmatprep.subr.mxu0 0.0
      %9492 = vmatpush1.xpose.msra.mxu0 0.0
      %9493 = vmatprep.subr.mxu0 0.0
      %9494 = vmatpush1.xpose.msra.mxu0 0.0
      %9495 = vmatprep.subr.mxu0 0.0
      %9496 = vmatpush1.xpose.msra.mxu0 0.0
      %9497 = vmatprep.subr.mxu0 0.0
      %9498 = vmatpush1.xpose.msra.mxu0 0.0
      %9499 = vmatprep.subr.mxu0 0.0
      %9500 = vmatpush1.xpose.msra.mxu0 0.0
      %9501 = vmatprep.subr.mxu0 0.0
      %9502 = vmatpush1.xpose.msra.mxu0 0.0
      %9503 = vmatprep.subr.mxu0 0.0
      %9504 = vmatpush1.xpose.msra.mxu0 0.0
      %9505 = vmatprep.subr.mxu0 0.0
      %9506 = vmatpush1.xpose.msra.mxu0 0.0
      %9507 = vmatprep.mubr.f32.mxu0 %v8905
      %9508 = vmatmul.mubr.f32.gmra.mrb[0].mxu0 %v8901
      %v9509 = vpop.f32.mrb[0].mxu0
      %v9510 = vadd.f32 %v9440, %v9509
      %v9511 = vpop.f32.mrb[0].mxu0
      %9512 = vdwg.mxu0
      %v9513 = vsub.f32 0.0, %v9510
      %v9514 = vmul.f32 %v9513, 1.442695
      %v9515 = vpow.pop %v9514
      %v9516 = vadd.f32 %v9515, 1.0
      %v9517 = vrcp.pop %v9516
      %v9518 = vmul.f32 1.0, %v9517
      %vm9519 = vcmask 253952
      %9520 = vst.msk [vmem:[%s477] sm:$0x1] %vm9519, %v9518
      %p9521 = scmp.lt.s32.totalorder %s24, 1
      %s9522 = scalar_select %p9521, %s24, 1
      %s9523 = scalar_lea.vmem %s11, %s9522
      // Predicated region
      $region65: #{object_model_forward.1} parent=63 // pred_check
        %p9524 = pneg %p298
      $region66: #{object_model_forward.1} parent=63 // pred_check_branch
        %9526 = sbr.rel (%p9524) target = $region68
      $region67: #{object_model_forward.1} parent=63 // pred_region
        _
      $region68: #{object_model_forward.1} parent=63 // pred_fallthru
        _
    $region64: #{object_model_forward.1} parent=5 // pred_fallthru
      _
    %p9527 = scmp.le.s32.totalorder 2, %s19
    // Predicated region
    $region69: #{object_model_forward.1} parent=5 // pred_check
      %p9528 = pneg %p9527
    $region70: #{object_model_forward.1} parent=5 // pred_check_branch
      %9530 = sbr.rel (%p9528) target = $region72
    $region71: #{object_model_forward.1} parent=5 // pred_region
      %s9531 = ssub.s32 %s19, 2
      // Predicated region
      $region73: #{object_model_forward.1} parent=71 // pred_check
        %p9532 = pneg %p304
      $region74: #{object_model_forward.1} parent=71 // pred_check_branch
        %9534 = sbr.rel (%p9532) target = $region76
      $region75: #{object_model_forward.1} parent=71 // pred_region
        %p9535 = scmp.lt.s32.totalorder %s25, 1
        %s9536 = scalar_select %p9535, %s25, 1
        %s9537 = scalar_lea.vmem %s11, %s9536
      $region76: #{object_model_forward.1} parent=71 // pred_fallthru
        _
    $region72: #{object_model_forward.1} parent=5 // pred_fallthru
      _
  $region6: #{object_model_forward.1} parent=0 // loop_footer
    %s23 = sadd.s32 1, %s19
  $region7: #{object_model_forward.1} parent=0 // loop_footer_branch
    %18 = sbr.rel target = $region3
  $region8: #{object_model_forward.1} parent=0 // loop_exit
    _

</llo_original>
